<compile_context>
chip_gen: v5e
topology: v5e:2x2
jax: 0.10.0
libtpu: 0.0.40
codegen_flags: <defaults>
</compile_context>

<pallas_src>
import functools
import math

import jax
import jax.numpy as jnp
from jax.experimental import pallas as pl
from jax.experimental.pallas import tpu as pltpu

BN_EPS = 1e-5


# ----------------------------------------------------------------------------
# Fused BasicBlock kernel: one (batch image) block does the whole residual block.
# ----------------------------------------------------------------------------
def _basic_block_kernel(x_ref, w1_ref, b1_ref, w2_ref, b2_ref, *rest,
                        stride, Ho, Wo, has_down):
    """Refs (per batch image):
      x_ref  : stride==1 -> (1, H, W, Cin) bf16 (unpadded; padded in-kernel)
               stride> 1 -> (1, s*s, Hn, Wn, Cin) bf16 (padded parity phases)
      w1_ref : (9*Cin, planes)    bf16, BN1 scale folded, rows ordered (kh, kw, cin)
      b1_ref : (1, planes)        f32   folded BN1 bias
      w2_ref : (9*planes, planes) bf16, BN2 scale folded
      b2_ref : (1, planes)        f32
      [wd_ref: (Cin, planes) bf16, bd_ref: (1, planes) f32]   (downsample)
      out_ref: (1, Ho*Wo, planes)
      scratch: [pad1 (H+2, W+2, Cin) bf16]   (stride==1 only)
               pad2 (Ho+2, Wo+2, planes) bf16
    """
    i = 0
    if has_down:
        wd_ref, bd_ref = rest[0], rest[1]
        i = 2
    out_ref = rest[i]
    i += 1
    pad1_ref = None
    if stride == 1:
        pad1_ref = rest[i]
        i += 1
    pad2_ref = rest[i]

    cin = x_ref.shape[-1]
    planes = w1_ref.shape[-1]
    M = Ho * Wo
    f32 = jnp.float32

    # conv3x3 = sum over 9 taps of shifted 1x1 matmuls; taps are grouped so each
    # MXU call has K ~= 256 (window channels concatenated along lanes).
    def conv3x3_acc(win_fn, w_ref, cin_):
        group = max(1, 256 // cin_)
        acc = jnp.zeros((M, w_ref.shape[-1]), f32)
        for g0 in range(0, 9, group):
            g1 = min(g0 + group, 9)
            parts = [win_fn(t).reshape(M, cin_) for t in range(g0, g1)]
            lhs = parts[0] if len(parts) == 1 else jnp.concatenate(parts, axis=-1)
            acc = acc + jnp.dot(lhs, w_ref[g0 * cin_:g1 * cin_, :],
                                preferred_element_type=f32)
        return acc

    # ---- conv1 input windows: in-kernel zero pad (stride 1) or parity phases ----
    if stride == 1:
        H = x_ref.shape[1]
        W = x_ref.shape[2]
        pad1_ref[...] = jnp.zeros(pad1_ref.shape, pad1_ref.dtype)
        pad1_ref[1:H + 1, 1:W + 1, :] = x_ref[0]

        def win1(t):
            kh, kw = t // 3, t % 3
            return pad1_ref[kh:kh + Ho, kw:kw + Wo, :]

        def ds_win():                       # x[ho, wo] == padded[1+ho, 1+wo]
            return pad1_ref[1:1 + Ho, 1:1 + Wo, :]
    else:
        s = stride

        # Phase p=(a,b) holds xpad[a::s, b::s], so tap (kh,kw) of the conv is an
        # unstrided window of phase (kh%s, kw%s).
        def win1(t):
            kh, kw = t // 3, t % 3
            ph = (kh % s) * s + (kw % s)
            return x_ref[0, ph, kh // s:kh // s + Ho, kw // s:kw // s + Wo, :]

        def ds_win():                       # x[s*ho, s*wo] == xpad[1+s*ho, 1+s*wo]
            ph = (1 % s) * s + (1 % s)
            o = 1 // s
            return x_ref[0, ph, o:o + Ho, o:o + Wo, :]

    # ---- conv1 + BN1 (scale folded into w1) + ReLU ----
    act1 = jnp.maximum(conv3x3_acc(win1, w1_ref, cin) + b1_ref[...], 0.0)
    act1 = act1.astype(pad2_ref.dtype)

    # ---- zero-pad act1 into the conv2 input scratch (never touches HBM) ----
    pad2_ref[...] = jnp.zeros(pad2_ref.shape, pad2_ref.dtype)
    pad2_ref[1:Ho + 1, 1:Wo + 1, :] = act1.reshape(Ho, Wo, planes)

    def win2(t):
        kh, kw = t // 3, t % 3
        return pad2_ref[kh:kh + Ho, kw:kw + Wo, :]

    # ---- conv2 + BN2 ----
    out = conv3x3_acc(win2, w2_ref, planes) + b2_ref[...]

    # ---- identity / downsample (conv1x1(stride) + BNd, scale folded into wd) ----
    if has_down:
        identity = jnp.dot(ds_win().reshape(M, cin), wd_ref[...],
                           preferred_element_type=f32) + bd_ref[...]
    else:
        identity = ds_win().reshape(M, cin).astype(f32)

    # ---- residual add + ReLU ----
    y = jnp.maximum(out + identity, 0.0)
    out_ref[...] = y.reshape(1, M, planes).astype(out_ref.dtype)


# ----------------------------------------------------------------------------
# Wrapper: one fused pallas_call per BasicBlock
# ----------------------------------------------------------------------------
def basic_block_forward(x_nhwc, p, out_dtype=jnp.float32):
    """x_nhwc: (N, H, W, Cin).  Returns (N, Ho, Wo, planes)."""
    N, H, W, Cin = x_nhwc.shape
    s = p['stride']
    planes = p['w1'].shape[-1]
    Ho = (H + 2 - 3) // s + 1
    Wo = (W + 2 - 3) // s + 1
    M = Ho * Wo
    has_down = 'wd' in p
    if not has_down:
        assert s == 1 and Cin == planes, "identity path needs matching shapes"

    # Fold BN (eval) scale into the conv weights; keep bias as a separate f32 input.
    def fold(w_hwio, bn):
        scale, bias = bn
        wf = (w_hwio * scale).reshape(-1, w_hwio.shape[-1]).astype(jnp.bfloat16)
        return wf, bias.reshape(1, -1).astype(jnp.float32)

    w1f, b1 = fold(p['w1'], p['bn1'])
    w2f, b2 = fold(p['w2'], p['bn2'])

    # conv1 input: stride 1 -> raw bf16 image (padded in-kernel); stride s -> XLA
    # pad + parity phase split so the kernel never does strided reads.
    if s == 1:
        xin = x_nhwc.astype(jnp.bfloat16)
        x_spec = pl.BlockSpec((1, H, W, Cin), lambda n: (n, 0, 0, 0))
    else:
        Hn = (3 - 1) // s + Ho
        Wn = (3 - 1) // s + Wo
        xp = jnp.pad(x_nhwc, ((0, 0), (1, 1), (1, 1), (0, 0)))
        phases = [xp[:, a::s, b::s, :][:, :Hn, :Wn, :]
                  for a in range(s) for b in range(s)]
        xin = jnp.stack(phases, axis=1).astype(jnp.bfloat16)  # (N, s*s, Hn, Wn, Cin)
        x_spec = pl.BlockSpec((1, s * s, Hn, Wn, Cin), lambda n: (n, 0, 0, 0, 0))

    in_specs = [
        x_spec,
        pl.BlockSpec(w1f.shape, lambda n: (0, 0)),
        pl.BlockSpec(b1.shape, lambda n: (0, 0)),
        pl.BlockSpec(w2f.shape, lambda n: (0, 0)),
        pl.BlockSpec(b2.shape, lambda n: (0, 0)),
    ]
    args = [xin, w1f, b1, w2f, b2]
    if has_down:
        wdf, bd = fold(p['wd'], p['bnd'])
        in_specs += [pl.BlockSpec(wdf.shape, lambda n: (0, 0)),
                     pl.BlockSpec(bd.shape, lambda n: (0, 0))]
        args += [wdf, bd]

    scratch_shapes = []
    if s == 1:
        scratch_shapes.append(pltpu.VMEM((H + 2, W + 2, Cin), jnp.bfloat16))
    scratch_shapes.append(pltpu.VMEM((Ho + 2, Wo + 2, planes), jnp.bfloat16))

    kernel = functools.partial(_basic_block_kernel, stride=s, Ho=Ho, Wo=Wo,
                               has_down=has_down)

    y = pl.pallas_call(
        kernel,
        out_shape=jax.ShapeDtypeStruct((N, M, planes), out_dtype),
        grid_spec=pltpu.PrefetchScalarGridSpec(
            num_scalar_prefetch=0,
            grid=(N,),
            in_specs=in_specs,
            out_specs=pl.BlockSpec((1, M, planes), lambda n: (n, 0, 0)),
            scratch_shapes=scratch_shapes,
        ),
        compiler_params=pltpu.CompilerParams(
            dimension_semantics=("parallel",)),
    )(*args)
    return y.reshape(N, Ho, Wo, planes)


# ----------------------------------------------------------------------------
# Parameter construction (deterministic, mirroring the module's __init__)
# ----------------------------------------------------------------------------
def make_conv_w(key, k, cin, cout):
    # nn.init.kaiming_normal_(mode='fan_out', nonlinearity='relu'), HWIO layout
    std = math.sqrt(2.0 / (k * k * cout))
    return jax.random.normal(key, (k, k, cin, cout), jnp.float32) * std


def make_bn(c):
    gamma = jnp.ones((c,), jnp.float32)
    beta = jnp.zeros((c,), jnp.float32)
    running_mean = jnp.zeros((c,), jnp.float32)
    running_var = jnp.ones((c,), jnp.float32)
    scale = gamma / jnp.sqrt(running_var + BN_EPS)
    bias = beta - running_mean * scale
    return scale, bias


def init_basic_block(key, inplanes, planes, stride):
    expansion = 1  # BasicBlock.expansion
    k1, k2, k3 = jax.random.split(key, 3)
    p = {
        'stride': stride,
        'w1': make_conv_w(k1, 3, inplanes, planes), 'bn1': make_bn(planes),
        'w2': make_conv_w(k2, 3, planes, planes), 'bn2': make_bn(planes),
    }
    if stride != 1 or inplanes != planes * expansion:
        p['wd'] = make_conv_w(k3, 1, inplanes, planes * expansion)
        p['bnd'] = make_bn(planes * expansion)
    return p


# ----------------------------------------------------------------------------
# Pure-JAX f32 reference (loose numerical check; kernel uses bf16 MXU operands)
# ----------------------------------------------------------------------------
def ref_conv_bn(x, w, scale, bias, stride, pad, relu, residual=None):
    y = jax.lax.conv_general_dilated(
        x.astype(jnp.float32), w.astype(jnp.float32),
        window_strides=(stride, stride),
        padding=[(pad, pad), (pad, pad)],
        dimension_numbers=('NHWC', 'HWIO', 'NHWC'))
    y = y * scale.reshape(1, 1, 1, -1) + bias.reshape(1, 1, 1, -1)
    if residual is not None:
        y = y + residual
    if relu:
        y = jnp.maximum(y, 0.0)
    return y


def ref_basic_block(x_nhwc, p):
    s = p['stride']
    out = ref_conv_bn(x_nhwc, p['w1'], *p['bn1'], s, 1, True)
    identity = (ref_conv_bn(x_nhwc, p['wd'], *p['bnd'], s, 0, False)
                if 'wd' in p else x_nhwc)
    return ref_conv_bn(out, p['w2'], *p['bn2'], 1, 1, True, residual=identity)


# ----------------------------------------------------------------------------
if __name__ == "__main__":
    key = jax.random.PRNGKey(0)
    kp1, kp2, kin = jax.random.split(key, 3)

    # Block A: inplanes=64 -> planes=64, stride=1, no downsample.
    # Block B: inplanes=64 -> planes=128, stride=2, conv1x1(stride)+BN downsample.
    pA = init_basic_block(kp1, 64, 64, stride=1)
    pB = init_basic_block(kp2, 64, 128, stride=2)

    # Small deterministic input, NCHW like the PyTorch module.
    x_nchw = jax.random.normal(kin, (2, 64, 16, 16), jnp.float32)

    def forward(x):
        xh = jnp.transpose(x, (0, 2, 3, 1))                      # NCHW -> NHWC
        y1 = basic_block_forward(xh, pA, out_dtype=jnp.bfloat16)  # feeds block B
        y2 = basic_block_forward(y1, pB, out_dtype=jnp.float32)
        return (jnp.transpose(y1, (0, 3, 1, 2)),                  # back to NCHW
                jnp.transpose(y2, (0, 3, 1, 2)))

    y1, y2 = jax.jit(forward)(x_nchw)
    y1 = jax.block_until_ready(y1)
    y2 = jax.block_until_ready(y2)

    assert y1.shape == (2, 64, 16, 16), y1.shape
    assert y2.shape == (2, 128, 8, 8), y2.shape
    assert bool(jnp.all(jnp.isfinite(y1.astype(jnp.float32))))
    assert bool(jnp.all(jnp.isfinite(y2)))

    # Loose check against a pure-JAX f32 reference (kernel uses bf16 matmul operands
    # and a bf16 intermediate between the two blocks).
    x_nhwc = jnp.transpose(x_nchw, (0, 2, 3, 1))
    r1 = jnp.transpose(ref_basic_block(x_nhwc, pA), (0, 3, 1, 2))
    r2 = jnp.transpose(ref_basic_block(jnp.transpose(r1, (0, 2, 3, 1)), pB),
                       (0, 3, 1, 2))
    for got, ref in ((y1, r1), (y2, r2)):
        err = float(jnp.max(jnp.abs(got.astype(jnp.float32) - ref)))
        tol = 3e-2 * float(jnp.max(jnp.abs(ref))) + 1e-1
        assert err < tol, (err, tol)

    print("KERNEL_OK")
</pallas_src>

<mosaic_0001>
module attributes {stable_mosaic.version = 11 : i64} {
  func.func @_basic_block_kernel(%arg0: i32, %arg1: memref<1x16x16x64xbf16, #tpu.memory_space<vmem>>, %arg2: memref<576x64xbf16, #tpu.memory_space<vmem>>, %arg3: memref<1x64xf32, #tpu.memory_space<vmem>>, %arg4: memref<576x64xbf16, #tpu.memory_space<vmem>>, %arg5: memref<1x64xf32, #tpu.memory_space<vmem>>, %arg6: memref<1x256x64xbf16, #tpu.memory_space<vmem>>, %arg7: memref<18x18x64xbf16, #tpu.memory_space<vmem>>, %arg8: memref<18x18x64xbf16, #tpu.memory_space<vmem>>) attributes {dimension_semantics = [#tpu.dimension_semantics<parallel>], iteration_bounds = array<i64: 2>, scalar_prefetch = 0 : i64, scratch_operands = 2 : i64, tpu.core_type = #tpu.core_type<tc>, window_params = [{transform_indices = @transform_0, window_bounds = array<i64: 1, 16, 16, 64>}, {pipeline_mode = #tpu.pipeline_mode<synchronous>, transform_indices = @transform_1, window_bounds = array<i64: 576, 64>}, {pipeline_mode = #tpu.pipeline_mode<synchronous>, transform_indices = @transform_2, window_bounds = array<i64: 1, 64>}, {pipeline_mode = #tpu.pipeline_mode<synchronous>, transform_indices = @transform_3, window_bounds = array<i64: 576, 64>}, {pipeline_mode = #tpu.pipeline_mode<synchronous>, transform_indices = @transform_4, window_bounds = array<i64: 1, 64>}, {transform_indices = @transform_5, window_bounds = array<i64: 1, 256, 64>}]} {
    %cst = arith.constant 0.000000e+00 : bf16
    %0 = vector.broadcast %cst : bf16 to vector<18x18x64xbf16>
    %c0 = arith.constant 0 : index
    %c0_0 = arith.constant 0 : index
    %c0_1 = arith.constant 0 : index
    %1 = vector.load %arg7[%c0, %c0_0, %c0_1] : memref<18x18x64xbf16, #tpu.memory_space<vmem>>, vector<18x18x64xbf16>
    tpu.vector_store %arg7[%c0, %c0_0, %c0_1], %0 {strides = array<i32>} : memref<18x18x64xbf16, #tpu.memory_space<vmem>>, vector<18x18x64xbf16>,
    %c0_2 = arith.constant 0 : index
    %c0_3 = arith.constant 0 : index
    %c0_4 = arith.constant 0 : index
    %c0_5 = arith.constant 0 : index
    %2 = vector.load %arg1[%c0_2, %c0_3, %c0_4, %c0_5] : memref<1x16x16x64xbf16, #tpu.memory_space<vmem>>, vector<1x16x16x64xbf16>
    %3 = vector.shape_cast %2 : vector<1x16x16x64xbf16> to vector<16x16x64xbf16>
    %c1 = arith.constant 1 : index
    %c1_6 = arith.constant 1 : index
    %c0_7 = arith.constant 0 : index
    %4 = vector.load %arg7[%c1, %c1_6, %c0_7] : memref<18x18x64xbf16, #tpu.memory_space<vmem>>, vector<16x16x64xbf16>
    tpu.vector_store %arg7[%c1, %c1_6, %c0_7], %3 {strides = array<i32>} : memref<18x18x64xbf16, #tpu.memory_space<vmem>>, vector<16x16x64xbf16>,
    %cst_8 = arith.constant 0.000000e+00 : f32
    %5 = vector.broadcast %cst_8 : f32 to vector<256x64xf32>
    %c0_9 = arith.constant 0 : index
    %c0_10 = arith.constant 0 : index
    %c0_11 = arith.constant 0 : index
    %6 = vector.load %arg7[%c0_9, %c0_10, %c0_11] : memref<18x18x64xbf16, #tpu.memory_space<vmem>>, vector<16x16x64xbf16>
    %7 = vector.shape_cast %6 : vector<16x16x64xbf16> to vector<256x64xbf16>
    %c0_12 = arith.constant 0 : index
    %c1_13 = arith.constant 1 : index
    %c0_14 = arith.constant 0 : index
    %8 = vector.load %arg7[%c0_12, %c1_13, %c0_14] : memref<18x18x64xbf16, #tpu.memory_space<vmem>>, vector<16x16x64xbf16>
    %9 = vector.shape_cast %8 : vector<16x16x64xbf16> to vector<256x64xbf16>
    %c0_15 = arith.constant 0 : index
    %c2 = arith.constant 2 : index
    %c0_16 = arith.constant 0 : index
    %10 = vector.load %arg7[%c0_15, %c2, %c0_16] : memref<18x18x64xbf16, #tpu.memory_space<vmem>>, vector<16x16x64xbf16>
    %11 = vector.shape_cast %10 : vector<16x16x64xbf16> to vector<256x64xbf16>
    %c1_17 = arith.constant 1 : index
    %c0_18 = arith.constant 0 : index
    %c0_19 = arith.constant 0 : index
    %12 = vector.load %arg7[%c1_17, %c0_18, %c0_19] : memref<18x18x64xbf16, #tpu.memory_space<vmem>>, vector<16x16x64xbf16>
    %13 = vector.shape_cast %12 : vector<16x16x64xbf16> to vector<256x64xbf16>
    %14 = tpu.concatenate %7, %9, %11, %13 in 1 : vector<256x64xbf16>, vector<256x64xbf16>, vector<256x64xbf16>, vector<256x64xbf16> -> vector<256x256xbf16>
    %c0_20 = arith.constant 0 : index
    %c0_21 = arith.constant 0 : index
    %15 = vector.load %arg2[%c0_20, %c0_21] : memref<576x64xbf16, #tpu.memory_space<vmem>>, vector<256x64xbf16>
    %cst_22 = arith.constant dense<0.000000e+00> : vector<256x64xf32>
    %16 = tpu.matmul %14, %15, %cst_22 {dimension_numbers = #tpu.dot_dimension_numbers<[1], [0], [0], [1], [0, 0, 1, 1], [], []>} : vector<256x256xbf16>, vector<256x64xbf16>, vector<256x64xf32> -> vector<256x64xf32>
    %17 = arith.addf %5, %16 : vector<256x64xf32>
    %c1_23 = arith.constant 1 : index
    %c1_24 = arith.constant 1 : index
    %c0_25 = arith.constant 0 : index
    %18 = vector.load %arg7[%c1_23, %c1_24, %c0_25] : memref<18x18x64xbf16, #tpu.memory_space<vmem>>, vector<16x16x64xbf16>
    %19 = vector.shape_cast %18 : vector<16x16x64xbf16> to vector<256x64xbf16>
    %c1_26 = arith.constant 1 : index
    %c2_27 = arith.constant 2 : index
    %c0_28 = arith.constant 0 : index
    %20 = vector.load %arg7[%c1_26, %c2_27, %c0_28] : memref<18x18x64xbf16, #tpu.memory_space<vmem>>, vector<16x16x64xbf16>
    %21 = vector.shape_cast %20 : vector<16x16x64xbf16> to vector<256x64xbf16>
    %c2_29 = arith.constant 2 : index
    %c0_30 = arith.constant 0 : index
    %c0_31 = arith.constant 0 : index
    %22 = vector.load %arg7[%c2_29, %c0_30, %c0_31] : memref<18x18x64xbf16, #tpu.memory_space<vmem>>, vector<16x16x64xbf16>
    %23 = vector.shape_cast %22 : vector<16x16x64xbf16> to vector<256x64xbf16>
    %c2_32 = arith.constant 2 : index
    %c1_33 = arith.constant 1 : index
    %c0_34 = arith.constant 0 : index
    %24 = vector.load %arg7[%c2_32, %c1_33, %c0_34] : memref<18x18x64xbf16, #tpu.memory_space<vmem>>, vector<16x16x64xbf16>
    %25 = vector.shape_cast %24 : vector<16x16x64xbf16> to vector<256x64xbf16>
    %26 = tpu.concatenate %19, %21, %23, %25 in 1 : vector<256x64xbf16>, vector<256x64xbf16>, vector<256x64xbf16>, vector<256x64xbf16> -> vector<256x256xbf16>
    %c256 = arith.constant 256 : index
    %c0_35 = arith.constant 0 : index
    %27 = vector.load %arg2[%c256, %c0_35] : memref<576x64xbf16, #tpu.memory_space<vmem>>, vector<256x64xbf16>
    %cst_36 = arith.constant dense<0.000000e+00> : vector<256x64xf32>
    %28 = tpu.matmul %26, %27, %cst_36 {dimension_numbers = #tpu.dot_dimension_numbers<[1], [0], [0], [1], [0, 0, 1, 1], [], []>} : vector<256x256xbf16>, vector<256x64xbf16>, vector<256x64xf32> -> vector<256x64xf32>
    %29 = arith.addf %17, %28 : vector<256x64xf32>
    %c2_37 = arith.constant 2 : index
    %c2_38 = arith.constant 2 : index
    %c0_39 = arith.constant 0 : index
    %30 = vector.load %arg7[%c2_37, %c2_38, %c0_39] : memref<18x18x64xbf16, #tpu.memory_space<vmem>>, vector<16x16x64xbf16>
    %31 = vector.shape_cast %30 : vector<16x16x64xbf16> to vector<256x64xbf16>
    %c512 = arith.constant 512 : index
    %c0_40 = arith.constant 0 : index
    %32 = vector.load %arg2[%c512, %c0_40] : memref<576x64xbf16, #tpu.memory_space<vmem>>, vector<64x64xbf16>
    %cst_41 = arith.constant dense<0.000000e+00> : vector<256x64xf32>
    %33 = tpu.matmul %31, %32, %cst_41 {dimension_numbers = #tpu.dot_dimension_numbers<[1], [0], [0], [1], [0, 0, 1, 1], [], []>} : vector<256x64xbf16>, vector<64x64xbf16>, vector<256x64xf32> -> vector<256x64xf32>
    %34 = arith.addf %29, %33 : vector<256x64xf32>
    %c0_42 = arith.constant 0 : index
    %c0_43 = arith.constant 0 : index
    %35 = vector.load %arg3[%c0_42, %c0_43] : memref<1x64xf32, #tpu.memory_space<vmem>>, vector<1x64xf32>
    %36 = vector.broadcast %35 : vector<1x64xf32> to vector<256x64xf32>
    %37 = arith.addf %34, %36 : vector<256x64xf32>
    %cst_44 = arith.constant 0.000000e+00 : f32
    %38 = vector.broadcast %cst_44 : f32 to vector<256x64xf32>
    %39 = arith.maximumf %37, %38 : vector<256x64xf32>
    %40 = arith.truncf %39 : vector<256x64xf32> to vector<256x64xbf16>
    %cst_45 = arith.constant 0.000000e+00 : bf16
    %41 = vector.broadcast %cst_45 : bf16 to vector<18x18x64xbf16>
    %c0_46 = arith.constant 0 : index
    %c0_47 = arith.constant 0 : index
    %c0_48 = arith.constant 0 : index
    %42 = vector.load %arg8[%c0_46, %c0_47, %c0_48] : memref<18x18x64xbf16, #tpu.memory_space<vmem>>, vector<18x18x64xbf16>
    tpu.vector_store %arg8[%c0_46, %c0_47, %c0_48], %41 {strides = array<i32>} : memref<18x18x64xbf16, #tpu.memory_space<vmem>>, vector<18x18x64xbf16>,
    %43 = vector.shape_cast %40 : vector<256x64xbf16> to vector<16x16x64xbf16>
    %c1_49 = arith.constant 1 : index
    %c1_50 = arith.constant 1 : index
    %c0_51 = arith.constant 0 : index
    %44 = vector.load %arg8[%c1_49, %c1_50, %c0_51] : memref<18x18x64xbf16, #tpu.memory_space<vmem>>, vector<16x16x64xbf16>
    tpu.vector_store %arg8[%c1_49, %c1_50, %c0_51], %43 {strides = array<i32>} : memref<18x18x64xbf16, #tpu.memory_space<vmem>>, vector<16x16x64xbf16>,
    %cst_52 = arith.constant 0.000000e+00 : f32
    %45 = vector.broadcast %cst_52 : f32 to vector<256x64xf32>
    %c0_53 = arith.constant 0 : index
    %c0_54 = arith.constant 0 : index
    %c0_55 = arith.constant 0 : index
    %46 = vector.load %arg8[%c0_53, %c0_54, %c0_55] : memref<18x18x64xbf16, #tpu.memory_space<vmem>>, vector<16x16x64xbf16>
    %47 = vector.shape_cast %46 : vector<16x16x64xbf16> to vector<256x64xbf16>
    %c0_56 = arith.constant 0 : index
    %c1_57 = arith.constant 1 : index
    %c0_58 = arith.constant 0 : index
    %48 = vector.load %arg8[%c0_56, %c1_57, %c0_58] : memref<18x18x64xbf16, #tpu.memory_space<vmem>>, vector<16x16x64xbf16>
    %49 = vector.shape_cast %48 : vector<16x16x64xbf16> to vector<256x64xbf16>
    %c0_59 = arith.constant 0 : index
    %c2_60 = arith.constant 2 : index
    %c0_61 = arith.constant 0 : index
    %50 = vector.load %arg8[%c0_59, %c2_60, %c0_61] : memref<18x18x64xbf16, #tpu.memory_space<vmem>>, vector<16x16x64xbf16>
    %51 = vector.shape_cast %50 : vector<16x16x64xbf16> to vector<256x64xbf16>
    %c1_62 = arith.constant 1 : index
    %c0_63 = arith.constant 0 : index
    %c0_64 = arith.constant 0 : index
    %52 = vector.load %arg8[%c1_62, %c0_63, %c0_64] : memref<18x18x64xbf16, #tpu.memory_space<vmem>>, vector<16x16x64xbf16>
    %53 = vector.shape_cast %52 : vector<16x16x64xbf16> to vector<256x64xbf16>
    %54 = tpu.concatenate %47, %49, %51, %53 in 1 : vector<256x64xbf16>, vector<256x64xbf16>, vector<256x64xbf16>, vector<256x64xbf16> -> vector<256x256xbf16>
    %c0_65 = arith.constant 0 : index
    %c0_66 = arith.constant 0 : index
    %55 = vector.load %arg4[%c0_65, %c0_66] : memref<576x64xbf16, #tpu.memory_space<vmem>>, vector<256x64xbf16>
    %cst_67 = arith.constant dense<0.000000e+00> : vector<256x64xf32>
    %56 = tpu.matmul %54, %55, %cst_67 {dimension_numbers = #tpu.dot_dimension_numbers<[1], [0], [0], [1], [0, 0, 1, 1], [], []>} : vector<256x256xbf16>, vector<256x64xbf16>, vector<256x64xf32> -> vector<256x64xf32>
    %57 = arith.addf %45, %56 : vector<256x64xf32>
    %c1_68 = arith.constant 1 : index
    %c1_69 = arith.constant 1 : index
    %c0_70 = arith.constant 0 : index
    %58 = vector.load %arg8[%c1_68, %c1_69, %c0_70] : memref<18x18x64xbf16, #tpu.memory_space<vmem>>, vector<16x16x64xbf16>
    %59 = vector.shape_cast %58 : vector<16x16x64xbf16> to vector<256x64xbf16>
    %c1_71 = arith.constant 1 : index
    %c2_72 = arith.constant 2 : index
    %c0_73 = arith.constant 0 : index
    %60 = vector.load %arg8[%c1_71, %c2_72, %c0_73] : memref<18x18x64xbf16, #tpu.memory_space<vmem>>, vector<16x16x64xbf16>
    %61 = vector.shape_cast %60 : vector<16x16x64xbf16> to vector<256x64xbf16>
    %c2_74 = arith.constant 2 : index
    %c0_75 = arith.constant 0 : index
    %c0_76 = arith.constant 0 : index
    %62 = vector.load %arg8[%c2_74, %c0_75, %c0_76] : memref<18x18x64xbf16, #tpu.memory_space<vmem>>, vector<16x16x64xbf16>
    %63 = vector.shape_cast %62 : vector<16x16x64xbf16> to vector<256x64xbf16>
    %c2_77 = arith.constant 2 : index
    %c1_78 = arith.constant 1 : index
    %c0_79 = arith.constant 0 : index
    %64 = vector.load %arg8[%c2_77, %c1_78, %c0_79] : memref<18x18x64xbf16, #tpu.memory_space<vmem>>, vector<16x16x64xbf16>
    %65 = vector.shape_cast %64 : vector<16x16x64xbf16> to vector<256x64xbf16>
    %66 = tpu.concatenate %59, %61, %63, %65 in 1 : vector<256x64xbf16>, vector<256x64xbf16>, vector<256x64xbf16>, vector<256x64xbf16> -> vector<256x256xbf16>
    %c256_80 = arith.constant 256 : index
    %c0_81 = arith.constant 0 : index
    %67 = vector.load %arg4[%c256_80, %c0_81] : memref<576x64xbf16, #tpu.memory_space<vmem>>, vector<256x64xbf16>
    %cst_82 = arith.constant dense<0.000000e+00> : vector<256x64xf32>
    %68 = tpu.matmul %66, %67, %cst_82 {dimension_numbers = #tpu.dot_dimension_numbers<[1], [0], [0], [1], [0, 0, 1, 1], [], []>} : vector<256x256xbf16>, vector<256x64xbf16>, vector<256x64xf32> -> vector<256x64xf32>
    %69 = arith.addf %57, %68 : vector<256x64xf32>
    %c2_83 = arith.constant 2 : index
    %c2_84 = arith.constant 2 : index
    %c0_85 = arith.constant 0 : index
    %70 = vector.load %arg8[%c2_83, %c2_84, %c0_85] : memref<18x18x64xbf16, #tpu.memory_space<vmem>>, vector<16x16x64xbf16>
    %71 = vector.shape_cast %70 : vector<16x16x64xbf16> to vector<256x64xbf16>
    %c512_86 = arith.constant 512 : index
    %c0_87 = arith.constant 0 : index
    %72 = vector.load %arg4[%c512_86, %c0_87] : memref<576x64xbf16, #tpu.memory_space<vmem>>, vector<64x64xbf16>
    %cst_88 = arith.constant dense<0.000000e+00> : vector<256x64xf32>
    %73 = tpu.matmul %71, %72, %cst_88 {dimension_numbers = #tpu.dot_dimension_numbers<[1], [0], [0], [1], [0, 0, 1, 1], [], []>} : vector<256x64xbf16>, vector<64x64xbf16>, vector<256x64xf32> -> vector<256x64xf32>
    %74 = arith.addf %69, %73 : vector<256x64xf32>
    %c0_89 = arith.constant 0 : index
    %c0_90 = arith.constant 0 : index
    %75 = vector.load %arg5[%c0_89, %c0_90] : memref<1x64xf32, #tpu.memory_space<vmem>>, vector<1x64xf32>
    %76 = vector.broadcast %75 : vector<1x64xf32> to vector<256x64xf32>
    %77 = arith.addf %74, %76 : vector<256x64xf32>
    %c1_91 = arith.constant 1 : index
    %c1_92 = arith.constant 1 : index
    %c0_93 = arith.constant 0 : index
    %78 = vector.load %arg7[%c1_91, %c1_92, %c0_93] : memref<18x18x64xbf16, #tpu.memory_space<vmem>>, vector<16x16x64xbf16>
    %79 = vector.shape_cast %78 : vector<16x16x64xbf16> to vector<256x64xbf16>
    %80 = arith.extf %79 : vector<256x64xbf16> to vector<256x64xf32>
    %81 = arith.addf %77, %80 : vector<256x64xf32>
    %cst_94 = arith.constant 0.000000e+00 : f32
    %82 = vector.broadcast %cst_94 : f32 to vector<256x64xf32>
    %83 = arith.maximumf %81, %82 : vector<256x64xf32>
    %84 = vector.shape_cast %83 : vector<256x64xf32> to vector<1x256x64xf32>
    %85 = arith.truncf %84 : vector<1x256x64xf32> to vector<1x256x64xbf16>
    %c0_95 = arith.constant 0 : index
    %c0_96 = arith.constant 0 : index
    %c0_97 = arith.constant 0 : index
    %86 = vector.load %arg6[%c0_95, %c0_96, %c0_97] : memref<1x256x64xbf16, #tpu.memory_space<vmem>>, vector<1x256x64xbf16>
    tpu.vector_store %arg6[%c0_95, %c0_96, %c0_97], %85 {strides = array<i32>} : memref<1x256x64xbf16, #tpu.memory_space<vmem>>, vector<1x256x64xbf16>,
    return
  }
  func.func @transform_0(%arg0: i32) -> (i32, i32, i32, i32) {
    %c0_i32 = arith.constant 0 : i32
    %c0_i32_0 = arith.constant 0 : i32
    %c0_i32_1 = arith.constant 0 : i32
    %c0_i32_2 = arith.constant 0 : i32
    return %arg0, %c0_i32, %c0_i32_0, %c0_i32_1 : i32, i32, i32, i32
  }
  func.func @transform_1(%arg0: i32) -> (i32, i32) {
    %c0_i32 = arith.constant 0 : i32
    %c0_i32_0 = arith.constant 0 : i32
    %c0_i32_1 = arith.constant 0 : i32
    return %c0_i32, %c0_i32_0 : i32, i32
  }
  func.func @transform_2(%arg0: i32) -> (i32, i32) {
    %c0_i32 = arith.constant 0 : i32
    %c0_i32_0 = arith.constant 0 : i32
    %c0_i32_1 = arith.constant 0 : i32
    return %c0_i32, %c0_i32_0 : i32, i32
  }
  func.func @transform_3(%arg0: i32) -> (i32, i32) {
    %c0_i32 = arith.constant 0 : i32
    %c0_i32_0 = arith.constant 0 : i32
    %c0_i32_1 = arith.constant 0 : i32
    return %c0_i32, %c0_i32_0 : i32, i32
  }
  func.func @transform_4(%arg0: i32) -> (i32, i32) {
    %c0_i32 = arith.constant 0 : i32
    %c0_i32_0 = arith.constant 0 : i32
    %c0_i32_1 = arith.constant 0 : i32
    return %c0_i32, %c0_i32_0 : i32, i32
  }
  func.func @transform_5(%arg0: i32) -> (i32, i32, i32) {
    %c0_i32 = arith.constant 0 : i32
    %c0_i32_0 = arith.constant 0 : i32
    %c0_i32_1 = arith.constant 0 : i32
    return %arg0, %c0_i32, %c0_i32_0 : i32, i32, i32
  }
}

module attributes {stable_mosaic.version = 11 : i64} {
  func.func @_basic_block_kernel(%arg0: i32, %arg1: memref<1x4x9x9x64xbf16, #tpu.memory_space<vmem>>, %arg2: memref<576x128xbf16, #tpu.memory_space<vmem>>, %arg3: memref<1x128xf32, #tpu.memory_space<vmem>>, %arg4: memref<1152x128xbf16, #tpu.memory_space<vmem>>, %arg5: memref<1x128xf32, #tpu.memory_space<vmem>>, %arg6: memref<64x128xbf16, #tpu.memory_space<vmem>>, %arg7: memref<1x128xf32, #tpu.memory_space<vmem>>, %arg8: memref<1x64x128xf32, #tpu.memory_space<vmem>>, %arg9: memref<10x10x128xbf16, #tpu.memory_space<vmem>>) attributes {dimension_semantics = [#tpu.dimension_semantics<parallel>], iteration_bounds = array<i64: 2>, scalar_prefetch = 0 : i64, scratch_operands = 1 : i64, tpu.core_type = #tpu.core_type<tc>, window_params = [{transform_indices = @transform_0, window_bounds = array<i64: 1, 4, 9, 9, 64>}, {pipeline_mode = #tpu.pipeline_mode<synchronous>, transform_indices = @transform_1, window_bounds = array<i64: 576, 128>}, {pipeline_mode = #tpu.pipeline_mode<synchronous>, transform_indices = @transform_2, window_bounds = array<i64: 1, 128>}, {pipeline_mode = #tpu.pipeline_mode<synchronous>, transform_indices = @transform_3, window_bounds = array<i64: 1152, 128>}, {pipeline_mode = #tpu.pipeline_mode<synchronous>, transform_indices = @transform_4, window_bounds = array<i64: 1, 128>}, {pipeline_mode = #tpu.pipeline_mode<synchronous>, transform_indices = @transform_5, window_bounds = array<i64: 64, 128>}, {pipeline_mode = #tpu.pipeline_mode<synchronous>, transform_indices = @transform_6, window_bounds = array<i64: 1, 128>}, {transform_indices = @transform_7, window_bounds = array<i64: 1, 64, 128>}]} {
    %cst = arith.constant 0.000000e+00 : f32
    %0 = vector.broadcast %cst : f32 to vector<64x128xf32>
    %c0 = arith.constant 0 : index
    %c0_0 = arith.constant 0 : index
    %c0_1 = arith.constant 0 : index
    %c0_2 = arith.constant 0 : index
    %c0_3 = arith.constant 0 : index
    %1 = vector.load %arg1[%c0, %c0_0, %c0_1, %c0_2, %c0_3] : memref<1x4x9x9x64xbf16, #tpu.memory_space<vmem>>, vector<1x1x8x8x64xbf16>
    %2 = vector.shape_cast %1 : vector<1x1x8x8x64xbf16> to vector<8x8x64xbf16>
    %3 = vector.shape_cast %2 : vector<8x8x64xbf16> to vector<64x64xbf16>
    %c0_4 = arith.constant 0 : index
    %c1 = arith.constant 1 : index
    %c0_5 = arith.constant 0 : index
    %c0_6 = arith.constant 0 : index
    %c0_7 = arith.constant 0 : index
    %4 = vector.load %arg1[%c0_4, %c1, %c0_5, %c0_6, %c0_7] : memref<1x4x9x9x64xbf16, #tpu.memory_space<vmem>>, vector<1x1x8x8x64xbf16>
    %5 = vector.shape_cast %4 : vector<1x1x8x8x64xbf16> to vector<8x8x64xbf16>
    %6 = vector.shape_cast %5 : vector<8x8x64xbf16> to vector<64x64xbf16>
    %c0_8 = arith.constant 0 : index
    %c0_9 = arith.constant 0 : index
    %c0_10 = arith.constant 0 : index
    %c1_11 = arith.constant 1 : index
    %c0_12 = arith.constant 0 : index
    %7 = vector.load %arg1[%c0_8, %c0_9, %c0_10, %c1_11, %c0_12] : memref<1x4x9x9x64xbf16, #tpu.memory_space<vmem>>, vector<1x1x8x8x64xbf16>
    %8 = vector.shape_cast %7 : vector<1x1x8x8x64xbf16> to vector<8x8x64xbf16>
    %9 = vector.shape_cast %8 : vector<8x8x64xbf16> to vector<64x64xbf16>
    %c0_13 = arith.constant 0 : index
    %c2 = arith.constant 2 : index
    %c0_14 = arith.constant 0 : index
    %c0_15 = arith.constant 0 : index
    %c0_16 = arith.constant 0 : index
    %10 = vector.load %arg1[%c0_13, %c2, %c0_14, %c0_15, %c0_16] : memref<1x4x9x9x64xbf16, #tpu.memory_space<vmem>>, vector<1x1x8x8x64xbf16>
    %11 = vector.shape_cast %10 : vector<1x1x8x8x64xbf16> to vector<8x8x64xbf16>
    %12 = vector.shape_cast %11 : vector<8x8x64xbf16> to vector<64x64xbf16>
    %13 = tpu.concatenate %3, %6, %9, %12 in 1 : vector<64x64xbf16>, vector<64x64xbf16>, vector<64x64xbf16>, vector<64x64xbf16> -> vector<64x256xbf16>
    %c0_17 = arith.constant 0 : index
    %c0_18 = arith.constant 0 : index
    %14 = vector.load %arg2[%c0_17, %c0_18] : memref<576x128xbf16, #tpu.memory_space<vmem>>, vector<256x128xbf16>
    %cst_19 = arith.constant dense<0.000000e+00> : vector<64x128xf32>
    %15 = tpu.matmul %13, %14, %cst_19 {dimension_numbers = #tpu.dot_dimension_numbers<[1], [0], [0], [1], [0, 0, 1, 1], [], []>} : vector<64x256xbf16>, vector<256x128xbf16>, vector<64x128xf32> -> vector<64x128xf32>
    %16 = arith.addf %0, %15 : vector<64x128xf32>
    %c0_20 = arith.constant 0 : index
    %c3 = arith.constant 3 : index
    %c0_21 = arith.constant 0 : index
    %c0_22 = arith.constant 0 : index
    %c0_23 = arith.constant 0 : index
    %17 = vector.load %arg1[%c0_20, %c3, %c0_21, %c0_22, %c0_23] : memref<1x4x9x9x64xbf16, #tpu.memory_space<vmem>>, vector<1x1x8x8x64xbf16>
    %18 = vector.shape_cast %17 : vector<1x1x8x8x64xbf16> to vector<8x8x64xbf16>
    %19 = vector.shape_cast %18 : vector<8x8x64xbf16> to vector<64x64xbf16>
    %c0_24 = arith.constant 0 : index
    %c2_25 = arith.constant 2 : index
    %c0_26 = arith.constant 0 : index
    %c1_27 = arith.constant 1 : index
    %c0_28 = arith.constant 0 : index
    %20 = vector.load %arg1[%c0_24, %c2_25, %c0_26, %c1_27, %c0_28] : memref<1x4x9x9x64xbf16, #tpu.memory_space<vmem>>, vector<1x1x8x8x64xbf16>
    %21 = vector.shape_cast %20 : vector<1x1x8x8x64xbf16> to vector<8x8x64xbf16>
    %22 = vector.shape_cast %21 : vector<8x8x64xbf16> to vector<64x64xbf16>
    %c0_29 = arith.constant 0 : index
    %c0_30 = arith.constant 0 : index
    %c1_31 = arith.constant 1 : index
    %c0_32 = arith.constant 0 : index
    %c0_33 = arith.constant 0 : index
    %23 = vector.load %arg1[%c0_29, %c0_30, %c1_31, %c0_32, %c0_33] : memref<1x4x9x9x64xbf16, #tpu.memory_space<vmem>>, vector<1x1x8x8x64xbf16>
    %24 = vector.shape_cast %23 : vector<1x1x8x8x64xbf16> to vector<8x8x64xbf16>
    %25 = vector.shape_cast %24 : vector<8x8x64xbf16> to vector<64x64xbf16>
    %c0_34 = arith.constant 0 : index
    %c1_35 = arith.constant 1 : index
    %c1_36 = arith.constant 1 : index
    %c0_37 = arith.constant 0 : index
    %c0_38 = arith.constant 0 : index
    %26 = vector.load %arg1[%c0_34, %c1_35, %c1_36, %c0_37, %c0_38] : memref<1x4x9x9x64xbf16, #tpu.memory_space<vmem>>, vector<1x1x8x8x64xbf16>
    %27 = vector.shape_cast %26 : vector<1x1x8x8x64xbf16> to vector<8x8x64xbf16>
    %28 = vector.shape_cast %27 : vector<8x8x64xbf16> to vector<64x64xbf16>
    %29 = tpu.concatenate %19, %22, %25, %28 in 1 : vector<64x64xbf16>, vector<64x64xbf16>, vector<64x64xbf16>, vector<64x64xbf16> -> vector<64x256xbf16>
    %c256 = arith.constant 256 : index
    %c0_39 = arith.constant 0 : index
    %30 = vector.load %arg2[%c256, %c0_39] : memref<576x128xbf16, #tpu.memory_space<vmem>>, vector<256x128xbf16>
    %cst_40 = arith.constant dense<0.000000e+00> : vector<64x128xf32>
    %31 = tpu.matmul %29, %30, %cst_40 {dimension_numbers = #tpu.dot_dimension_numbers<[1], [0], [0], [1], [0, 0, 1, 1], [], []>} : vector<64x256xbf16>, vector<256x128xbf16>, vector<64x128xf32> -> vector<64x128xf32>
    %32 = arith.addf %16, %31 : vector<64x128xf32>
    %c0_41 = arith.constant 0 : index
    %c0_42 = arith.constant 0 : index
    %c1_43 = arith.constant 1 : index
    %c1_44 = arith.constant 1 : index
    %c0_45 = arith.constant 0 : index
    %33 = vector.load %arg1[%c0_41, %c0_42, %c1_43, %c1_44, %c0_45] : memref<1x4x9x9x64xbf16, #tpu.memory_space<vmem>>, vector<1x1x8x8x64xbf16>
    %34 = vector.shape_cast %33 : vector<1x1x8x8x64xbf16> to vector<8x8x64xbf16>
    %35 = vector.shape_cast %34 : vector<8x8x64xbf16> to vector<64x64xbf16>
    %c512 = arith.constant 512 : index
    %c0_46 = arith.constant 0 : index
    %36 = vector.load %arg2[%c512, %c0_46] : memref<576x128xbf16, #tpu.memory_space<vmem>>, vector<64x128xbf16>
    %cst_47 = arith.constant dense<0.000000e+00> : vector<64x128xf32>
    %37 = tpu.matmul %35, %36, %cst_47 {dimension_numbers = #tpu.dot_dimension_numbers<[1], [0], [0], [1], [0, 0, 1, 1], [], []>} : vector<64x64xbf16>, vector<64x128xbf16>, vector<64x128xf32> -> vector<64x128xf32>
    %38 = arith.addf %32, %37 : vector<64x128xf32>
    %c0_48 = arith.constant 0 : index
    %c0_49 = arith.constant 0 : index
    %39 = vector.load %arg3[%c0_48, %c0_49] : memref<1x128xf32, #tpu.memory_space<vmem>>, vector<1x128xf32>
    %40 = vector.broadcast %39 : vector<1x128xf32> to vector<64x128xf32>
    %41 = arith.addf %38, %40 : vector<64x128xf32>
    %cst_50 = arith.constant 0.000000e+00 : f32
    %42 = vector.broadcast %cst_50 : f32 to vector<64x128xf32>
    %43 = arith.maximumf %41, %42 : vector<64x128xf32>
    %44 = arith.truncf %43 : vector<64x128xf32> to vector<64x128xbf16>
    %cst_51 = arith.constant 0.000000e+00 : bf16
    %45 = vector.broadcast %cst_51 : bf16 to vector<10x10x128xbf16>
    %c0_52 = arith.constant 0 : index
    %c0_53 = arith.constant 0 : index
    %c0_54 = arith.constant 0 : index
    %46 = vector.load %arg9[%c0_52, %c0_53, %c0_54] : memref<10x10x128xbf16, #tpu.memory_space<vmem>>, vector<10x10x128xbf16>
    tpu.vector_store %arg9[%c0_52, %c0_53, %c0_54], %45 {strides = array<i32>} : memref<10x10x128xbf16, #tpu.memory_space<vmem>>, vector<10x10x128xbf16>,
    %47 = vector.shape_cast %44 : vector<64x128xbf16> to vector<8x8x128xbf16>
    %c1_55 = arith.constant 1 : index
    %c1_56 = arith.constant 1 : index
    %c0_57 = arith.constant 0 : index
    %48 = vector.load %arg9[%c1_55, %c1_56, %c0_57] : memref<10x10x128xbf16, #tpu.memory_space<vmem>>, vector<8x8x128xbf16>
    tpu.vector_store %arg9[%c1_55, %c1_56, %c0_57], %47 {strides = array<i32>} : memref<10x10x128xbf16, #tpu.memory_space<vmem>>, vector<8x8x128xbf16>,
    %cst_58 = arith.constant 0.000000e+00 : f32
    %49 = vector.broadcast %cst_58 : f32 to vector<64x128xf32>
    %c0_59 = arith.constant 0 : index
    %c0_60 = arith.constant 0 : index
    %c0_61 = arith.constant 0 : index
    %50 = vector.load %arg9[%c0_59, %c0_60, %c0_61] : memref<10x10x128xbf16, #tpu.memory_space<vmem>>, vector<8x8x128xbf16>
    %51 = vector.shape_cast %50 : vector<8x8x128xbf16> to vector<64x128xbf16>
    %c0_62 = arith.constant 0 : index
    %c1_63 = arith.constant 1 : index
    %c0_64 = arith.constant 0 : index
    %52 = vector.load %arg9[%c0_62, %c1_63, %c0_64] : memref<10x10x128xbf16, #tpu.memory_space<vmem>>, vector<8x8x128xbf16>
    %53 = vector.shape_cast %52 : vector<8x8x128xbf16> to vector<64x128xbf16>
    %54 = tpu.concatenate %51, %53 in 1 : vector<64x128xbf16>, vector<64x128xbf16> -> vector<64x256xbf16>
    %c0_65 = arith.constant 0 : index
    %c0_66 = arith.constant 0 : index
    %55 = vector.load %arg4[%c0_65, %c0_66] : memref<1152x128xbf16, #tpu.memory_space<vmem>>, vector<256x128xbf16>
    %cst_67 = arith.constant dense<0.000000e+00> : vector<64x128xf32>
    %56 = tpu.matmul %54, %55, %cst_67 {dimension_numbers = #tpu.dot_dimension_numbers<[1], [0], [0], [1], [0, 0, 1, 1], [], []>} : vector<64x256xbf16>, vector<256x128xbf16>, vector<64x128xf32> -> vector<64x128xf32>
    %57 = arith.addf %49, %56 : vector<64x128xf32>
    %c0_68 = arith.constant 0 : index
    %c2_69 = arith.constant 2 : index
    %c0_70 = arith.constant 0 : index
    %58 = vector.load %arg9[%c0_68, %c2_69, %c0_70] : memref<10x10x128xbf16, #tpu.memory_space<vmem>>, vector<8x8x128xbf16>
    %59 = vector.shape_cast %58 : vector<8x8x128xbf16> to vector<64x128xbf16>
    %c1_71 = arith.constant 1 : index
    %c0_72 = arith.constant 0 : index
    %c0_73 = arith.constant 0 : index
    %60 = vector.load %arg9[%c1_71, %c0_72, %c0_73] : memref<10x10x128xbf16, #tpu.memory_space<vmem>>, vector<8x8x128xbf16>
    %61 = vector.shape_cast %60 : vector<8x8x128xbf16> to vector<64x128xbf16>
    %62 = tpu.concatenate %59, %61 in 1 : vector<64x128xbf16>, vector<64x128xbf16> -> vector<64x256xbf16>
    %c256_74 = arith.constant 256 : index
    %c0_75 = arith.constant 0 : index
    %63 = vector.load %arg4[%c256_74, %c0_75] : memref<1152x128xbf16, #tpu.memory_space<vmem>>, vector<256x128xbf16>
    %cst_76 = arith.constant dense<0.000000e+00> : vector<64x128xf32>
    %64 = tpu.matmul %62, %63, %cst_76 {dimension_numbers = #tpu.dot_dimension_numbers<[1], [0], [0], [1], [0, 0, 1, 1], [], []>} : vector<64x256xbf16>, vector<256x128xbf16>, vector<64x128xf32> -> vector<64x128xf32>
    %65 = arith.addf %57, %64 : vector<64x128xf32>
    %c1_77 = arith.constant 1 : index
    %c1_78 = arith.constant 1 : index
    %c0_79 = arith.constant 0 : index
    %66 = vector.load %arg9[%c1_77, %c1_78, %c0_79] : memref<10x10x128xbf16, #tpu.memory_space<vmem>>, vector<8x8x128xbf16>
    %67 = vector.shape_cast %66 : vector<8x8x128xbf16> to vector<64x128xbf16>
    %c1_80 = arith.constant 1 : index
    %c2_81 = arith.constant 2 : index
    %c0_82 = arith.constant 0 : index
    %68 = vector.load %arg9[%c1_80, %c2_81, %c0_82] : memref<10x10x128xbf16, #tpu.memory_space<vmem>>, vector<8x8x128xbf16>
    %69 = vector.shape_cast %68 : vector<8x8x128xbf16> to vector<64x128xbf16>
    %70 = tpu.concatenate %67, %69 in 1 : vector<64x128xbf16>, vector<64x128xbf16> -> vector<64x256xbf16>
    %c512_83 = arith.constant 512 : index
    %c0_84 = arith.constant 0 : index
    %71 = vector.load %arg4[%c512_83, %c0_84] : memref<1152x128xbf16, #tpu.memory_space<vmem>>, vector<256x128xbf16>
    %cst_85 = arith.constant dense<0.000000e+00> : vector<64x128xf32>
    %72 = tpu.matmul %70, %71, %cst_85 {dimension_numbers = #tpu.dot_dimension_numbers<[1], [0], [0], [1], [0, 0, 1, 1], [], []>} : vector<64x256xbf16>, vector<256x128xbf16>, vector<64x128xf32> -> vector<64x128xf32>
    %73 = arith.addf %65, %72 : vector<64x128xf32>
    %c2_86 = arith.constant 2 : index
    %c0_87 = arith.constant 0 : index
    %c0_88 = arith.constant 0 : index
    %74 = vector.load %arg9[%c2_86, %c0_87, %c0_88] : memref<10x10x128xbf16, #tpu.memory_space<vmem>>, vector<8x8x128xbf16>
    %75 = vector.shape_cast %74 : vector<8x8x128xbf16> to vector<64x128xbf16>
    %c2_89 = arith.constant 2 : index
    %c1_90 = arith.constant 1 : index
    %c0_91 = arith.constant 0 : index
    %76 = vector.load %arg9[%c2_89, %c1_90, %c0_91] : memref<10x10x128xbf16, #tpu.memory_space<vmem>>, vector<8x8x128xbf16>
    %77 = vector.shape_cast %76 : vector<8x8x128xbf16> to vector<64x128xbf16>
    %78 = tpu.concatenate %75, %77 in 1 : vector<64x128xbf16>, vector<64x128xbf16> -> vector<64x256xbf16>
    %c768 = arith.constant 768 : index
    %c0_92 = arith.constant 0 : index
    %79 = vector.load %arg4[%c768, %c0_92] : memref<1152x128xbf16, #tpu.memory_space<vmem>>, vector<256x128xbf16>
    %cst_93 = arith.constant dense<0.000000e+00> : vector<64x128xf32>
    %80 = tpu.matmul %78, %79, %cst_93 {dimension_numbers = #tpu.dot_dimension_numbers<[1], [0], [0], [1], [0, 0, 1, 1], [], []>} : vector<64x256xbf16>, vector<256x128xbf16>, vector<64x128xf32> -> vector<64x128xf32>
    %81 = arith.addf %73, %80 : vector<64x128xf32>
    %c2_94 = arith.constant 2 : index
    %c2_95 = arith.constant 2 : index
    %c0_96 = arith.constant 0 : index
    %82 = vector.load %arg9[%c2_94, %c2_95, %c0_96] : memref<10x10x128xbf16, #tpu.memory_space<vmem>>, vector<8x8x128xbf16>
    %83 = vector.shape_cast %82 : vector<8x8x128xbf16> to vector<64x128xbf16>
    %c1024 = arith.constant 1024 : index
    %c0_97 = arith.constant 0 : index
    %84 = vector.load %arg4[%c1024, %c0_97] : memref<1152x128xbf16, #tpu.memory_space<vmem>>, vector<128x128xbf16>
    %cst_98 = arith.constant dense<0.000000e+00> : vector<64x128xf32>
    %85 = tpu.matmul %83, %84, %cst_98 {dimension_numbers = #tpu.dot_dimension_numbers<[1], [0], [0], [1], [0, 0, 1, 1], [], []>} : vector<64x128xbf16>, vector<128x128xbf16>, vector<64x128xf32> -> vector<64x128xf32>
    %86 = arith.addf %81, %85 : vector<64x128xf32>
    %c0_99 = arith.constant 0 : index
    %c0_100 = arith.constant 0 : index
    %87 = vector.load %arg5[%c0_99, %c0_100] : memref<1x128xf32, #tpu.memory_space<vmem>>, vector<1x128xf32>
    %88 = vector.broadcast %87 : vector<1x128xf32> to vector<64x128xf32>
    %89 = arith.addf %86, %88 : vector<64x128xf32>
    %c0_101 = arith.constant 0 : index
    %c3_102 = arith.constant 3 : index
    %c0_103 = arith.constant 0 : index
    %c0_104 = arith.constant 0 : index
    %c0_105 = arith.constant 0 : index
    %90 = vector.load %arg1[%c0_101, %c3_102, %c0_103, %c0_104, %c0_105] : memref<1x4x9x9x64xbf16, #tpu.memory_space<vmem>>, vector<1x1x8x8x64xbf16>
    %91 = vector.shape_cast %90 : vector<1x1x8x8x64xbf16> to vector<8x8x64xbf16>
    %92 = vector.shape_cast %91 : vector<8x8x64xbf16> to vector<64x64xbf16>
    %c0_106 = arith.constant 0 : index
    %c0_107 = arith.constant 0 : index
    %93 = vector.load %arg6[%c0_106, %c0_107] : memref<64x128xbf16, #tpu.memory_space<vmem>>, vector<64x128xbf16>
    %cst_108 = arith.constant dense<0.000000e+00> : vector<64x128xf32>
    %94 = tpu.matmul %92, %93, %cst_108 {dimension_numbers = #tpu.dot_dimension_numbers<[1], [0], [0], [1], [0, 0, 1, 1], [], []>} : vector<64x64xbf16>, vector<64x128xbf16>, vector<64x128xf32> -> vector<64x128xf32>
    %c0_109 = arith.constant 0 : index
    %c0_110 = arith.constant 0 : index
    %95 = vector.load %arg7[%c0_109, %c0_110] : memref<1x128xf32, #tpu.memory_space<vmem>>, vector<1x128xf32>
    %96 = vector.broadcast %95 : vector<1x128xf32> to vector<64x128xf32>
    %97 = arith.addf %94, %96 : vector<64x128xf32>
    %98 = arith.addf %89, %97 : vector<64x128xf32>
    %cst_111 = arith.constant 0.000000e+00 : f32
    %99 = vector.broadcast %cst_111 : f32 to vector<64x128xf32>
    %100 = arith.maximumf %98, %99 : vector<64x128xf32>
    %101 = vector.shape_cast %100 : vector<64x128xf32> to vector<1x64x128xf32>
    %c0_112 = arith.constant 0 : index
    %c0_113 = arith.constant 0 : index
    %c0_114 = arith.constant 0 : index
    %102 = vector.load %arg8[%c0_112, %c0_113, %c0_114] : memref<1x64x128xf32, #tpu.memory_space<vmem>>, vector<1x64x128xf32>
    tpu.vector_store %arg8[%c0_112, %c0_113, %c0_114], %101 {strides = array<i32>} : memref<1x64x128xf32, #tpu.memory_space<vmem>>, vector<1x64x128xf32>,
    return
  }
  func.func @transform_0(%arg0: i32) -> (i32, i32, i32, i32, i32) {
    %c0_i32 = arith.constant 0 : i32
    %c0_i32_0 = arith.constant 0 : i32
    %c0_i32_1 = arith.constant 0 : i32
    %c0_i32_2 = arith.constant 0 : i32
    %c0_i32_3 = arith.constant 0 : i32
    return %arg0, %c0_i32, %c0_i32_0, %c0_i32_1, %c0_i32_2 : i32, i32, i32, i32, i32
  }
  func.func @transform_1(%arg0: i32) -> (i32, i32) {
    %c0_i32 = arith.constant 0 : i32
    %c0_i32_0 = arith.constant 0 : i32
    %c0_i32_1 = arith.constant 0 : i32
    return %c0_i32, %c0_i32_0 : i32, i32
  }
  func.func @transform_2(%arg0: i32) -> (i32, i32) {
    %c0_i32 = arith.constant 0 : i32
    %c0_i32_0 = arith.constant 0 : i32
    %c0_i32_1 = arith.constant 0 : i32
    return %c0_i32, %c0_i32_0 : i32, i32
  }
  func.func @transform_3(%arg0: i32) -> (i32, i32) {
    %c0_i32 = arith.constant 0 : i32
    %c0_i32_0 = arith.constant 0 : i32
    %c0_i32_1 = arith.constant 0 : i32
    return %c0_i32, %c0_i32_0 : i32, i32
  }
  func.func @transform_4(%arg0: i32) -> (i32, i32) {
    %c0_i32 = arith.constant 0 : i32
    %c0_i32_0 = arith.constant 0 : i32
    %c0_i32_1 = arith.constant 0 : i32
    return %c0_i32, %c0_i32_0 : i32, i32
  }
  func.func @transform_5(%arg0: i32) -> (i32, i32) {
    %c0_i32 = arith.constant 0 : i32
    %c0_i32_0 = arith.constant 0 : i32
    %c0_i32_1 = arith.constant 0 : i32
    return %c0_i32, %c0_i32_0 : i32, i32
  }
  func.func @transform_6(%arg0: i32) -> (i32, i32) {
    %c0_i32 = arith.constant 0 : i32
    %c0_i32_0 = arith.constant 0 : i32
    %c0_i32_1 = arith.constant 0 : i32
    return %c0_i32, %c0_i32_0 : i32, i32
  }
  func.func @transform_7(%arg0: i32) -> (i32, i32, i32) {
    %c0_i32 = arith.constant 0 : i32
    %c0_i32_0 = arith.constant 0 : i32
    %c0_i32_1 = arith.constant 0 : i32
    return %arg0, %c0_i32, %c0_i32_0 : i32, i32, i32
  }
}

</mosaic_0001>

<llo_original>
// kernel: forward.3
$region0: #{forward.3}
  #allocation0 [shape = 'u32[]', space=smem, size = 0x4, offset = 0x4, fixed_abs, tag = 'smem constant byte address 0x4 - core index']
  #allocation1 [shape = 'u32[72,128]{1,0:T(1,128)}', space=vmem, size = 0x9000, scoped, tag = 'internal scratch']
  #allocation2 [shape = 'bf16[10,10,128]{2,1,0:T(8,128)(2,1)}', space=vmem, size = 0xa000, scoped, tag = 'scratch operand']
  %s0 = inlined_call_operand.vmem [shape: bf16[2,4,9,9,64], index: 0, kind: input, shape index: {}]
  %s1 = inlined_call_operand.vmem [shape: bf16[576,128], index: 1, kind: input, shape index: {}]
  %s2 = inlined_call_operand.vmem [shape: f32[1,128], index: 2, kind: input, shape index: {}, may-alias: {2,4,6}]
  %s3 = inlined_call_operand.vmem [shape: bf16[1152,128], index: 3, kind: input, shape index: {}]
  %s4 = inlined_call_operand.vmem [shape: f32[1,128], index: 4, kind: input, shape index: {}, may-alias: {2,4,6}]
  %s5 = inlined_call_operand.vmem [shape: bf16[64,128], index: 5, kind: input, shape index: {}]
  %s6 = inlined_call_operand.vmem [shape: f32[1,128], index: 6, kind: input, shape index: {}, may-alias: {2,4,6}]
  %s7 = inlined_call_operand.hbm [shape: f32[2,64,128], index: 7, kind: output, shape index: {}]
  %s8 = sld [smem:[#allocation0]]
  $region61: #{forward.3} parent=0
    _
  %s10 = ssub.s32 1, %s8
  %s11 = scalar_select 0, %s10, %s8
  $region1: #{forward.3} parent=0
    #allocation3 [shape = 'u8[65536]{0}', space=vmem, size = 0x10000, scoped, tag = 'output window, operand 0']
    #allocation4 [shape = 's32[2]{0}', space=sflag, size = 0x8, scoped, tag = 'scoped memory for forward.3']
    %12 = vsyncpa [#allocation4], 0
    %s13 = scalar_lea.sflag [#allocation4], 1
    %14 = vsyncpa %s13, 0
    loop: start=0, step=1, limit=4
    $region2: #{forward.3} parent=1 // loop_pre_header
      _
    $region3: #{forward.3} parent=1 // loop_header
      %s16 = sphi 0, %s20
      %p17 = scmp.ge.s32.totalorder %s16, 4
      %s26 = sphi 0, %s28
      %s29 = sphi 0, %s26
      %s30 = sphi 0, %s29
      %s46 = sphi 0, %s30
      %s50 = sphi 0, %s50
      %s52 = sphi 0, %s50
      %s53 = sphi 0, %s52
      %s67 = sphi 0, %s53
      %s71 = sphi 0, %s71
      %s73 = sphi 0, %s71
      %s74 = sphi 0, %s73
      %s88 = sphi 0, %s74
      %s92 = sphi 0, %s92
      %s94 = sphi 0, %s92
      %s95 = sphi 0, %s94
      %s109 = sphi 0, %s95
      %s113 = sphi 0, %s113
      %s115 = sphi 0, %s113
      %s116 = sphi 0, %s115
      %s130 = sphi 0, %s116
      %s134 = sphi 0, %s134
      %s136 = sphi 0, %s134
      %s137 = sphi 0, %s136
      %s151 = sphi 0, %s137
      %s155 = sphi 0, %s155
      %s157 = sphi 0, %s155
      %s158 = sphi 0, %s157
      %s172 = sphi 0, %s158
      %s178 = sphi 0, %s180
      %s181 = sphi 0, %s178
      %s182 = sphi 0, %s181
      %s198 = sphi 0, %s182
    $region4: #{forward.3} parent=1 // loop_header_branch
      %19 = sbr.rel (%p17) target = $region8
    $region5: #{forward.3} parent=1 // loop_body
      %s21 = ssub.s32 %s16, 1
      %s22 = ssub.s32 %s16, 2
      %s23 = sadd.s32 %s16, 1
      %s24 = ssub.s32 %s16, %s23
      %p25 = scmp.eq.s32.totalorder %s24, 0
      %s27 = sadd.s32 %s26, 1
      %s28 = scalar_select %p25, %s26, %s27
      %p31 = pneg %p25
      %p32 = scmp.eq.s32.totalorder %s16, 1
      %p33 = por %p31, %p32
      %p34 = scmp.ne.s32.totalorder %s26, %s29
      %p35 = scmp.eq.s32.totalorder %s16, 0
      %p36 = por %p34, %p35
      %p37 = scmp.ne.s32.totalorder %s26, %s29
      %p38 = scmp.eq.s32.totalorder %s21, 1
      %p39 = por %p37, %p38
      %p40 = scmp.ne.s32.totalorder %s29, %s30
      %p41 = scmp.eq.s32.totalorder %s21, 0
      %p42 = por %p40, %p41
      %p43 = scmp.ne.s32.totalorder %s29, %s30
      %p44 = scmp.eq.s32.totalorder %s22, 1
      %p45 = por %p43, %p44
      %p47 = scmp.ne.s32.totalorder %s30, %s46
      %p48 = scmp.eq.s32.totalorder %s22, 0
      %p49 = por %p47, %p48
      %s51 = sadd.s32 %s50, 1
      %p54 = scmp.eq.s32.totalorder %s16, 1
      %p55 = scmp.ne.s32.totalorder %s50, %s52
      %p56 = scmp.eq.s32.totalorder %s16, 0
      %p57 = por %p55, %p56
      %p58 = scmp.ne.s32.totalorder %s50, %s52
      %p59 = scmp.eq.s32.totalorder %s21, 1
      %p60 = por %p58, %p59
      %p61 = scmp.ne.s32.totalorder %s52, %s53
      %p62 = scmp.eq.s32.totalorder %s21, 0
      %p63 = por %p61, %p62
      %p64 = scmp.ne.s32.totalorder %s52, %s53
      %p65 = scmp.eq.s32.totalorder %s22, 1
      %p66 = por %p64, %p65
      %p68 = scmp.ne.s32.totalorder %s53, %s67
      %p69 = scmp.eq.s32.totalorder %s22, 0
      %p70 = por %p68, %p69
      %s72 = sadd.s32 %s71, 1
      %p75 = scmp.eq.s32.totalorder %s16, 1
      %p76 = scmp.ne.s32.totalorder %s71, %s73
      %p77 = scmp.eq.s32.totalorder %s16, 0
      %p78 = por %p76, %p77
      %p79 = scmp.ne.s32.totalorder %s71, %s73
      %p80 = scmp.eq.s32.totalorder %s21, 1
      %p81 = por %p79, %p80
      %p82 = scmp.ne.s32.totalorder %s73, %s74
      %p83 = scmp.eq.s32.totalorder %s21, 0
      %p84 = por %p82, %p83
      %p85 = scmp.ne.s32.totalorder %s73, %s74
      %p86 = scmp.eq.s32.totalorder %s22, 1
      %p87 = por %p85, %p86
      %p89 = scmp.ne.s32.totalorder %s74, %s88
      %p90 = scmp.eq.s32.totalorder %s22, 0
      %p91 = por %p89, %p90
      %s93 = sadd.s32 %s92, 1
      %p96 = scmp.eq.s32.totalorder %s16, 1
      %p97 = scmp.ne.s32.totalorder %s92, %s94
      %p98 = scmp.eq.s32.totalorder %s16, 0
      %p99 = por %p97, %p98
      %p100 = scmp.ne.s32.totalorder %s92, %s94
      %p101 = scmp.eq.s32.totalorder %s21, 1
      %p102 = por %p100, %p101
      %p103 = scmp.ne.s32.totalorder %s94, %s95
      %p104 = scmp.eq.s32.totalorder %s21, 0
      %p105 = por %p103, %p104
      %p106 = scmp.ne.s32.totalorder %s94, %s95
      %p107 = scmp.eq.s32.totalorder %s22, 1
      %p108 = por %p106, %p107
      %p110 = scmp.ne.s32.totalorder %s95, %s109
      %p111 = scmp.eq.s32.totalorder %s22, 0
      %p112 = por %p110, %p111
      %s114 = sadd.s32 %s113, 1
      %p117 = scmp.eq.s32.totalorder %s16, 1
      %p118 = scmp.ne.s32.totalorder %s113, %s115
      %p119 = scmp.eq.s32.totalorder %s16, 0
      %p120 = por %p118, %p119
      %p121 = scmp.ne.s32.totalorder %s113, %s115
      %p122 = scmp.eq.s32.totalorder %s21, 1
      %p123 = por %p121, %p122
      %p124 = scmp.ne.s32.totalorder %s115, %s116
      %p125 = scmp.eq.s32.totalorder %s21, 0
      %p126 = por %p124, %p125
      %p127 = scmp.ne.s32.totalorder %s115, %s116
      %p128 = scmp.eq.s32.totalorder %s22, 1
      %p129 = por %p127, %p128
      %p131 = scmp.ne.s32.totalorder %s116, %s130
      %p132 = scmp.eq.s32.totalorder %s22, 0
      %p133 = por %p131, %p132
      %s135 = sadd.s32 %s134, 1
      %p138 = scmp.eq.s32.totalorder %s16, 1
      %p139 = scmp.ne.s32.totalorder %s134, %s136
      %p140 = scmp.eq.s32.totalorder %s16, 0
      %p141 = por %p139, %p140
      %p142 = scmp.ne.s32.totalorder %s134, %s136
      %p143 = scmp.eq.s32.totalorder %s21, 1
      %p144 = por %p142, %p143
      %p145 = scmp.ne.s32.totalorder %s136, %s137
      %p146 = scmp.eq.s32.totalorder %s21, 0
      %p147 = por %p145, %p146
      %p148 = scmp.ne.s32.totalorder %s136, %s137
      %p149 = scmp.eq.s32.totalorder %s22, 1
      %p150 = por %p148, %p149
      %p152 = scmp.ne.s32.totalorder %s137, %s151
      %p153 = scmp.eq.s32.totalorder %s22, 0
      %p154 = por %p152, %p153
      %s156 = sadd.s32 %s155, 1
      %p159 = scmp.eq.s32.totalorder %s16, 1
      %p160 = scmp.ne.s32.totalorder %s155, %s157
      %p161 = scmp.eq.s32.totalorder %s16, 0
      %p162 = por %p160, %p161
      %p163 = scmp.ne.s32.totalorder %s155, %s157
      %p164 = scmp.eq.s32.totalorder %s21, 1
      %p165 = por %p163, %p164
      %p166 = scmp.ne.s32.totalorder %s157, %s158
      %p167 = scmp.eq.s32.totalorder %s21, 0
      %p168 = por %p166, %p167
      %p169 = scmp.ne.s32.totalorder %s157, %s158
      %p170 = scmp.eq.s32.totalorder %s22, 1
      %p171 = por %p169, %p170
      %p173 = scmp.ne.s32.totalorder %s158, %s172
      %p174 = scmp.eq.s32.totalorder %s22, 0
      %p175 = por %p173, %p174
      %s176 = ssub.s32 %s16, %s23
      %p177 = scmp.eq.s32.totalorder %s176, 0
      %s179 = sadd.s32 %s178, 1
      %s180 = scalar_select %p177, %s178, %s179
      %p183 = pneg %p177
      %p184 = scmp.eq.s32.totalorder %s16, 1
      %p185 = por %p183, %p184
      %p186 = scmp.ne.s32.totalorder %s178, %s181
      %p187 = scmp.eq.s32.totalorder %s16, 0
      %p188 = por %p186, %p187
      %p189 = scmp.ne.s32.totalorder %s178, %s181
      %p190 = scmp.eq.s32.totalorder %s21, 1
      %p191 = por %p189, %p190
      %p192 = scmp.ne.s32.totalorder %s181, %s182
      %p193 = scmp.eq.s32.totalorder %s21, 0
      %p194 = por %p192, %p193
      %p195 = scmp.ne.s32.totalorder %s181, %s182
      %p196 = scmp.eq.s32.totalorder %s22, 1
      %p197 = por %p195, %p196
      %p199 = scmp.ne.s32.totalorder %s182, %s198
      %p200 = scmp.eq.s32.totalorder %s22, 0
      %p201 = por %p199, %p200
      %p202 = scmp.le.s32.totalorder 1, %s16
      %p203 = scmp.lt.s32.totalorder %s16, 3
      %p204 = pnand %p202, %p203
      %p205 = pneg %p204
      // Predicated region
      $region9: #{forward.3} parent=5 // pred_check
        _
      $region10: #{forward.3} parent=5 // pred_check_branch
        %207 = sbr.rel (%p204) target = $region12
      $region11: #{forward.3} parent=5 // pred_region
        %s208 = ssub.s32 %s16, 1
        // Predicated region
        $region13: #{forward.3} parent=11 // pred_check
          %p209 = pneg %p63
        $region14: #{forward.3} parent=11 // pred_check_branch
          %211 = sbr.rel (%p209) target = $region16
        $region15: #{forward.3} parent=11 // pred_region
          _
        $region16: #{forward.3} parent=11 // pred_fallthru
          _
        // Predicated region
        $region17: #{forward.3} parent=11 // pred_check
          %p212 = pneg %p84
        $region18: #{forward.3} parent=11 // pred_check_branch
          %214 = sbr.rel (%p212) target = $region20
        $region19: #{forward.3} parent=11 // pred_region
          _
        $region20: #{forward.3} parent=11 // pred_fallthru
          _
        // Predicated region
        $region21: #{forward.3} parent=11 // pred_check
          %p215 = pneg %p105
        $region22: #{forward.3} parent=11 // pred_check_branch
          %217 = sbr.rel (%p215) target = $region24
        $region23: #{forward.3} parent=11 // pred_region
          _
        $region24: #{forward.3} parent=11 // pred_fallthru
          _
        // Predicated region
        $region25: #{forward.3} parent=11 // pred_check
          %p218 = pneg %p126
        $region26: #{forward.3} parent=11 // pred_check_branch
          %220 = sbr.rel (%p218) target = $region28
        $region27: #{forward.3} parent=11 // pred_region
          _
        $region28: #{forward.3} parent=11 // pred_fallthru
          _
        // Predicated region
        $region29: #{forward.3} parent=11 // pred_check
          %p221 = pneg %p147
        $region30: #{forward.3} parent=11 // pred_check_branch
          %223 = sbr.rel (%p221) target = $region32
        $region31: #{forward.3} parent=11 // pred_region
          _
        $region32: #{forward.3} parent=11 // pred_fallthru
          _
        // Predicated region
        $region33: #{forward.3} parent=11 // pred_check
          %p224 = pneg %p168
        $region34: #{forward.3} parent=11 // pred_check_branch
          %226 = sbr.rel (%p224) target = $region36
        $region35: #{forward.3} parent=11 // pred_region
          _
        $region36: #{forward.3} parent=11 // pred_fallthru
          _
      $region12: #{forward.3} parent=5 // pred_fallthru
        _
      %p227 = scmp.lt.s32.totalorder %s16, 2
      // Predicated region
      $region37: #{forward.3} parent=5 // pred_check
        %p228 = pneg %p227
      $region38: #{forward.3} parent=5 // pred_check_branch
        %230 = sbr.rel (%p228) target = $region40
      $region39: #{forward.3} parent=5 // pred_region
        // Predicated region
        $region41: #{forward.3} parent=39 // pred_check
          %p231 = pneg %p36
        $region42: #{forward.3} parent=39 // pred_check_branch
          %233 = sbr.rel (%p231) target = $region44
        $region43: #{forward.3} parent=39 // pred_region
          %p234 = scmp.lt.s32.totalorder %s16, 1
          %s235 = scalar_select %p234, %s16, 1
          %s236 = smul.addr %s235, 72
          %s237 = smul.addr %s236, 4
          %s238 = scalar_lea.vmem %s0, %s237
        $region44: #{forward.3} parent=39 // pred_fallthru
          _
      $region40: #{forward.3} parent=5 // pred_fallthru
        _
      %p239 = scmp.le.s32.totalorder 1, %s16
      %p240 = scmp.lt.s32.totalorder %s16, 3
      %p241 = pnand %p239, %p240
      %p242 = pneg %p241
      // Predicated region
      $region45: #{forward.3} parent=5 // pred_check
        _
      $region46: #{forward.3} parent=5 // pred_check_branch
        %244 = sbr.rel (%p241) target = $region48
      $region47: #{forward.3} parent=5 // pred_region
        %s245 = ssub.s32 %s16, 1
        %p246 = scmp.lt.s32.totalorder %s21, 1
        %s247 = scalar_select %p246, %s21, 1
        %s248 = smul.addr %s247, 72
        %s249 = smul.addr %s248, 4
        %s250 = scalar_lea.vmem %s0, %s249
        %p251 = pneg %p42
        %p252 = pneg %p39
        %p253 = pneg %p63
        %p254 = pneg %p60
        %p255 = pneg %p84
        %p256 = pneg %p81
        %p257 = pneg %p105
        %p258 = pneg %p102
        %p259 = pneg %p126
        %p260 = pneg %p123
        %p261 = pneg %p147
        %p262 = pneg %p144
        %p263 = pneg %p168
        %p264 = pneg %p165
        %p265 = pneg %p194
        %p266 = pneg %p191
        %s267 = sand.u32 %s181, 1
        %s268 = scalar_lea.sflag [#allocation4], %s267
        %s269 = sand.u32 %s181, 1
        %s270 = smul.addr %s269, 64
        %s271 = scalar_lea.vmem [#allocation3], %s270
        %p272 = scmp.lt.s32.totalorder %s21, 1
        %s273 = scalar_select %p272, %s21, 1
        %s274 = smul.addr %s273, 72
        %s275 = smul.addr %s274, 4
        %s276 = scalar_lea.vmem %s0, %s275
        %v278 = vld [vmem:[%s276] sm:$0xf]
        %v279 = vld [vmem:[%s276 + $0x8] sm:$0xf]
        %v280 = vld [vmem:[%s276 + $0x10] sm:$0xf]
        %v281 = vld [vmem:[%s276 + $0x18] sm:$0xf]
        %v282 = vld [vmem:[%s276 + $0x20] sm:$0xf]
        %v283 = vld [vmem:[%s276 + $0x28] sm:$0xf]
        %v284 = vld [vmem:[%s276 + $0x30] sm:$0xf]
        %v285 = vld [vmem:[%s276 + $0x38] sm:$0xf]
        %s286 = scalar_lea.vmem %s276, 72
        %v287 = vld [vmem:[%s286] sm:$0xf]
        %v288 = vld [vmem:[%s286 + $0x8] sm:$0xf]
        %v289 = vld [vmem:[%s286 + $0x10] sm:$0xf]
        %v290 = vld [vmem:[%s286 + $0x18] sm:$0xf]
        %v291 = vld [vmem:[%s286 + $0x20] sm:$0xf]
        %v292 = vld [vmem:[%s286 + $0x28] sm:$0xf]
        %v293 = vld [vmem:[%s286 + $0x30] sm:$0xf]
        %v294 = vld [vmem:[%s286 + $0x38] sm:$0xf]
        %v295 = vld [vmem:[%s276 + $0x4] sm:$0x1]
        %v296 = vld [vmem:[%s276 + $0xc] sm:$0x1]
        %v297 = vld [vmem:[%s276 + $0x14] sm:$0x1]
        %v298 = vld [vmem:[%s276 + $0x1c] sm:$0x1]
        %v299 = vld [vmem:[%s276 + $0x24] sm:$0x1]
        %v300 = vld [vmem:[%s276 + $0x2c] sm:$0x1]
        %v301 = vld [vmem:[%s276 + $0x34] sm:$0x1]
        %v302 = vld [vmem:[%s276 + $0x3c] sm:$0x1]
        %vm303 = vsmask.f32 3328
        %vm304 = vsmask.f32 7440
        %vm305 = vmor %vm303, %vm304
        %v307 = vshrl.u32 %v278, 16
        %v309 = vrot.slane %v307, 4
        %v310 = vshll.u32 %v278, 16
        %v312 = vrot.slane %v310, 5
        %v313 = vor.u32 %v309, %v312
        %v314 = vrot.slane %v313, 4
        %v316 = vshll.u32 %v295, 16
        %v318 = vrot.slane %v316, 5
        %v319 = vsel %vm305, %v314, %v318
        %v321 = vshrl.u32 %v279, 16
        %v323 = vrot.slane %v321, 4
        %v324 = vshll.u32 %v279, 16
        %v326 = vrot.slane %v324, 5
        %v327 = vor.u32 %v323, %v326
        %v328 = vrot.slane %v327, 4
        %v330 = vshll.u32 %v296, 16
        %v332 = vrot.slane %v330, 5
        %v333 = vsel %vm305, %v328, %v332
        %v335 = vshrl.u32 %v280, 16
        %v337 = vrot.slane %v335, 4
        %v338 = vshll.u32 %v280, 16
        %v340 = vrot.slane %v338, 5
        %v341 = vor.u32 %v337, %v340
        %v342 = vrot.slane %v341, 4
        %v344 = vshll.u32 %v297, 16
        %v346 = vrot.slane %v344, 5
        %v347 = vsel %vm305, %v342, %v346
        %v349 = vshrl.u32 %v281, 16
        %v351 = vrot.slane %v349, 4
        %v352 = vshll.u32 %v281, 16
        %v354 = vrot.slane %v352, 5
        %v355 = vor.u32 %v351, %v354
        %v356 = vrot.slane %v355, 4
        %v358 = vshll.u32 %v298, 16
        %v360 = vrot.slane %v358, 5
        %v361 = vsel %vm305, %v356, %v360
        %v363 = vshrl.u32 %v282, 16
        %v365 = vrot.slane %v363, 4
        %v366 = vshll.u32 %v282, 16
        %v368 = vrot.slane %v366, 5
        %v369 = vor.u32 %v365, %v368
        %v370 = vrot.slane %v369, 4
        %v372 = vshll.u32 %v299, 16
        %v374 = vrot.slane %v372, 5
        %v375 = vsel %vm305, %v370, %v374
        %v377 = vshrl.u32 %v283, 16
        %v379 = vrot.slane %v377, 4
        %v380 = vshll.u32 %v283, 16
        %v382 = vrot.slane %v380, 5
        %v383 = vor.u32 %v379, %v382
        %v384 = vrot.slane %v383, 4
        %v386 = vshll.u32 %v300, 16
        %v388 = vrot.slane %v386, 5
        %v389 = vsel %vm305, %v384, %v388
        %v391 = vshrl.u32 %v284, 16
        %v393 = vrot.slane %v391, 4
        %v394 = vshll.u32 %v284, 16
        %v396 = vrot.slane %v394, 5
        %v397 = vor.u32 %v393, %v396
        %v398 = vrot.slane %v397, 4
        %v400 = vshll.u32 %v301, 16
        %v402 = vrot.slane %v400, 5
        %v403 = vsel %vm305, %v398, %v402
        %v405 = vshrl.u32 %v285, 16
        %v407 = vrot.slane %v405, 4
        %v408 = vshll.u32 %v285, 16
        %v410 = vrot.slane %v408, 5
        %v411 = vor.u32 %v407, %v410
        %v412 = vrot.slane %v411, 4
        %v414 = vshll.u32 %v302, 16
        %v416 = vrot.slane %v414, 5
        %v417 = vsel %vm305, %v412, %v416
        %s418 = scalar_lea.vmem %s276, 144
        %v419 = vld [vmem:[%s418] sm:$0xf]
        %v420 = vld [vmem:[%s418 + $0x8] sm:$0xf]
        %v421 = vld [vmem:[%s418 + $0x10] sm:$0xf]
        %v422 = vld [vmem:[%s418 + $0x18] sm:$0xf]
        %v423 = vld [vmem:[%s418 + $0x20] sm:$0xf]
        %v424 = vld [vmem:[%s418 + $0x28] sm:$0xf]
        %v425 = vld [vmem:[%s418 + $0x30] sm:$0xf]
        %v426 = vld [vmem:[%s418 + $0x38] sm:$0xf]
        %v435 = vunpack.c.l.b16 %v278
        %v436 = vunpack.c.l.b16 %v279
        %v437 = vunpack.c.l.b16 %v280
        %v438 = vunpack.c.l.b16 %v281
        %v439 = vunpack.c.l.b16 %v282
        %v440 = vunpack.c.l.b16 %v283
        %v441 = vunpack.c.l.b16 %v284
        %v442 = vunpack.c.l.b16 %v285
        %v443 = vpack.c.b16 %v436, %v435
        %v444 = vpack.c.b16 %v438, %v437
        %v445 = vpack.c.b16 %v440, %v439
        %v446 = vpack.c.b16 %v442, %v441
        %v455 = vunpack.c.l.b16 %v287
        %v456 = vunpack.c.l.b16 %v288
        %v457 = vunpack.c.l.b16 %v289
        %v458 = vunpack.c.l.b16 %v290
        %v459 = vunpack.c.l.b16 %v291
        %v460 = vunpack.c.l.b16 %v292
        %v461 = vunpack.c.l.b16 %v293
        %v462 = vunpack.c.l.b16 %v294
        %v463 = vpack.c.b16 %v456, %v455
        %v464 = vpack.c.b16 %v458, %v457
        %v465 = vpack.c.b16 %v460, %v459
        %v466 = vpack.c.b16 %v462, %v461
        %467 = vrot.lane.b32.xlu0 %v463, 64
        %v468 = vpop.permute.xlu0 %467
        %469 = vrot.lane.b32.xlu0 %v464, 64
        %v470 = vpop.permute.xlu0 %469
        %471 = vrot.lane.b32.xlu0 %v465, 64
        %v472 = vpop.permute.xlu0 %471
        %473 = vrot.lane.b32.xlu0 %v466, 64
        %v474 = vpop.permute.xlu0 %473
        %v475 = vunpack.c.l.b16 %v319
        %v476 = vunpack.c.l.b16 %v333
        %v477 = vunpack.c.l.b16 %v347
        %v478 = vunpack.c.l.b16 %v361
        %v479 = vunpack.c.l.b16 %v375
        %v480 = vunpack.c.l.b16 %v389
        %v481 = vunpack.c.l.b16 %v403
        %v482 = vunpack.c.l.b16 %v417
        %v483 = vpack.c.b16 %v476, %v475
        %v484 = vpack.c.b16 %v478, %v477
        %v485 = vpack.c.b16 %v480, %v479
        %v486 = vpack.c.b16 %v482, %v481
        %v495 = vunpack.c.l.b16 %v419
        %v496 = vunpack.c.l.b16 %v420
        %v497 = vunpack.c.l.b16 %v421
        %v498 = vunpack.c.l.b16 %v422
        %v499 = vunpack.c.l.b16 %v423
        %v500 = vunpack.c.l.b16 %v424
        %v501 = vunpack.c.l.b16 %v425
        %v502 = vunpack.c.l.b16 %v426
        %v503 = vpack.c.b16 %v496, %v495
        %v504 = vpack.c.b16 %v498, %v497
        %v505 = vpack.c.b16 %v500, %v499
        %v506 = vpack.c.b16 %v502, %v501
        %507 = vrot.lane.b32.xlu0 %v503, 64
        %v508 = vpop.permute.xlu0 %507
        %509 = vrot.lane.b32.xlu0 %v504, 64
        %v510 = vpop.permute.xlu0 %509
        %511 = vrot.lane.b32.xlu0 %v505, 64
        %v512 = vpop.permute.xlu0 %511
        %513 = vrot.lane.b32.xlu0 %v506, 64
        %v514 = vpop.permute.xlu0 %513
        %vm515 = vcmask 523264
        %v518 = vsel %vm515, %v443, %v468
        %v522 = vsel %vm515, %v444, %v470
        %v526 = vsel %vm515, %v445, %v472
        %v530 = vsel %vm515, %v446, %v474
        %v534 = vsel %vm515, %v483, %v508
        %v538 = vsel %vm515, %v484, %v510
        %v542 = vsel %vm515, %v485, %v512
        %v546 = vsel %vm515, %v486, %v514
        %v548 = vld [vmem:[%s1] sm:$0xf]
        %v549 = vld [vmem:[%s1 + $0x4] sm:$0xf]
        %v550 = vld [vmem:[%s1 + $0x8] sm:$0xf]
        %v551 = vld [vmem:[%s1 + $0xc] sm:$0xf]
        %v552 = vld [vmem:[%s1 + $0x10] sm:$0xf]
        %v553 = vld [vmem:[%s1 + $0x14] sm:$0xf]
        %v554 = vld [vmem:[%s1 + $0x18] sm:$0xf]
        %v555 = vld [vmem:[%s1 + $0x1c] sm:$0xf]
        %v556 = vld [vmem:[%s1 + $0x20] sm:$0xf]
        %v557 = vld [vmem:[%s1 + $0x24] sm:$0xf]
        %v558 = vld [vmem:[%s1 + $0x28] sm:$0xf]
        %v559 = vld [vmem:[%s1 + $0x2c] sm:$0xf]
        %v560 = vld [vmem:[%s1 + $0x30] sm:$0xf]
        %v561 = vld [vmem:[%s1 + $0x34] sm:$0xf]
        %v562 = vld [vmem:[%s1 + $0x38] sm:$0xf]
        %v563 = vld [vmem:[%s1 + $0x3c] sm:$0xf]
        %v564 = vld [vmem:[%s1 + $0x40] sm:$0xf]
        %v565 = vld [vmem:[%s1 + $0x44] sm:$0xf]
        %v566 = vld [vmem:[%s1 + $0x48] sm:$0xf]
        %v567 = vld [vmem:[%s1 + $0x4c] sm:$0xf]
        %v568 = vld [vmem:[%s1 + $0x50] sm:$0xf]
        %v569 = vld [vmem:[%s1 + $0x54] sm:$0xf]
        %v570 = vld [vmem:[%s1 + $0x58] sm:$0xf]
        %v571 = vld [vmem:[%s1 + $0x5c] sm:$0xf]
        %v572 = vld [vmem:[%s1 + $0x60] sm:$0xf]
        %v573 = vld [vmem:[%s1 + $0x64] sm:$0xf]
        %v574 = vld [vmem:[%s1 + $0x68] sm:$0xf]
        %v575 = vld [vmem:[%s1 + $0x6c] sm:$0xf]
        %v576 = vld [vmem:[%s1 + $0x70] sm:$0xf]
        %v577 = vld [vmem:[%s1 + $0x74] sm:$0xf]
        %v578 = vld [vmem:[%s1 + $0x78] sm:$0xf]
        %v579 = vld [vmem:[%s1 + $0x7c] sm:$0xf]
        %s580 = scalar_lea.vmem %s276, 216
        %v581 = vld [vmem:[%s580] sm:$0xf]
        %v582 = vld [vmem:[%s580 + $0x8] sm:$0xf]
        %v583 = vld [vmem:[%s580 + $0x10] sm:$0xf]
        %v584 = vld [vmem:[%s580 + $0x18] sm:$0xf]
        %v585 = vld [vmem:[%s580 + $0x20] sm:$0xf]
        %v586 = vld [vmem:[%s580 + $0x28] sm:$0xf]
        %v587 = vld [vmem:[%s580 + $0x30] sm:$0xf]
        %v588 = vld [vmem:[%s580 + $0x38] sm:$0xf]
        %v589 = vld [vmem:[%s418 + $0x4] sm:$0x1]
        %v590 = vld [vmem:[%s418 + $0xc] sm:$0x1]
        %v591 = vld [vmem:[%s418 + $0x14] sm:$0x1]
        %v592 = vld [vmem:[%s418 + $0x1c] sm:$0x1]
        %v593 = vld [vmem:[%s418 + $0x24] sm:$0x1]
        %v594 = vld [vmem:[%s418 + $0x2c] sm:$0x1]
        %v595 = vld [vmem:[%s418 + $0x34] sm:$0x1]
        %v596 = vld [vmem:[%s418 + $0x3c] sm:$0x1]
        %v598 = vshrl.u32 %v419, 16
        %v600 = vrot.slane %v598, 4
        %v601 = vshll.u32 %v419, 16
        %v603 = vrot.slane %v601, 5
        %v604 = vor.u32 %v600, %v603
        %v605 = vrot.slane %v604, 4
        %v607 = vshll.u32 %v589, 16
        %v609 = vrot.slane %v607, 5
        %v610 = vsel %vm305, %v605, %v609
        %v612 = vshrl.u32 %v420, 16
        %v614 = vrot.slane %v612, 4
        %v615 = vshll.u32 %v420, 16
        %v617 = vrot.slane %v615, 5
        %v618 = vor.u32 %v614, %v617
        %v619 = vrot.slane %v618, 4
        %v621 = vshll.u32 %v590, 16
        %v623 = vrot.slane %v621, 5
        %v624 = vsel %vm305, %v619, %v623
        %v626 = vshrl.u32 %v421, 16
        %v628 = vrot.slane %v626, 4
        %v629 = vshll.u32 %v421, 16
        %v631 = vrot.slane %v629, 5
        %v632 = vor.u32 %v628, %v631
        %v633 = vrot.slane %v632, 4
        %v635 = vshll.u32 %v591, 16
        %v637 = vrot.slane %v635, 5
        %v638 = vsel %vm305, %v633, %v637
        %v640 = vshrl.u32 %v422, 16
        %v642 = vrot.slane %v640, 4
        %v643 = vshll.u32 %v422, 16
        %v645 = vrot.slane %v643, 5
        %v646 = vor.u32 %v642, %v645
        %v647 = vrot.slane %v646, 4
        %v649 = vshll.u32 %v592, 16
        %v651 = vrot.slane %v649, 5
        %v652 = vsel %vm305, %v647, %v651
        %v654 = vshrl.u32 %v423, 16
        %v656 = vrot.slane %v654, 4
        %v657 = vshll.u32 %v423, 16
        %v659 = vrot.slane %v657, 5
        %v660 = vor.u32 %v656, %v659
        %v661 = vrot.slane %v660, 4
        %v663 = vshll.u32 %v593, 16
        %v665 = vrot.slane %v663, 5
        %v666 = vsel %vm305, %v661, %v665
        %v668 = vshrl.u32 %v424, 16
        %v670 = vrot.slane %v668, 4
        %v671 = vshll.u32 %v424, 16
        %v673 = vrot.slane %v671, 5
        %v674 = vor.u32 %v670, %v673
        %v675 = vrot.slane %v674, 4
        %v677 = vshll.u32 %v594, 16
        %v679 = vrot.slane %v677, 5
        %v680 = vsel %vm305, %v675, %v679
        %v682 = vshrl.u32 %v425, 16
        %v684 = vrot.slane %v682, 4
        %v685 = vshll.u32 %v425, 16
        %v687 = vrot.slane %v685, 5
        %v688 = vor.u32 %v684, %v687
        %v689 = vrot.slane %v688, 4
        %v691 = vshll.u32 %v595, 16
        %v693 = vrot.slane %v691, 5
        %v694 = vsel %vm305, %v689, %v693
        %v696 = vshrl.u32 %v426, 16
        %v698 = vrot.slane %v696, 4
        %v699 = vshll.u32 %v426, 16
        %v701 = vrot.slane %v699, 5
        %v702 = vor.u32 %v698, %v701
        %v703 = vrot.slane %v702, 4
        %v705 = vshll.u32 %v596, 16
        %v707 = vrot.slane %v705, 5
        %v708 = vsel %vm305, %v703, %v707
        %s709 = scalar_lea.vmem %s276, 8
        %v710 = vld [vmem:[%s709] sm:$0xf]
        %v711 = vld [vmem:[%s709 + $0x8] sm:$0xf]
        %v712 = vld [vmem:[%s709 + $0x10] sm:$0xf]
        %v713 = vld [vmem:[%s709 + $0x18] sm:$0xf]
        %v714 = vld [vmem:[%s709 + $0x20] sm:$0xf]
        %v715 = vld [vmem:[%s709 + $0x28] sm:$0xf]
        %v716 = vld [vmem:[%s709 + $0x30] sm:$0xf]
        %v717 = vld [vmem:[%s709 + $0x38] sm:$0xf]
        %s718 = scalar_lea.vmem %s276, 80
        %v719 = vld [vmem:[%s718] sm:$0xf]
        %v720 = vld [vmem:[%s718 + $0x8] sm:$0xf]
        %v721 = vld [vmem:[%s718 + $0x10] sm:$0xf]
        %v722 = vld [vmem:[%s718 + $0x18] sm:$0xf]
        %v723 = vld [vmem:[%s718 + $0x20] sm:$0xf]
        %v724 = vld [vmem:[%s718 + $0x28] sm:$0xf]
        %v725 = vld [vmem:[%s718 + $0x30] sm:$0xf]
        %v726 = vld [vmem:[%s718 + $0x38] sm:$0xf]
        %v735 = vunpack.c.l.b16 %v581
        %v736 = vunpack.c.l.b16 %v582
        %v737 = vunpack.c.l.b16 %v583
        %v738 = vunpack.c.l.b16 %v584
        %v739 = vunpack.c.l.b16 %v585
        %v740 = vunpack.c.l.b16 %v586
        %v741 = vunpack.c.l.b16 %v587
        %v742 = vunpack.c.l.b16 %v588
        %v743 = vpack.c.b16 %v736, %v735
        %v744 = vpack.c.b16 %v738, %v737
        %v745 = vpack.c.b16 %v740, %v739
        %v746 = vpack.c.b16 %v742, %v741
        %v747 = vunpack.c.l.b16 %v610
        %v748 = vunpack.c.l.b16 %v624
        %v749 = vunpack.c.l.b16 %v638
        %v750 = vunpack.c.l.b16 %v652
        %v751 = vunpack.c.l.b16 %v666
        %v752 = vunpack.c.l.b16 %v680
        %v753 = vunpack.c.l.b16 %v694
        %v754 = vunpack.c.l.b16 %v708
        %v755 = vpack.c.b16 %v748, %v747
        %v756 = vpack.c.b16 %v750, %v749
        %v757 = vpack.c.b16 %v752, %v751
        %v758 = vpack.c.b16 %v754, %v753
        %759 = vrot.lane.b32.xlu0 %v755, 64
        %v760 = vpop.permute.xlu0 %759
        %761 = vrot.lane.b32.xlu0 %v756, 64
        %v762 = vpop.permute.xlu0 %761
        %763 = vrot.lane.b32.xlu0 %v757, 64
        %v764 = vpop.permute.xlu0 %763
        %765 = vrot.lane.b32.xlu0 %v758, 64
        %v766 = vpop.permute.xlu0 %765
        %v775 = vunpack.c.l.b16 %v710
        %v776 = vunpack.c.l.b16 %v711
        %v777 = vunpack.c.l.b16 %v712
        %v778 = vunpack.c.l.b16 %v713
        %v779 = vunpack.c.l.b16 %v714
        %v780 = vunpack.c.l.b16 %v715
        %v781 = vunpack.c.l.b16 %v716
        %v782 = vunpack.c.l.b16 %v717
        %v783 = vpack.c.b16 %v776, %v775
        %v784 = vpack.c.b16 %v778, %v777
        %v785 = vpack.c.b16 %v780, %v779
        %v786 = vpack.c.b16 %v782, %v781
        %v795 = vunpack.c.l.b16 %v719
        %v796 = vunpack.c.l.b16 %v720
        %v797 = vunpack.c.l.b16 %v721
        %v798 = vunpack.c.l.b16 %v722
        %v799 = vunpack.c.l.b16 %v723
        %v800 = vunpack.c.l.b16 %v724
        %v801 = vunpack.c.l.b16 %v725
        %v802 = vunpack.c.l.b16 %v726
        %v803 = vpack.c.b16 %v796, %v795
        %v804 = vpack.c.b16 %v798, %v797
        %v805 = vpack.c.b16 %v800, %v799
        %v806 = vpack.c.b16 %v802, %v801
        %807 = vrot.lane.b32.xlu0 %v803, 64
        %v808 = vpop.permute.xlu0 %807
        %809 = vrot.lane.b32.xlu0 %v804, 64
        %v810 = vpop.permute.xlu0 %809
        %811 = vrot.lane.b32.xlu0 %v805, 64
        %v812 = vpop.permute.xlu0 %811
        %813 = vrot.lane.b32.xlu0 %v806, 64
        %v814 = vpop.permute.xlu0 %813
        %v817 = vsel %vm515, %v743, %v760
        %v821 = vsel %vm515, %v744, %v762
        %v825 = vsel %vm515, %v745, %v764
        %v829 = vsel %vm515, %v746, %v766
        %v833 = vsel %vm515, %v783, %v808
        %v837 = vsel %vm515, %v784, %v810
        %v841 = vsel %vm515, %v785, %v812
        %v845 = vsel %vm515, %v786, %v814
        %v847 = vld [vmem:[%s1 + $0x80] sm:$0xf]
        %v848 = vld [vmem:[%s1 + $0x84] sm:$0xf]
        %v849 = vld [vmem:[%s1 + $0x88] sm:$0xf]
        %v850 = vld [vmem:[%s1 + $0x8c] sm:$0xf]
        %v851 = vld [vmem:[%s1 + $0x90] sm:$0xf]
        %v852 = vld [vmem:[%s1 + $0x94] sm:$0xf]
        %v853 = vld [vmem:[%s1 + $0x98] sm:$0xf]
        %v854 = vld [vmem:[%s1 + $0x9c] sm:$0xf]
        %v855 = vld [vmem:[%s1 + $0xa0] sm:$0xf]
        %v856 = vld [vmem:[%s1 + $0xa4] sm:$0xf]
        %v857 = vld [vmem:[%s1 + $0xa8] sm:$0xf]
        %v858 = vld [vmem:[%s1 + $0xac] sm:$0xf]
        %v859 = vld [vmem:[%s1 + $0xb0] sm:$0xf]
        %v860 = vld [vmem:[%s1 + $0xb4] sm:$0xf]
        %v861 = vld [vmem:[%s1 + $0xb8] sm:$0xf]
        %v862 = vld [vmem:[%s1 + $0xbc] sm:$0xf]
        %v863 = vld [vmem:[%s1 + $0xc0] sm:$0xf]
        %v864 = vld [vmem:[%s1 + $0xc4] sm:$0xf]
        %v865 = vld [vmem:[%s1 + $0xc8] sm:$0xf]
        %v866 = vld [vmem:[%s1 + $0xcc] sm:$0xf]
        %v867 = vld [vmem:[%s1 + $0xd0] sm:$0xf]
        %v868 = vld [vmem:[%s1 + $0xd4] sm:$0xf]
        %v869 = vld [vmem:[%s1 + $0xd8] sm:$0xf]
        %v870 = vld [vmem:[%s1 + $0xdc] sm:$0xf]
        %v871 = vld [vmem:[%s1 + $0xe0] sm:$0xf]
        %v872 = vld [vmem:[%s1 + $0xe4] sm:$0xf]
        %v873 = vld [vmem:[%s1 + $0xe8] sm:$0xf]
        %v874 = vld [vmem:[%s1 + $0xec] sm:$0xf]
        %v875 = vld [vmem:[%s1 + $0xf0] sm:$0xf]
        %v876 = vld [vmem:[%s1 + $0xf4] sm:$0xf]
        %v877 = vld [vmem:[%s1 + $0xf8] sm:$0xf]
        %v878 = vld [vmem:[%s1 + $0xfc] sm:$0xf]
        %v911 = vunpack.c.l.b16 %v847
        %v912 = vunpack.c.l.b16 %v848
        %v913 = vunpack.c.l.b16 %v849
        %v914 = vunpack.c.l.b16 %v850
        %v915 = vunpack.c.l.b16 %v851
        %v916 = vunpack.c.l.b16 %v852
        %v917 = vunpack.c.l.b16 %v853
        %v918 = vunpack.c.l.b16 %v854
        %v919 = vunpack.c.l.b16 %v855
        %v920 = vunpack.c.l.b16 %v856
        %v921 = vunpack.c.l.b16 %v857
        %v922 = vunpack.c.l.b16 %v858
        %v923 = vunpack.c.l.b16 %v859
        %v924 = vunpack.c.l.b16 %v860
        %v925 = vunpack.c.l.b16 %v861
        %v926 = vunpack.c.l.b16 %v862
        %v927 = vunpack.c.l.b16 %v863
        %v928 = vunpack.c.l.b16 %v864
        %v929 = vunpack.c.l.b16 %v865
        %v930 = vunpack.c.l.b16 %v866
        %v931 = vunpack.c.l.b16 %v867
        %v932 = vunpack.c.l.b16 %v868
        %v933 = vunpack.c.l.b16 %v869
        %v934 = vunpack.c.l.b16 %v870
        %v935 = vunpack.c.l.b16 %v871
        %v936 = vunpack.c.l.b16 %v872
        %v937 = vunpack.c.l.b16 %v873
        %v938 = vunpack.c.l.b16 %v874
        %v939 = vunpack.c.l.b16 %v875
        %v940 = vunpack.c.l.b16 %v876
        %v941 = vunpack.c.l.b16 %v877
        %v942 = vunpack.c.l.b16 %v878
        %v943 = vpack.c.b16 %v912, %v911
        %v944 = vpack.c.b16 %v914, %v913
        %v945 = vpack.c.b16 %v916, %v915
        %v946 = vpack.c.b16 %v918, %v917
        %v947 = vpack.c.b16 %v920, %v919
        %v948 = vpack.c.b16 %v922, %v921
        %v949 = vpack.c.b16 %v924, %v923
        %v950 = vpack.c.b16 %v926, %v925
        %v951 = vpack.c.b16 %v928, %v927
        %v952 = vpack.c.b16 %v930, %v929
        %v953 = vpack.c.b16 %v932, %v931
        %v954 = vpack.c.b16 %v934, %v933
        %v955 = vpack.c.b16 %v936, %v935
        %v956 = vpack.c.b16 %v938, %v937
        %v957 = vpack.c.b16 %v940, %v939
        %v958 = vpack.c.b16 %v942, %v941
        %975 = vmatpush.bf16.msra.mxu0 %v950
        %976 = vmatpush.bf16.msra.mxu0 %v949
        %977 = vmatpush.bf16.msra.mxu0 %v948
        %978 = vmatpush.bf16.msra.mxu0 %v947
        %979 = vmatpush.bf16.msra.mxu0 %v946
        %980 = vmatpush.bf16.msra.mxu0 %v945
        %981 = vmatpush.bf16.msra.mxu0 %v944
        %982 = vmatpush.bf16.msra.mxu0 %v943
        %983 = vmatmul.bf16.gmra.mxu0 %v817
        %v984 = vpop.f32.mrf.mxu0
        %v985 = vadd.f32 0.0, %v984
        %v986 = vpop.f32.mrf.mxu0
        %v987 = vadd.f32 0.0, %v986
        %988 = vmatmul.bf16.gmra.mxu0 %v821
        %v989 = vpop.f32.mrf.mxu0
        %v990 = vadd.f32 0.0, %v989
        %v991 = vpop.f32.mrf.mxu0
        %v992 = vadd.f32 0.0, %v991
        %993 = vmatmul.bf16.gmra.mxu0 %v825
        %v994 = vpop.f32.mrf.mxu0
        %v995 = vadd.f32 0.0, %v994
        %v996 = vpop.f32.mrf.mxu0
        %v997 = vadd.f32 0.0, %v996
        %998 = vmatmul.bf16.gmra.mxu0 %v829
        %v999 = vpop.f32.mrf.mxu0
        %v1000 = vadd.f32 0.0, %v999
        %v1001 = vpop.f32.mrf.mxu0
        %v1002 = vadd.f32 0.0, %v1001
        %1003 = vdwg.mxu0
        %1004 = vmatpush.bf16.msra.mxu0 %v958
        %1005 = vmatpush.bf16.msra.mxu0 %v957
        %1006 = vmatpush.bf16.msra.mxu0 %v956
        %1007 = vmatpush.bf16.msra.mxu0 %v955
        %1008 = vmatpush.bf16.msra.mxu0 %v954
        %1009 = vmatpush.bf16.msra.mxu0 %v953
        %1010 = vmatpush.bf16.msra.mxu0 %v952
        %1011 = vmatpush.bf16.msra.mxu0 %v951
        %1012 = vmatmul.bf16.gmra.mxu0 %v833
        %v1013 = vpop.f32.mrf.mxu0
        %v1014 = vadd.f32 %v985, %v1013
        %v1015 = vpop.f32.mrf.mxu0
        %v1016 = vadd.f32 %v987, %v1015
        %1017 = vmatmul.bf16.gmra.mxu0 %v837
        %v1018 = vpop.f32.mrf.mxu0
        %v1019 = vadd.f32 %v990, %v1018
        %v1020 = vpop.f32.mrf.mxu0
        %v1021 = vadd.f32 %v992, %v1020
        %1022 = vmatmul.bf16.gmra.mxu0 %v841
        %v1023 = vpop.f32.mrf.mxu0
        %v1024 = vadd.f32 %v995, %v1023
        %v1025 = vpop.f32.mrf.mxu0
        %v1026 = vadd.f32 %v997, %v1025
        %1027 = vmatmul.bf16.gmra.mxu0 %v845
        %v1028 = vpop.f32.mrf.mxu0
        %v1029 = vadd.f32 %v1000, %v1028
        %v1030 = vpop.f32.mrf.mxu0
        %v1031 = vadd.f32 %v1002, %v1030
        %1032 = vdwg.mxu0
        %v1065 = vunpack.c.l.b16 %v548
        %v1066 = vunpack.c.l.b16 %v549
        %v1067 = vunpack.c.l.b16 %v550
        %v1068 = vunpack.c.l.b16 %v551
        %v1069 = vunpack.c.l.b16 %v552
        %v1070 = vunpack.c.l.b16 %v553
        %v1071 = vunpack.c.l.b16 %v554
        %v1072 = vunpack.c.l.b16 %v555
        %v1073 = vunpack.c.l.b16 %v556
        %v1074 = vunpack.c.l.b16 %v557
        %v1075 = vunpack.c.l.b16 %v558
        %v1076 = vunpack.c.l.b16 %v559
        %v1077 = vunpack.c.l.b16 %v560
        %v1078 = vunpack.c.l.b16 %v561
        %v1079 = vunpack.c.l.b16 %v562
        %v1080 = vunpack.c.l.b16 %v563
        %v1081 = vunpack.c.l.b16 %v564
        %v1082 = vunpack.c.l.b16 %v565
        %v1083 = vunpack.c.l.b16 %v566
        %v1084 = vunpack.c.l.b16 %v567
        %v1085 = vunpack.c.l.b16 %v568
        %v1086 = vunpack.c.l.b16 %v569
        %v1087 = vunpack.c.l.b16 %v570
        %v1088 = vunpack.c.l.b16 %v571
        %v1089 = vunpack.c.l.b16 %v572
        %v1090 = vunpack.c.l.b16 %v573
        %v1091 = vunpack.c.l.b16 %v574
        %v1092 = vunpack.c.l.b16 %v575
        %v1093 = vunpack.c.l.b16 %v576
        %v1094 = vunpack.c.l.b16 %v577
        %v1095 = vunpack.c.l.b16 %v578
        %v1096 = vunpack.c.l.b16 %v579
        %v1097 = vpack.c.b16 %v1066, %v1065
        %v1098 = vpack.c.b16 %v1068, %v1067
        %v1099 = vpack.c.b16 %v1070, %v1069
        %v1100 = vpack.c.b16 %v1072, %v1071
        %v1101 = vpack.c.b16 %v1074, %v1073
        %v1102 = vpack.c.b16 %v1076, %v1075
        %v1103 = vpack.c.b16 %v1078, %v1077
        %v1104 = vpack.c.b16 %v1080, %v1079
        %v1105 = vpack.c.b16 %v1082, %v1081
        %v1106 = vpack.c.b16 %v1084, %v1083
        %v1107 = vpack.c.b16 %v1086, %v1085
        %v1108 = vpack.c.b16 %v1088, %v1087
        %v1109 = vpack.c.b16 %v1090, %v1089
        %v1110 = vpack.c.b16 %v1092, %v1091
        %v1111 = vpack.c.b16 %v1094, %v1093
        %v1112 = vpack.c.b16 %v1096, %v1095
        %1129 = vmatpush.bf16.msra.mxu0 %v1104
        %1130 = vmatpush.bf16.msra.mxu0 %v1103
        %1131 = vmatpush.bf16.msra.mxu0 %v1102
        %1132 = vmatpush.bf16.msra.mxu0 %v1101
        %1133 = vmatpush.bf16.msra.mxu0 %v1100
        %1134 = vmatpush.bf16.msra.mxu0 %v1099
        %1135 = vmatpush.bf16.msra.mxu0 %v1098
        %1136 = vmatpush.bf16.msra.mxu0 %v1097
        %1137 = vmatmul.bf16.gmra.mxu0 %v518
        %v1138 = vpop.f32.mrf.mxu0
        %v1139 = vadd.f32 %v1014, %v1138
        %v1140 = vpop.f32.mrf.mxu0
        %v1141 = vadd.f32 %v1016, %v1140
        %1142 = vmatmul.bf16.gmra.mxu0 %v522
        %v1143 = vpop.f32.mrf.mxu0
        %v1144 = vadd.f32 %v1019, %v1143
        %v1145 = vpop.f32.mrf.mxu0
        %v1146 = vadd.f32 %v1021, %v1145
        %1147 = vmatmul.bf16.gmra.mxu0 %v526
        %v1148 = vpop.f32.mrf.mxu0
        %v1149 = vadd.f32 %v1024, %v1148
        %v1150 = vpop.f32.mrf.mxu0
        %v1151 = vadd.f32 %v1026, %v1150
        %1152 = vmatmul.bf16.gmra.mxu0 %v530
        %v1153 = vpop.f32.mrf.mxu0
        %v1154 = vadd.f32 %v1029, %v1153
        %v1155 = vpop.f32.mrf.mxu0
        %v1156 = vadd.f32 %v1031, %v1155
        %1157 = vdwg.mxu0
        %1158 = vmatpush.bf16.msra.mxu0 %v1112
        %1159 = vmatpush.bf16.msra.mxu0 %v1111
        %1160 = vmatpush.bf16.msra.mxu0 %v1110
        %1161 = vmatpush.bf16.msra.mxu0 %v1109
        %1162 = vmatpush.bf16.msra.mxu0 %v1108
        %1163 = vmatpush.bf16.msra.mxu0 %v1107
        %1164 = vmatpush.bf16.msra.mxu0 %v1106
        %1165 = vmatpush.bf16.msra.mxu0 %v1105
        %1166 = vmatmul.bf16.gmra.mxu0 %v534
        %v1167 = vpop.f32.mrf.mxu0
        %v1168 = vadd.f32 %v1139, %v1167
        %v1169 = vpop.f32.mrf.mxu0
        %v1170 = vadd.f32 %v1141, %v1169
        %1171 = vmatmul.bf16.gmra.mxu0 %v538
        %v1172 = vpop.f32.mrf.mxu0
        %v1173 = vadd.f32 %v1144, %v1172
        %v1174 = vpop.f32.mrf.mxu0
        %v1175 = vadd.f32 %v1146, %v1174
        %1176 = vmatmul.bf16.gmra.mxu0 %v542
        %v1177 = vpop.f32.mrf.mxu0
        %v1178 = vadd.f32 %v1149, %v1177
        %v1179 = vpop.f32.mrf.mxu0
        %v1180 = vadd.f32 %v1151, %v1179
        %1181 = vmatmul.bf16.gmra.mxu0 %v546
        %v1182 = vpop.f32.mrf.mxu0
        %v1183 = vadd.f32 %v1154, %v1182
        %v1184 = vpop.f32.mrf.mxu0
        %v1185 = vadd.f32 %v1156, %v1184
        %1186 = vdwg.mxu0
        %v1187 = vld [vmem:[%s709] sm:$0xf]
        %v1188 = vld [vmem:[%s709 + $0x4] sm:$0x1]
        %v1189 = vld [vmem:[%s709 + $0x8] sm:$0xf]
        %v1190 = vld [vmem:[%s709 + $0xc] sm:$0x1]
        %v1191 = vld [vmem:[%s709 + $0x10] sm:$0xf]
        %v1192 = vld [vmem:[%s709 + $0x14] sm:$0x1]
        %v1193 = vld [vmem:[%s709 + $0x18] sm:$0xf]
        %v1194 = vld [vmem:[%s709 + $0x1c] sm:$0x1]
        %v1195 = vld [vmem:[%s709 + $0x20] sm:$0xf]
        %v1196 = vld [vmem:[%s709 + $0x24] sm:$0x1]
        %v1197 = vld [vmem:[%s709 + $0x28] sm:$0xf]
        %v1198 = vld [vmem:[%s709 + $0x2c] sm:$0x1]
        %v1199 = vld [vmem:[%s709 + $0x30] sm:$0xf]
        %v1200 = vld [vmem:[%s709 + $0x34] sm:$0x1]
        %v1201 = vld [vmem:[%s709 + $0x38] sm:$0xf]
        %v1202 = vld [vmem:[%s709 + $0x3c] sm:$0x1]
        %v1204 = vshrl.u32 %v1187, 16
        %v1206 = vrot.slane %v1204, 4
        %v1207 = vshll.u32 %v1187, 16
        %v1209 = vrot.slane %v1207, 5
        %v1210 = vor.u32 %v1206, %v1209
        %v1211 = vrot.slane %v1210, 4
        %v1213 = vshll.u32 %v1188, 16
        %v1215 = vrot.slane %v1213, 5
        %v1216 = vsel %vm305, %v1211, %v1215
        %v1218 = vshrl.u32 %v1189, 16
        %v1220 = vrot.slane %v1218, 4
        %v1221 = vshll.u32 %v1189, 16
        %v1223 = vrot.slane %v1221, 5
        %v1224 = vor.u32 %v1220, %v1223
        %v1225 = vrot.slane %v1224, 4
        %v1227 = vshll.u32 %v1190, 16
        %v1229 = vrot.slane %v1227, 5
        %v1230 = vsel %vm305, %v1225, %v1229
        %v1232 = vshrl.u32 %v1191, 16
        %v1234 = vrot.slane %v1232, 4
        %v1235 = vshll.u32 %v1191, 16
        %v1237 = vrot.slane %v1235, 5
        %v1238 = vor.u32 %v1234, %v1237
        %v1239 = vrot.slane %v1238, 4
        %v1241 = vshll.u32 %v1192, 16
        %v1243 = vrot.slane %v1241, 5
        %v1244 = vsel %vm305, %v1239, %v1243
        %v1246 = vshrl.u32 %v1193, 16
        %v1248 = vrot.slane %v1246, 4
        %v1249 = vshll.u32 %v1193, 16
        %v1251 = vrot.slane %v1249, 5
        %v1252 = vor.u32 %v1248, %v1251
        %v1253 = vrot.slane %v1252, 4
        %v1255 = vshll.u32 %v1194, 16
        %v1257 = vrot.slane %v1255, 5
        %v1258 = vsel %vm305, %v1253, %v1257
        %v1260 = vshrl.u32 %v1195, 16
        %v1262 = vrot.slane %v1260, 4
        %v1263 = vshll.u32 %v1195, 16
        %v1265 = vrot.slane %v1263, 5
        %v1266 = vor.u32 %v1262, %v1265
        %v1267 = vrot.slane %v1266, 4
        %v1269 = vshll.u32 %v1196, 16
        %v1271 = vrot.slane %v1269, 5
        %v1272 = vsel %vm305, %v1267, %v1271
        %v1274 = vshrl.u32 %v1197, 16
        %v1276 = vrot.slane %v1274, 4
        %v1277 = vshll.u32 %v1197, 16
        %v1279 = vrot.slane %v1277, 5
        %v1280 = vor.u32 %v1276, %v1279
        %v1281 = vrot.slane %v1280, 4
        %v1283 = vshll.u32 %v1198, 16
        %v1285 = vrot.slane %v1283, 5
        %v1286 = vsel %vm305, %v1281, %v1285
        %v1288 = vshrl.u32 %v1199, 16
        %v1290 = vrot.slane %v1288, 4
        %v1291 = vshll.u32 %v1199, 16
        %v1293 = vrot.slane %v1291, 5
        %v1294 = vor.u32 %v1290, %v1293
        %v1295 = vrot.slane %v1294, 4
        %v1297 = vshll.u32 %v1200, 16
        %v1299 = vrot.slane %v1297, 5
        %v1300 = vsel %vm305, %v1295, %v1299
        %v1302 = vshrl.u32 %v1201, 16
        %v1304 = vrot.slane %v1302, 4
        %v1305 = vshll.u32 %v1201, 16
        %v1307 = vrot.slane %v1305, 5
        %v1308 = vor.u32 %v1304, %v1307
        %v1309 = vrot.slane %v1308, 4
        %v1311 = vshll.u32 %v1202, 16
        %v1313 = vrot.slane %v1311, 5
        %v1314 = vsel %vm305, %v1309, %v1313
        %v1315 = vld [vmem:[%s1 + $0x100] sm:$0xf]
        %v1316 = vld [vmem:[%s1 + $0x104] sm:$0xf]
        %v1317 = vld [vmem:[%s1 + $0x108] sm:$0xf]
        %v1318 = vld [vmem:[%s1 + $0x10c] sm:$0xf]
        %v1319 = vld [vmem:[%s1 + $0x110] sm:$0xf]
        %v1320 = vld [vmem:[%s1 + $0x114] sm:$0xf]
        %v1321 = vld [vmem:[%s1 + $0x118] sm:$0xf]
        %v1322 = vld [vmem:[%s1 + $0x11c] sm:$0xf]
        %v1323 = vunpack.c.l.b16 %v1216
        %v1324 = vunpack.c.l.b16 %v1230
        %v1325 = vunpack.c.l.b16 %v1244
        %v1326 = vunpack.c.l.b16 %v1258
        %v1327 = vunpack.c.l.b16 %v1272
        %v1328 = vunpack.c.l.b16 %v1286
        %v1329 = vunpack.c.l.b16 %v1300
        %v1330 = vunpack.c.l.b16 %v1314
        %v1331 = vpack.c.b16 %v1324, %v1323
        %v1332 = vpack.c.b16 %v1326, %v1325
        %v1333 = vpack.c.b16 %v1328, %v1327
        %v1334 = vpack.c.b16 %v1330, %v1329
        %v1343 = vunpack.c.l.b16 %v1315
        %v1344 = vunpack.c.l.b16 %v1316
        %v1345 = vunpack.c.l.b16 %v1317
        %v1346 = vunpack.c.l.b16 %v1318
        %v1347 = vunpack.c.l.b16 %v1319
        %v1348 = vunpack.c.l.b16 %v1320
        %v1349 = vunpack.c.l.b16 %v1321
        %v1350 = vunpack.c.l.b16 %v1322
        %v1351 = vpack.c.b16 %v1344, %v1343
        %v1352 = vpack.c.b16 %v1346, %v1345
        %v1353 = vpack.c.b16 %v1348, %v1347
        %v1354 = vpack.c.b16 %v1350, %v1349
        %v1360 = vsel %vm515, %v1331, 0
        %v1363 = vsel %vm515, %v1332, 0
        %v1366 = vsel %vm515, %v1333, 0
        %v1369 = vsel %vm515, %v1334, 0
        %1371 = vmatpush.bf16.msra.mxu0 0
        %1372 = vmatpush.bf16.msra.mxu0 0
        %1373 = vmatpush.bf16.msra.mxu0 0
        %1374 = vmatpush.bf16.msra.mxu0 0
        %1375 = vmatpush.bf16.msra.mxu0 %v1354
        %1376 = vmatpush.bf16.msra.mxu0 %v1353
        %1377 = vmatpush.bf16.msra.mxu0 %v1352
        %1378 = vmatpush.bf16.msra.mxu0 %v1351
        %1379 = vmatmul.bf16.gmra.mxu0 %v1360
        %v1380 = vpop.f32.mrf.mxu0
        %v1381 = vadd.f32 0.0, %v1380
        %v1382 = vpop.f32.mrf.mxu0
        %v1383 = vadd.f32 0.0, %v1382
        %1384 = vmatmul.bf16.gmra.mxu0 %v1363
        %v1385 = vpop.f32.mrf.mxu0
        %v1386 = vadd.f32 0.0, %v1385
        %v1387 = vpop.f32.mrf.mxu0
        %v1388 = vadd.f32 0.0, %v1387
        %1389 = vmatmul.bf16.gmra.mxu0 %v1366
        %v1390 = vpop.f32.mrf.mxu0
        %v1391 = vadd.f32 0.0, %v1390
        %v1392 = vpop.f32.mrf.mxu0
        %v1393 = vadd.f32 0.0, %v1392
        %1394 = vmatmul.bf16.gmra.mxu0 %v1369
        %v1395 = vpop.f32.mrf.mxu0
        %v1396 = vadd.f32 0.0, %v1395
        %v1397 = vpop.f32.mrf.mxu0
        %v1398 = vadd.f32 0.0, %v1397
        %1399 = vdwg.mxu0
        %v1400 = vadd.f32 %v1168, %v1381
        %v1401 = vadd.f32 %v1170, %v1383
        %v1402 = vadd.f32 %v1173, %v1386
        %v1403 = vadd.f32 %v1175, %v1388
        %v1404 = vadd.f32 %v1178, %v1391
        %v1405 = vadd.f32 %v1180, %v1393
        %v1406 = vadd.f32 %v1183, %v1396
        %v1407 = vadd.f32 %v1185, %v1398
        %v1408 = vld [vmem:[%s2] sm:$0x1]
        %v1410 = vperm.slane %v1408, 0
        %v1412 = vadd.f32 %v1400, %v1410
        %v1413 = vadd.f32 %v1401, %v1410
        %v1414 = vadd.f32 %v1402, %v1410
        %v1415 = vadd.f32 %v1403, %v1410
        %v1416 = vadd.f32 %v1404, %v1410
        %v1417 = vadd.f32 %v1405, %v1410
        %v1418 = vadd.f32 %v1406, %v1410
        %v1419 = vadd.f32 %v1407, %v1410
        %v1420 = vmax.f32 %v1412, 0.0
        %v1421 = vmax.f32 %v1413, 0.0
        %v1422 = vmax.f32 %v1414, 0.0
        %v1423 = vmax.f32 %v1415, 0.0
        %v1424 = vmax.f32 %v1416, 0.0
        %v1425 = vmax.f32 %v1417, 0.0
        %v1426 = vmax.f32 %v1418, 0.0
        %v1427 = vmax.f32 %v1419, 0.0
        %v1428 = vpack.c.bf16 %v1420, %v1420
        %v1429 = vpack.c.bf16 %v1421, %v1421
        %v1430 = vpack.c.bf16 %v1422, %v1422
        %v1431 = vpack.c.bf16 %v1423, %v1423
        %v1432 = vpack.c.bf16 %v1424, %v1424
        %v1433 = vpack.c.bf16 %v1425, %v1425
        %v1434 = vpack.c.bf16 %v1426, %v1426
        %v1435 = vpack.c.bf16 %v1427, %v1427
        %1436 = vst [vmem:[#allocation2] sm:$0xf] 0
        %1437 = vst [vmem:[#allocation2 + $0x4] sm:$0x1] 0
        %1438 = vst [vmem:[#allocation2 + $0x8] sm:$0xf] 0
        %1439 = vst [vmem:[#allocation2 + $0xc] sm:$0x1] 0
        %1440 = vst [vmem:[#allocation2 + $0x10] sm:$0xf] 0
        %1441 = vst [vmem:[#allocation2 + $0x14] sm:$0x1] 0
        %1442 = vst [vmem:[#allocation2 + $0x18] sm:$0xf] 0
        %1443 = vst [vmem:[#allocation2 + $0x1c] sm:$0x1] 0
        %1444 = vst [vmem:[#allocation2 + $0x20] sm:$0xf] 0
        %1445 = vst [vmem:[#allocation2 + $0x24] sm:$0x1] 0
        %1446 = vst [vmem:[#allocation2 + $0x28] sm:$0xf] 0
        %1447 = vst [vmem:[#allocation2 + $0x2c] sm:$0x1] 0
        %1448 = vst [vmem:[#allocation2 + $0x30] sm:$0xf] 0
        %1449 = vst [vmem:[#allocation2 + $0x34] sm:$0x1] 0
        %1450 = vst [vmem:[#allocation2 + $0x38] sm:$0xf] 0
        %1451 = vst [vmem:[#allocation2 + $0x3c] sm:$0x1] 0
        %1452 = vst [vmem:[#allocation2 + $0x40] sm:$0xf] 0
        %1453 = vst [vmem:[#allocation2 + $0x44] sm:$0x1] 0
        %1454 = vst [vmem:[#allocation2 + $0x48] sm:$0xf] 0
        %1455 = vst [vmem:[#allocation2 + $0x4c] sm:$0x1] 0
        %v1457 = vshrl.u32 %v1428, 16
        %v1459 = vrot.slane %v1457, 7
        %v1460 = vshll.u32 %v1428, 16
        %v1462 = vor.u32 %v1459, %v1460
        %v1463 = vrot.slane %v1459, 4
        %v1465 = vshrl.u32 %v1429, 16
        %v1467 = vrot.slane %v1465, 7
        %v1468 = vshll.u32 %v1429, 16
        %v1470 = vor.u32 %v1467, %v1468
        %v1471 = vrot.slane %v1467, 4
        %v1473 = vshrl.u32 %v1430, 16
        %v1475 = vrot.slane %v1473, 7
        %v1476 = vshll.u32 %v1430, 16
        %v1478 = vor.u32 %v1475, %v1476
        %v1479 = vrot.slane %v1475, 4
        %v1481 = vshrl.u32 %v1431, 16
        %v1483 = vrot.slane %v1481, 7
        %v1484 = vshll.u32 %v1431, 16
        %v1486 = vor.u32 %v1483, %v1484
        %v1487 = vrot.slane %v1483, 4
        %v1489 = vshrl.u32 %v1432, 16
        %v1491 = vrot.slane %v1489, 7
        %v1492 = vshll.u32 %v1432, 16
        %v1494 = vor.u32 %v1491, %v1492
        %v1495 = vrot.slane %v1491, 4
        %v1497 = vshrl.u32 %v1433, 16
        %v1499 = vrot.slane %v1497, 7
        %v1500 = vshll.u32 %v1433, 16
        %v1502 = vor.u32 %v1499, %v1500
        %v1503 = vrot.slane %v1499, 4
        %v1505 = vshrl.u32 %v1434, 16
        %v1507 = vrot.slane %v1505, 7
        %v1508 = vshll.u32 %v1434, 16
        %v1510 = vor.u32 %v1507, %v1508
        %v1511 = vrot.slane %v1507, 4
        %v1513 = vshrl.u32 %v1435, 16
        %v1515 = vrot.slane %v1513, 7
        %v1516 = vshll.u32 %v1435, 16
        %v1518 = vor.u32 %v1515, %v1516
        %v1519 = vrot.slane %v1515, 4
        %s1536 = scalar_lea.vmem [#allocation2], 8
        %vm1537 = vcmask 1043456
        %vm1538 = vsmask.f32 7938
        %vm1539 = vmand %vm1537, %vm1538
        %v1540 = vld [vmem:[%s1536] sm:$0xf]
        %v1541 = vsel %vm1539, %v1462, %v1540
        %1542 = vst [vmem:[%s1536] sm:$0xf] %v1541
        %vm1543 = vcmask 1040384
        %vm1544 = vsmask.f32 256
        %vm1545 = vmand %vm1543, %vm1544
        %v1546 = vld [vmem:[%s1536 + $0x4] sm:$0x1]
        %v1547 = vsel %vm1545, %v1463, %v1546
        %1548 = vst [vmem:[%s1536 + $0x4] sm:$0x1] %v1547
        %v1549 = vld [vmem:[%s1536 + $0x8] sm:$0xf]
        %v1550 = vsel %vm1539, %v1470, %v1549
        %1551 = vst [vmem:[%s1536 + $0x8] sm:$0xf] %v1550
        %v1552 = vld [vmem:[%s1536 + $0xc] sm:$0x1]
        %v1553 = vsel %vm1545, %v1471, %v1552
        %1554 = vst [vmem:[%s1536 + $0xc] sm:$0x1] %v1553
        %v1555 = vld [vmem:[%s1536 + $0x10] sm:$0xf]
        %v1556 = vsel %vm1539, %v1478, %v1555
        %1557 = vst [vmem:[%s1536 + $0x10] sm:$0xf] %v1556
        %v1558 = vld [vmem:[%s1536 + $0x14] sm:$0x1]
        %v1559 = vsel %vm1545, %v1479, %v1558
        %1560 = vst [vmem:[%s1536 + $0x14] sm:$0x1] %v1559
        %v1561 = vld [vmem:[%s1536 + $0x18] sm:$0xf]
        %v1562 = vsel %vm1539, %v1486, %v1561
        %1563 = vst [vmem:[%s1536 + $0x18] sm:$0xf] %v1562
        %v1564 = vld [vmem:[%s1536 + $0x1c] sm:$0x1]
        %v1565 = vsel %vm1545, %v1487, %v1564
        %1566 = vst [vmem:[%s1536 + $0x1c] sm:$0x1] %v1565
        %v1567 = vld [vmem:[%s1536 + $0x20] sm:$0xf]
        %v1568 = vsel %vm1539, %v1494, %v1567
        %1569 = vst [vmem:[%s1536 + $0x20] sm:$0xf] %v1568
        %v1570 = vld [vmem:[%s1536 + $0x24] sm:$0x1]
        %v1571 = vsel %vm1545, %v1495, %v1570
        %1572 = vst [vmem:[%s1536 + $0x24] sm:$0x1] %v1571
        %v1573 = vld [vmem:[%s1536 + $0x28] sm:$0xf]
        %v1574 = vsel %vm1539, %v1502, %v1573
        %1575 = vst [vmem:[%s1536 + $0x28] sm:$0xf] %v1574
        %v1576 = vld [vmem:[%s1536 + $0x2c] sm:$0x1]
        %v1577 = vsel %vm1545, %v1503, %v1576
        %1578 = vst [vmem:[%s1536 + $0x2c] sm:$0x1] %v1577
        %v1579 = vld [vmem:[%s1536 + $0x30] sm:$0xf]
        %v1580 = vsel %vm1539, %v1510, %v1579
        %1581 = vst [vmem:[%s1536 + $0x30] sm:$0xf] %v1580
        %v1582 = vld [vmem:[%s1536 + $0x34] sm:$0x1]
        %v1583 = vsel %vm1545, %v1511, %v1582
        %1584 = vst [vmem:[%s1536 + $0x34] sm:$0x1] %v1583
        %v1585 = vld [vmem:[%s1536 + $0x38] sm:$0xf]
        %v1586 = vsel %vm1539, %v1518, %v1585
        %1587 = vst [vmem:[%s1536 + $0x38] sm:$0xf] %v1586
        %v1588 = vld [vmem:[%s1536 + $0x3c] sm:$0x1]
        %v1589 = vsel %vm1545, %v1519, %v1588
        %1590 = vst [vmem:[%s1536 + $0x3c] sm:$0x1] %v1589
        %v1591 = vld [vmem:[#allocation2] sm:$0xf]
        %v1592 = vld [vmem:[#allocation2 + $0x8] sm:$0xf]
        %v1593 = vld [vmem:[#allocation2 + $0x10] sm:$0xf]
        %v1594 = vld [vmem:[#allocation2 + $0x18] sm:$0xf]
        %v1595 = vld [vmem:[#allocation2 + $0x20] sm:$0xf]
        %v1596 = vld [vmem:[#allocation2 + $0x28] sm:$0xf]
        %v1597 = vld [vmem:[#allocation2 + $0x30] sm:$0xf]
        %v1598 = vld [vmem:[#allocation2 + $0x38] sm:$0xf]
        %v1599 = vld [vmem:[#allocation2 + $0x4] sm:$0x1]
        %v1600 = vld [vmem:[#allocation2 + $0xc] sm:$0x1]
        %v1601 = vld [vmem:[#allocation2 + $0x14] sm:$0x1]
        %v1602 = vld [vmem:[#allocation2 + $0x1c] sm:$0x1]
        %v1603 = vld [vmem:[#allocation2 + $0x24] sm:$0x1]
        %v1604 = vld [vmem:[#allocation2 + $0x2c] sm:$0x1]
        %v1605 = vld [vmem:[#allocation2 + $0x34] sm:$0x1]
        %v1606 = vld [vmem:[#allocation2 + $0x3c] sm:$0x1]
        %v1608 = vshrl.u32 %v1591, 16
        %v1610 = vrot.slane %v1608, 4
        %v1611 = vshll.u32 %v1591, 16
        %v1613 = vrot.slane %v1611, 5
        %v1614 = vor.u32 %v1610, %v1613
        %v1615 = vrot.slane %v1614, 4
        %v1617 = vshll.u32 %v1599, 16
        %v1619 = vrot.slane %v1617, 5
        %v1620 = vsel %vm305, %v1615, %v1619
        %v1622 = vshrl.u32 %v1592, 16
        %v1624 = vrot.slane %v1622, 4
        %v1625 = vshll.u32 %v1592, 16
        %v1627 = vrot.slane %v1625, 5
        %v1628 = vor.u32 %v1624, %v1627
        %v1629 = vrot.slane %v1628, 4
        %v1631 = vshll.u32 %v1600, 16
        %v1633 = vrot.slane %v1631, 5
        %v1634 = vsel %vm305, %v1629, %v1633
        %v1636 = vshrl.u32 %v1593, 16
        %v1638 = vrot.slane %v1636, 4
        %v1639 = vshll.u32 %v1593, 16
        %v1641 = vrot.slane %v1639, 5
        %v1642 = vor.u32 %v1638, %v1641
        %v1643 = vrot.slane %v1642, 4
        %v1645 = vshll.u32 %v1601, 16
        %v1647 = vrot.slane %v1645, 5
        %v1648 = vsel %vm305, %v1643, %v1647
        %v1650 = vshrl.u32 %v1594, 16
        %v1652 = vrot.slane %v1650, 4
        %v1653 = vshll.u32 %v1594, 16
        %v1655 = vrot.slane %v1653, 5
        %v1656 = vor.u32 %v1652, %v1655
        %v1657 = vrot.slane %v1656, 4
        %v1659 = vshll.u32 %v1602, 16
        %v1661 = vrot.slane %v1659, 5
        %v1662 = vsel %vm305, %v1657, %v1661
        %v1664 = vshrl.u32 %v1595, 16
        %v1666 = vrot.slane %v1664, 4
        %v1667 = vshll.u32 %v1595, 16
        %v1669 = vrot.slane %v1667, 5
        %v1670 = vor.u32 %v1666, %v1669
        %v1671 = vrot.slane %v1670, 4
        %v1673 = vshll.u32 %v1603, 16
        %v1675 = vrot.slane %v1673, 5
        %v1676 = vsel %vm305, %v1671, %v1675
        %v1678 = vshrl.u32 %v1596, 16
        %v1680 = vrot.slane %v1678, 4
        %v1681 = vshll.u32 %v1596, 16
        %v1683 = vrot.slane %v1681, 5
        %v1684 = vor.u32 %v1680, %v1683
        %v1685 = vrot.slane %v1684, 4
        %v1687 = vshll.u32 %v1604, 16
        %v1689 = vrot.slane %v1687, 5
        %v1690 = vsel %vm305, %v1685, %v1689
        %v1692 = vshrl.u32 %v1597, 16
        %v1694 = vrot.slane %v1692, 4
        %v1695 = vshll.u32 %v1597, 16
        %v1697 = vrot.slane %v1695, 5
        %v1698 = vor.u32 %v1694, %v1697
        %v1699 = vrot.slane %v1698, 4
        %v1701 = vshll.u32 %v1605, 16
        %v1703 = vrot.slane %v1701, 5
        %v1704 = vsel %vm305, %v1699, %v1703
        %v1706 = vshrl.u32 %v1598, 16
        %v1708 = vrot.slane %v1706, 4
        %v1709 = vshll.u32 %v1598, 16
        %v1711 = vrot.slane %v1709, 5
        %v1712 = vor.u32 %v1708, %v1711
        %v1713 = vrot.slane %v1712, 4
        %v1715 = vshll.u32 %v1606, 16
        %v1717 = vrot.slane %v1715, 5
        %v1718 = vsel %vm305, %v1713, %v1717
        %v1727 = vunpack.c.l.b16 %v1591
        %v1728 = vunpack.c.l.b16 %v1592
        %v1729 = vunpack.c.l.b16 %v1593
        %v1730 = vunpack.c.l.b16 %v1594
        %v1731 = vunpack.c.l.b16 %v1595
        %v1732 = vunpack.c.l.b16 %v1596
        %v1733 = vunpack.c.l.b16 %v1597
        %v1734 = vunpack.c.l.b16 %v1598
        %v1735 = vpack.c.b16 %v1728, %v1727
        %v1736 = vpack.c.b16 %v1730, %v1729
        %v1737 = vpack.c.b16 %v1732, %v1731
        %v1738 = vpack.c.b16 %v1734, %v1733
        %v1743 = vunpack.c.l.b16 %v1620
        %v1744 = vunpack.c.l.b16 %v1634
        %v1745 = vunpack.c.l.b16 %v1648
        %v1746 = vunpack.c.l.b16 %v1662
        %v1747 = vunpack.c.l.b16 %v1676
        %v1748 = vunpack.c.l.b16 %v1690
        %v1749 = vunpack.c.l.b16 %v1704
        %v1750 = vunpack.c.l.b16 %v1718
        %v1751 = vpack.c.b16 %v1744, %v1743
        %v1752 = vpack.c.b16 %v1746, %v1745
        %v1753 = vpack.c.b16 %v1748, %v1747
        %v1754 = vpack.c.b16 %v1750, %v1749
        %v1759 = vld [vmem:[%s3] sm:$0xf]
        %v1760 = vld [vmem:[%s3 + $0x4] sm:$0xf]
        %v1761 = vld [vmem:[%s3 + $0x8] sm:$0xf]
        %v1762 = vld [vmem:[%s3 + $0xc] sm:$0xf]
        %v1763 = vld [vmem:[%s3 + $0x10] sm:$0xf]
        %v1764 = vld [vmem:[%s3 + $0x14] sm:$0xf]
        %v1765 = vld [vmem:[%s3 + $0x18] sm:$0xf]
        %v1766 = vld [vmem:[%s3 + $0x1c] sm:$0xf]
        %v1767 = vld [vmem:[%s3 + $0x20] sm:$0xf]
        %v1768 = vld [vmem:[%s3 + $0x24] sm:$0xf]
        %v1769 = vld [vmem:[%s3 + $0x28] sm:$0xf]
        %v1770 = vld [vmem:[%s3 + $0x2c] sm:$0xf]
        %v1771 = vld [vmem:[%s3 + $0x30] sm:$0xf]
        %v1772 = vld [vmem:[%s3 + $0x34] sm:$0xf]
        %v1773 = vld [vmem:[%s3 + $0x38] sm:$0xf]
        %v1774 = vld [vmem:[%s3 + $0x3c] sm:$0xf]
        %v1775 = vld [vmem:[%s3 + $0x40] sm:$0xf]
        %v1776 = vld [vmem:[%s3 + $0x44] sm:$0xf]
        %v1777 = vld [vmem:[%s3 + $0x48] sm:$0xf]
        %v1778 = vld [vmem:[%s3 + $0x4c] sm:$0xf]
        %v1779 = vld [vmem:[%s3 + $0x50] sm:$0xf]
        %v1780 = vld [vmem:[%s3 + $0x54] sm:$0xf]
        %v1781 = vld [vmem:[%s3 + $0x58] sm:$0xf]
        %v1782 = vld [vmem:[%s3 + $0x5c] sm:$0xf]
        %v1783 = vld [vmem:[%s3 + $0x60] sm:$0xf]
        %v1784 = vld [vmem:[%s3 + $0x64] sm:$0xf]
        %v1785 = vld [vmem:[%s3 + $0x68] sm:$0xf]
        %v1786 = vld [vmem:[%s3 + $0x6c] sm:$0xf]
        %v1787 = vld [vmem:[%s3 + $0x70] sm:$0xf]
        %v1788 = vld [vmem:[%s3 + $0x74] sm:$0xf]
        %v1789 = vld [vmem:[%s3 + $0x78] sm:$0xf]
        %v1790 = vld [vmem:[%s3 + $0x7c] sm:$0xf]
        %v1791 = vld [vmem:[#allocation2] sm:$0xe]
        %v1792 = vld [vmem:[#allocation2 + $0x8] sm:$0xe]
        %v1793 = vld [vmem:[#allocation2 + $0x10] sm:$0xe]
        %v1794 = vld [vmem:[#allocation2 + $0x18] sm:$0xe]
        %v1795 = vld [vmem:[#allocation2 + $0x20] sm:$0xe]
        %v1796 = vld [vmem:[#allocation2 + $0x28] sm:$0xe]
        %v1797 = vld [vmem:[#allocation2 + $0x30] sm:$0xe]
        %v1798 = vld [vmem:[#allocation2 + $0x38] sm:$0xe]
        %vm1815 = vcmask 1042432
        %vm1816 = vcmask 1046532
        %vm1817 = vmor %vm1815, %vm1816
        %v1818 = vrot.slane %v1791, 5
        %v1819 = vrot.slane %v1818, 4
        %v1820 = vrot.slane %v1599, 5
        %v1821 = vsel %vm1817, %v1819, %v1820
        %v1822 = vrot.slane %v1792, 5
        %v1823 = vrot.slane %v1822, 4
        %v1824 = vrot.slane %v1600, 5
        %v1825 = vsel %vm1817, %v1823, %v1824
        %v1826 = vrot.slane %v1793, 5
        %v1827 = vrot.slane %v1826, 4
        %v1828 = vrot.slane %v1601, 5
        %v1829 = vsel %vm1817, %v1827, %v1828
        %v1830 = vrot.slane %v1794, 5
        %v1831 = vrot.slane %v1830, 4
        %v1832 = vrot.slane %v1602, 5
        %v1833 = vsel %vm1817, %v1831, %v1832
        %v1834 = vrot.slane %v1795, 5
        %v1835 = vrot.slane %v1834, 4
        %v1836 = vrot.slane %v1603, 5
        %v1837 = vsel %vm1817, %v1835, %v1836
        %v1838 = vrot.slane %v1796, 5
        %v1839 = vrot.slane %v1838, 4
        %v1840 = vrot.slane %v1604, 5
        %v1841 = vsel %vm1817, %v1839, %v1840
        %v1842 = vrot.slane %v1797, 5
        %v1843 = vrot.slane %v1842, 4
        %v1844 = vrot.slane %v1605, 5
        %v1845 = vsel %vm1817, %v1843, %v1844
        %v1846 = vrot.slane %v1798, 5
        %v1847 = vrot.slane %v1846, 4
        %v1848 = vrot.slane %v1606, 5
        %v1849 = vsel %vm1817, %v1847, %v1848
        %v1850 = vld [vmem:[%s1536] sm:$0xf]
        %v1851 = vld [vmem:[%s1536 + $0x8] sm:$0xf]
        %v1852 = vld [vmem:[%s1536 + $0x10] sm:$0xf]
        %v1853 = vld [vmem:[%s1536 + $0x18] sm:$0xf]
        %v1854 = vld [vmem:[%s1536 + $0x20] sm:$0xf]
        %v1855 = vld [vmem:[%s1536 + $0x28] sm:$0xf]
        %v1856 = vld [vmem:[%s1536 + $0x30] sm:$0xf]
        %v1857 = vld [vmem:[%s1536 + $0x38] sm:$0xf]
        %v1858 = vunpack.c.l.b16 %v1821
        %v1859 = vunpack.c.l.b16 %v1825
        %v1860 = vunpack.c.l.b16 %v1829
        %v1861 = vunpack.c.l.b16 %v1833
        %v1862 = vunpack.c.l.b16 %v1837
        %v1863 = vunpack.c.l.b16 %v1841
        %v1864 = vunpack.c.l.b16 %v1845
        %v1865 = vunpack.c.l.b16 %v1849
        %v1866 = vpack.c.b16 %v1859, %v1858
        %v1867 = vpack.c.b16 %v1861, %v1860
        %v1868 = vpack.c.b16 %v1863, %v1862
        %v1869 = vpack.c.b16 %v1865, %v1864
        %v1882 = vunpack.c.l.b16 %v1850
        %v1883 = vunpack.c.l.b16 %v1851
        %v1884 = vunpack.c.l.b16 %v1852
        %v1885 = vunpack.c.l.b16 %v1853
        %v1886 = vunpack.c.l.b16 %v1854
        %v1887 = vunpack.c.l.b16 %v1855
        %v1888 = vunpack.c.l.b16 %v1856
        %v1889 = vunpack.c.l.b16 %v1857
        %v1890 = vpack.c.b16 %v1883, %v1882
        %v1891 = vpack.c.b16 %v1885, %v1884
        %v1892 = vpack.c.b16 %v1887, %v1886
        %v1893 = vpack.c.b16 %v1889, %v1888
        %v1898 = vld [vmem:[%s3 + $0x80] sm:$0xf]
        %v1899 = vld [vmem:[%s3 + $0x84] sm:$0xf]
        %v1900 = vld [vmem:[%s3 + $0x88] sm:$0xf]
        %v1901 = vld [vmem:[%s3 + $0x8c] sm:$0xf]
        %v1902 = vld [vmem:[%s3 + $0x90] sm:$0xf]
        %v1903 = vld [vmem:[%s3 + $0x94] sm:$0xf]
        %v1904 = vld [vmem:[%s3 + $0x98] sm:$0xf]
        %v1905 = vld [vmem:[%s3 + $0x9c] sm:$0xf]
        %v1906 = vld [vmem:[%s3 + $0xa0] sm:$0xf]
        %v1907 = vld [vmem:[%s3 + $0xa4] sm:$0xf]
        %v1908 = vld [vmem:[%s3 + $0xa8] sm:$0xf]
        %v1909 = vld [vmem:[%s3 + $0xac] sm:$0xf]
        %v1910 = vld [vmem:[%s3 + $0xb0] sm:$0xf]
        %v1911 = vld [vmem:[%s3 + $0xb4] sm:$0xf]
        %v1912 = vld [vmem:[%s3 + $0xb8] sm:$0xf]
        %v1913 = vld [vmem:[%s3 + $0xbc] sm:$0xf]
        %v1914 = vld [vmem:[%s3 + $0xc0] sm:$0xf]
        %v1915 = vld [vmem:[%s3 + $0xc4] sm:$0xf]
        %v1916 = vld [vmem:[%s3 + $0xc8] sm:$0xf]
        %v1917 = vld [vmem:[%s3 + $0xcc] sm:$0xf]
        %v1918 = vld [vmem:[%s3 + $0xd0] sm:$0xf]
        %v1919 = vld [vmem:[%s3 + $0xd4] sm:$0xf]
        %v1920 = vld [vmem:[%s3 + $0xd8] sm:$0xf]
        %v1921 = vld [vmem:[%s3 + $0xdc] sm:$0xf]
        %v1922 = vld [vmem:[%s3 + $0xe0] sm:$0xf]
        %v1923 = vld [vmem:[%s3 + $0xe4] sm:$0xf]
        %v1924 = vld [vmem:[%s3 + $0xe8] sm:$0xf]
        %v1925 = vld [vmem:[%s3 + $0xec] sm:$0xf]
        %v1926 = vld [vmem:[%s3 + $0xf0] sm:$0xf]
        %v1927 = vld [vmem:[%s3 + $0xf4] sm:$0xf]
        %v1928 = vld [vmem:[%s3 + $0xf8] sm:$0xf]
        %v1929 = vld [vmem:[%s3 + $0xfc] sm:$0xf]
        %v1962 = vunpack.c.l.b16 %v1898
        %v1963 = vunpack.c.l.b16 %v1899
        %v1964 = vunpack.c.l.b16 %v1900
        %v1965 = vunpack.c.l.b16 %v1901
        %v1966 = vunpack.c.l.b16 %v1902
        %v1967 = vunpack.c.l.b16 %v1903
        %v1968 = vunpack.c.l.b16 %v1904
        %v1969 = vunpack.c.l.b16 %v1905
        %v1970 = vunpack.c.l.b16 %v1906
        %v1971 = vunpack.c.l.b16 %v1907
        %v1972 = vunpack.c.l.b16 %v1908
        %v1973 = vunpack.c.l.b16 %v1909
        %v1974 = vunpack.c.l.b16 %v1910
        %v1975 = vunpack.c.l.b16 %v1911
        %v1976 = vunpack.c.l.b16 %v1912
        %v1977 = vunpack.c.l.b16 %v1913
        %v1978 = vunpack.c.l.b16 %v1914
        %v1979 = vunpack.c.l.b16 %v1915
        %v1980 = vunpack.c.l.b16 %v1916
        %v1981 = vunpack.c.l.b16 %v1917
        %v1982 = vunpack.c.l.b16 %v1918
        %v1983 = vunpack.c.l.b16 %v1919
        %v1984 = vunpack.c.l.b16 %v1920
        %v1985 = vunpack.c.l.b16 %v1921
        %v1986 = vunpack.c.l.b16 %v1922
        %v1987 = vunpack.c.l.b16 %v1923
        %v1988 = vunpack.c.l.b16 %v1924
        %v1989 = vunpack.c.l.b16 %v1925
        %v1990 = vunpack.c.l.b16 %v1926
        %v1991 = vunpack.c.l.b16 %v1927
        %v1992 = vunpack.c.l.b16 %v1928
        %v1993 = vunpack.c.l.b16 %v1929
        %v1994 = vpack.c.b16 %v1963, %v1962
        %v1995 = vpack.c.b16 %v1965, %v1964
        %v1996 = vpack.c.b16 %v1967, %v1966
        %v1997 = vpack.c.b16 %v1969, %v1968
        %v1998 = vpack.c.b16 %v1971, %v1970
        %v1999 = vpack.c.b16 %v1973, %v1972
        %v2000 = vpack.c.b16 %v1975, %v1974
        %v2001 = vpack.c.b16 %v1977, %v1976
        %v2002 = vpack.c.b16 %v1979, %v1978
        %v2003 = vpack.c.b16 %v1981, %v1980
        %v2004 = vpack.c.b16 %v1983, %v1982
        %v2005 = vpack.c.b16 %v1985, %v1984
        %v2006 = vpack.c.b16 %v1987, %v1986
        %v2007 = vpack.c.b16 %v1989, %v1988
        %v2008 = vpack.c.b16 %v1991, %v1990
        %v2009 = vpack.c.b16 %v1993, %v1992
        %2026 = vmatpush.bf16.msra.mxu0 %v2001
        %2027 = vmatpush.bf16.msra.mxu0 %v2000
        %2028 = vmatpush.bf16.msra.mxu0 %v1999
        %2029 = vmatpush.bf16.msra.mxu0 %v1998
        %2030 = vmatpush.bf16.msra.mxu0 %v1997
        %2031 = vmatpush.bf16.msra.mxu0 %v1996
        %2032 = vmatpush.bf16.msra.mxu0 %v1995
        %2033 = vmatpush.bf16.msra.mxu0 %v1994
        %2034 = vmatmul.bf16.gmra.mxu0 %v1866
        %v2035 = vpop.f32.mrf.mxu0
        %v2036 = vadd.f32 0.0, %v2035
        %v2037 = vpop.f32.mrf.mxu0
        %v2038 = vadd.f32 0.0, %v2037
        %2039 = vmatmul.bf16.gmra.mxu0 %v1867
        %v2040 = vpop.f32.mrf.mxu0
        %v2041 = vadd.f32 0.0, %v2040
        %v2042 = vpop.f32.mrf.mxu0
        %v2043 = vadd.f32 0.0, %v2042
        %2044 = vmatmul.bf16.gmra.mxu0 %v1868
        %v2045 = vpop.f32.mrf.mxu0
        %v2046 = vadd.f32 0.0, %v2045
        %v2047 = vpop.f32.mrf.mxu0
        %v2048 = vadd.f32 0.0, %v2047
        %2049 = vmatmul.bf16.gmra.mxu0 %v1869
        %v2050 = vpop.f32.mrf.mxu0
        %v2051 = vadd.f32 0.0, %v2050
        %v2052 = vpop.f32.mrf.mxu0
        %v2053 = vadd.f32 0.0, %v2052
        %2054 = vdwg.mxu0
        %2055 = vmatpush.bf16.msra.mxu0 %v2009
        %2056 = vmatpush.bf16.msra.mxu0 %v2008
        %2057 = vmatpush.bf16.msra.mxu0 %v2007
        %2058 = vmatpush.bf16.msra.mxu0 %v2006
        %2059 = vmatpush.bf16.msra.mxu0 %v2005
        %2060 = vmatpush.bf16.msra.mxu0 %v2004
        %2061 = vmatpush.bf16.msra.mxu0 %v2003
        %2062 = vmatpush.bf16.msra.mxu0 %v2002
        %2063 = vmatmul.bf16.gmra.mxu0 %v1890
        %v2064 = vpop.f32.mrf.mxu0
        %v2065 = vadd.f32 %v2036, %v2064
        %v2066 = vpop.f32.mrf.mxu0
        %v2067 = vadd.f32 %v2038, %v2066
        %2068 = vmatmul.bf16.gmra.mxu0 %v1891
        %v2069 = vpop.f32.mrf.mxu0
        %v2070 = vadd.f32 %v2041, %v2069
        %v2071 = vpop.f32.mrf.mxu0
        %v2072 = vadd.f32 %v2043, %v2071
        %2073 = vmatmul.bf16.gmra.mxu0 %v1892
        %v2074 = vpop.f32.mrf.mxu0
        %v2075 = vadd.f32 %v2046, %v2074
        %v2076 = vpop.f32.mrf.mxu0
        %v2077 = vadd.f32 %v2048, %v2076
        %2078 = vmatmul.bf16.gmra.mxu0 %v1893
        %v2079 = vpop.f32.mrf.mxu0
        %v2080 = vadd.f32 %v2051, %v2079
        %v2081 = vpop.f32.mrf.mxu0
        %v2082 = vadd.f32 %v2053, %v2081
        %2083 = vdwg.mxu0
        %v2116 = vunpack.c.l.b16 %v1759
        %v2117 = vunpack.c.l.b16 %v1760
        %v2118 = vunpack.c.l.b16 %v1761
        %v2119 = vunpack.c.l.b16 %v1762
        %v2120 = vunpack.c.l.b16 %v1763
        %v2121 = vunpack.c.l.b16 %v1764
        %v2122 = vunpack.c.l.b16 %v1765
        %v2123 = vunpack.c.l.b16 %v1766
        %v2124 = vunpack.c.l.b16 %v1767
        %v2125 = vunpack.c.l.b16 %v1768
        %v2126 = vunpack.c.l.b16 %v1769
        %v2127 = vunpack.c.l.b16 %v1770
        %v2128 = vunpack.c.l.b16 %v1771
        %v2129 = vunpack.c.l.b16 %v1772
        %v2130 = vunpack.c.l.b16 %v1773
        %v2131 = vunpack.c.l.b16 %v1774
        %v2132 = vunpack.c.l.b16 %v1775
        %v2133 = vunpack.c.l.b16 %v1776
        %v2134 = vunpack.c.l.b16 %v1777
        %v2135 = vunpack.c.l.b16 %v1778
        %v2136 = vunpack.c.l.b16 %v1779
        %v2137 = vunpack.c.l.b16 %v1780
        %v2138 = vunpack.c.l.b16 %v1781
        %v2139 = vunpack.c.l.b16 %v1782
        %v2140 = vunpack.c.l.b16 %v1783
        %v2141 = vunpack.c.l.b16 %v1784
        %v2142 = vunpack.c.l.b16 %v1785
        %v2143 = vunpack.c.l.b16 %v1786
        %v2144 = vunpack.c.l.b16 %v1787
        %v2145 = vunpack.c.l.b16 %v1788
        %v2146 = vunpack.c.l.b16 %v1789
        %v2147 = vunpack.c.l.b16 %v1790
        %v2148 = vpack.c.b16 %v2117, %v2116
        %v2149 = vpack.c.b16 %v2119, %v2118
        %v2150 = vpack.c.b16 %v2121, %v2120
        %v2151 = vpack.c.b16 %v2123, %v2122
        %v2152 = vpack.c.b16 %v2125, %v2124
        %v2153 = vpack.c.b16 %v2127, %v2126
        %v2154 = vpack.c.b16 %v2129, %v2128
        %v2155 = vpack.c.b16 %v2131, %v2130
        %v2156 = vpack.c.b16 %v2133, %v2132
        %v2157 = vpack.c.b16 %v2135, %v2134
        %v2158 = vpack.c.b16 %v2137, %v2136
        %v2159 = vpack.c.b16 %v2139, %v2138
        %v2160 = vpack.c.b16 %v2141, %v2140
        %v2161 = vpack.c.b16 %v2143, %v2142
        %v2162 = vpack.c.b16 %v2145, %v2144
        %v2163 = vpack.c.b16 %v2147, %v2146
        %2180 = vmatpush.bf16.msra.mxu0 %v2155
        %2181 = vmatpush.bf16.msra.mxu0 %v2154
        %2182 = vmatpush.bf16.msra.mxu0 %v2153
        %2183 = vmatpush.bf16.msra.mxu0 %v2152
        %2184 = vmatpush.bf16.msra.mxu0 %v2151
        %2185 = vmatpush.bf16.msra.mxu0 %v2150
        %2186 = vmatpush.bf16.msra.mxu0 %v2149
        %2187 = vmatpush.bf16.msra.mxu0 %v2148
        %2188 = vmatmul.bf16.gmra.mxu0 %v1735
        %v2189 = vpop.f32.mrf.mxu0
        %v2190 = vadd.f32 %v2065, %v2189
        %v2191 = vpop.f32.mrf.mxu0
        %v2192 = vadd.f32 %v2067, %v2191
        %2193 = vmatmul.bf16.gmra.mxu0 %v1736
        %v2194 = vpop.f32.mrf.mxu0
        %v2195 = vadd.f32 %v2070, %v2194
        %v2196 = vpop.f32.mrf.mxu0
        %v2197 = vadd.f32 %v2072, %v2196
        %2198 = vmatmul.bf16.gmra.mxu0 %v1737
        %v2199 = vpop.f32.mrf.mxu0
        %v2200 = vadd.f32 %v2075, %v2199
        %v2201 = vpop.f32.mrf.mxu0
        %v2202 = vadd.f32 %v2077, %v2201
        %2203 = vmatmul.bf16.gmra.mxu0 %v1738
        %v2204 = vpop.f32.mrf.mxu0
        %v2205 = vadd.f32 %v2080, %v2204
        %v2206 = vpop.f32.mrf.mxu0
        %v2207 = vadd.f32 %v2082, %v2206
        %2208 = vdwg.mxu0
        %2209 = vmatpush.bf16.msra.mxu0 %v2163
        %2210 = vmatpush.bf16.msra.mxu0 %v2162
        %2211 = vmatpush.bf16.msra.mxu0 %v2161
        %2212 = vmatpush.bf16.msra.mxu0 %v2160
        %2213 = vmatpush.bf16.msra.mxu0 %v2159
        %2214 = vmatpush.bf16.msra.mxu0 %v2158
        %2215 = vmatpush.bf16.msra.mxu0 %v2157
        %2216 = vmatpush.bf16.msra.mxu0 %v2156
        %2217 = vmatmul.bf16.gmra.mxu0 %v1751
        %v2218 = vpop.f32.mrf.mxu0
        %v2219 = vadd.f32 %v2190, %v2218
        %v2220 = vpop.f32.mrf.mxu0
        %v2221 = vadd.f32 %v2192, %v2220
        %2222 = vmatmul.bf16.gmra.mxu0 %v1752
        %v2223 = vpop.f32.mrf.mxu0
        %v2224 = vadd.f32 %v2195, %v2223
        %v2225 = vpop.f32.mrf.mxu0
        %v2226 = vadd.f32 %v2197, %v2225
        %2227 = vmatmul.bf16.gmra.mxu0 %v1753
        %v2228 = vpop.f32.mrf.mxu0
        %v2229 = vadd.f32 %v2200, %v2228
        %v2230 = vpop.f32.mrf.mxu0
        %v2231 = vadd.f32 %v2202, %v2230
        %2232 = vmatmul.bf16.gmra.mxu0 %v1754
        %v2233 = vpop.f32.mrf.mxu0
        %v2234 = vadd.f32 %v2205, %v2233
        %v2235 = vpop.f32.mrf.mxu0
        %v2236 = vadd.f32 %v2207, %v2235
        %2237 = vdwg.mxu0
        %v2238 = vld [vmem:[%s1536] sm:$0xf]
        %v2239 = vld [vmem:[%s1536 + $0x4] sm:$0x1]
        %v2240 = vld [vmem:[%s1536 + $0x8] sm:$0xf]
        %v2241 = vld [vmem:[%s1536 + $0xc] sm:$0x1]
        %v2242 = vld [vmem:[%s1536 + $0x10] sm:$0xf]
        %v2243 = vld [vmem:[%s1536 + $0x14] sm:$0x1]
        %v2244 = vld [vmem:[%s1536 + $0x18] sm:$0xf]
        %v2245 = vld [vmem:[%s1536 + $0x1c] sm:$0x1]
        %v2246 = vld [vmem:[%s1536 + $0x20] sm:$0xf]
        %v2247 = vld [vmem:[%s1536 + $0x24] sm:$0x1]
        %v2248 = vld [vmem:[%s1536 + $0x28] sm:$0xf]
        %v2249 = vld [vmem:[%s1536 + $0x2c] sm:$0x1]
        %v2250 = vld [vmem:[%s1536 + $0x30] sm:$0xf]
        %v2251 = vld [vmem:[%s1536 + $0x34] sm:$0x1]
        %v2252 = vld [vmem:[%s1536 + $0x38] sm:$0xf]
        %v2253 = vld [vmem:[%s1536 + $0x3c] sm:$0x1]
        %v2255 = vshrl.u32 %v2238, 16
        %v2257 = vrot.slane %v2255, 4
        %v2258 = vshll.u32 %v2238, 16
        %v2260 = vrot.slane %v2258, 5
        %v2261 = vor.u32 %v2257, %v2260
        %v2262 = vrot.slane %v2261, 4
        %v2264 = vshll.u32 %v2239, 16
        %v2266 = vrot.slane %v2264, 5
        %v2267 = vsel %vm305, %v2262, %v2266
        %v2269 = vshrl.u32 %v2240, 16
        %v2271 = vrot.slane %v2269, 4
        %v2272 = vshll.u32 %v2240, 16
        %v2274 = vrot.slane %v2272, 5
        %v2275 = vor.u32 %v2271, %v2274
        %v2276 = vrot.slane %v2275, 4
        %v2278 = vshll.u32 %v2241, 16
        %v2280 = vrot.slane %v2278, 5
        %v2281 = vsel %vm305, %v2276, %v2280
        %v2283 = vshrl.u32 %v2242, 16
        %v2285 = vrot.slane %v2283, 4
        %v2286 = vshll.u32 %v2242, 16
        %v2288 = vrot.slane %v2286, 5
        %v2289 = vor.u32 %v2285, %v2288
        %v2290 = vrot.slane %v2289, 4
        %v2292 = vshll.u32 %v2243, 16
        %v2294 = vrot.slane %v2292, 5
        %v2295 = vsel %vm305, %v2290, %v2294
        %v2297 = vshrl.u32 %v2244, 16
        %v2299 = vrot.slane %v2297, 4
        %v2300 = vshll.u32 %v2244, 16
        %v2302 = vrot.slane %v2300, 5
        %v2303 = vor.u32 %v2299, %v2302
        %v2304 = vrot.slane %v2303, 4
        %v2306 = vshll.u32 %v2245, 16
        %v2308 = vrot.slane %v2306, 5
        %v2309 = vsel %vm305, %v2304, %v2308
        %v2311 = vshrl.u32 %v2246, 16
        %v2313 = vrot.slane %v2311, 4
        %v2314 = vshll.u32 %v2246, 16
        %v2316 = vrot.slane %v2314, 5
        %v2317 = vor.u32 %v2313, %v2316
        %v2318 = vrot.slane %v2317, 4
        %v2320 = vshll.u32 %v2247, 16
        %v2322 = vrot.slane %v2320, 5
        %v2323 = vsel %vm305, %v2318, %v2322
        %v2325 = vshrl.u32 %v2248, 16
        %v2327 = vrot.slane %v2325, 4
        %v2328 = vshll.u32 %v2248, 16
        %v2330 = vrot.slane %v2328, 5
        %v2331 = vor.u32 %v2327, %v2330
        %v2332 = vrot.slane %v2331, 4
        %v2334 = vshll.u32 %v2249, 16
        %v2336 = vrot.slane %v2334, 5
        %v2337 = vsel %vm305, %v2332, %v2336
        %v2339 = vshrl.u32 %v2250, 16
        %v2341 = vrot.slane %v2339, 4
        %v2342 = vshll.u32 %v2250, 16
        %v2344 = vrot.slane %v2342, 5
        %v2345 = vor.u32 %v2341, %v2344
        %v2346 = vrot.slane %v2345, 4
        %v2348 = vshll.u32 %v2251, 16
        %v2350 = vrot.slane %v2348, 5
        %v2351 = vsel %vm305, %v2346, %v2350
        %v2353 = vshrl.u32 %v2252, 16
        %v2355 = vrot.slane %v2353, 4
        %v2356 = vshll.u32 %v2252, 16
        %v2358 = vrot.slane %v2356, 5
        %v2359 = vor.u32 %v2355, %v2358
        %v2360 = vrot.slane %v2359, 4
        %v2362 = vshll.u32 %v2253, 16
        %v2364 = vrot.slane %v2362, 5
        %v2365 = vsel %vm305, %v2360, %v2364
        %v2366 = vld [vmem:[%s1536] sm:$0xe]
        %v2367 = vld [vmem:[%s1536 + $0x8] sm:$0xe]
        %v2368 = vld [vmem:[%s1536 + $0x10] sm:$0xe]
        %v2369 = vld [vmem:[%s1536 + $0x18] sm:$0xe]
        %v2370 = vld [vmem:[%s1536 + $0x20] sm:$0xe]
        %v2371 = vld [vmem:[%s1536 + $0x28] sm:$0xe]
        %v2372 = vld [vmem:[%s1536 + $0x30] sm:$0xe]
        %v2373 = vld [vmem:[%s1536 + $0x38] sm:$0xe]
        %v2390 = vrot.slane %v2366, 5
        %v2391 = vrot.slane %v2390, 4
        %v2392 = vrot.slane %v2239, 5
        %v2393 = vsel %vm1817, %v2391, %v2392
        %v2394 = vrot.slane %v2367, 5
        %v2395 = vrot.slane %v2394, 4
        %v2396 = vrot.slane %v2241, 5
        %v2397 = vsel %vm1817, %v2395, %v2396
        %v2398 = vrot.slane %v2368, 5
        %v2399 = vrot.slane %v2398, 4
        %v2400 = vrot.slane %v2243, 5
        %v2401 = vsel %vm1817, %v2399, %v2400
        %v2402 = vrot.slane %v2369, 5
        %v2403 = vrot.slane %v2402, 4
        %v2404 = vrot.slane %v2245, 5
        %v2405 = vsel %vm1817, %v2403, %v2404
        %v2406 = vrot.slane %v2370, 5
        %v2407 = vrot.slane %v2406, 4
        %v2408 = vrot.slane %v2247, 5
        %v2409 = vsel %vm1817, %v2407, %v2408
        %v2410 = vrot.slane %v2371, 5
        %v2411 = vrot.slane %v2410, 4
        %v2412 = vrot.slane %v2249, 5
        %v2413 = vsel %vm1817, %v2411, %v2412
        %v2414 = vrot.slane %v2372, 5
        %v2415 = vrot.slane %v2414, 4
        %v2416 = vrot.slane %v2251, 5
        %v2417 = vsel %vm1817, %v2415, %v2416
        %v2418 = vrot.slane %v2373, 5
        %v2419 = vrot.slane %v2418, 4
        %v2420 = vrot.slane %v2253, 5
        %v2421 = vsel %vm1817, %v2419, %v2420
        %v2422 = vunpack.c.l.b16 %v2267
        %v2423 = vunpack.c.l.b16 %v2281
        %v2424 = vunpack.c.l.b16 %v2295
        %v2425 = vunpack.c.l.b16 %v2309
        %v2426 = vunpack.c.l.b16 %v2323
        %v2427 = vunpack.c.l.b16 %v2337
        %v2428 = vunpack.c.l.b16 %v2351
        %v2429 = vunpack.c.l.b16 %v2365
        %v2430 = vpack.c.b16 %v2423, %v2422
        %v2431 = vpack.c.b16 %v2425, %v2424
        %v2432 = vpack.c.b16 %v2427, %v2426
        %v2433 = vpack.c.b16 %v2429, %v2428
        %v2438 = vunpack.c.l.b16 %v2393
        %v2439 = vunpack.c.l.b16 %v2397
        %v2440 = vunpack.c.l.b16 %v2401
        %v2441 = vunpack.c.l.b16 %v2405
        %v2442 = vunpack.c.l.b16 %v2409
        %v2443 = vunpack.c.l.b16 %v2413
        %v2444 = vunpack.c.l.b16 %v2417
        %v2445 = vunpack.c.l.b16 %v2421
        %v2446 = vpack.c.b16 %v2439, %v2438
        %v2447 = vpack.c.b16 %v2441, %v2440
        %v2448 = vpack.c.b16 %v2443, %v2442
        %v2449 = vpack.c.b16 %v2445, %v2444
        %v2454 = vld [vmem:[%s3 + $0x100] sm:$0xf]
        %v2455 = vld [vmem:[%s3 + $0x104] sm:$0xf]
        %v2456 = vld [vmem:[%s3 + $0x108] sm:$0xf]
        %v2457 = vld [vmem:[%s3 + $0x10c] sm:$0xf]
        %v2458 = vld [vmem:[%s3 + $0x110] sm:$0xf]
        %v2459 = vld [vmem:[%s3 + $0x114] sm:$0xf]
        %v2460 = vld [vmem:[%s3 + $0x118] sm:$0xf]
        %v2461 = vld [vmem:[%s3 + $0x11c] sm:$0xf]
        %v2462 = vld [vmem:[%s3 + $0x120] sm:$0xf]
        %v2463 = vld [vmem:[%s3 + $0x124] sm:$0xf]
        %v2464 = vld [vmem:[%s3 + $0x128] sm:$0xf]
        %v2465 = vld [vmem:[%s3 + $0x12c] sm:$0xf]
        %v2466 = vld [vmem:[%s3 + $0x130] sm:$0xf]
        %v2467 = vld [vmem:[%s3 + $0x134] sm:$0xf]
        %v2468 = vld [vmem:[%s3 + $0x138] sm:$0xf]
        %v2469 = vld [vmem:[%s3 + $0x13c] sm:$0xf]
        %v2470 = vld [vmem:[%s3 + $0x140] sm:$0xf]
        %v2471 = vld [vmem:[%s3 + $0x144] sm:$0xf]
        %v2472 = vld [vmem:[%s3 + $0x148] sm:$0xf]
        %v2473 = vld [vmem:[%s3 + $0x14c] sm:$0xf]
        %v2474 = vld [vmem:[%s3 + $0x150] sm:$0xf]
        %v2475 = vld [vmem:[%s3 + $0x154] sm:$0xf]
        %v2476 = vld [vmem:[%s3 + $0x158] sm:$0xf]
        %v2477 = vld [vmem:[%s3 + $0x15c] sm:$0xf]
        %v2478 = vld [vmem:[%s3 + $0x160] sm:$0xf]
        %v2479 = vld [vmem:[%s3 + $0x164] sm:$0xf]
        %v2480 = vld [vmem:[%s3 + $0x168] sm:$0xf]
        %v2481 = vld [vmem:[%s3 + $0x16c] sm:$0xf]
        %v2482 = vld [vmem:[%s3 + $0x170] sm:$0xf]
        %v2483 = vld [vmem:[%s3 + $0x174] sm:$0xf]
        %v2484 = vld [vmem:[%s3 + $0x178] sm:$0xf]
        %v2485 = vld [vmem:[%s3 + $0x17c] sm:$0xf]
        %v2518 = vunpack.c.l.b16 %v2454
        %v2519 = vunpack.c.l.b16 %v2455
        %v2520 = vunpack.c.l.b16 %v2456
        %v2521 = vunpack.c.l.b16 %v2457
        %v2522 = vunpack.c.l.b16 %v2458
        %v2523 = vunpack.c.l.b16 %v2459
        %v2524 = vunpack.c.l.b16 %v2460
        %v2525 = vunpack.c.l.b16 %v2461
        %v2526 = vunpack.c.l.b16 %v2462
        %v2527 = vunpack.c.l.b16 %v2463
        %v2528 = vunpack.c.l.b16 %v2464
        %v2529 = vunpack.c.l.b16 %v2465
        %v2530 = vunpack.c.l.b16 %v2466
        %v2531 = vunpack.c.l.b16 %v2467
        %v2532 = vunpack.c.l.b16 %v2468
        %v2533 = vunpack.c.l.b16 %v2469
        %v2534 = vunpack.c.l.b16 %v2470
        %v2535 = vunpack.c.l.b16 %v2471
        %v2536 = vunpack.c.l.b16 %v2472
        %v2537 = vunpack.c.l.b16 %v2473
        %v2538 = vunpack.c.l.b16 %v2474
        %v2539 = vunpack.c.l.b16 %v2475
        %v2540 = vunpack.c.l.b16 %v2476
        %v2541 = vunpack.c.l.b16 %v2477
        %v2542 = vunpack.c.l.b16 %v2478
        %v2543 = vunpack.c.l.b16 %v2479
        %v2544 = vunpack.c.l.b16 %v2480
        %v2545 = vunpack.c.l.b16 %v2481
        %v2546 = vunpack.c.l.b16 %v2482
        %v2547 = vunpack.c.l.b16 %v2483
        %v2548 = vunpack.c.l.b16 %v2484
        %v2549 = vunpack.c.l.b16 %v2485
        %v2550 = vpack.c.b16 %v2519, %v2518
        %v2551 = vpack.c.b16 %v2521, %v2520
        %v2552 = vpack.c.b16 %v2523, %v2522
        %v2553 = vpack.c.b16 %v2525, %v2524
        %v2554 = vpack.c.b16 %v2527, %v2526
        %v2555 = vpack.c.b16 %v2529, %v2528
        %v2556 = vpack.c.b16 %v2531, %v2530
        %v2557 = vpack.c.b16 %v2533, %v2532
        %v2558 = vpack.c.b16 %v2535, %v2534
        %v2559 = vpack.c.b16 %v2537, %v2536
        %v2560 = vpack.c.b16 %v2539, %v2538
        %v2561 = vpack.c.b16 %v2541, %v2540
        %v2562 = vpack.c.b16 %v2543, %v2542
        %v2563 = vpack.c.b16 %v2545, %v2544
        %v2564 = vpack.c.b16 %v2547, %v2546
        %v2565 = vpack.c.b16 %v2549, %v2548
        %2582 = vmatpush.bf16.msra.mxu0 %v2557
        %2583 = vmatpush.bf16.msra.mxu0 %v2556
        %2584 = vmatpush.bf16.msra.mxu0 %v2555
        %2585 = vmatpush.bf16.msra.mxu0 %v2554
        %2586 = vmatpush.bf16.msra.mxu0 %v2553
        %2587 = vmatpush.bf16.msra.mxu0 %v2552
        %2588 = vmatpush.bf16.msra.mxu0 %v2551
        %2589 = vmatpush.bf16.msra.mxu0 %v2550
        %2590 = vmatmul.bf16.gmra.mxu0 %v2430
        %v2591 = vpop.f32.mrf.mxu0
        %v2592 = vadd.f32 0.0, %v2591
        %v2593 = vpop.f32.mrf.mxu0
        %v2594 = vadd.f32 0.0, %v2593
        %2595 = vmatmul.bf16.gmra.mxu0 %v2431
        %v2596 = vpop.f32.mrf.mxu0
        %v2597 = vadd.f32 0.0, %v2596
        %v2598 = vpop.f32.mrf.mxu0
        %v2599 = vadd.f32 0.0, %v2598
        %2600 = vmatmul.bf16.gmra.mxu0 %v2432
        %v2601 = vpop.f32.mrf.mxu0
        %v2602 = vadd.f32 0.0, %v2601
        %v2603 = vpop.f32.mrf.mxu0
        %v2604 = vadd.f32 0.0, %v2603
        %2605 = vmatmul.bf16.gmra.mxu0 %v2433
        %v2606 = vpop.f32.mrf.mxu0
        %v2607 = vadd.f32 0.0, %v2606
        %v2608 = vpop.f32.mrf.mxu0
        %v2609 = vadd.f32 0.0, %v2608
        %2610 = vdwg.mxu0
        %2611 = vmatpush.bf16.msra.mxu0 %v2565
        %2612 = vmatpush.bf16.msra.mxu0 %v2564
        %2613 = vmatpush.bf16.msra.mxu0 %v2563
        %2614 = vmatpush.bf16.msra.mxu0 %v2562
        %2615 = vmatpush.bf16.msra.mxu0 %v2561
        %2616 = vmatpush.bf16.msra.mxu0 %v2560
        %2617 = vmatpush.bf16.msra.mxu0 %v2559
        %2618 = vmatpush.bf16.msra.mxu0 %v2558
        %2619 = vmatmul.bf16.gmra.mxu0 %v2446
        %v2620 = vpop.f32.mrf.mxu0
        %v2621 = vadd.f32 %v2592, %v2620
        %v2622 = vpop.f32.mrf.mxu0
        %v2623 = vadd.f32 %v2594, %v2622
        %2624 = vmatmul.bf16.gmra.mxu0 %v2447
        %v2625 = vpop.f32.mrf.mxu0
        %v2626 = vadd.f32 %v2597, %v2625
        %v2627 = vpop.f32.mrf.mxu0
        %v2628 = vadd.f32 %v2599, %v2627
        %2629 = vmatmul.bf16.gmra.mxu0 %v2448
        %v2630 = vpop.f32.mrf.mxu0
        %v2631 = vadd.f32 %v2602, %v2630
        %v2632 = vpop.f32.mrf.mxu0
        %v2633 = vadd.f32 %v2604, %v2632
        %2634 = vmatmul.bf16.gmra.mxu0 %v2449
        %v2635 = vpop.f32.mrf.mxu0
        %v2636 = vadd.f32 %v2607, %v2635
        %v2637 = vpop.f32.mrf.mxu0
        %v2638 = vadd.f32 %v2609, %v2637
        %2639 = vdwg.mxu0
        %v2640 = vadd.f32 %v2219, %v2621
        %v2641 = vadd.f32 %v2221, %v2623
        %v2642 = vadd.f32 %v2224, %v2626
        %v2643 = vadd.f32 %v2226, %v2628
        %v2644 = vadd.f32 %v2229, %v2631
        %v2645 = vadd.f32 %v2231, %v2633
        %v2646 = vadd.f32 %v2234, %v2636
        %v2647 = vadd.f32 %v2236, %v2638
        %s2648 = scalar_lea.vmem [#allocation2], 16
        %v2649 = vld [vmem:[%s2648] sm:$0xf]
        %v2650 = vld [vmem:[%s2648 + $0x8] sm:$0xf]
        %v2651 = vld [vmem:[%s2648 + $0x10] sm:$0xf]
        %v2652 = vld [vmem:[%s2648 + $0x18] sm:$0xf]
        %v2653 = vld [vmem:[%s2648 + $0x20] sm:$0xf]
        %v2654 = vld [vmem:[%s2648 + $0x28] sm:$0xf]
        %v2655 = vld [vmem:[%s2648 + $0x30] sm:$0xf]
        %v2656 = vld [vmem:[%s2648 + $0x38] sm:$0xf]
        %v2657 = vld [vmem:[%s2648 + $0x4] sm:$0x1]
        %v2658 = vld [vmem:[%s2648 + $0xc] sm:$0x1]
        %v2659 = vld [vmem:[%s2648 + $0x14] sm:$0x1]
        %v2660 = vld [vmem:[%s2648 + $0x1c] sm:$0x1]
        %v2661 = vld [vmem:[%s2648 + $0x24] sm:$0x1]
        %v2662 = vld [vmem:[%s2648 + $0x2c] sm:$0x1]
        %v2663 = vld [vmem:[%s2648 + $0x34] sm:$0x1]
        %v2664 = vld [vmem:[%s2648 + $0x3c] sm:$0x1]
        %v2666 = vshrl.u32 %v2649, 16
        %v2668 = vrot.slane %v2666, 4
        %v2669 = vshll.u32 %v2649, 16
        %v2671 = vrot.slane %v2669, 5
        %v2672 = vor.u32 %v2668, %v2671
        %v2673 = vrot.slane %v2672, 4
        %v2675 = vshll.u32 %v2657, 16
        %v2677 = vrot.slane %v2675, 5
        %v2678 = vsel %vm305, %v2673, %v2677
        %v2680 = vshrl.u32 %v2650, 16
        %v2682 = vrot.slane %v2680, 4
        %v2683 = vshll.u32 %v2650, 16
        %v2685 = vrot.slane %v2683, 5
        %v2686 = vor.u32 %v2682, %v2685
        %v2687 = vrot.slane %v2686, 4
        %v2689 = vshll.u32 %v2658, 16
        %v2691 = vrot.slane %v2689, 5
        %v2692 = vsel %vm305, %v2687, %v2691
        %v2694 = vshrl.u32 %v2651, 16
        %v2696 = vrot.slane %v2694, 4
        %v2697 = vshll.u32 %v2651, 16
        %v2699 = vrot.slane %v2697, 5
        %v2700 = vor.u32 %v2696, %v2699
        %v2701 = vrot.slane %v2700, 4
        %v2703 = vshll.u32 %v2659, 16
        %v2705 = vrot.slane %v2703, 5
        %v2706 = vsel %vm305, %v2701, %v2705
        %v2708 = vshrl.u32 %v2652, 16
        %v2710 = vrot.slane %v2708, 4
        %v2711 = vshll.u32 %v2652, 16
        %v2713 = vrot.slane %v2711, 5
        %v2714 = vor.u32 %v2710, %v2713
        %v2715 = vrot.slane %v2714, 4
        %v2717 = vshll.u32 %v2660, 16
        %v2719 = vrot.slane %v2717, 5
        %v2720 = vsel %vm305, %v2715, %v2719
        %v2722 = vshrl.u32 %v2653, 16
        %v2724 = vrot.slane %v2722, 4
        %v2725 = vshll.u32 %v2653, 16
        %v2727 = vrot.slane %v2725, 5
        %v2728 = vor.u32 %v2724, %v2727
        %v2729 = vrot.slane %v2728, 4
        %v2731 = vshll.u32 %v2661, 16
        %v2733 = vrot.slane %v2731, 5
        %v2734 = vsel %vm305, %v2729, %v2733
        %v2736 = vshrl.u32 %v2654, 16
        %v2738 = vrot.slane %v2736, 4
        %v2739 = vshll.u32 %v2654, 16
        %v2741 = vrot.slane %v2739, 5
        %v2742 = vor.u32 %v2738, %v2741
        %v2743 = vrot.slane %v2742, 4
        %v2745 = vshll.u32 %v2662, 16
        %v2747 = vrot.slane %v2745, 5
        %v2748 = vsel %vm305, %v2743, %v2747
        %v2750 = vshrl.u32 %v2655, 16
        %v2752 = vrot.slane %v2750, 4
        %v2753 = vshll.u32 %v2655, 16
        %v2755 = vrot.slane %v2753, 5
        %v2756 = vor.u32 %v2752, %v2755
        %v2757 = vrot.slane %v2756, 4
        %v2759 = vshll.u32 %v2663, 16
        %v2761 = vrot.slane %v2759, 5
        %v2762 = vsel %vm305, %v2757, %v2761
        %v2764 = vshrl.u32 %v2656, 16
        %v2766 = vrot.slane %v2764, 4
        %v2767 = vshll.u32 %v2656, 16
        %v2769 = vrot.slane %v2767, 5
        %v2770 = vor.u32 %v2766, %v2769
        %v2771 = vrot.slane %v2770, 4
        %v2773 = vshll.u32 %v2664, 16
        %v2775 = vrot.slane %v2773, 5
        %v2776 = vsel %vm305, %v2771, %v2775
        %v2785 = vunpack.c.l.b16 %v2649
        %v2786 = vunpack.c.l.b16 %v2650
        %v2787 = vunpack.c.l.b16 %v2651
        %v2788 = vunpack.c.l.b16 %v2652
        %v2789 = vunpack.c.l.b16 %v2653
        %v2790 = vunpack.c.l.b16 %v2654
        %v2791 = vunpack.c.l.b16 %v2655
        %v2792 = vunpack.c.l.b16 %v2656
        %v2793 = vpack.c.b16 %v2786, %v2785
        %v2794 = vpack.c.b16 %v2788, %v2787
        %v2795 = vpack.c.b16 %v2790, %v2789
        %v2796 = vpack.c.b16 %v2792, %v2791
        %v2801 = vunpack.c.l.b16 %v2678
        %v2802 = vunpack.c.l.b16 %v2692
        %v2803 = vunpack.c.l.b16 %v2706
        %v2804 = vunpack.c.l.b16 %v2720
        %v2805 = vunpack.c.l.b16 %v2734
        %v2806 = vunpack.c.l.b16 %v2748
        %v2807 = vunpack.c.l.b16 %v2762
        %v2808 = vunpack.c.l.b16 %v2776
        %v2809 = vpack.c.b16 %v2802, %v2801
        %v2810 = vpack.c.b16 %v2804, %v2803
        %v2811 = vpack.c.b16 %v2806, %v2805
        %v2812 = vpack.c.b16 %v2808, %v2807
        %v2817 = vld [vmem:[%s3 + $0x180] sm:$0xf]
        %v2818 = vld [vmem:[%s3 + $0x184] sm:$0xf]
        %v2819 = vld [vmem:[%s3 + $0x188] sm:$0xf]
        %v2820 = vld [vmem:[%s3 + $0x18c] sm:$0xf]
        %v2821 = vld [vmem:[%s3 + $0x190] sm:$0xf]
        %v2822 = vld [vmem:[%s3 + $0x194] sm:$0xf]
        %v2823 = vld [vmem:[%s3 + $0x198] sm:$0xf]
        %v2824 = vld [vmem:[%s3 + $0x19c] sm:$0xf]
        %v2825 = vld [vmem:[%s3 + $0x1a0] sm:$0xf]
        %v2826 = vld [vmem:[%s3 + $0x1a4] sm:$0xf]
        %v2827 = vld [vmem:[%s3 + $0x1a8] sm:$0xf]
        %v2828 = vld [vmem:[%s3 + $0x1ac] sm:$0xf]
        %v2829 = vld [vmem:[%s3 + $0x1b0] sm:$0xf]
        %v2830 = vld [vmem:[%s3 + $0x1b4] sm:$0xf]
        %v2831 = vld [vmem:[%s3 + $0x1b8] sm:$0xf]
        %v2832 = vld [vmem:[%s3 + $0x1bc] sm:$0xf]
        %v2833 = vld [vmem:[%s3 + $0x1c0] sm:$0xf]
        %v2834 = vld [vmem:[%s3 + $0x1c4] sm:$0xf]
        %v2835 = vld [vmem:[%s3 + $0x1c8] sm:$0xf]
        %v2836 = vld [vmem:[%s3 + $0x1cc] sm:$0xf]
        %v2837 = vld [vmem:[%s3 + $0x1d0] sm:$0xf]
        %v2838 = vld [vmem:[%s3 + $0x1d4] sm:$0xf]
        %v2839 = vld [vmem:[%s3 + $0x1d8] sm:$0xf]
        %v2840 = vld [vmem:[%s3 + $0x1dc] sm:$0xf]
        %v2841 = vld [vmem:[%s3 + $0x1e0] sm:$0xf]
        %v2842 = vld [vmem:[%s3 + $0x1e4] sm:$0xf]
        %v2843 = vld [vmem:[%s3 + $0x1e8] sm:$0xf]
        %v2844 = vld [vmem:[%s3 + $0x1ec] sm:$0xf]
        %v2845 = vld [vmem:[%s3 + $0x1f0] sm:$0xf]
        %v2846 = vld [vmem:[%s3 + $0x1f4] sm:$0xf]
        %v2847 = vld [vmem:[%s3 + $0x1f8] sm:$0xf]
        %v2848 = vld [vmem:[%s3 + $0x1fc] sm:$0xf]
        %v2881 = vunpack.c.l.b16 %v2817
        %v2882 = vunpack.c.l.b16 %v2818
        %v2883 = vunpack.c.l.b16 %v2819
        %v2884 = vunpack.c.l.b16 %v2820
        %v2885 = vunpack.c.l.b16 %v2821
        %v2886 = vunpack.c.l.b16 %v2822
        %v2887 = vunpack.c.l.b16 %v2823
        %v2888 = vunpack.c.l.b16 %v2824
        %v2889 = vunpack.c.l.b16 %v2825
        %v2890 = vunpack.c.l.b16 %v2826
        %v2891 = vunpack.c.l.b16 %v2827
        %v2892 = vunpack.c.l.b16 %v2828
        %v2893 = vunpack.c.l.b16 %v2829
        %v2894 = vunpack.c.l.b16 %v2830
        %v2895 = vunpack.c.l.b16 %v2831
        %v2896 = vunpack.c.l.b16 %v2832
        %v2897 = vunpack.c.l.b16 %v2833
        %v2898 = vunpack.c.l.b16 %v2834
        %v2899 = vunpack.c.l.b16 %v2835
        %v2900 = vunpack.c.l.b16 %v2836
        %v2901 = vunpack.c.l.b16 %v2837
        %v2902 = vunpack.c.l.b16 %v2838
        %v2903 = vunpack.c.l.b16 %v2839
        %v2904 = vunpack.c.l.b16 %v2840
        %v2905 = vunpack.c.l.b16 %v2841
        %v2906 = vunpack.c.l.b16 %v2842
        %v2907 = vunpack.c.l.b16 %v2843
        %v2908 = vunpack.c.l.b16 %v2844
        %v2909 = vunpack.c.l.b16 %v2845
        %v2910 = vunpack.c.l.b16 %v2846
        %v2911 = vunpack.c.l.b16 %v2847
        %v2912 = vunpack.c.l.b16 %v2848
        %v2913 = vpack.c.b16 %v2882, %v2881
        %v2914 = vpack.c.b16 %v2884, %v2883
        %v2915 = vpack.c.b16 %v2886, %v2885
        %v2916 = vpack.c.b16 %v2888, %v2887
        %v2917 = vpack.c.b16 %v2890, %v2889
        %v2918 = vpack.c.b16 %v2892, %v2891
        %v2919 = vpack.c.b16 %v2894, %v2893
        %v2920 = vpack.c.b16 %v2896, %v2895
        %v2921 = vpack.c.b16 %v2898, %v2897
        %v2922 = vpack.c.b16 %v2900, %v2899
        %v2923 = vpack.c.b16 %v2902, %v2901
        %v2924 = vpack.c.b16 %v2904, %v2903
        %v2925 = vpack.c.b16 %v2906, %v2905
        %v2926 = vpack.c.b16 %v2908, %v2907
        %v2927 = vpack.c.b16 %v2910, %v2909
        %v2928 = vpack.c.b16 %v2912, %v2911
        %2945 = vmatpush.bf16.msra.mxu0 %v2920
        %2946 = vmatpush.bf16.msra.mxu0 %v2919
        %2947 = vmatpush.bf16.msra.mxu0 %v2918
        %2948 = vmatpush.bf16.msra.mxu0 %v2917
        %2949 = vmatpush.bf16.msra.mxu0 %v2916
        %2950 = vmatpush.bf16.msra.mxu0 %v2915
        %2951 = vmatpush.bf16.msra.mxu0 %v2914
        %2952 = vmatpush.bf16.msra.mxu0 %v2913
        %2953 = vmatmul.bf16.gmra.mxu0 %v2793
        %v2954 = vpop.f32.mrf.mxu0
        %v2955 = vadd.f32 0.0, %v2954
        %v2956 = vpop.f32.mrf.mxu0
        %v2957 = vadd.f32 0.0, %v2956
        %2958 = vmatmul.bf16.gmra.mxu0 %v2794
        %v2959 = vpop.f32.mrf.mxu0
        %v2960 = vadd.f32 0.0, %v2959
        %v2961 = vpop.f32.mrf.mxu0
        %v2962 = vadd.f32 0.0, %v2961
        %2963 = vmatmul.bf16.gmra.mxu0 %v2795
        %v2964 = vpop.f32.mrf.mxu0
        %v2965 = vadd.f32 0.0, %v2964
        %v2966 = vpop.f32.mrf.mxu0
        %v2967 = vadd.f32 0.0, %v2966
        %2968 = vmatmul.bf16.gmra.mxu0 %v2796
        %v2969 = vpop.f32.mrf.mxu0
        %v2970 = vadd.f32 0.0, %v2969
        %v2971 = vpop.f32.mrf.mxu0
        %v2972 = vadd.f32 0.0, %v2971
        %2973 = vdwg.mxu0
        %2974 = vmatpush.bf16.msra.mxu0 %v2928
        %2975 = vmatpush.bf16.msra.mxu0 %v2927
        %2976 = vmatpush.bf16.msra.mxu0 %v2926
        %2977 = vmatpush.bf16.msra.mxu0 %v2925
        %2978 = vmatpush.bf16.msra.mxu0 %v2924
        %2979 = vmatpush.bf16.msra.mxu0 %v2923
        %2980 = vmatpush.bf16.msra.mxu0 %v2922
        %2981 = vmatpush.bf16.msra.mxu0 %v2921
        %2982 = vmatmul.bf16.gmra.mxu0 %v2809
        %v2983 = vpop.f32.mrf.mxu0
        %v2984 = vadd.f32 %v2955, %v2983
        %v2985 = vpop.f32.mrf.mxu0
        %v2986 = vadd.f32 %v2957, %v2985
        %2987 = vmatmul.bf16.gmra.mxu0 %v2810
        %v2988 = vpop.f32.mrf.mxu0
        %v2989 = vadd.f32 %v2960, %v2988
        %v2990 = vpop.f32.mrf.mxu0
        %v2991 = vadd.f32 %v2962, %v2990
        %2992 = vmatmul.bf16.gmra.mxu0 %v2811
        %v2993 = vpop.f32.mrf.mxu0
        %v2994 = vadd.f32 %v2965, %v2993
        %v2995 = vpop.f32.mrf.mxu0
        %v2996 = vadd.f32 %v2967, %v2995
        %2997 = vmatmul.bf16.gmra.mxu0 %v2812
        %v2998 = vpop.f32.mrf.mxu0
        %v2999 = vadd.f32 %v2970, %v2998
        %v3000 = vpop.f32.mrf.mxu0
        %v3001 = vadd.f32 %v2972, %v3000
        %3002 = vdwg.mxu0
        %v3003 = vadd.f32 %v2640, %v2984
        %v3004 = vadd.f32 %v2641, %v2986
        %v3005 = vadd.f32 %v2642, %v2989
        %v3006 = vadd.f32 %v2643, %v2991
        %v3007 = vadd.f32 %v2644, %v2994
        %v3008 = vadd.f32 %v2645, %v2996
        %v3009 = vadd.f32 %v2646, %v2999
        %v3010 = vadd.f32 %v2647, %v3001
        %v3011 = vld [vmem:[%s2648] sm:$0xe]
        %v3012 = vld [vmem:[%s2648 + $0x8] sm:$0xe]
        %v3013 = vld [vmem:[%s2648 + $0x10] sm:$0xe]
        %v3014 = vld [vmem:[%s2648 + $0x18] sm:$0xe]
        %v3015 = vld [vmem:[%s2648 + $0x20] sm:$0xe]
        %v3016 = vld [vmem:[%s2648 + $0x28] sm:$0xe]
        %v3017 = vld [vmem:[%s2648 + $0x30] sm:$0xe]
        %v3018 = vld [vmem:[%s2648 + $0x38] sm:$0xe]
        %v3035 = vrot.slane %v3011, 5
        %v3036 = vrot.slane %v3035, 4
        %v3037 = vrot.slane %v2657, 5
        %v3038 = vsel %vm1817, %v3036, %v3037
        %v3039 = vrot.slane %v3012, 5
        %v3040 = vrot.slane %v3039, 4
        %v3041 = vrot.slane %v2658, 5
        %v3042 = vsel %vm1817, %v3040, %v3041
        %v3043 = vrot.slane %v3013, 5
        %v3044 = vrot.slane %v3043, 4
        %v3045 = vrot.slane %v2659, 5
        %v3046 = vsel %vm1817, %v3044, %v3045
        %v3047 = vrot.slane %v3014, 5
        %v3048 = vrot.slane %v3047, 4
        %v3049 = vrot.slane %v2660, 5
        %v3050 = vsel %vm1817, %v3048, %v3049
        %v3051 = vrot.slane %v3015, 5
        %v3052 = vrot.slane %v3051, 4
        %v3053 = vrot.slane %v2661, 5
        %v3054 = vsel %vm1817, %v3052, %v3053
        %v3055 = vrot.slane %v3016, 5
        %v3056 = vrot.slane %v3055, 4
        %v3057 = vrot.slane %v2662, 5
        %v3058 = vsel %vm1817, %v3056, %v3057
        %v3059 = vrot.slane %v3017, 5
        %v3060 = vrot.slane %v3059, 4
        %v3061 = vrot.slane %v2663, 5
        %v3062 = vsel %vm1817, %v3060, %v3061
        %v3063 = vrot.slane %v3018, 5
        %v3064 = vrot.slane %v3063, 4
        %v3065 = vrot.slane %v2664, 5
        %v3066 = vsel %vm1817, %v3064, %v3065
        %v3067 = vld [vmem:[%s3 + $0x200] sm:$0xf]
        %v3068 = vld [vmem:[%s3 + $0x204] sm:$0xf]
        %v3069 = vld [vmem:[%s3 + $0x208] sm:$0xf]
        %v3070 = vld [vmem:[%s3 + $0x20c] sm:$0xf]
        %v3071 = vld [vmem:[%s3 + $0x210] sm:$0xf]
        %v3072 = vld [vmem:[%s3 + $0x214] sm:$0xf]
        %v3073 = vld [vmem:[%s3 + $0x218] sm:$0xf]
        %v3074 = vld [vmem:[%s3 + $0x21c] sm:$0xf]
        %v3075 = vld [vmem:[%s3 + $0x220] sm:$0xf]
        %v3076 = vld [vmem:[%s3 + $0x224] sm:$0xf]
        %v3077 = vld [vmem:[%s3 + $0x228] sm:$0xf]
        %v3078 = vld [vmem:[%s3 + $0x22c] sm:$0xf]
        %v3079 = vld [vmem:[%s3 + $0x230] sm:$0xf]
        %v3080 = vld [vmem:[%s3 + $0x234] sm:$0xf]
        %v3081 = vld [vmem:[%s3 + $0x238] sm:$0xf]
        %v3082 = vld [vmem:[%s3 + $0x23c] sm:$0xf]
        %v3083 = vunpack.c.l.b16 %v3038
        %v3084 = vunpack.c.l.b16 %v3042
        %v3085 = vunpack.c.l.b16 %v3046
        %v3086 = vunpack.c.l.b16 %v3050
        %v3087 = vunpack.c.l.b16 %v3054
        %v3088 = vunpack.c.l.b16 %v3058
        %v3089 = vunpack.c.l.b16 %v3062
        %v3090 = vunpack.c.l.b16 %v3066
        %v3091 = vpack.c.b16 %v3084, %v3083
        %v3092 = vpack.c.b16 %v3086, %v3085
        %v3093 = vpack.c.b16 %v3088, %v3087
        %v3094 = vpack.c.b16 %v3090, %v3089
        %v3115 = vunpack.c.l.b16 %v3067
        %v3116 = vunpack.c.l.b16 %v3068
        %v3117 = vunpack.c.l.b16 %v3069
        %v3118 = vunpack.c.l.b16 %v3070
        %v3119 = vunpack.c.l.b16 %v3071
        %v3120 = vunpack.c.l.b16 %v3072
        %v3121 = vunpack.c.l.b16 %v3073
        %v3122 = vunpack.c.l.b16 %v3074
        %v3123 = vunpack.c.l.b16 %v3075
        %v3124 = vunpack.c.l.b16 %v3076
        %v3125 = vunpack.c.l.b16 %v3077
        %v3126 = vunpack.c.l.b16 %v3078
        %v3127 = vunpack.c.l.b16 %v3079
        %v3128 = vunpack.c.l.b16 %v3080
        %v3129 = vunpack.c.l.b16 %v3081
        %v3130 = vunpack.c.l.b16 %v3082
        %v3131 = vpack.c.b16 %v3116, %v3115
        %v3132 = vpack.c.b16 %v3118, %v3117
        %v3133 = vpack.c.b16 %v3120, %v3119
        %v3134 = vpack.c.b16 %v3122, %v3121
        %v3135 = vpack.c.b16 %v3124, %v3123
        %v3136 = vpack.c.b16 %v3126, %v3125
        %v3137 = vpack.c.b16 %v3128, %v3127
        %v3138 = vpack.c.b16 %v3130, %v3129
        %3147 = vmatpush.bf16.msra.mxu0 %v3138
        %3148 = vmatpush.bf16.msra.mxu0 %v3137
        %3149 = vmatpush.bf16.msra.mxu0 %v3136
        %3150 = vmatpush.bf16.msra.mxu0 %v3135
        %3151 = vmatpush.bf16.msra.mxu0 %v3134
        %3152 = vmatpush.bf16.msra.mxu0 %v3133
        %3153 = vmatpush.bf16.msra.mxu0 %v3132
        %3154 = vmatpush.bf16.msra.mxu0 %v3131
        %3155 = vmatmul.bf16.gmra.mxu0 %v3091
        %v3156 = vpop.f32.mrf.mxu0
        %v3157 = vadd.f32 0.0, %v3156
        %v3158 = vpop.f32.mrf.mxu0
        %v3159 = vadd.f32 0.0, %v3158
        %3160 = vmatmul.bf16.gmra.mxu0 %v3092
        %v3161 = vpop.f32.mrf.mxu0
        %v3162 = vadd.f32 0.0, %v3161
        %v3163 = vpop.f32.mrf.mxu0
        %v3164 = vadd.f32 0.0, %v3163
        %3165 = vmatmul.bf16.gmra.mxu0 %v3093
        %v3166 = vpop.f32.mrf.mxu0
        %v3167 = vadd.f32 0.0, %v3166
        %v3168 = vpop.f32.mrf.mxu0
        %v3169 = vadd.f32 0.0, %v3168
        %3170 = vmatmul.bf16.gmra.mxu0 %v3094
        %v3171 = vpop.f32.mrf.mxu0
        %v3172 = vadd.f32 0.0, %v3171
        %v3173 = vpop.f32.mrf.mxu0
        %v3174 = vadd.f32 0.0, %v3173
        %3175 = vdwg.mxu0
        %v3176 = vadd.f32 %v3003, %v3157
        %v3177 = vadd.f32 %v3004, %v3159
        %v3178 = vadd.f32 %v3005, %v3162
        %v3179 = vadd.f32 %v3006, %v3164
        %v3180 = vadd.f32 %v3007, %v3167
        %v3181 = vadd.f32 %v3008, %v3169
        %v3182 = vadd.f32 %v3009, %v3172
        %v3183 = vadd.f32 %v3010, %v3174
        %v3184 = vld [vmem:[%s4] sm:$0x1]
        %v3186 = vperm.slane %v3184, 0
        %v3188 = vadd.f32 %v3176, %v3186
        %v3189 = vadd.f32 %v3177, %v3186
        %v3190 = vadd.f32 %v3178, %v3186
        %v3191 = vadd.f32 %v3179, %v3186
        %v3192 = vadd.f32 %v3180, %v3186
        %v3193 = vadd.f32 %v3181, %v3186
        %v3194 = vadd.f32 %v3182, %v3186
        %v3195 = vadd.f32 %v3183, %v3186
        %v3196 = vld [vmem:[%s580] sm:$0xf]
        %v3197 = vld [vmem:[%s580 + $0x8] sm:$0xf]
        %v3198 = vld [vmem:[%s580 + $0x10] sm:$0xf]
        %v3199 = vld [vmem:[%s580 + $0x18] sm:$0xf]
        %v3200 = vld [vmem:[%s580 + $0x20] sm:$0xf]
        %v3201 = vld [vmem:[%s580 + $0x28] sm:$0xf]
        %v3202 = vld [vmem:[%s580 + $0x30] sm:$0xf]
        %v3203 = vld [vmem:[%s580 + $0x38] sm:$0xf]
        %v3204 = vld [vmem:[%s5] sm:$0xf]
        %v3205 = vld [vmem:[%s5 + $0x4] sm:$0xf]
        %v3206 = vld [vmem:[%s5 + $0x8] sm:$0xf]
        %v3207 = vld [vmem:[%s5 + $0xc] sm:$0xf]
        %v3208 = vld [vmem:[%s5 + $0x10] sm:$0xf]
        %v3209 = vld [vmem:[%s5 + $0x14] sm:$0xf]
        %v3210 = vld [vmem:[%s5 + $0x18] sm:$0xf]
        %v3211 = vld [vmem:[%s5 + $0x1c] sm:$0xf]
        %v3212 = vld [vmem:[%s6] sm:$0x1]
        %v3214 = vperm.slane %v3212, 0
        %v3224 = vunpack.c.l.b16 %v3196
        %v3225 = vunpack.c.l.b16 %v3197
        %v3226 = vunpack.c.l.b16 %v3198
        %v3227 = vunpack.c.l.b16 %v3199
        %v3228 = vunpack.c.l.b16 %v3200
        %v3229 = vunpack.c.l.b16 %v3201
        %v3230 = vunpack.c.l.b16 %v3202
        %v3231 = vunpack.c.l.b16 %v3203
        %v3232 = vpack.c.b16 %v3225, %v3224
        %v3233 = vpack.c.b16 %v3227, %v3226
        %v3234 = vpack.c.b16 %v3229, %v3228
        %v3235 = vpack.c.b16 %v3231, %v3230
        %v3244 = vunpack.c.l.b16 %v3204
        %v3245 = vunpack.c.l.b16 %v3205
        %v3246 = vunpack.c.l.b16 %v3206
        %v3247 = vunpack.c.l.b16 %v3207
        %v3248 = vunpack.c.l.b16 %v3208
        %v3249 = vunpack.c.l.b16 %v3209
        %v3250 = vunpack.c.l.b16 %v3210
        %v3251 = vunpack.c.l.b16 %v3211
        %v3252 = vpack.c.b16 %v3245, %v3244
        %v3253 = vpack.c.b16 %v3247, %v3246
        %v3254 = vpack.c.b16 %v3249, %v3248
        %v3255 = vpack.c.b16 %v3251, %v3250
        %v3261 = vsel %vm515, %v3232, 0
        %v3264 = vsel %vm515, %v3233, 0
        %v3267 = vsel %vm515, %v3234, 0
        %v3270 = vsel %vm515, %v3235, 0
        %3272 = vmatpush.bf16.msra.mxu0 0
        %3273 = vmatpush.bf16.msra.mxu0 0
        %3274 = vmatpush.bf16.msra.mxu0 0
        %3275 = vmatpush.bf16.msra.mxu0 0
        %3276 = vmatpush.bf16.msra.mxu0 %v3255
        %3277 = vmatpush.bf16.msra.mxu0 %v3254
        %3278 = vmatpush.bf16.msra.mxu0 %v3253
        %3279 = vmatpush.bf16.msra.mxu0 %v3252
        %3280 = vmatmul.bf16.gmra.mxu0 %v3261
        %v3281 = vpop.f32.mrf.mxu0
        %v3282 = vadd.f32 %v3214, %v3281
        %v3283 = vpop.f32.mrf.mxu0
        %v3284 = vadd.f32 %v3214, %v3283
        %3285 = vmatmul.bf16.gmra.mxu0 %v3264
        %v3286 = vpop.f32.mrf.mxu0
        %v3287 = vadd.f32 %v3214, %v3286
        %v3288 = vpop.f32.mrf.mxu0
        %v3289 = vadd.f32 %v3214, %v3288
        %3290 = vmatmul.bf16.gmra.mxu0 %v3267
        %v3291 = vpop.f32.mrf.mxu0
        %v3292 = vadd.f32 %v3214, %v3291
        %v3293 = vpop.f32.mrf.mxu0
        %v3294 = vadd.f32 %v3214, %v3293
        %3295 = vmatmul.bf16.gmra.mxu0 %v3270
        %v3296 = vpop.f32.mrf.mxu0
        %v3297 = vadd.f32 %v3214, %v3296
        %v3298 = vpop.f32.mrf.mxu0
        %v3299 = vadd.f32 %v3214, %v3298
        %3300 = vdwg.mxu0
        %v3301 = vadd.f32 %v3188, %v3282
        %v3302 = vadd.f32 %v3189, %v3284
        %v3303 = vadd.f32 %v3190, %v3287
        %v3304 = vadd.f32 %v3191, %v3289
        %v3305 = vadd.f32 %v3192, %v3292
        %v3306 = vadd.f32 %v3193, %v3294
        %v3307 = vadd.f32 %v3194, %v3297
        %v3308 = vadd.f32 %v3195, %v3299
        %v3309 = vmax.f32 %v3301, 0.0
        %v3310 = vmax.f32 %v3302, 0.0
        %v3311 = vmax.f32 %v3303, 0.0
        %v3312 = vmax.f32 %v3304, 0.0
        %v3313 = vmax.f32 %v3305, 0.0
        %v3314 = vmax.f32 %v3306, 0.0
        %v3315 = vmax.f32 %v3307, 0.0
        %v3316 = vmax.f32 %v3308, 0.0
        %3317 = vst [vmem:[%s271] sm:$0xff] %v3309
        %3318 = vst [vmem:[%s271 + $0x8] sm:$0xff] %v3310
        %3319 = vst [vmem:[%s271 + $0x10] sm:$0xff] %v3311
        %3320 = vst [vmem:[%s271 + $0x18] sm:$0xff] %v3312
        %3321 = vst [vmem:[%s271 + $0x20] sm:$0xff] %v3313
        %3322 = vst [vmem:[%s271 + $0x28] sm:$0xff] %v3314
        %3323 = vst [vmem:[%s271 + $0x30] sm:$0xff] %v3315
        %3324 = vst [vmem:[%s271 + $0x38] sm:$0xff] %v3316
        %s3325 = sand.u32 %s181, 1
        %s3326 = scalar_lea.sflag [#allocation4], %s3325
        %s3327 = sand.u32 %s181, 1
        %s3328 = smul.addr %s3327, 64
        %s3329 = scalar_lea.vmem [#allocation3], %s3328
        // Predicated region
        $region49: #{forward.3} parent=47 // pred_check
          %p3330 = pneg %p191
        $region50: #{forward.3} parent=47 // pred_check_branch
          %3332 = sbr.rel (%p3330) target = $region52
        $region51: #{forward.3} parent=47 // pred_region
          %3334 = vsyncadd %s3326, 0
          %s3335 = smul.addr %s21, 8
          %s3336 = smul.addr %s3335, 8
          %s3337 = scalar_lea.hbm %s7, %s3336
          %s3338 = sshll.u32 %s3329, 4
          %s3339 = int_to_ptr.vmem [resolvable:$true] %s3338
          %s3340 = sshll.u32 %s3337, 4
          %s3341 = int_to_ptr.hbm [resolvable:$true] %s3340
          %3346 = dma.vmem_to_hbm [thread:$0]  %s3339, 1024, %s3341, %s3326, 128, 128, 8
        $region52: #{forward.3} parent=47 // pred_fallthru
          _
      $region48: #{forward.3} parent=5 // pred_fallthru
        _
      %p3347 = scmp.le.s32.totalorder 2, %s16
      // Predicated region
      $region53: #{forward.3} parent=5 // pred_check
        %p3348 = pneg %p3347
      $region54: #{forward.3} parent=5 // pred_check_branch
        %3350 = sbr.rel (%p3348) target = $region56
      $region55: #{forward.3} parent=5 // pred_region
        %s3351 = ssub.s32 %s16, 2
        // Predicated region
        $region57: #{forward.3} parent=55 // pred_check
          %p3352 = pneg %p197
        $region58: #{forward.3} parent=55 // pred_check_branch
          %3354 = sbr.rel (%p3352) target = $region60
        $region59: #{forward.3} parent=55 // pred_region
          %s3355 = sand.u32 %s182, 1
          %s3356 = scalar_lea.sflag [#allocation4], %s3355
          %s3357 = sand.u32 %s182, 1
          %s3358 = smul.addr %s3357, 64
          %s3359 = scalar_lea.vmem [#allocation3], %s3358
          %3361 = dma.done %s3356, 1024
        $region60: #{forward.3} parent=55 // pred_fallthru
          _
      $region56: #{forward.3} parent=5 // pred_fallthru
        _
    $region6: #{forward.3} parent=1 // loop_footer
      %s20 = sadd.s32 1, %s16
    $region7: #{forward.3} parent=1 // loop_footer_branch
      %15 = sbr.rel target = $region3
    $region8: #{forward.3} parent=1 // loop_exit
      _
    %3362 = vsyncpa [#allocation4], 1
    %s3363 = scalar_lea.sflag [#allocation4], 1
    %3364 = vsyncpa %s3363, 1

// kernel: forward.2
$region0: #{forward.2}
  #allocation0 [shape = 'u32[]', space=smem, size = 0x4, offset = 0x4, fixed_abs, tag = 'smem constant byte address 0x4 - core index']
  #allocation1 [shape = 'u32[72,128]{1,0:T(1,128)}', space=vmem, size = 0x9000, scoped, tag = 'internal scratch']
  #allocation2 [shape = 'bf16[18,18,64]{2,1,0:T(8,128)(2,1)}', space=vmem, size = 0x1b000, scoped, tag = 'scratch operand']
  #allocation3 [shape = 'bf16[18,18,64]{2,1,0:T(8,128)(2,1)}', space=vmem, size = 0x1b000, scoped, tag = 'scratch operand']
  %s0 = inlined_call_operand.vmem [shape: bf16[2,16,16,64], index: 0, kind: input, shape index: {}]
  %s1 = inlined_call_operand.vmem [shape: bf16[576,64], index: 1, kind: input, shape index: {}]
  %s2 = inlined_call_operand.vmem [shape: f32[1,64], index: 2, kind: input, shape index: {}, may-alias: {2,4}]
  %s3 = inlined_call_operand.vmem [shape: bf16[576,64], index: 3, kind: input, shape index: {}]
  %s4 = inlined_call_operand.vmem [shape: f32[1,64], index: 4, kind: input, shape index: {}, may-alias: {2,4}]
  %s5 = inlined_call_operand.vmem [shape: bf16[2,256,64], index: 5, kind: output, shape index: {}]
  %s6 = sld [smem:[#allocation0]]
  $region53: #{forward.2} parent=0
    _
  %s8 = ssub.s32 1, %s6
  %s9 = scalar_select 0, %s8, %s6
  loop: start=0, step=1, limit=4
  $region2: #{forward.2} parent=0 // loop_pre_header
    _
  $region3: #{forward.2} parent=0 // loop_header
    %s11 = sphi 0, %s15
    %p12 = scmp.ge.s32.totalorder %s11, 4
    %s21 = sphi 0, %s23
    %s24 = sphi 0, %s21
    %s25 = sphi 0, %s24
    %s41 = sphi 0, %s25
    %s45 = sphi 0, %s45
    %s47 = sphi 0, %s45
    %s48 = sphi 0, %s47
    %s62 = sphi 0, %s48
    %s66 = sphi 0, %s66
    %s68 = sphi 0, %s66
    %s69 = sphi 0, %s68
    %s83 = sphi 0, %s69
    %s87 = sphi 0, %s87
    %s89 = sphi 0, %s87
    %s90 = sphi 0, %s89
    %s104 = sphi 0, %s90
    %s108 = sphi 0, %s108
    %s110 = sphi 0, %s108
    %s111 = sphi 0, %s110
    %s125 = sphi 0, %s111
    %s131 = sphi 0, %s133
    %s134 = sphi 0, %s131
    %s135 = sphi 0, %s134
    %s151 = sphi 0, %s135
  $region4: #{forward.2} parent=0 // loop_header_branch
    %14 = sbr.rel (%p12) target = $region8
  $region5: #{forward.2} parent=0 // loop_body
    %s16 = ssub.s32 %s11, 1
    %s17 = ssub.s32 %s11, 2
    %s18 = sadd.s32 %s11, 1
    %s19 = ssub.s32 %s11, %s18
    %p20 = scmp.eq.s32.totalorder %s19, 0
    %s22 = sadd.s32 %s21, 1
    %s23 = scalar_select %p20, %s21, %s22
    %p26 = pneg %p20
    %p27 = scmp.eq.s32.totalorder %s11, 1
    %p28 = por %p26, %p27
    %p29 = scmp.ne.s32.totalorder %s21, %s24
    %p30 = scmp.eq.s32.totalorder %s11, 0
    %p31 = por %p29, %p30
    %p32 = scmp.ne.s32.totalorder %s21, %s24
    %p33 = scmp.eq.s32.totalorder %s16, 1
    %p34 = por %p32, %p33
    %p35 = scmp.ne.s32.totalorder %s24, %s25
    %p36 = scmp.eq.s32.totalorder %s16, 0
    %p37 = por %p35, %p36
    %p38 = scmp.ne.s32.totalorder %s24, %s25
    %p39 = scmp.eq.s32.totalorder %s17, 1
    %p40 = por %p38, %p39
    %p42 = scmp.ne.s32.totalorder %s25, %s41
    %p43 = scmp.eq.s32.totalorder %s17, 0
    %p44 = por %p42, %p43
    %s46 = sadd.s32 %s45, 1
    %p49 = scmp.eq.s32.totalorder %s11, 1
    %p50 = scmp.ne.s32.totalorder %s45, %s47
    %p51 = scmp.eq.s32.totalorder %s11, 0
    %p52 = por %p50, %p51
    %p53 = scmp.ne.s32.totalorder %s45, %s47
    %p54 = scmp.eq.s32.totalorder %s16, 1
    %p55 = por %p53, %p54
    %p56 = scmp.ne.s32.totalorder %s47, %s48
    %p57 = scmp.eq.s32.totalorder %s16, 0
    %p58 = por %p56, %p57
    %p59 = scmp.ne.s32.totalorder %s47, %s48
    %p60 = scmp.eq.s32.totalorder %s17, 1
    %p61 = por %p59, %p60
    %p63 = scmp.ne.s32.totalorder %s48, %s62
    %p64 = scmp.eq.s32.totalorder %s17, 0
    %p65 = por %p63, %p64
    %s67 = sadd.s32 %s66, 1
    %p70 = scmp.eq.s32.totalorder %s11, 1
    %p71 = scmp.ne.s32.totalorder %s66, %s68
    %p72 = scmp.eq.s32.totalorder %s11, 0
    %p73 = por %p71, %p72
    %p74 = scmp.ne.s32.totalorder %s66, %s68
    %p75 = scmp.eq.s32.totalorder %s16, 1
    %p76 = por %p74, %p75
    %p77 = scmp.ne.s32.totalorder %s68, %s69
    %p78 = scmp.eq.s32.totalorder %s16, 0
    %p79 = por %p77, %p78
    %p80 = scmp.ne.s32.totalorder %s68, %s69
    %p81 = scmp.eq.s32.totalorder %s17, 1
    %p82 = por %p80, %p81
    %p84 = scmp.ne.s32.totalorder %s69, %s83
    %p85 = scmp.eq.s32.totalorder %s17, 0
    %p86 = por %p84, %p85
    %s88 = sadd.s32 %s87, 1
    %p91 = scmp.eq.s32.totalorder %s11, 1
    %p92 = scmp.ne.s32.totalorder %s87, %s89
    %p93 = scmp.eq.s32.totalorder %s11, 0
    %p94 = por %p92, %p93
    %p95 = scmp.ne.s32.totalorder %s87, %s89
    %p96 = scmp.eq.s32.totalorder %s16, 1
    %p97 = por %p95, %p96
    %p98 = scmp.ne.s32.totalorder %s89, %s90
    %p99 = scmp.eq.s32.totalorder %s16, 0
    %p100 = por %p98, %p99
    %p101 = scmp.ne.s32.totalorder %s89, %s90
    %p102 = scmp.eq.s32.totalorder %s17, 1
    %p103 = por %p101, %p102
    %p105 = scmp.ne.s32.totalorder %s90, %s104
    %p106 = scmp.eq.s32.totalorder %s17, 0
    %p107 = por %p105, %p106
    %s109 = sadd.s32 %s108, 1
    %p112 = scmp.eq.s32.totalorder %s11, 1
    %p113 = scmp.ne.s32.totalorder %s108, %s110
    %p114 = scmp.eq.s32.totalorder %s11, 0
    %p115 = por %p113, %p114
    %p116 = scmp.ne.s32.totalorder %s108, %s110
    %p117 = scmp.eq.s32.totalorder %s16, 1
    %p118 = por %p116, %p117
    %p119 = scmp.ne.s32.totalorder %s110, %s111
    %p120 = scmp.eq.s32.totalorder %s16, 0
    %p121 = por %p119, %p120
    %p122 = scmp.ne.s32.totalorder %s110, %s111
    %p123 = scmp.eq.s32.totalorder %s17, 1
    %p124 = por %p122, %p123
    %p126 = scmp.ne.s32.totalorder %s111, %s125
    %p127 = scmp.eq.s32.totalorder %s17, 0
    %p128 = por %p126, %p127
    %s129 = ssub.s32 %s11, %s18
    %p130 = scmp.eq.s32.totalorder %s129, 0
    %s132 = sadd.s32 %s131, 1
    %s133 = scalar_select %p130, %s131, %s132
    %p136 = pneg %p130
    %p137 = scmp.eq.s32.totalorder %s11, 1
    %p138 = por %p136, %p137
    %p139 = scmp.ne.s32.totalorder %s131, %s134
    %p140 = scmp.eq.s32.totalorder %s11, 0
    %p141 = por %p139, %p140
    %p142 = scmp.ne.s32.totalorder %s131, %s134
    %p143 = scmp.eq.s32.totalorder %s16, 1
    %p144 = por %p142, %p143
    %p145 = scmp.ne.s32.totalorder %s134, %s135
    %p146 = scmp.eq.s32.totalorder %s16, 0
    %p147 = por %p145, %p146
    %p148 = scmp.ne.s32.totalorder %s134, %s135
    %p149 = scmp.eq.s32.totalorder %s17, 1
    %p150 = por %p148, %p149
    %p152 = scmp.ne.s32.totalorder %s135, %s151
    %p153 = scmp.eq.s32.totalorder %s17, 0
    %p154 = por %p152, %p153
    %p155 = scmp.le.s32.totalorder 1, %s11
    %p156 = scmp.lt.s32.totalorder %s11, 3
    %p157 = pnand %p155, %p156
    %p158 = pneg %p157
    // Predicated region
    $region9: #{forward.2} parent=5 // pred_check
      _
    $region10: #{forward.2} parent=5 // pred_check_branch
      %160 = sbr.rel (%p157) target = $region12
    $region11: #{forward.2} parent=5 // pred_region
      %s161 = ssub.s32 %s11, 1
      // Predicated region
      $region13: #{forward.2} parent=11 // pred_check
        %p162 = pneg %p58
      $region14: #{forward.2} parent=11 // pred_check_branch
        %164 = sbr.rel (%p162) target = $region16
      $region15: #{forward.2} parent=11 // pred_region
        _
      $region16: #{forward.2} parent=11 // pred_fallthru
        _
      // Predicated region
      $region17: #{forward.2} parent=11 // pred_check
        %p165 = pneg %p79
      $region18: #{forward.2} parent=11 // pred_check_branch
        %167 = sbr.rel (%p165) target = $region20
      $region19: #{forward.2} parent=11 // pred_region
        _
      $region20: #{forward.2} parent=11 // pred_fallthru
        _
      // Predicated region
      $region21: #{forward.2} parent=11 // pred_check
        %p168 = pneg %p100
      $region22: #{forward.2} parent=11 // pred_check_branch
        %170 = sbr.rel (%p168) target = $region24
      $region23: #{forward.2} parent=11 // pred_region
        _
      $region24: #{forward.2} parent=11 // pred_fallthru
        _
      // Predicated region
      $region25: #{forward.2} parent=11 // pred_check
        %p171 = pneg %p121
      $region26: #{forward.2} parent=11 // pred_check_branch
        %173 = sbr.rel (%p171) target = $region28
      $region27: #{forward.2} parent=11 // pred_region
        _
      $region28: #{forward.2} parent=11 // pred_fallthru
        _
    $region12: #{forward.2} parent=5 // pred_fallthru
      _
    %p174 = scmp.lt.s32.totalorder %s11, 2
    // Predicated region
    $region29: #{forward.2} parent=5 // pred_check
      %p175 = pneg %p174
    $region30: #{forward.2} parent=5 // pred_check_branch
      %177 = sbr.rel (%p175) target = $region32
    $region31: #{forward.2} parent=5 // pred_region
      // Predicated region
      $region33: #{forward.2} parent=31 // pred_check
        %p178 = pneg %p31
      $region34: #{forward.2} parent=31 // pred_check_branch
        %180 = sbr.rel (%p178) target = $region36
      $region35: #{forward.2} parent=31 // pred_region
        %p181 = scmp.lt.s32.totalorder %s11, 1
        %s182 = scalar_select %p181, %s11, 1
        %s183 = smul.addr %s182, 32
        %s184 = smul.addr %s183, 4
        %s185 = scalar_lea.vmem %s0, %s184
      $region36: #{forward.2} parent=31 // pred_fallthru
        _
    $region32: #{forward.2} parent=5 // pred_fallthru
      _
    %p186 = scmp.le.s32.totalorder 1, %s11
    %p187 = scmp.lt.s32.totalorder %s11, 3
    %p188 = pnand %p186, %p187
    %p189 = pneg %p188
    // Predicated region
    $region37: #{forward.2} parent=5 // pred_check
      _
    $region38: #{forward.2} parent=5 // pred_check_branch
      %191 = sbr.rel (%p188) target = $region40
    $region39: #{forward.2} parent=5 // pred_region
      %s192 = ssub.s32 %s11, 1
      %p193 = scmp.lt.s32.totalorder %s16, 1
      %s194 = scalar_select %p193, %s16, 1
      %s195 = smul.addr %s194, 32
      %s196 = smul.addr %s195, 4
      %s197 = scalar_lea.vmem %s0, %s196
      %p198 = pneg %p37
      %p199 = pneg %p34
      %p200 = pneg %p58
      %p201 = pneg %p55
      %p202 = pneg %p79
      %p203 = pneg %p76
      %p204 = pneg %p100
      %p205 = pneg %p97
      %p206 = pneg %p121
      %p207 = pneg %p118
      %p208 = pneg %p147
      %p209 = pneg %p144
      %p210 = scmp.lt.s32.totalorder %s16, 1
      %s211 = scalar_select %p210, %s16, 1
      %s212 = smul.addr %s211, 32
      %s213 = smul.addr %s212, 4
      %s214 = scalar_lea.vmem %s5, %s213
      %p215 = scmp.lt.s32.totalorder %s16, 1
      %s216 = scalar_select %p215, %s16, 1
      %s217 = smul.addr %s216, 32
      %s218 = smul.addr %s217, 4
      %s219 = scalar_lea.vmem %s0, %s218
      %p220 = scmp.lt.s32.totalorder %s16, 1
      %s221 = scalar_select %p220, %s16, 1
      %s222 = smul.addr %s221, 32
      %s223 = smul.addr %s222, 4
      %s224 = scalar_lea.vmem %s5, %s223
      %vm226 = vcmask 519168
      %227 = vst.msk [vmem:[#allocation2] sm:$0xf] %vm226, 0
      %228 = vst.msk [vmem:[#allocation2 + $0x4] sm:$0xf] %vm226, 0
      %vm229 = vcmask 516096
      %230 = vst.msk [vmem:[#allocation2 + $0x8] sm:$0x1] %vm229, 0
      %231 = vst.msk [vmem:[#allocation2 + $0xc] sm:$0xf] %vm226, 0
      %232 = vst.msk [vmem:[#allocation2 + $0x10] sm:$0xf] %vm226, 0
      %233 = vst.msk [vmem:[#allocation2 + $0x14] sm:$0x1] %vm229, 0
      %234 = vst.msk [vmem:[#allocation2 + $0x18] sm:$0xf] %vm226, 0
      %235 = vst.msk [vmem:[#allocation2 + $0x1c] sm:$0xf] %vm226, 0
      %236 = vst.msk [vmem:[#allocation2 + $0x20] sm:$0x1] %vm229, 0
      %237 = vst.msk [vmem:[#allocation2 + $0x24] sm:$0xf] %vm226, 0
      %238 = vst.msk [vmem:[#allocation2 + $0x28] sm:$0xf] %vm226, 0
      %239 = vst.msk [vmem:[#allocation2 + $0x2c] sm:$0x1] %vm229, 0
      %240 = vst.msk [vmem:[#allocation2 + $0x30] sm:$0xf] %vm226, 0
      %241 = vst.msk [vmem:[#allocation2 + $0x34] sm:$0xf] %vm226, 0
      %242 = vst.msk [vmem:[#allocation2 + $0x38] sm:$0x1] %vm229, 0
      %243 = vst.msk [vmem:[#allocation2 + $0x3c] sm:$0xf] %vm226, 0
      %244 = vst.msk [vmem:[#allocation2 + $0x40] sm:$0xf] %vm226, 0
      %245 = vst.msk [vmem:[#allocation2 + $0x44] sm:$0x1] %vm229, 0
      %246 = vst.msk [vmem:[#allocation2 + $0x48] sm:$0xf] %vm226, 0
      %247 = vst.msk [vmem:[#allocation2 + $0x4c] sm:$0xf] %vm226, 0
      %248 = vst.msk [vmem:[#allocation2 + $0x50] sm:$0x1] %vm229, 0
      %249 = vst.msk [vmem:[#allocation2 + $0x54] sm:$0xf] %vm226, 0
      %250 = vst.msk [vmem:[#allocation2 + $0x58] sm:$0xf] %vm226, 0
      %251 = vst.msk [vmem:[#allocation2 + $0x5c] sm:$0x1] %vm229, 0
      %252 = vst.msk [vmem:[#allocation2 + $0x60] sm:$0xf] %vm226, 0
      %253 = vst.msk [vmem:[#allocation2 + $0x64] sm:$0xf] %vm226, 0
      %254 = vst.msk [vmem:[#allocation2 + $0x68] sm:$0x1] %vm229, 0
      %255 = vst.msk [vmem:[#allocation2 + $0x6c] sm:$0xf] %vm226, 0
      %256 = vst.msk [vmem:[#allocation2 + $0x70] sm:$0xf] %vm226, 0
      %257 = vst.msk [vmem:[#allocation2 + $0x74] sm:$0x1] %vm229, 0
      %258 = vst.msk [vmem:[#allocation2 + $0x78] sm:$0xf] %vm226, 0
      %259 = vst.msk [vmem:[#allocation2 + $0x7c] sm:$0xf] %vm226, 0
      %260 = vst.msk [vmem:[#allocation2 + $0x80] sm:$0x1] %vm229, 0
      %261 = vst.msk [vmem:[#allocation2 + $0x84] sm:$0xf] %vm226, 0
      %262 = vst.msk [vmem:[#allocation2 + $0x88] sm:$0xf] %vm226, 0
      %263 = vst.msk [vmem:[#allocation2 + $0x8c] sm:$0x1] %vm229, 0
      %264 = vst.msk [vmem:[#allocation2 + $0x90] sm:$0xf] %vm226, 0
      %265 = vst.msk [vmem:[#allocation2 + $0x94] sm:$0xf] %vm226, 0
      %266 = vst.msk [vmem:[#allocation2 + $0x98] sm:$0x1] %vm229, 0
      %267 = vst.msk [vmem:[#allocation2 + $0x9c] sm:$0xf] %vm226, 0
      %268 = vst.msk [vmem:[#allocation2 + $0xa0] sm:$0xf] %vm226, 0
      %269 = vst.msk [vmem:[#allocation2 + $0xa4] sm:$0x1] %vm229, 0
      %270 = vst.msk [vmem:[#allocation2 + $0xa8] sm:$0xf] %vm226, 0
      %271 = vst.msk [vmem:[#allocation2 + $0xac] sm:$0xf] %vm226, 0
      %272 = vst.msk [vmem:[#allocation2 + $0xb0] sm:$0x1] %vm229, 0
      %273 = vst.msk [vmem:[#allocation2 + $0xb4] sm:$0xf] %vm226, 0
      %274 = vst.msk [vmem:[#allocation2 + $0xb8] sm:$0xf] %vm226, 0
      %275 = vst.msk [vmem:[#allocation2 + $0xbc] sm:$0x1] %vm229, 0
      %276 = vst.msk [vmem:[#allocation2 + $0xc0] sm:$0xf] %vm226, 0
      %277 = vst.msk [vmem:[#allocation2 + $0xc4] sm:$0xf] %vm226, 0
      %278 = vst.msk [vmem:[#allocation2 + $0xc8] sm:$0x1] %vm229, 0
      %279 = vst.msk [vmem:[#allocation2 + $0xcc] sm:$0xf] %vm226, 0
      %280 = vst.msk [vmem:[#allocation2 + $0xd0] sm:$0xf] %vm226, 0
      %281 = vst.msk [vmem:[#allocation2 + $0xd4] sm:$0x1] %vm229, 0
      %v282 = vld [vmem:[%s219] sm:$0xf]
      %v283 = vld [vmem:[%s219 + $0x4] sm:$0xf]
      %v284 = vld [vmem:[%s219 + $0x8] sm:$0xf]
      %v285 = vld [vmem:[%s219 + $0xc] sm:$0xf]
      %v286 = vld [vmem:[%s219 + $0x10] sm:$0xf]
      %v287 = vld [vmem:[%s219 + $0x14] sm:$0xf]
      %v288 = vld [vmem:[%s219 + $0x18] sm:$0xf]
      %v289 = vld [vmem:[%s219 + $0x1c] sm:$0xf]
      %v290 = vld [vmem:[%s219 + $0x20] sm:$0xf]
      %v291 = vld [vmem:[%s219 + $0x24] sm:$0xf]
      %v292 = vld [vmem:[%s219 + $0x28] sm:$0xf]
      %v293 = vld [vmem:[%s219 + $0x2c] sm:$0xf]
      %v294 = vld [vmem:[%s219 + $0x30] sm:$0xf]
      %v295 = vld [vmem:[%s219 + $0x34] sm:$0xf]
      %v296 = vld [vmem:[%s219 + $0x38] sm:$0xf]
      %v297 = vld [vmem:[%s219 + $0x3c] sm:$0xf]
      %v298 = vld [vmem:[%s219 + $0x40] sm:$0xf]
      %v299 = vld [vmem:[%s219 + $0x44] sm:$0xf]
      %v300 = vld [vmem:[%s219 + $0x48] sm:$0xf]
      %v301 = vld [vmem:[%s219 + $0x4c] sm:$0xf]
      %v302 = vld [vmem:[%s219 + $0x50] sm:$0xf]
      %v303 = vld [vmem:[%s219 + $0x54] sm:$0xf]
      %v304 = vld [vmem:[%s219 + $0x58] sm:$0xf]
      %v305 = vld [vmem:[%s219 + $0x5c] sm:$0xf]
      %v306 = vld [vmem:[%s219 + $0x60] sm:$0xf]
      %v307 = vld [vmem:[%s219 + $0x64] sm:$0xf]
      %v308 = vld [vmem:[%s219 + $0x68] sm:$0xf]
      %v309 = vld [vmem:[%s219 + $0x6c] sm:$0xf]
      %v310 = vld [vmem:[%s219 + $0x70] sm:$0xf]
      %v311 = vld [vmem:[%s219 + $0x74] sm:$0xf]
      %v312 = vld [vmem:[%s219 + $0x78] sm:$0xf]
      %v313 = vld [vmem:[%s219 + $0x7c] sm:$0xf]
      %vm314 = vsmask.f32 256
      %vm315 = vsmask.f32 4368
      %vm316 = vmor %vm314, %vm315
      %v318 = vshrl.u32 %v282, 16
      %v320 = vrot.slane %v318, 7
      %v321 = vshll.u32 %v282, 16
      %v323 = vor.u32 %v320, %v321
      %v324 = vrot.slane %v320, 4
      %v326 = vshrl.u32 %v283, 16
      %v328 = vrot.slane %v326, 7
      %v329 = vshll.u32 %v283, 16
      %v331 = vor.u32 %v328, %v329
      %v332 = vsel %vm316, %v324, %v331
      %v333 = vrot.slane %v328, 4
      %v335 = vshrl.u32 %v284, 16
      %v337 = vrot.slane %v335, 7
      %v338 = vshll.u32 %v284, 16
      %v340 = vor.u32 %v337, %v338
      %v341 = vrot.slane %v337, 4
      %v343 = vshrl.u32 %v285, 16
      %v345 = vrot.slane %v343, 7
      %v346 = vshll.u32 %v285, 16
      %v348 = vor.u32 %v345, %v346
      %v349 = vsel %vm316, %v341, %v348
      %v350 = vrot.slane %v345, 4
      %v352 = vshrl.u32 %v286, 16
      %v354 = vrot.slane %v352, 7
      %v355 = vshll.u32 %v286, 16
      %v357 = vor.u32 %v354, %v355
      %v358 = vrot.slane %v354, 4
      %v360 = vshrl.u32 %v287, 16
      %v362 = vrot.slane %v360, 7
      %v363 = vshll.u32 %v287, 16
      %v365 = vor.u32 %v362, %v363
      %v366 = vsel %vm316, %v358, %v365
      %v367 = vrot.slane %v362, 4
      %v369 = vshrl.u32 %v288, 16
      %v371 = vrot.slane %v369, 7
      %v372 = vshll.u32 %v288, 16
      %v374 = vor.u32 %v371, %v372
      %v375 = vrot.slane %v371, 4
      %v377 = vshrl.u32 %v289, 16
      %v379 = vrot.slane %v377, 7
      %v380 = vshll.u32 %v289, 16
      %v382 = vor.u32 %v379, %v380
      %v383 = vsel %vm316, %v375, %v382
      %v384 = vrot.slane %v379, 4
      %v386 = vshrl.u32 %v290, 16
      %v388 = vrot.slane %v386, 7
      %v389 = vshll.u32 %v290, 16
      %v391 = vor.u32 %v388, %v389
      %v392 = vrot.slane %v388, 4
      %v394 = vshrl.u32 %v291, 16
      %v396 = vrot.slane %v394, 7
      %v397 = vshll.u32 %v291, 16
      %v399 = vor.u32 %v396, %v397
      %v400 = vsel %vm316, %v392, %v399
      %v401 = vrot.slane %v396, 4
      %v403 = vshrl.u32 %v292, 16
      %v405 = vrot.slane %v403, 7
      %v406 = vshll.u32 %v292, 16
      %v408 = vor.u32 %v405, %v406
      %v409 = vrot.slane %v405, 4
      %v411 = vshrl.u32 %v293, 16
      %v413 = vrot.slane %v411, 7
      %v414 = vshll.u32 %v293, 16
      %v416 = vor.u32 %v413, %v414
      %v417 = vsel %vm316, %v409, %v416
      %v418 = vrot.slane %v413, 4
      %v420 = vshrl.u32 %v294, 16
      %v422 = vrot.slane %v420, 7
      %v423 = vshll.u32 %v294, 16
      %v425 = vor.u32 %v422, %v423
      %v426 = vrot.slane %v422, 4
      %v428 = vshrl.u32 %v295, 16
      %v430 = vrot.slane %v428, 7
      %v431 = vshll.u32 %v295, 16
      %v433 = vor.u32 %v430, %v431
      %v434 = vsel %vm316, %v426, %v433
      %v435 = vrot.slane %v430, 4
      %v437 = vshrl.u32 %v296, 16
      %v439 = vrot.slane %v437, 7
      %v440 = vshll.u32 %v296, 16
      %v442 = vor.u32 %v439, %v440
      %v443 = vrot.slane %v439, 4
      %v445 = vshrl.u32 %v297, 16
      %v447 = vrot.slane %v445, 7
      %v448 = vshll.u32 %v297, 16
      %v450 = vor.u32 %v447, %v448
      %v451 = vsel %vm316, %v443, %v450
      %v452 = vrot.slane %v447, 4
      %v454 = vshrl.u32 %v298, 16
      %v456 = vrot.slane %v454, 7
      %v457 = vshll.u32 %v298, 16
      %v459 = vor.u32 %v456, %v457
      %v460 = vrot.slane %v456, 4
      %v462 = vshrl.u32 %v299, 16
      %v464 = vrot.slane %v462, 7
      %v465 = vshll.u32 %v299, 16
      %v467 = vor.u32 %v464, %v465
      %v468 = vsel %vm316, %v460, %v467
      %v469 = vrot.slane %v464, 4
      %v471 = vshrl.u32 %v300, 16
      %v473 = vrot.slane %v471, 7
      %v474 = vshll.u32 %v300, 16
      %v476 = vor.u32 %v473, %v474
      %v477 = vrot.slane %v473, 4
      %v479 = vshrl.u32 %v301, 16
      %v481 = vrot.slane %v479, 7
      %v482 = vshll.u32 %v301, 16
      %v484 = vor.u32 %v481, %v482
      %v485 = vsel %vm316, %v477, %v484
      %v486 = vrot.slane %v481, 4
      %v488 = vshrl.u32 %v302, 16
      %v490 = vrot.slane %v488, 7
      %v491 = vshll.u32 %v302, 16
      %v493 = vor.u32 %v490, %v491
      %v494 = vrot.slane %v490, 4
      %v496 = vshrl.u32 %v303, 16
      %v498 = vrot.slane %v496, 7
      %v499 = vshll.u32 %v303, 16
      %v501 = vor.u32 %v498, %v499
      %v502 = vsel %vm316, %v494, %v501
      %v503 = vrot.slane %v498, 4
      %v505 = vshrl.u32 %v304, 16
      %v507 = vrot.slane %v505, 7
      %v508 = vshll.u32 %v304, 16
      %v510 = vor.u32 %v507, %v508
      %v511 = vrot.slane %v507, 4
      %v513 = vshrl.u32 %v305, 16
      %v515 = vrot.slane %v513, 7
      %v516 = vshll.u32 %v305, 16
      %v518 = vor.u32 %v515, %v516
      %v519 = vsel %vm316, %v511, %v518
      %v520 = vrot.slane %v515, 4
      %v522 = vshrl.u32 %v306, 16
      %v524 = vrot.slane %v522, 7
      %v525 = vshll.u32 %v306, 16
      %v527 = vor.u32 %v524, %v525
      %v528 = vrot.slane %v524, 4
      %v530 = vshrl.u32 %v307, 16
      %v532 = vrot.slane %v530, 7
      %v533 = vshll.u32 %v307, 16
      %v535 = vor.u32 %v532, %v533
      %v536 = vsel %vm316, %v528, %v535
      %v537 = vrot.slane %v532, 4
      %v539 = vshrl.u32 %v308, 16
      %v541 = vrot.slane %v539, 7
      %v542 = vshll.u32 %v308, 16
      %v544 = vor.u32 %v541, %v542
      %v545 = vrot.slane %v541, 4
      %v547 = vshrl.u32 %v309, 16
      %v549 = vrot.slane %v547, 7
      %v550 = vshll.u32 %v309, 16
      %v552 = vor.u32 %v549, %v550
      %v553 = vsel %vm316, %v545, %v552
      %v554 = vrot.slane %v549, 4
      %v556 = vshrl.u32 %v310, 16
      %v558 = vrot.slane %v556, 7
      %v559 = vshll.u32 %v310, 16
      %v561 = vor.u32 %v558, %v559
      %v562 = vrot.slane %v558, 4
      %v564 = vshrl.u32 %v311, 16
      %v566 = vrot.slane %v564, 7
      %v567 = vshll.u32 %v311, 16
      %v569 = vor.u32 %v566, %v567
      %v570 = vsel %vm316, %v562, %v569
      %v571 = vrot.slane %v566, 4
      %v573 = vshrl.u32 %v312, 16
      %v575 = vrot.slane %v573, 7
      %v576 = vshll.u32 %v312, 16
      %v578 = vor.u32 %v575, %v576
      %v579 = vrot.slane %v575, 4
      %v581 = vshrl.u32 %v313, 16
      %v583 = vrot.slane %v581, 7
      %v584 = vshll.u32 %v313, 16
      %v586 = vor.u32 %v583, %v584
      %v587 = vsel %vm316, %v579, %v586
      %v588 = vrot.slane %v583, 4
      %s637 = scalar_lea.vmem [#allocation2], 12
      %vm638 = vcmask 519168
      %vm639 = vsmask.f32 7938
      %vm640 = vmand %vm638, %vm639
      %v641 = vld [vmem:[%s637] sm:$0xf]
      %v642 = vsel %vm640, %v323, %v641
      %643 = vst [vmem:[%s637] sm:$0xf] %v642
      %644 = vst.msk [vmem:[%s637 + $0x4] sm:$0xf] %vm226, %v332
      %vm645 = vcmask 516096
      %vm646 = vmand %vm645, %vm314
      %v647 = vld [vmem:[%s637 + $0x8] sm:$0x1]
      %v648 = vsel %vm646, %v333, %v647
      %649 = vst [vmem:[%s637 + $0x8] sm:$0x1] %v648
      %v650 = vld [vmem:[%s637 + $0xc] sm:$0xf]
      %v651 = vsel %vm640, %v340, %v650
      %652 = vst [vmem:[%s637 + $0xc] sm:$0xf] %v651
      %653 = vst.msk [vmem:[%s637 + $0x10] sm:$0xf] %vm226, %v349
      %v654 = vld [vmem:[%s637 + $0x14] sm:$0x1]
      %v655 = vsel %vm646, %v350, %v654
      %656 = vst [vmem:[%s637 + $0x14] sm:$0x1] %v655
      %v657 = vld [vmem:[%s637 + $0x18] sm:$0xf]
      %v658 = vsel %vm640, %v357, %v657
      %659 = vst [vmem:[%s637 + $0x18] sm:$0xf] %v658
      %660 = vst.msk [vmem:[%s637 + $0x1c] sm:$0xf] %vm226, %v366
      %v661 = vld [vmem:[%s637 + $0x20] sm:$0x1]
      %v662 = vsel %vm646, %v367, %v661
      %663 = vst [vmem:[%s637 + $0x20] sm:$0x1] %v662
      %v664 = vld [vmem:[%s637 + $0x24] sm:$0xf]
      %v665 = vsel %vm640, %v374, %v664
      %666 = vst [vmem:[%s637 + $0x24] sm:$0xf] %v665
      %667 = vst.msk [vmem:[%s637 + $0x28] sm:$0xf] %vm226, %v383
      %v668 = vld [vmem:[%s637 + $0x2c] sm:$0x1]
      %v669 = vsel %vm646, %v384, %v668
      %670 = vst [vmem:[%s637 + $0x2c] sm:$0x1] %v669
      %v671 = vld [vmem:[%s637 + $0x30] sm:$0xf]
      %v672 = vsel %vm640, %v391, %v671
      %673 = vst [vmem:[%s637 + $0x30] sm:$0xf] %v672
      %674 = vst.msk [vmem:[%s637 + $0x34] sm:$0xf] %vm226, %v400
      %v675 = vld [vmem:[%s637 + $0x38] sm:$0x1]
      %v676 = vsel %vm646, %v401, %v675
      %677 = vst [vmem:[%s637 + $0x38] sm:$0x1] %v676
      %v678 = vld [vmem:[%s637 + $0x3c] sm:$0xf]
      %v679 = vsel %vm640, %v408, %v678
      %680 = vst [vmem:[%s637 + $0x3c] sm:$0xf] %v679
      %681 = vst.msk [vmem:[%s637 + $0x40] sm:$0xf] %vm226, %v417
      %v682 = vld [vmem:[%s637 + $0x44] sm:$0x1]
      %v683 = vsel %vm646, %v418, %v682
      %684 = vst [vmem:[%s637 + $0x44] sm:$0x1] %v683
      %v685 = vld [vmem:[%s637 + $0x48] sm:$0xf]
      %v686 = vsel %vm640, %v425, %v685
      %687 = vst [vmem:[%s637 + $0x48] sm:$0xf] %v686
      %688 = vst.msk [vmem:[%s637 + $0x4c] sm:$0xf] %vm226, %v434
      %v689 = vld [vmem:[%s637 + $0x50] sm:$0x1]
      %v690 = vsel %vm646, %v435, %v689
      %691 = vst [vmem:[%s637 + $0x50] sm:$0x1] %v690
      %v692 = vld [vmem:[%s637 + $0x54] sm:$0xf]
      %v693 = vsel %vm640, %v442, %v692
      %694 = vst [vmem:[%s637 + $0x54] sm:$0xf] %v693
      %695 = vst.msk [vmem:[%s637 + $0x58] sm:$0xf] %vm226, %v451
      %v696 = vld [vmem:[%s637 + $0x5c] sm:$0x1]
      %v697 = vsel %vm646, %v452, %v696
      %698 = vst [vmem:[%s637 + $0x5c] sm:$0x1] %v697
      %v699 = vld [vmem:[%s637 + $0x60] sm:$0xf]
      %v700 = vsel %vm640, %v459, %v699
      %701 = vst [vmem:[%s637 + $0x60] sm:$0xf] %v700
      %702 = vst.msk [vmem:[%s637 + $0x64] sm:$0xf] %vm226, %v468
      %v703 = vld [vmem:[%s637 + $0x68] sm:$0x1]
      %v704 = vsel %vm646, %v469, %v703
      %705 = vst [vmem:[%s637 + $0x68] sm:$0x1] %v704
      %v706 = vld [vmem:[%s637 + $0x6c] sm:$0xf]
      %v707 = vsel %vm640, %v476, %v706
      %708 = vst [vmem:[%s637 + $0x6c] sm:$0xf] %v707
      %709 = vst.msk [vmem:[%s637 + $0x70] sm:$0xf] %vm226, %v485
      %v710 = vld [vmem:[%s637 + $0x74] sm:$0x1]
      %v711 = vsel %vm646, %v486, %v710
      %712 = vst [vmem:[%s637 + $0x74] sm:$0x1] %v711
      %v713 = vld [vmem:[%s637 + $0x78] sm:$0xf]
      %v714 = vsel %vm640, %v493, %v713
      %715 = vst [vmem:[%s637 + $0x78] sm:$0xf] %v714
      %716 = vst.msk [vmem:[%s637 + $0x7c] sm:$0xf] %vm226, %v502
      %v717 = vld [vmem:[%s637 + $0x80] sm:$0x1]
      %v718 = vsel %vm646, %v503, %v717
      %719 = vst [vmem:[%s637 + $0x80] sm:$0x1] %v718
      %v720 = vld [vmem:[%s637 + $0x84] sm:$0xf]
      %v721 = vsel %vm640, %v510, %v720
      %722 = vst [vmem:[%s637 + $0x84] sm:$0xf] %v721
      %723 = vst.msk [vmem:[%s637 + $0x88] sm:$0xf] %vm226, %v519
      %v724 = vld [vmem:[%s637 + $0x8c] sm:$0x1]
      %v725 = vsel %vm646, %v520, %v724
      %726 = vst [vmem:[%s637 + $0x8c] sm:$0x1] %v725
      %v727 = vld [vmem:[%s637 + $0x90] sm:$0xf]
      %v728 = vsel %vm640, %v527, %v727
      %729 = vst [vmem:[%s637 + $0x90] sm:$0xf] %v728
      %730 = vst.msk [vmem:[%s637 + $0x94] sm:$0xf] %vm226, %v536
      %v731 = vld [vmem:[%s637 + $0x98] sm:$0x1]
      %v732 = vsel %vm646, %v537, %v731
      %733 = vst [vmem:[%s637 + $0x98] sm:$0x1] %v732
      %v734 = vld [vmem:[%s637 + $0x9c] sm:$0xf]
      %v735 = vsel %vm640, %v544, %v734
      %736 = vst [vmem:[%s637 + $0x9c] sm:$0xf] %v735
      %737 = vst.msk [vmem:[%s637 + $0xa0] sm:$0xf] %vm226, %v553
      %v738 = vld [vmem:[%s637 + $0xa4] sm:$0x1]
      %v739 = vsel %vm646, %v554, %v738
      %740 = vst [vmem:[%s637 + $0xa4] sm:$0x1] %v739
      %v741 = vld [vmem:[%s637 + $0xa8] sm:$0xf]
      %v742 = vsel %vm640, %v561, %v741
      %743 = vst [vmem:[%s637 + $0xa8] sm:$0xf] %v742
      %744 = vst.msk [vmem:[%s637 + $0xac] sm:$0xf] %vm226, %v570
      %v745 = vld [vmem:[%s637 + $0xb0] sm:$0x1]
      %v746 = vsel %vm646, %v571, %v745
      %747 = vst [vmem:[%s637 + $0xb0] sm:$0x1] %v746
      %v748 = vld [vmem:[%s637 + $0xb4] sm:$0xf]
      %v749 = vsel %vm640, %v578, %v748
      %750 = vst [vmem:[%s637 + $0xb4] sm:$0xf] %v749
      %751 = vst.msk [vmem:[%s637 + $0xb8] sm:$0xf] %vm226, %v587
      %v752 = vld [vmem:[%s637 + $0xbc] sm:$0x1]
      %v753 = vsel %vm646, %v588, %v752
      %754 = vst [vmem:[%s637 + $0xbc] sm:$0x1] %v753
      %v755 = vld [vmem:[#allocation2] sm:$0xf]
      %v756 = vld [vmem:[#allocation2 + $0x4] sm:$0xf]
      %v757 = vld [vmem:[#allocation2 + $0xc] sm:$0xf]
      %v758 = vld [vmem:[#allocation2 + $0x10] sm:$0xf]
      %v759 = vld [vmem:[#allocation2 + $0x18] sm:$0xf]
      %v760 = vld [vmem:[#allocation2 + $0x1c] sm:$0xf]
      %v761 = vld [vmem:[#allocation2 + $0x24] sm:$0xf]
      %v762 = vld [vmem:[#allocation2 + $0x28] sm:$0xf]
      %v763 = vld [vmem:[#allocation2 + $0x30] sm:$0xf]
      %v764 = vld [vmem:[#allocation2 + $0x34] sm:$0xf]
      %v765 = vld [vmem:[#allocation2 + $0x3c] sm:$0xf]
      %v766 = vld [vmem:[#allocation2 + $0x40] sm:$0xf]
      %v767 = vld [vmem:[#allocation2 + $0x48] sm:$0xf]
      %v768 = vld [vmem:[#allocation2 + $0x4c] sm:$0xf]
      %v769 = vld [vmem:[#allocation2 + $0x54] sm:$0xf]
      %v770 = vld [vmem:[#allocation2 + $0x58] sm:$0xf]
      %v771 = vld [vmem:[#allocation2 + $0x60] sm:$0xf]
      %v772 = vld [vmem:[#allocation2 + $0x64] sm:$0xf]
      %v773 = vld [vmem:[#allocation2 + $0x6c] sm:$0xf]
      %v774 = vld [vmem:[#allocation2 + $0x70] sm:$0xf]
      %v775 = vld [vmem:[#allocation2 + $0x78] sm:$0xf]
      %v776 = vld [vmem:[#allocation2 + $0x7c] sm:$0xf]
      %v777 = vld [vmem:[#allocation2 + $0x84] sm:$0xf]
      %v778 = vld [vmem:[#allocation2 + $0x88] sm:$0xf]
      %v779 = vld [vmem:[#allocation2 + $0x90] sm:$0xf]
      %v780 = vld [vmem:[#allocation2 + $0x94] sm:$0xf]
      %v781 = vld [vmem:[#allocation2 + $0x9c] sm:$0xf]
      %v782 = vld [vmem:[#allocation2 + $0xa0] sm:$0xf]
      %v783 = vld [vmem:[#allocation2 + $0xa8] sm:$0xf]
      %v784 = vld [vmem:[#allocation2 + $0xac] sm:$0xf]
      %v785 = vld [vmem:[#allocation2 + $0xb4] sm:$0xf]
      %v786 = vld [vmem:[#allocation2 + $0xb8] sm:$0xf]
      %v787 = vld [vmem:[#allocation2 + $0x8] sm:$0x1]
      %v788 = vld [vmem:[#allocation2 + $0x14] sm:$0x1]
      %v789 = vld [vmem:[#allocation2 + $0x20] sm:$0x1]
      %v790 = vld [vmem:[#allocation2 + $0x2c] sm:$0x1]
      %v791 = vld [vmem:[#allocation2 + $0x38] sm:$0x1]
      %v792 = vld [vmem:[#allocation2 + $0x44] sm:$0x1]
      %v793 = vld [vmem:[#allocation2 + $0x50] sm:$0x1]
      %v794 = vld [vmem:[#allocation2 + $0x5c] sm:$0x1]
      %v795 = vld [vmem:[#allocation2 + $0x68] sm:$0x1]
      %v796 = vld [vmem:[#allocation2 + $0x74] sm:$0x1]
      %v797 = vld [vmem:[#allocation2 + $0x80] sm:$0x1]
      %v798 = vld [vmem:[#allocation2 + $0x8c] sm:$0x1]
      %v799 = vld [vmem:[#allocation2 + $0x98] sm:$0x1]
      %v800 = vld [vmem:[#allocation2 + $0xa4] sm:$0x1]
      %v801 = vld [vmem:[#allocation2 + $0xb0] sm:$0x1]
      %v802 = vld [vmem:[#allocation2 + $0xbc] sm:$0x1]
      %vm803 = vsmask.f32 3328
      %vm804 = vsmask.f32 7440
      %vm805 = vmor %vm803, %vm804
      %v807 = vshrl.u32 %v755, 16
      %v809 = vrot.slane %v807, 4
      %v810 = vshll.u32 %v755, 16
      %v812 = vrot.slane %v810, 5
      %v813 = vor.u32 %v809, %v812
      %v814 = vrot.slane %v813, 4
      %v816 = vshll.u32 %v756, 16
      %v818 = vrot.slane %v816, 5
      %v819 = vsel %vm805, %v814, %v818
      %v820 = vshrl.u32 %v756, 16
      %v822 = vrot.slane %v820, 4
      %v823 = vor.u32 %v822, %v818
      %v824 = vrot.slane %v823, 4
      %v826 = vshll.u32 %v787, 16
      %v828 = vrot.slane %v826, 5
      %v829 = vsel %vm805, %v824, %v828
      %v831 = vshrl.u32 %v757, 16
      %v833 = vrot.slane %v831, 4
      %v834 = vshll.u32 %v757, 16
      %v836 = vrot.slane %v834, 5
      %v837 = vor.u32 %v833, %v836
      %v838 = vrot.slane %v837, 4
      %v840 = vshll.u32 %v758, 16
      %v842 = vrot.slane %v840, 5
      %v843 = vsel %vm805, %v838, %v842
      %v844 = vshrl.u32 %v758, 16
      %v846 = vrot.slane %v844, 4
      %v847 = vor.u32 %v846, %v842
      %v848 = vrot.slane %v847, 4
      %v850 = vshll.u32 %v788, 16
      %v852 = vrot.slane %v850, 5
      %v853 = vsel %vm805, %v848, %v852
      %v855 = vshrl.u32 %v759, 16
      %v857 = vrot.slane %v855, 4
      %v858 = vshll.u32 %v759, 16
      %v860 = vrot.slane %v858, 5
      %v861 = vor.u32 %v857, %v860
      %v862 = vrot.slane %v861, 4
      %v864 = vshll.u32 %v760, 16
      %v866 = vrot.slane %v864, 5
      %v867 = vsel %vm805, %v862, %v866
      %v868 = vshrl.u32 %v760, 16
      %v870 = vrot.slane %v868, 4
      %v871 = vor.u32 %v870, %v866
      %v872 = vrot.slane %v871, 4
      %v874 = vshll.u32 %v789, 16
      %v876 = vrot.slane %v874, 5
      %v877 = vsel %vm805, %v872, %v876
      %v879 = vshrl.u32 %v761, 16
      %v881 = vrot.slane %v879, 4
      %v882 = vshll.u32 %v761, 16
      %v884 = vrot.slane %v882, 5
      %v885 = vor.u32 %v881, %v884
      %v886 = vrot.slane %v885, 4
      %v888 = vshll.u32 %v762, 16
      %v890 = vrot.slane %v888, 5
      %v891 = vsel %vm805, %v886, %v890
      %v892 = vshrl.u32 %v762, 16
      %v894 = vrot.slane %v892, 4
      %v895 = vor.u32 %v894, %v890
      %v896 = vrot.slane %v895, 4
      %v898 = vshll.u32 %v790, 16
      %v900 = vrot.slane %v898, 5
      %v901 = vsel %vm805, %v896, %v900
      %v903 = vshrl.u32 %v763, 16
      %v905 = vrot.slane %v903, 4
      %v906 = vshll.u32 %v763, 16
      %v908 = vrot.slane %v906, 5
      %v909 = vor.u32 %v905, %v908
      %v910 = vrot.slane %v909, 4
      %v912 = vshll.u32 %v764, 16
      %v914 = vrot.slane %v912, 5
      %v915 = vsel %vm805, %v910, %v914
      %v916 = vshrl.u32 %v764, 16
      %v918 = vrot.slane %v916, 4
      %v919 = vor.u32 %v918, %v914
      %v920 = vrot.slane %v919, 4
      %v922 = vshll.u32 %v791, 16
      %v924 = vrot.slane %v922, 5
      %v925 = vsel %vm805, %v920, %v924
      %v927 = vshrl.u32 %v765, 16
      %v929 = vrot.slane %v927, 4
      %v930 = vshll.u32 %v765, 16
      %v932 = vrot.slane %v930, 5
      %v933 = vor.u32 %v929, %v932
      %v934 = vrot.slane %v933, 4
      %v936 = vshll.u32 %v766, 16
      %v938 = vrot.slane %v936, 5
      %v939 = vsel %vm805, %v934, %v938
      %v940 = vshrl.u32 %v766, 16
      %v942 = vrot.slane %v940, 4
      %v943 = vor.u32 %v942, %v938
      %v944 = vrot.slane %v943, 4
      %v946 = vshll.u32 %v792, 16
      %v948 = vrot.slane %v946, 5
      %v949 = vsel %vm805, %v944, %v948
      %v951 = vshrl.u32 %v767, 16
      %v953 = vrot.slane %v951, 4
      %v954 = vshll.u32 %v767, 16
      %v956 = vrot.slane %v954, 5
      %v957 = vor.u32 %v953, %v956
      %v958 = vrot.slane %v957, 4
      %v960 = vshll.u32 %v768, 16
      %v962 = vrot.slane %v960, 5
      %v963 = vsel %vm805, %v958, %v962
      %v964 = vshrl.u32 %v768, 16
      %v966 = vrot.slane %v964, 4
      %v967 = vor.u32 %v966, %v962
      %v968 = vrot.slane %v967, 4
      %v970 = vshll.u32 %v793, 16
      %v972 = vrot.slane %v970, 5
      %v973 = vsel %vm805, %v968, %v972
      %v975 = vshrl.u32 %v769, 16
      %v977 = vrot.slane %v975, 4
      %v978 = vshll.u32 %v769, 16
      %v980 = vrot.slane %v978, 5
      %v981 = vor.u32 %v977, %v980
      %v982 = vrot.slane %v981, 4
      %v984 = vshll.u32 %v770, 16
      %v986 = vrot.slane %v984, 5
      %v987 = vsel %vm805, %v982, %v986
      %v988 = vshrl.u32 %v770, 16
      %v990 = vrot.slane %v988, 4
      %v991 = vor.u32 %v990, %v986
      %v992 = vrot.slane %v991, 4
      %v994 = vshll.u32 %v794, 16
      %v996 = vrot.slane %v994, 5
      %v997 = vsel %vm805, %v992, %v996
      %v999 = vshrl.u32 %v771, 16
      %v1001 = vrot.slane %v999, 4
      %v1002 = vshll.u32 %v771, 16
      %v1004 = vrot.slane %v1002, 5
      %v1005 = vor.u32 %v1001, %v1004
      %v1006 = vrot.slane %v1005, 4
      %v1008 = vshll.u32 %v772, 16
      %v1010 = vrot.slane %v1008, 5
      %v1011 = vsel %vm805, %v1006, %v1010
      %v1012 = vshrl.u32 %v772, 16
      %v1014 = vrot.slane %v1012, 4
      %v1015 = vor.u32 %v1014, %v1010
      %v1016 = vrot.slane %v1015, 4
      %v1018 = vshll.u32 %v795, 16
      %v1020 = vrot.slane %v1018, 5
      %v1021 = vsel %vm805, %v1016, %v1020
      %v1023 = vshrl.u32 %v773, 16
      %v1025 = vrot.slane %v1023, 4
      %v1026 = vshll.u32 %v773, 16
      %v1028 = vrot.slane %v1026, 5
      %v1029 = vor.u32 %v1025, %v1028
      %v1030 = vrot.slane %v1029, 4
      %v1032 = vshll.u32 %v774, 16
      %v1034 = vrot.slane %v1032, 5
      %v1035 = vsel %vm805, %v1030, %v1034
      %v1036 = vshrl.u32 %v774, 16
      %v1038 = vrot.slane %v1036, 4
      %v1039 = vor.u32 %v1038, %v1034
      %v1040 = vrot.slane %v1039, 4
      %v1042 = vshll.u32 %v796, 16
      %v1044 = vrot.slane %v1042, 5
      %v1045 = vsel %vm805, %v1040, %v1044
      %v1047 = vshrl.u32 %v775, 16
      %v1049 = vrot.slane %v1047, 4
      %v1050 = vshll.u32 %v775, 16
      %v1052 = vrot.slane %v1050, 5
      %v1053 = vor.u32 %v1049, %v1052
      %v1054 = vrot.slane %v1053, 4
      %v1056 = vshll.u32 %v776, 16
      %v1058 = vrot.slane %v1056, 5
      %v1059 = vsel %vm805, %v1054, %v1058
      %v1060 = vshrl.u32 %v776, 16
      %v1062 = vrot.slane %v1060, 4
      %v1063 = vor.u32 %v1062, %v1058
      %v1064 = vrot.slane %v1063, 4
      %v1066 = vshll.u32 %v797, 16
      %v1068 = vrot.slane %v1066, 5
      %v1069 = vsel %vm805, %v1064, %v1068
      %v1071 = vshrl.u32 %v777, 16
      %v1073 = vrot.slane %v1071, 4
      %v1074 = vshll.u32 %v777, 16
      %v1076 = vrot.slane %v1074, 5
      %v1077 = vor.u32 %v1073, %v1076
      %v1078 = vrot.slane %v1077, 4
      %v1080 = vshll.u32 %v778, 16
      %v1082 = vrot.slane %v1080, 5
      %v1083 = vsel %vm805, %v1078, %v1082
      %v1084 = vshrl.u32 %v778, 16
      %v1086 = vrot.slane %v1084, 4
      %v1087 = vor.u32 %v1086, %v1082
      %v1088 = vrot.slane %v1087, 4
      %v1090 = vshll.u32 %v798, 16
      %v1092 = vrot.slane %v1090, 5
      %v1093 = vsel %vm805, %v1088, %v1092
      %v1095 = vshrl.u32 %v779, 16
      %v1097 = vrot.slane %v1095, 4
      %v1098 = vshll.u32 %v779, 16
      %v1100 = vrot.slane %v1098, 5
      %v1101 = vor.u32 %v1097, %v1100
      %v1102 = vrot.slane %v1101, 4
      %v1104 = vshll.u32 %v780, 16
      %v1106 = vrot.slane %v1104, 5
      %v1107 = vsel %vm805, %v1102, %v1106
      %v1108 = vshrl.u32 %v780, 16
      %v1110 = vrot.slane %v1108, 4
      %v1111 = vor.u32 %v1110, %v1106
      %v1112 = vrot.slane %v1111, 4
      %v1114 = vshll.u32 %v799, 16
      %v1116 = vrot.slane %v1114, 5
      %v1117 = vsel %vm805, %v1112, %v1116
      %v1119 = vshrl.u32 %v781, 16
      %v1121 = vrot.slane %v1119, 4
      %v1122 = vshll.u32 %v781, 16
      %v1124 = vrot.slane %v1122, 5
      %v1125 = vor.u32 %v1121, %v1124
      %v1126 = vrot.slane %v1125, 4
      %v1128 = vshll.u32 %v782, 16
      %v1130 = vrot.slane %v1128, 5
      %v1131 = vsel %vm805, %v1126, %v1130
      %v1132 = vshrl.u32 %v782, 16
      %v1134 = vrot.slane %v1132, 4
      %v1135 = vor.u32 %v1134, %v1130
      %v1136 = vrot.slane %v1135, 4
      %v1138 = vshll.u32 %v800, 16
      %v1140 = vrot.slane %v1138, 5
      %v1141 = vsel %vm805, %v1136, %v1140
      %v1143 = vshrl.u32 %v783, 16
      %v1145 = vrot.slane %v1143, 4
      %v1146 = vshll.u32 %v783, 16
      %v1148 = vrot.slane %v1146, 5
      %v1149 = vor.u32 %v1145, %v1148
      %v1150 = vrot.slane %v1149, 4
      %v1152 = vshll.u32 %v784, 16
      %v1154 = vrot.slane %v1152, 5
      %v1155 = vsel %vm805, %v1150, %v1154
      %v1156 = vshrl.u32 %v784, 16
      %v1158 = vrot.slane %v1156, 4
      %v1159 = vor.u32 %v1158, %v1154
      %v1160 = vrot.slane %v1159, 4
      %v1162 = vshll.u32 %v801, 16
      %v1164 = vrot.slane %v1162, 5
      %v1165 = vsel %vm805, %v1160, %v1164
      %v1167 = vshrl.u32 %v785, 16
      %v1169 = vrot.slane %v1167, 4
      %v1170 = vshll.u32 %v785, 16
      %v1172 = vrot.slane %v1170, 5
      %v1173 = vor.u32 %v1169, %v1172
      %v1174 = vrot.slane %v1173, 4
      %v1176 = vshll.u32 %v786, 16
      %v1178 = vrot.slane %v1176, 5
      %v1179 = vsel %vm805, %v1174, %v1178
      %v1180 = vshrl.u32 %v786, 16
      %v1182 = vrot.slane %v1180, 4
      %v1183 = vor.u32 %v1182, %v1178
      %v1184 = vrot.slane %v1183, 4
      %v1186 = vshll.u32 %v802, 16
      %v1188 = vrot.slane %v1186, 5
      %v1189 = vsel %vm805, %v1184, %v1188
      %v1190 = vld [vmem:[#allocation2] sm:$0xe]
      %v1191 = vld [vmem:[#allocation2 + $0xc] sm:$0xe]
      %v1192 = vld [vmem:[#allocation2 + $0x18] sm:$0xe]
      %v1193 = vld [vmem:[#allocation2 + $0x24] sm:$0xe]
      %v1194 = vld [vmem:[#allocation2 + $0x30] sm:$0xe]
      %v1195 = vld [vmem:[#allocation2 + $0x3c] sm:$0xe]
      %v1196 = vld [vmem:[#allocation2 + $0x48] sm:$0xe]
      %v1197 = vld [vmem:[#allocation2 + $0x54] sm:$0xe]
      %v1198 = vld [vmem:[#allocation2 + $0x60] sm:$0xe]
      %v1199 = vld [vmem:[#allocation2 + $0x6c] sm:$0xe]
      %v1200 = vld [vmem:[#allocation2 + $0x78] sm:$0xe]
      %v1201 = vld [vmem:[#allocation2 + $0x84] sm:$0xe]
      %v1202 = vld [vmem:[#allocation2 + $0x90] sm:$0xe]
      %v1203 = vld [vmem:[#allocation2 + $0x9c] sm:$0xe]
      %v1204 = vld [vmem:[#allocation2 + $0xa8] sm:$0xe]
      %v1205 = vld [vmem:[#allocation2 + $0xb4] sm:$0xe]
      %vm1254 = vcmask 1042432
      %vm1255 = vcmask 1046532
      %vm1256 = vmor %vm1254, %vm1255
      %v1257 = vrot.slane %v1190, 5
      %v1258 = vrot.slane %v1257, 4
      %v1259 = vrot.slane %v756, 5
      %v1260 = vsel %vm1256, %v1258, %v1259
      %v1261 = vrot.slane %v1259, 4
      %v1262 = vrot.slane %v787, 5
      %v1263 = vsel %vm1256, %v1261, %v1262
      %v1264 = vrot.slane %v1191, 5
      %v1265 = vrot.slane %v1264, 4
      %v1266 = vrot.slane %v758, 5
      %v1267 = vsel %vm1256, %v1265, %v1266
      %v1268 = vrot.slane %v1266, 4
      %v1269 = vrot.slane %v788, 5
      %v1270 = vsel %vm1256, %v1268, %v1269
      %v1271 = vrot.slane %v1192, 5
      %v1272 = vrot.slane %v1271, 4
      %v1273 = vrot.slane %v760, 5
      %v1274 = vsel %vm1256, %v1272, %v1273
      %v1275 = vrot.slane %v1273, 4
      %v1276 = vrot.slane %v789, 5
      %v1277 = vsel %vm1256, %v1275, %v1276
      %v1278 = vrot.slane %v1193, 5
      %v1279 = vrot.slane %v1278, 4
      %v1280 = vrot.slane %v762, 5
      %v1281 = vsel %vm1256, %v1279, %v1280
      %v1282 = vrot.slane %v1280, 4
      %v1283 = vrot.slane %v790, 5
      %v1284 = vsel %vm1256, %v1282, %v1283
      %v1285 = vrot.slane %v1194, 5
      %v1286 = vrot.slane %v1285, 4
      %v1287 = vrot.slane %v764, 5
      %v1288 = vsel %vm1256, %v1286, %v1287
      %v1289 = vrot.slane %v1287, 4
      %v1290 = vrot.slane %v791, 5
      %v1291 = vsel %vm1256, %v1289, %v1290
      %v1292 = vrot.slane %v1195, 5
      %v1293 = vrot.slane %v1292, 4
      %v1294 = vrot.slane %v766, 5
      %v1295 = vsel %vm1256, %v1293, %v1294
      %v1296 = vrot.slane %v1294, 4
      %v1297 = vrot.slane %v792, 5
      %v1298 = vsel %vm1256, %v1296, %v1297
      %v1299 = vrot.slane %v1196, 5
      %v1300 = vrot.slane %v1299, 4
      %v1301 = vrot.slane %v768, 5
      %v1302 = vsel %vm1256, %v1300, %v1301
      %v1303 = vrot.slane %v1301, 4
      %v1304 = vrot.slane %v793, 5
      %v1305 = vsel %vm1256, %v1303, %v1304
      %v1306 = vrot.slane %v1197, 5
      %v1307 = vrot.slane %v1306, 4
      %v1308 = vrot.slane %v770, 5
      %v1309 = vsel %vm1256, %v1307, %v1308
      %v1310 = vrot.slane %v1308, 4
      %v1311 = vrot.slane %v794, 5
      %v1312 = vsel %vm1256, %v1310, %v1311
      %v1313 = vrot.slane %v1198, 5
      %v1314 = vrot.slane %v1313, 4
      %v1315 = vrot.slane %v772, 5
      %v1316 = vsel %vm1256, %v1314, %v1315
      %v1317 = vrot.slane %v1315, 4
      %v1318 = vrot.slane %v795, 5
      %v1319 = vsel %vm1256, %v1317, %v1318
      %v1320 = vrot.slane %v1199, 5
      %v1321 = vrot.slane %v1320, 4
      %v1322 = vrot.slane %v774, 5
      %v1323 = vsel %vm1256, %v1321, %v1322
      %v1324 = vrot.slane %v1322, 4
      %v1325 = vrot.slane %v796, 5
      %v1326 = vsel %vm1256, %v1324, %v1325
      %v1327 = vrot.slane %v1200, 5
      %v1328 = vrot.slane %v1327, 4
      %v1329 = vrot.slane %v776, 5
      %v1330 = vsel %vm1256, %v1328, %v1329
      %v1331 = vrot.slane %v1329, 4
      %v1332 = vrot.slane %v797, 5
      %v1333 = vsel %vm1256, %v1331, %v1332
      %v1334 = vrot.slane %v1201, 5
      %v1335 = vrot.slane %v1334, 4
      %v1336 = vrot.slane %v778, 5
      %v1337 = vsel %vm1256, %v1335, %v1336
      %v1338 = vrot.slane %v1336, 4
      %v1339 = vrot.slane %v798, 5
      %v1340 = vsel %vm1256, %v1338, %v1339
      %v1341 = vrot.slane %v1202, 5
      %v1342 = vrot.slane %v1341, 4
      %v1343 = vrot.slane %v780, 5
      %v1344 = vsel %vm1256, %v1342, %v1343
      %v1345 = vrot.slane %v1343, 4
      %v1346 = vrot.slane %v799, 5
      %v1347 = vsel %vm1256, %v1345, %v1346
      %v1348 = vrot.slane %v1203, 5
      %v1349 = vrot.slane %v1348, 4
      %v1350 = vrot.slane %v782, 5
      %v1351 = vsel %vm1256, %v1349, %v1350
      %v1352 = vrot.slane %v1350, 4
      %v1353 = vrot.slane %v800, 5
      %v1354 = vsel %vm1256, %v1352, %v1353
      %v1355 = vrot.slane %v1204, 5
      %v1356 = vrot.slane %v1355, 4
      %v1357 = vrot.slane %v784, 5
      %v1358 = vsel %vm1256, %v1356, %v1357
      %v1359 = vrot.slane %v1357, 4
      %v1360 = vrot.slane %v801, 5
      %v1361 = vsel %vm1256, %v1359, %v1360
      %v1362 = vrot.slane %v1205, 5
      %v1363 = vrot.slane %v1362, 4
      %v1364 = vrot.slane %v786, 5
      %v1365 = vsel %vm1256, %v1363, %v1364
      %v1366 = vrot.slane %v1364, 4
      %v1367 = vrot.slane %v802, 5
      %v1368 = vsel %vm1256, %v1366, %v1367
      %v1369 = vld [vmem:[%s637] sm:$0xf]
      %v1370 = vld [vmem:[%s637 + $0x4] sm:$0xf]
      %v1371 = vld [vmem:[%s637 + $0xc] sm:$0xf]
      %v1372 = vld [vmem:[%s637 + $0x10] sm:$0xf]
      %v1373 = vld [vmem:[%s637 + $0x18] sm:$0xf]
      %v1374 = vld [vmem:[%s637 + $0x1c] sm:$0xf]
      %v1375 = vld [vmem:[%s637 + $0x24] sm:$0xf]
      %v1376 = vld [vmem:[%s637 + $0x28] sm:$0xf]
      %v1377 = vld [vmem:[%s637 + $0x30] sm:$0xf]
      %v1378 = vld [vmem:[%s637 + $0x34] sm:$0xf]
      %v1379 = vld [vmem:[%s637 + $0x3c] sm:$0xf]
      %v1380 = vld [vmem:[%s637 + $0x40] sm:$0xf]
      %v1381 = vld [vmem:[%s637 + $0x48] sm:$0xf]
      %v1382 = vld [vmem:[%s637 + $0x4c] sm:$0xf]
      %v1383 = vld [vmem:[%s637 + $0x54] sm:$0xf]
      %v1384 = vld [vmem:[%s637 + $0x58] sm:$0xf]
      %v1385 = vld [vmem:[%s637 + $0x60] sm:$0xf]
      %v1386 = vld [vmem:[%s637 + $0x64] sm:$0xf]
      %v1387 = vld [vmem:[%s637 + $0x6c] sm:$0xf]
      %v1388 = vld [vmem:[%s637 + $0x70] sm:$0xf]
      %v1389 = vld [vmem:[%s637 + $0x78] sm:$0xf]
      %v1390 = vld [vmem:[%s637 + $0x7c] sm:$0xf]
      %v1391 = vld [vmem:[%s637 + $0x84] sm:$0xf]
      %v1392 = vld [vmem:[%s637 + $0x88] sm:$0xf]
      %v1393 = vld [vmem:[%s637 + $0x90] sm:$0xf]
      %v1394 = vld [vmem:[%s637 + $0x94] sm:$0xf]
      %v1395 = vld [vmem:[%s637 + $0x9c] sm:$0xf]
      %v1396 = vld [vmem:[%s637 + $0xa0] sm:$0xf]
      %v1397 = vld [vmem:[%s637 + $0xa8] sm:$0xf]
      %v1398 = vld [vmem:[%s637 + $0xac] sm:$0xf]
      %v1399 = vld [vmem:[%s637 + $0xb4] sm:$0xf]
      %v1400 = vld [vmem:[%s637 + $0xb8] sm:$0xf]
      %v1417 = vunpack.c.l.b16 %v755
      %v1418 = vunpack.c.l.b16 %v756
      %v1419 = vunpack.c.l.b16 %v757
      %v1420 = vunpack.c.l.b16 %v758
      %v1421 = vunpack.c.l.b16 %v759
      %v1422 = vunpack.c.l.b16 %v760
      %v1423 = vunpack.c.l.b16 %v761
      %v1424 = vunpack.c.l.b16 %v762
      %v1425 = vunpack.c.l.b16 %v763
      %v1426 = vunpack.c.l.b16 %v764
      %v1427 = vunpack.c.l.b16 %v765
      %v1428 = vunpack.c.l.b16 %v766
      %v1429 = vunpack.c.l.b16 %v767
      %v1430 = vunpack.c.l.b16 %v768
      %v1431 = vunpack.c.l.b16 %v769
      %v1432 = vunpack.c.l.b16 %v770
      %v1433 = vunpack.c.l.b16 %v771
      %v1434 = vunpack.c.l.b16 %v772
      %v1435 = vunpack.c.l.b16 %v773
      %v1436 = vunpack.c.l.b16 %v774
      %v1437 = vunpack.c.l.b16 %v775
      %v1438 = vunpack.c.l.b16 %v776
      %v1439 = vunpack.c.l.b16 %v777
      %v1440 = vunpack.c.l.b16 %v778
      %v1441 = vunpack.c.l.b16 %v779
      %v1442 = vunpack.c.l.b16 %v780
      %v1443 = vunpack.c.l.b16 %v781
      %v1444 = vunpack.c.l.b16 %v782
      %v1445 = vunpack.c.l.b16 %v783
      %v1446 = vunpack.c.l.b16 %v784
      %v1447 = vunpack.c.l.b16 %v785
      %v1448 = vunpack.c.l.b16 %v786
      %v1449 = vpack.c.b16 %v1418, %v1417
      %v1450 = vpack.c.b16 %v1420, %v1419
      %v1451 = vpack.c.b16 %v1422, %v1421
      %v1452 = vpack.c.b16 %v1424, %v1423
      %v1453 = vpack.c.b16 %v1426, %v1425
      %v1454 = vpack.c.b16 %v1428, %v1427
      %v1455 = vpack.c.b16 %v1430, %v1429
      %v1456 = vpack.c.b16 %v1432, %v1431
      %v1457 = vpack.c.b16 %v1434, %v1433
      %v1458 = vpack.c.b16 %v1436, %v1435
      %v1459 = vpack.c.b16 %v1438, %v1437
      %v1460 = vpack.c.b16 %v1440, %v1439
      %v1461 = vpack.c.b16 %v1442, %v1441
      %v1462 = vpack.c.b16 %v1444, %v1443
      %v1463 = vpack.c.b16 %v1446, %v1445
      %v1464 = vpack.c.b16 %v1448, %v1447
      %v1465 = vunpack.c.l.b16 %v819
      %v1466 = vunpack.c.l.b16 %v829
      %v1467 = vunpack.c.l.b16 %v843
      %v1468 = vunpack.c.l.b16 %v853
      %v1469 = vunpack.c.l.b16 %v867
      %v1470 = vunpack.c.l.b16 %v877
      %v1471 = vunpack.c.l.b16 %v891
      %v1472 = vunpack.c.l.b16 %v901
      %v1473 = vunpack.c.l.b16 %v915
      %v1474 = vunpack.c.l.b16 %v925
      %v1475 = vunpack.c.l.b16 %v939
      %v1476 = vunpack.c.l.b16 %v949
      %v1477 = vunpack.c.l.b16 %v963
      %v1478 = vunpack.c.l.b16 %v973
      %v1479 = vunpack.c.l.b16 %v987
      %v1480 = vunpack.c.l.b16 %v997
      %v1481 = vunpack.c.l.b16 %v1011
      %v1482 = vunpack.c.l.b16 %v1021
      %v1483 = vunpack.c.l.b16 %v1035
      %v1484 = vunpack.c.l.b16 %v1045
      %v1485 = vunpack.c.l.b16 %v1059
      %v1486 = vunpack.c.l.b16 %v1069
      %v1487 = vunpack.c.l.b16 %v1083
      %v1488 = vunpack.c.l.b16 %v1093
      %v1489 = vunpack.c.l.b16 %v1107
      %v1490 = vunpack.c.l.b16 %v1117
      %v1491 = vunpack.c.l.b16 %v1131
      %v1492 = vunpack.c.l.b16 %v1141
      %v1493 = vunpack.c.l.b16 %v1155
      %v1494 = vunpack.c.l.b16 %v1165
      %v1495 = vunpack.c.l.b16 %v1179
      %v1496 = vunpack.c.l.b16 %v1189
      %v1497 = vpack.c.b16 %v1466, %v1465
      %v1498 = vpack.c.b16 %v1468, %v1467
      %v1499 = vpack.c.b16 %v1470, %v1469
      %v1500 = vpack.c.b16 %v1472, %v1471
      %v1501 = vpack.c.b16 %v1474, %v1473
      %v1502 = vpack.c.b16 %v1476, %v1475
      %v1503 = vpack.c.b16 %v1478, %v1477
      %v1504 = vpack.c.b16 %v1480, %v1479
      %v1505 = vpack.c.b16 %v1482, %v1481
      %v1506 = vpack.c.b16 %v1484, %v1483
      %v1507 = vpack.c.b16 %v1486, %v1485
      %v1508 = vpack.c.b16 %v1488, %v1487
      %v1509 = vpack.c.b16 %v1490, %v1489
      %v1510 = vpack.c.b16 %v1492, %v1491
      %v1511 = vpack.c.b16 %v1494, %v1493
      %v1512 = vpack.c.b16 %v1496, %v1495
      %1513 = vrot.lane.b32.xlu0 %v1497, 64
      %v1514 = vpop.permute.xlu0 %1513
      %1515 = vrot.lane.b32.xlu0 %v1498, 64
      %v1516 = vpop.permute.xlu0 %1515
      %1517 = vrot.lane.b32.xlu0 %v1499, 64
      %v1518 = vpop.permute.xlu0 %1517
      %1519 = vrot.lane.b32.xlu0 %v1500, 64
      %v1520 = vpop.permute.xlu0 %1519
      %1521 = vrot.lane.b32.xlu0 %v1501, 64
      %v1522 = vpop.permute.xlu0 %1521
      %1523 = vrot.lane.b32.xlu0 %v1502, 64
      %v1524 = vpop.permute.xlu0 %1523
      %1525 = vrot.lane.b32.xlu0 %v1503, 64
      %v1526 = vpop.permute.xlu0 %1525
      %1527 = vrot.lane.b32.xlu0 %v1504, 64
      %v1528 = vpop.permute.xlu0 %1527
      %1529 = vrot.lane.b32.xlu0 %v1505, 64
      %v1530 = vpop.permute.xlu0 %1529
      %1531 = vrot.lane.b32.xlu0 %v1506, 64
      %v1532 = vpop.permute.xlu0 %1531
      %1533 = vrot.lane.b32.xlu0 %v1507, 64
      %v1534 = vpop.permute.xlu0 %1533
      %1535 = vrot.lane.b32.xlu0 %v1508, 64
      %v1536 = vpop.permute.xlu0 %1535
      %1537 = vrot.lane.b32.xlu0 %v1509, 64
      %v1538 = vpop.permute.xlu0 %1537
      %1539 = vrot.lane.b32.xlu0 %v1510, 64
      %v1540 = vpop.permute.xlu0 %1539
      %1541 = vrot.lane.b32.xlu0 %v1511, 64
      %v1542 = vpop.permute.xlu0 %1541
      %1543 = vrot.lane.b32.xlu0 %v1512, 64
      %v1544 = vpop.permute.xlu0 %1543
      %v1545 = vunpack.c.l.b16 %v1260
      %v1546 = vunpack.c.l.b16 %v1263
      %v1547 = vunpack.c.l.b16 %v1267
      %v1548 = vunpack.c.l.b16 %v1270
      %v1549 = vunpack.c.l.b16 %v1274
      %v1550 = vunpack.c.l.b16 %v1277
      %v1551 = vunpack.c.l.b16 %v1281
      %v1552 = vunpack.c.l.b16 %v1284
      %v1553 = vunpack.c.l.b16 %v1288
      %v1554 = vunpack.c.l.b16 %v1291
      %v1555 = vunpack.c.l.b16 %v1295
      %v1556 = vunpack.c.l.b16 %v1298
      %v1557 = vunpack.c.l.b16 %v1302
      %v1558 = vunpack.c.l.b16 %v1305
      %v1559 = vunpack.c.l.b16 %v1309
      %v1560 = vunpack.c.l.b16 %v1312
      %v1561 = vunpack.c.l.b16 %v1316
      %v1562 = vunpack.c.l.b16 %v1319
      %v1563 = vunpack.c.l.b16 %v1323
      %v1564 = vunpack.c.l.b16 %v1326
      %v1565 = vunpack.c.l.b16 %v1330
      %v1566 = vunpack.c.l.b16 %v1333
      %v1567 = vunpack.c.l.b16 %v1337
      %v1568 = vunpack.c.l.b16 %v1340
      %v1569 = vunpack.c.l.b16 %v1344
      %v1570 = vunpack.c.l.b16 %v1347
      %v1571 = vunpack.c.l.b16 %v1351
      %v1572 = vunpack.c.l.b16 %v1354
      %v1573 = vunpack.c.l.b16 %v1358
      %v1574 = vunpack.c.l.b16 %v1361
      %v1575 = vunpack.c.l.b16 %v1365
      %v1576 = vunpack.c.l.b16 %v1368
      %v1577 = vpack.c.b16 %v1546, %v1545
      %v1578 = vpack.c.b16 %v1548, %v1547
      %v1579 = vpack.c.b16 %v1550, %v1549
      %v1580 = vpack.c.b16 %v1552, %v1551
      %v1581 = vpack.c.b16 %v1554, %v1553
      %v1582 = vpack.c.b16 %v1556, %v1555
      %v1583 = vpack.c.b16 %v1558, %v1557
      %v1584 = vpack.c.b16 %v1560, %v1559
      %v1585 = vpack.c.b16 %v1562, %v1561
      %v1586 = vpack.c.b16 %v1564, %v1563
      %v1587 = vpack.c.b16 %v1566, %v1565
      %v1588 = vpack.c.b16 %v1568, %v1567
      %v1589 = vpack.c.b16 %v1570, %v1569
      %v1590 = vpack.c.b16 %v1572, %v1571
      %v1591 = vpack.c.b16 %v1574, %v1573
      %v1592 = vpack.c.b16 %v1576, %v1575
      %v1625 = vunpack.c.l.b16 %v1369
      %v1626 = vunpack.c.l.b16 %v1370
      %v1627 = vunpack.c.l.b16 %v1371
      %v1628 = vunpack.c.l.b16 %v1372
      %v1629 = vunpack.c.l.b16 %v1373
      %v1630 = vunpack.c.l.b16 %v1374
      %v1631 = vunpack.c.l.b16 %v1375
      %v1632 = vunpack.c.l.b16 %v1376
      %v1633 = vunpack.c.l.b16 %v1377
      %v1634 = vunpack.c.l.b16 %v1378
      %v1635 = vunpack.c.l.b16 %v1379
      %v1636 = vunpack.c.l.b16 %v1380
      %v1637 = vunpack.c.l.b16 %v1381
      %v1638 = vunpack.c.l.b16 %v1382
      %v1639 = vunpack.c.l.b16 %v1383
      %v1640 = vunpack.c.l.b16 %v1384
      %v1641 = vunpack.c.l.b16 %v1385
      %v1642 = vunpack.c.l.b16 %v1386
      %v1643 = vunpack.c.l.b16 %v1387
      %v1644 = vunpack.c.l.b16 %v1388
      %v1645 = vunpack.c.l.b16 %v1389
      %v1646 = vunpack.c.l.b16 %v1390
      %v1647 = vunpack.c.l.b16 %v1391
      %v1648 = vunpack.c.l.b16 %v1392
      %v1649 = vunpack.c.l.b16 %v1393
      %v1650 = vunpack.c.l.b16 %v1394
      %v1651 = vunpack.c.l.b16 %v1395
      %v1652 = vunpack.c.l.b16 %v1396
      %v1653 = vunpack.c.l.b16 %v1397
      %v1654 = vunpack.c.l.b16 %v1398
      %v1655 = vunpack.c.l.b16 %v1399
      %v1656 = vunpack.c.l.b16 %v1400
      %v1657 = vpack.c.b16 %v1626, %v1625
      %v1658 = vpack.c.b16 %v1628, %v1627
      %v1659 = vpack.c.b16 %v1630, %v1629
      %v1660 = vpack.c.b16 %v1632, %v1631
      %v1661 = vpack.c.b16 %v1634, %v1633
      %v1662 = vpack.c.b16 %v1636, %v1635
      %v1663 = vpack.c.b16 %v1638, %v1637
      %v1664 = vpack.c.b16 %v1640, %v1639
      %v1665 = vpack.c.b16 %v1642, %v1641
      %v1666 = vpack.c.b16 %v1644, %v1643
      %v1667 = vpack.c.b16 %v1646, %v1645
      %v1668 = vpack.c.b16 %v1648, %v1647
      %v1669 = vpack.c.b16 %v1650, %v1649
      %v1670 = vpack.c.b16 %v1652, %v1651
      %v1671 = vpack.c.b16 %v1654, %v1653
      %v1672 = vpack.c.b16 %v1656, %v1655
      %1673 = vrot.lane.b32.xlu0 %v1657, 64
      %v1674 = vpop.permute.xlu0 %1673
      %1675 = vrot.lane.b32.xlu0 %v1658, 64
      %v1676 = vpop.permute.xlu0 %1675
      %1677 = vrot.lane.b32.xlu0 %v1659, 64
      %v1678 = vpop.permute.xlu0 %1677
      %1679 = vrot.lane.b32.xlu0 %v1660, 64
      %v1680 = vpop.permute.xlu0 %1679
      %1681 = vrot.lane.b32.xlu0 %v1661, 64
      %v1682 = vpop.permute.xlu0 %1681
      %1683 = vrot.lane.b32.xlu0 %v1662, 64
      %v1684 = vpop.permute.xlu0 %1683
      %1685 = vrot.lane.b32.xlu0 %v1663, 64
      %v1686 = vpop.permute.xlu0 %1685
      %1687 = vrot.lane.b32.xlu0 %v1664, 64
      %v1688 = vpop.permute.xlu0 %1687
      %1689 = vrot.lane.b32.xlu0 %v1665, 64
      %v1690 = vpop.permute.xlu0 %1689
      %1691 = vrot.lane.b32.xlu0 %v1666, 64
      %v1692 = vpop.permute.xlu0 %1691
      %1693 = vrot.lane.b32.xlu0 %v1667, 64
      %v1694 = vpop.permute.xlu0 %1693
      %1695 = vrot.lane.b32.xlu0 %v1668, 64
      %v1696 = vpop.permute.xlu0 %1695
      %1697 = vrot.lane.b32.xlu0 %v1669, 64
      %v1698 = vpop.permute.xlu0 %1697
      %1699 = vrot.lane.b32.xlu0 %v1670, 64
      %v1700 = vpop.permute.xlu0 %1699
      %1701 = vrot.lane.b32.xlu0 %v1671, 64
      %v1702 = vpop.permute.xlu0 %1701
      %1703 = vrot.lane.b32.xlu0 %v1672, 64
      %v1704 = vpop.permute.xlu0 %1703
      %vm1705 = vcmask 523264
      %v1708 = vsel %vm1705, %v1449, %v1514
      %v1712 = vsel %vm1705, %v1450, %v1516
      %v1716 = vsel %vm1705, %v1451, %v1518
      %v1720 = vsel %vm1705, %v1452, %v1520
      %v1724 = vsel %vm1705, %v1453, %v1522
      %v1728 = vsel %vm1705, %v1454, %v1524
      %v1732 = vsel %vm1705, %v1455, %v1526
      %v1736 = vsel %vm1705, %v1456, %v1528
      %v1740 = vsel %vm1705, %v1457, %v1530
      %v1744 = vsel %vm1705, %v1458, %v1532
      %v1748 = vsel %vm1705, %v1459, %v1534
      %v1752 = vsel %vm1705, %v1460, %v1536
      %v1756 = vsel %vm1705, %v1461, %v1538
      %v1760 = vsel %vm1705, %v1462, %v1540
      %v1764 = vsel %vm1705, %v1463, %v1542
      %v1768 = vsel %vm1705, %v1464, %v1544
      %v1772 = vsel %vm1705, %v1577, %v1674
      %v1776 = vsel %vm1705, %v1578, %v1676
      %v1780 = vsel %vm1705, %v1579, %v1678
      %v1784 = vsel %vm1705, %v1580, %v1680
      %v1788 = vsel %vm1705, %v1581, %v1682
      %v1792 = vsel %vm1705, %v1582, %v1684
      %v1796 = vsel %vm1705, %v1583, %v1686
      %v1800 = vsel %vm1705, %v1584, %v1688
      %v1804 = vsel %vm1705, %v1585, %v1690
      %v1808 = vsel %vm1705, %v1586, %v1692
      %v1812 = vsel %vm1705, %v1587, %v1694
      %v1816 = vsel %vm1705, %v1588, %v1696
      %v1820 = vsel %vm1705, %v1589, %v1698
      %v1824 = vsel %vm1705, %v1590, %v1700
      %v1828 = vsel %vm1705, %v1591, %v1702
      %v1832 = vsel %vm1705, %v1592, %v1704
      %v1834 = vld [vmem:[%s1] sm:$0xf]
      %v1835 = vld [vmem:[%s1 + $0x4] sm:$0xf]
      %v1836 = vld [vmem:[%s1 + $0x8] sm:$0xf]
      %v1837 = vld [vmem:[%s1 + $0xc] sm:$0xf]
      %v1838 = vld [vmem:[%s1 + $0x10] sm:$0xf]
      %v1839 = vld [vmem:[%s1 + $0x14] sm:$0xf]
      %v1840 = vld [vmem:[%s1 + $0x18] sm:$0xf]
      %v1841 = vld [vmem:[%s1 + $0x1c] sm:$0xf]
      %v1842 = vld [vmem:[%s1 + $0x20] sm:$0xf]
      %v1843 = vld [vmem:[%s1 + $0x24] sm:$0xf]
      %v1844 = vld [vmem:[%s1 + $0x28] sm:$0xf]
      %v1845 = vld [vmem:[%s1 + $0x2c] sm:$0xf]
      %v1846 = vld [vmem:[%s1 + $0x30] sm:$0xf]
      %v1847 = vld [vmem:[%s1 + $0x34] sm:$0xf]
      %v1848 = vld [vmem:[%s1 + $0x38] sm:$0xf]
      %v1849 = vld [vmem:[%s1 + $0x3c] sm:$0xf]
      %v1850 = vld [vmem:[%s1 + $0x40] sm:$0xf]
      %v1851 = vld [vmem:[%s1 + $0x44] sm:$0xf]
      %v1852 = vld [vmem:[%s1 + $0x48] sm:$0xf]
      %v1853 = vld [vmem:[%s1 + $0x4c] sm:$0xf]
      %v1854 = vld [vmem:[%s1 + $0x50] sm:$0xf]
      %v1855 = vld [vmem:[%s1 + $0x54] sm:$0xf]
      %v1856 = vld [vmem:[%s1 + $0x58] sm:$0xf]
      %v1857 = vld [vmem:[%s1 + $0x5c] sm:$0xf]
      %v1858 = vld [vmem:[%s1 + $0x60] sm:$0xf]
      %v1859 = vld [vmem:[%s1 + $0x64] sm:$0xf]
      %v1860 = vld [vmem:[%s1 + $0x68] sm:$0xf]
      %v1861 = vld [vmem:[%s1 + $0x6c] sm:$0xf]
      %v1862 = vld [vmem:[%s1 + $0x70] sm:$0xf]
      %v1863 = vld [vmem:[%s1 + $0x74] sm:$0xf]
      %v1864 = vld [vmem:[%s1 + $0x78] sm:$0xf]
      %v1865 = vld [vmem:[%s1 + $0x7c] sm:$0xf]
      %v1866 = vld [vmem:[%s637 + $0x8] sm:$0x1]
      %v1867 = vld [vmem:[%s637 + $0x14] sm:$0x1]
      %v1868 = vld [vmem:[%s637 + $0x20] sm:$0x1]
      %v1869 = vld [vmem:[%s637 + $0x2c] sm:$0x1]
      %v1870 = vld [vmem:[%s637 + $0x38] sm:$0x1]
      %v1871 = vld [vmem:[%s637 + $0x44] sm:$0x1]
      %v1872 = vld [vmem:[%s637 + $0x50] sm:$0x1]
      %v1873 = vld [vmem:[%s637 + $0x5c] sm:$0x1]
      %v1874 = vld [vmem:[%s637 + $0x68] sm:$0x1]
      %v1875 = vld [vmem:[%s637 + $0x74] sm:$0x1]
      %v1876 = vld [vmem:[%s637 + $0x80] sm:$0x1]
      %v1877 = vld [vmem:[%s637 + $0x8c] sm:$0x1]
      %v1878 = vld [vmem:[%s637 + $0x98] sm:$0x1]
      %v1879 = vld [vmem:[%s637 + $0xa4] sm:$0x1]
      %v1880 = vld [vmem:[%s637 + $0xb0] sm:$0x1]
      %v1881 = vld [vmem:[%s637 + $0xbc] sm:$0x1]
      %v1883 = vshrl.u32 %v1369, 16
      %v1885 = vrot.slane %v1883, 4
      %v1886 = vshll.u32 %v1369, 16
      %v1888 = vrot.slane %v1886, 5
      %v1889 = vor.u32 %v1885, %v1888
      %v1890 = vrot.slane %v1889, 4
      %v1892 = vshll.u32 %v1370, 16
      %v1894 = vrot.slane %v1892, 5
      %v1895 = vsel %vm805, %v1890, %v1894
      %v1896 = vshrl.u32 %v1370, 16
      %v1898 = vrot.slane %v1896, 4
      %v1899 = vor.u32 %v1898, %v1894
      %v1900 = vrot.slane %v1899, 4
      %v1902 = vshll.u32 %v1866, 16
      %v1904 = vrot.slane %v1902, 5
      %v1905 = vsel %vm805, %v1900, %v1904
      %v1907 = vshrl.u32 %v1371, 16
      %v1909 = vrot.slane %v1907, 4
      %v1910 = vshll.u32 %v1371, 16
      %v1912 = vrot.slane %v1910, 5
      %v1913 = vor.u32 %v1909, %v1912
      %v1914 = vrot.slane %v1913, 4
      %v1916 = vshll.u32 %v1372, 16
      %v1918 = vrot.slane %v1916, 5
      %v1919 = vsel %vm805, %v1914, %v1918
      %v1920 = vshrl.u32 %v1372, 16
      %v1922 = vrot.slane %v1920, 4
      %v1923 = vor.u32 %v1922, %v1918
      %v1924 = vrot.slane %v1923, 4
      %v1926 = vshll.u32 %v1867, 16
      %v1928 = vrot.slane %v1926, 5
      %v1929 = vsel %vm805, %v1924, %v1928
      %v1931 = vshrl.u32 %v1373, 16
      %v1933 = vrot.slane %v1931, 4
      %v1934 = vshll.u32 %v1373, 16
      %v1936 = vrot.slane %v1934, 5
      %v1937 = vor.u32 %v1933, %v1936
      %v1938 = vrot.slane %v1937, 4
      %v1940 = vshll.u32 %v1374, 16
      %v1942 = vrot.slane %v1940, 5
      %v1943 = vsel %vm805, %v1938, %v1942
      %v1944 = vshrl.u32 %v1374, 16
      %v1946 = vrot.slane %v1944, 4
      %v1947 = vor.u32 %v1946, %v1942
      %v1948 = vrot.slane %v1947, 4
      %v1950 = vshll.u32 %v1868, 16
      %v1952 = vrot.slane %v1950, 5
      %v1953 = vsel %vm805, %v1948, %v1952
      %v1955 = vshrl.u32 %v1375, 16
      %v1957 = vrot.slane %v1955, 4
      %v1958 = vshll.u32 %v1375, 16
      %v1960 = vrot.slane %v1958, 5
      %v1961 = vor.u32 %v1957, %v1960
      %v1962 = vrot.slane %v1961, 4
      %v1964 = vshll.u32 %v1376, 16
      %v1966 = vrot.slane %v1964, 5
      %v1967 = vsel %vm805, %v1962, %v1966
      %v1968 = vshrl.u32 %v1376, 16
      %v1970 = vrot.slane %v1968, 4
      %v1971 = vor.u32 %v1970, %v1966
      %v1972 = vrot.slane %v1971, 4
      %v1974 = vshll.u32 %v1869, 16
      %v1976 = vrot.slane %v1974, 5
      %v1977 = vsel %vm805, %v1972, %v1976
      %v1979 = vshrl.u32 %v1377, 16
      %v1981 = vrot.slane %v1979, 4
      %v1982 = vshll.u32 %v1377, 16
      %v1984 = vrot.slane %v1982, 5
      %v1985 = vor.u32 %v1981, %v1984
      %v1986 = vrot.slane %v1985, 4
      %v1988 = vshll.u32 %v1378, 16
      %v1990 = vrot.slane %v1988, 5
      %v1991 = vsel %vm805, %v1986, %v1990
      %v1992 = vshrl.u32 %v1378, 16
      %v1994 = vrot.slane %v1992, 4
      %v1995 = vor.u32 %v1994, %v1990
      %v1996 = vrot.slane %v1995, 4
      %v1998 = vshll.u32 %v1870, 16
      %v2000 = vrot.slane %v1998, 5
      %v2001 = vsel %vm805, %v1996, %v2000
      %v2003 = vshrl.u32 %v1379, 16
      %v2005 = vrot.slane %v2003, 4
      %v2006 = vshll.u32 %v1379, 16
      %v2008 = vrot.slane %v2006, 5
      %v2009 = vor.u32 %v2005, %v2008
      %v2010 = vrot.slane %v2009, 4
      %v2012 = vshll.u32 %v1380, 16
      %v2014 = vrot.slane %v2012, 5
      %v2015 = vsel %vm805, %v2010, %v2014
      %v2016 = vshrl.u32 %v1380, 16
      %v2018 = vrot.slane %v2016, 4
      %v2019 = vor.u32 %v2018, %v2014
      %v2020 = vrot.slane %v2019, 4
      %v2022 = vshll.u32 %v1871, 16
      %v2024 = vrot.slane %v2022, 5
      %v2025 = vsel %vm805, %v2020, %v2024
      %v2027 = vshrl.u32 %v1381, 16
      %v2029 = vrot.slane %v2027, 4
      %v2030 = vshll.u32 %v1381, 16
      %v2032 = vrot.slane %v2030, 5
      %v2033 = vor.u32 %v2029, %v2032
      %v2034 = vrot.slane %v2033, 4
      %v2036 = vshll.u32 %v1382, 16
      %v2038 = vrot.slane %v2036, 5
      %v2039 = vsel %vm805, %v2034, %v2038
      %v2040 = vshrl.u32 %v1382, 16
      %v2042 = vrot.slane %v2040, 4
      %v2043 = vor.u32 %v2042, %v2038
      %v2044 = vrot.slane %v2043, 4
      %v2046 = vshll.u32 %v1872, 16
      %v2048 = vrot.slane %v2046, 5
      %v2049 = vsel %vm805, %v2044, %v2048
      %v2051 = vshrl.u32 %v1383, 16
      %v2053 = vrot.slane %v2051, 4
      %v2054 = vshll.u32 %v1383, 16
      %v2056 = vrot.slane %v2054, 5
      %v2057 = vor.u32 %v2053, %v2056
      %v2058 = vrot.slane %v2057, 4
      %v2060 = vshll.u32 %v1384, 16
      %v2062 = vrot.slane %v2060, 5
      %v2063 = vsel %vm805, %v2058, %v2062
      %v2064 = vshrl.u32 %v1384, 16
      %v2066 = vrot.slane %v2064, 4
      %v2067 = vor.u32 %v2066, %v2062
      %v2068 = vrot.slane %v2067, 4
      %v2070 = vshll.u32 %v1873, 16
      %v2072 = vrot.slane %v2070, 5
      %v2073 = vsel %vm805, %v2068, %v2072
      %v2075 = vshrl.u32 %v1385, 16
      %v2077 = vrot.slane %v2075, 4
      %v2078 = vshll.u32 %v1385, 16
      %v2080 = vrot.slane %v2078, 5
      %v2081 = vor.u32 %v2077, %v2080
      %v2082 = vrot.slane %v2081, 4
      %v2084 = vshll.u32 %v1386, 16
      %v2086 = vrot.slane %v2084, 5
      %v2087 = vsel %vm805, %v2082, %v2086
      %v2088 = vshrl.u32 %v1386, 16
      %v2090 = vrot.slane %v2088, 4
      %v2091 = vor.u32 %v2090, %v2086
      %v2092 = vrot.slane %v2091, 4
      %v2094 = vshll.u32 %v1874, 16
      %v2096 = vrot.slane %v2094, 5
      %v2097 = vsel %vm805, %v2092, %v2096
      %v2099 = vshrl.u32 %v1387, 16
      %v2101 = vrot.slane %v2099, 4
      %v2102 = vshll.u32 %v1387, 16
      %v2104 = vrot.slane %v2102, 5
      %v2105 = vor.u32 %v2101, %v2104
      %v2106 = vrot.slane %v2105, 4
      %v2108 = vshll.u32 %v1388, 16
      %v2110 = vrot.slane %v2108, 5
      %v2111 = vsel %vm805, %v2106, %v2110
      %v2112 = vshrl.u32 %v1388, 16
      %v2114 = vrot.slane %v2112, 4
      %v2115 = vor.u32 %v2114, %v2110
      %v2116 = vrot.slane %v2115, 4
      %v2118 = vshll.u32 %v1875, 16
      %v2120 = vrot.slane %v2118, 5
      %v2121 = vsel %vm805, %v2116, %v2120
      %v2123 = vshrl.u32 %v1389, 16
      %v2125 = vrot.slane %v2123, 4
      %v2126 = vshll.u32 %v1389, 16
      %v2128 = vrot.slane %v2126, 5
      %v2129 = vor.u32 %v2125, %v2128
      %v2130 = vrot.slane %v2129, 4
      %v2132 = vshll.u32 %v1390, 16
      %v2134 = vrot.slane %v2132, 5
      %v2135 = vsel %vm805, %v2130, %v2134
      %v2136 = vshrl.u32 %v1390, 16
      %v2138 = vrot.slane %v2136, 4
      %v2139 = vor.u32 %v2138, %v2134
      %v2140 = vrot.slane %v2139, 4
      %v2142 = vshll.u32 %v1876, 16
      %v2144 = vrot.slane %v2142, 5
      %v2145 = vsel %vm805, %v2140, %v2144
      %v2147 = vshrl.u32 %v1391, 16
      %v2149 = vrot.slane %v2147, 4
      %v2150 = vshll.u32 %v1391, 16
      %v2152 = vrot.slane %v2150, 5
      %v2153 = vor.u32 %v2149, %v2152
      %v2154 = vrot.slane %v2153, 4
      %v2156 = vshll.u32 %v1392, 16
      %v2158 = vrot.slane %v2156, 5
      %v2159 = vsel %vm805, %v2154, %v2158
      %v2160 = vshrl.u32 %v1392, 16
      %v2162 = vrot.slane %v2160, 4
      %v2163 = vor.u32 %v2162, %v2158
      %v2164 = vrot.slane %v2163, 4
      %v2166 = vshll.u32 %v1877, 16
      %v2168 = vrot.slane %v2166, 5
      %v2169 = vsel %vm805, %v2164, %v2168
      %v2171 = vshrl.u32 %v1393, 16
      %v2173 = vrot.slane %v2171, 4
      %v2174 = vshll.u32 %v1393, 16
      %v2176 = vrot.slane %v2174, 5
      %v2177 = vor.u32 %v2173, %v2176
      %v2178 = vrot.slane %v2177, 4
      %v2180 = vshll.u32 %v1394, 16
      %v2182 = vrot.slane %v2180, 5
      %v2183 = vsel %vm805, %v2178, %v2182
      %v2184 = vshrl.u32 %v1394, 16
      %v2186 = vrot.slane %v2184, 4
      %v2187 = vor.u32 %v2186, %v2182
      %v2188 = vrot.slane %v2187, 4
      %v2190 = vshll.u32 %v1878, 16
      %v2192 = vrot.slane %v2190, 5
      %v2193 = vsel %vm805, %v2188, %v2192
      %v2195 = vshrl.u32 %v1395, 16
      %v2197 = vrot.slane %v2195, 4
      %v2198 = vshll.u32 %v1395, 16
      %v2200 = vrot.slane %v2198, 5
      %v2201 = vor.u32 %v2197, %v2200
      %v2202 = vrot.slane %v2201, 4
      %v2204 = vshll.u32 %v1396, 16
      %v2206 = vrot.slane %v2204, 5
      %v2207 = vsel %vm805, %v2202, %v2206
      %v2208 = vshrl.u32 %v1396, 16
      %v2210 = vrot.slane %v2208, 4
      %v2211 = vor.u32 %v2210, %v2206
      %v2212 = vrot.slane %v2211, 4
      %v2214 = vshll.u32 %v1879, 16
      %v2216 = vrot.slane %v2214, 5
      %v2217 = vsel %vm805, %v2212, %v2216
      %v2219 = vshrl.u32 %v1397, 16
      %v2221 = vrot.slane %v2219, 4
      %v2222 = vshll.u32 %v1397, 16
      %v2224 = vrot.slane %v2222, 5
      %v2225 = vor.u32 %v2221, %v2224
      %v2226 = vrot.slane %v2225, 4
      %v2228 = vshll.u32 %v1398, 16
      %v2230 = vrot.slane %v2228, 5
      %v2231 = vsel %vm805, %v2226, %v2230
      %v2232 = vshrl.u32 %v1398, 16
      %v2234 = vrot.slane %v2232, 4
      %v2235 = vor.u32 %v2234, %v2230
      %v2236 = vrot.slane %v2235, 4
      %v2238 = vshll.u32 %v1880, 16
      %v2240 = vrot.slane %v2238, 5
      %v2241 = vsel %vm805, %v2236, %v2240
      %v2243 = vshrl.u32 %v1399, 16
      %v2245 = vrot.slane %v2243, 4
      %v2246 = vshll.u32 %v1399, 16
      %v2248 = vrot.slane %v2246, 5
      %v2249 = vor.u32 %v2245, %v2248
      %v2250 = vrot.slane %v2249, 4
      %v2252 = vshll.u32 %v1400, 16
      %v2254 = vrot.slane %v2252, 5
      %v2255 = vsel %vm805, %v2250, %v2254
      %v2256 = vshrl.u32 %v1400, 16
      %v2258 = vrot.slane %v2256, 4
      %v2259 = vor.u32 %v2258, %v2254
      %v2260 = vrot.slane %v2259, 4
      %v2262 = vshll.u32 %v1881, 16
      %v2264 = vrot.slane %v2262, 5
      %v2265 = vsel %vm805, %v2260, %v2264
      %v2266 = vld [vmem:[%s637] sm:$0xe]
      %v2267 = vld [vmem:[%s637 + $0xc] sm:$0xe]
      %v2268 = vld [vmem:[%s637 + $0x18] sm:$0xe]
      %v2269 = vld [vmem:[%s637 + $0x24] sm:$0xe]
      %v2270 = vld [vmem:[%s637 + $0x30] sm:$0xe]
      %v2271 = vld [vmem:[%s637 + $0x3c] sm:$0xe]
      %v2272 = vld [vmem:[%s637 + $0x48] sm:$0xe]
      %v2273 = vld [vmem:[%s637 + $0x54] sm:$0xe]
      %v2274 = vld [vmem:[%s637 + $0x60] sm:$0xe]
      %v2275 = vld [vmem:[%s637 + $0x6c] sm:$0xe]
      %v2276 = vld [vmem:[%s637 + $0x78] sm:$0xe]
      %v2277 = vld [vmem:[%s637 + $0x84] sm:$0xe]
      %v2278 = vld [vmem:[%s637 + $0x90] sm:$0xe]
      %v2279 = vld [vmem:[%s637 + $0x9c] sm:$0xe]
      %v2280 = vld [vmem:[%s637 + $0xa8] sm:$0xe]
      %v2281 = vld [vmem:[%s637 + $0xb4] sm:$0xe]
      %v2314 = vrot.slane %v2266, 5
      %v2315 = vrot.slane %v2314, 4
      %v2316 = vrot.slane %v1370, 5
      %v2317 = vsel %vm1256, %v2315, %v2316
      %v2318 = vrot.slane %v2316, 4
      %v2319 = vrot.slane %v1866, 5
      %v2320 = vsel %vm1256, %v2318, %v2319
      %v2321 = vrot.slane %v2267, 5
      %v2322 = vrot.slane %v2321, 4
      %v2323 = vrot.slane %v1372, 5
      %v2324 = vsel %vm1256, %v2322, %v2323
      %v2325 = vrot.slane %v2323, 4
      %v2326 = vrot.slane %v1867, 5
      %v2327 = vsel %vm1256, %v2325, %v2326
      %v2328 = vrot.slane %v2268, 5
      %v2329 = vrot.slane %v2328, 4
      %v2330 = vrot.slane %v1374, 5
      %v2331 = vsel %vm1256, %v2329, %v2330
      %v2332 = vrot.slane %v2330, 4
      %v2333 = vrot.slane %v1868, 5
      %v2334 = vsel %vm1256, %v2332, %v2333
      %v2335 = vrot.slane %v2269, 5
      %v2336 = vrot.slane %v2335, 4
      %v2337 = vrot.slane %v1376, 5
      %v2338 = vsel %vm1256, %v2336, %v2337
      %v2339 = vrot.slane %v2337, 4
      %v2340 = vrot.slane %v1869, 5
      %v2341 = vsel %vm1256, %v2339, %v2340
      %v2342 = vrot.slane %v2270, 5
      %v2343 = vrot.slane %v2342, 4
      %v2344 = vrot.slane %v1378, 5
      %v2345 = vsel %vm1256, %v2343, %v2344
      %v2346 = vrot.slane %v2344, 4
      %v2347 = vrot.slane %v1870, 5
      %v2348 = vsel %vm1256, %v2346, %v2347
      %v2349 = vrot.slane %v2271, 5
      %v2350 = vrot.slane %v2349, 4
      %v2351 = vrot.slane %v1380, 5
      %v2352 = vsel %vm1256, %v2350, %v2351
      %v2353 = vrot.slane %v2351, 4
      %v2354 = vrot.slane %v1871, 5
      %v2355 = vsel %vm1256, %v2353, %v2354
      %v2356 = vrot.slane %v2272, 5
      %v2357 = vrot.slane %v2356, 4
      %v2358 = vrot.slane %v1382, 5
      %v2359 = vsel %vm1256, %v2357, %v2358
      %v2360 = vrot.slane %v2358, 4
      %v2361 = vrot.slane %v1872, 5
      %v2362 = vsel %vm1256, %v2360, %v2361
      %v2363 = vrot.slane %v2273, 5
      %v2364 = vrot.slane %v2363, 4
      %v2365 = vrot.slane %v1384, 5
      %v2366 = vsel %vm1256, %v2364, %v2365
      %v2367 = vrot.slane %v2365, 4
      %v2368 = vrot.slane %v1873, 5
      %v2369 = vsel %vm1256, %v2367, %v2368
      %v2370 = vrot.slane %v2274, 5
      %v2371 = vrot.slane %v2370, 4
      %v2372 = vrot.slane %v1386, 5
      %v2373 = vsel %vm1256, %v2371, %v2372
      %v2374 = vrot.slane %v2372, 4
      %v2375 = vrot.slane %v1874, 5
      %v2376 = vsel %vm1256, %v2374, %v2375
      %v2377 = vrot.slane %v2275, 5
      %v2378 = vrot.slane %v2377, 4
      %v2379 = vrot.slane %v1388, 5
      %v2380 = vsel %vm1256, %v2378, %v2379
      %v2381 = vrot.slane %v2379, 4
      %v2382 = vrot.slane %v1875, 5
      %v2383 = vsel %vm1256, %v2381, %v2382
      %v2384 = vrot.slane %v2276, 5
      %v2385 = vrot.slane %v2384, 4
      %v2386 = vrot.slane %v1390, 5
      %v2387 = vsel %vm1256, %v2385, %v2386
      %v2388 = vrot.slane %v2386, 4
      %v2389 = vrot.slane %v1876, 5
      %v2390 = vsel %vm1256, %v2388, %v2389
      %v2391 = vrot.slane %v2277, 5
      %v2392 = vrot.slane %v2391, 4
      %v2393 = vrot.slane %v1392, 5
      %v2394 = vsel %vm1256, %v2392, %v2393
      %v2395 = vrot.slane %v2393, 4
      %v2396 = vrot.slane %v1877, 5
      %v2397 = vsel %vm1256, %v2395, %v2396
      %v2398 = vrot.slane %v2278, 5
      %v2399 = vrot.slane %v2398, 4
      %v2400 = vrot.slane %v1394, 5
      %v2401 = vsel %vm1256, %v2399, %v2400
      %v2402 = vrot.slane %v2400, 4
      %v2403 = vrot.slane %v1878, 5
      %v2404 = vsel %vm1256, %v2402, %v2403
      %v2405 = vrot.slane %v2279, 5
      %v2406 = vrot.slane %v2405, 4
      %v2407 = vrot.slane %v1396, 5
      %v2408 = vsel %vm1256, %v2406, %v2407
      %v2409 = vrot.slane %v2407, 4
      %v2410 = vrot.slane %v1879, 5
      %v2411 = vsel %vm1256, %v2409, %v2410
      %v2412 = vrot.slane %v2280, 5
      %v2413 = vrot.slane %v2412, 4
      %v2414 = vrot.slane %v1398, 5
      %v2415 = vsel %vm1256, %v2413, %v2414
      %v2416 = vrot.slane %v2414, 4
      %v2417 = vrot.slane %v1880, 5
      %v2418 = vsel %vm1256, %v2416, %v2417
      %v2419 = vrot.slane %v2281, 5
      %v2420 = vrot.slane %v2419, 4
      %v2421 = vrot.slane %v1400, 5
      %v2422 = vsel %vm1256, %v2420, %v2421
      %v2423 = vrot.slane %v2421, 4
      %v2424 = vrot.slane %v1881, 5
      %v2425 = vsel %vm1256, %v2423, %v2424
      %s2426 = scalar_lea.vmem [#allocation2], 24
      %v2427 = vld [vmem:[%s2426] sm:$0xf]
      %v2428 = vld [vmem:[%s2426 + $0x4] sm:$0xf]
      %v2429 = vld [vmem:[%s2426 + $0xc] sm:$0xf]
      %v2430 = vld [vmem:[%s2426 + $0x10] sm:$0xf]
      %v2431 = vld [vmem:[%s2426 + $0x18] sm:$0xf]
      %v2432 = vld [vmem:[%s2426 + $0x1c] sm:$0xf]
      %v2433 = vld [vmem:[%s2426 + $0x24] sm:$0xf]
      %v2434 = vld [vmem:[%s2426 + $0x28] sm:$0xf]
      %v2435 = vld [vmem:[%s2426 + $0x30] sm:$0xf]
      %v2436 = vld [vmem:[%s2426 + $0x34] sm:$0xf]
      %v2437 = vld [vmem:[%s2426 + $0x3c] sm:$0xf]
      %v2438 = vld [vmem:[%s2426 + $0x40] sm:$0xf]
      %v2439 = vld [vmem:[%s2426 + $0x48] sm:$0xf]
      %v2440 = vld [vmem:[%s2426 + $0x4c] sm:$0xf]
      %v2441 = vld [vmem:[%s2426 + $0x54] sm:$0xf]
      %v2442 = vld [vmem:[%s2426 + $0x58] sm:$0xf]
      %v2443 = vld [vmem:[%s2426 + $0x60] sm:$0xf]
      %v2444 = vld [vmem:[%s2426 + $0x64] sm:$0xf]
      %v2445 = vld [vmem:[%s2426 + $0x6c] sm:$0xf]
      %v2446 = vld [vmem:[%s2426 + $0x70] sm:$0xf]
      %v2447 = vld [vmem:[%s2426 + $0x78] sm:$0xf]
      %v2448 = vld [vmem:[%s2426 + $0x7c] sm:$0xf]
      %v2449 = vld [vmem:[%s2426 + $0x84] sm:$0xf]
      %v2450 = vld [vmem:[%s2426 + $0x88] sm:$0xf]
      %v2451 = vld [vmem:[%s2426 + $0x90] sm:$0xf]
      %v2452 = vld [vmem:[%s2426 + $0x94] sm:$0xf]
      %v2453 = vld [vmem:[%s2426 + $0x9c] sm:$0xf]
      %v2454 = vld [vmem:[%s2426 + $0xa0] sm:$0xf]
      %v2455 = vld [vmem:[%s2426 + $0xa8] sm:$0xf]
      %v2456 = vld [vmem:[%s2426 + $0xac] sm:$0xf]
      %v2457 = vld [vmem:[%s2426 + $0xb4] sm:$0xf]
      %v2458 = vld [vmem:[%s2426 + $0xb8] sm:$0xf]
      %v2459 = vld [vmem:[%s2426 + $0x8] sm:$0x1]
      %v2460 = vld [vmem:[%s2426 + $0x14] sm:$0x1]
      %v2461 = vld [vmem:[%s2426 + $0x20] sm:$0x1]
      %v2462 = vld [vmem:[%s2426 + $0x2c] sm:$0x1]
      %v2463 = vld [vmem:[%s2426 + $0x38] sm:$0x1]
      %v2464 = vld [vmem:[%s2426 + $0x44] sm:$0x1]
      %v2465 = vld [vmem:[%s2426 + $0x50] sm:$0x1]
      %v2466 = vld [vmem:[%s2426 + $0x5c] sm:$0x1]
      %v2467 = vld [vmem:[%s2426 + $0x68] sm:$0x1]
      %v2468 = vld [vmem:[%s2426 + $0x74] sm:$0x1]
      %v2469 = vld [vmem:[%s2426 + $0x80] sm:$0x1]
      %v2470 = vld [vmem:[%s2426 + $0x8c] sm:$0x1]
      %v2471 = vld [vmem:[%s2426 + $0x98] sm:$0x1]
      %v2472 = vld [vmem:[%s2426 + $0xa4] sm:$0x1]
      %v2473 = vld [vmem:[%s2426 + $0xb0] sm:$0x1]
      %v2474 = vld [vmem:[%s2426 + $0xbc] sm:$0x1]
      %v2476 = vshrl.u32 %v2427, 16
      %v2478 = vrot.slane %v2476, 4
      %v2479 = vshll.u32 %v2427, 16
      %v2481 = vrot.slane %v2479, 5
      %v2482 = vor.u32 %v2478, %v2481
      %v2483 = vrot.slane %v2482, 4
      %v2485 = vshll.u32 %v2428, 16
      %v2487 = vrot.slane %v2485, 5
      %v2488 = vsel %vm805, %v2483, %v2487
      %v2489 = vshrl.u32 %v2428, 16
      %v2491 = vrot.slane %v2489, 4
      %v2492 = vor.u32 %v2491, %v2487
      %v2493 = vrot.slane %v2492, 4
      %v2495 = vshll.u32 %v2459, 16
      %v2497 = vrot.slane %v2495, 5
      %v2498 = vsel %vm805, %v2493, %v2497
      %v2500 = vshrl.u32 %v2429, 16
      %v2502 = vrot.slane %v2500, 4
      %v2503 = vshll.u32 %v2429, 16
      %v2505 = vrot.slane %v2503, 5
      %v2506 = vor.u32 %v2502, %v2505
      %v2507 = vrot.slane %v2506, 4
      %v2509 = vshll.u32 %v2430, 16
      %v2511 = vrot.slane %v2509, 5
      %v2512 = vsel %vm805, %v2507, %v2511
      %v2513 = vshrl.u32 %v2430, 16
      %v2515 = vrot.slane %v2513, 4
      %v2516 = vor.u32 %v2515, %v2511
      %v2517 = vrot.slane %v2516, 4
      %v2519 = vshll.u32 %v2460, 16
      %v2521 = vrot.slane %v2519, 5
      %v2522 = vsel %vm805, %v2517, %v2521
      %v2524 = vshrl.u32 %v2431, 16
      %v2526 = vrot.slane %v2524, 4
      %v2527 = vshll.u32 %v2431, 16
      %v2529 = vrot.slane %v2527, 5
      %v2530 = vor.u32 %v2526, %v2529
      %v2531 = vrot.slane %v2530, 4
      %v2533 = vshll.u32 %v2432, 16
      %v2535 = vrot.slane %v2533, 5
      %v2536 = vsel %vm805, %v2531, %v2535
      %v2537 = vshrl.u32 %v2432, 16
      %v2539 = vrot.slane %v2537, 4
      %v2540 = vor.u32 %v2539, %v2535
      %v2541 = vrot.slane %v2540, 4
      %v2543 = vshll.u32 %v2461, 16
      %v2545 = vrot.slane %v2543, 5
      %v2546 = vsel %vm805, %v2541, %v2545
      %v2548 = vshrl.u32 %v2433, 16
      %v2550 = vrot.slane %v2548, 4
      %v2551 = vshll.u32 %v2433, 16
      %v2553 = vrot.slane %v2551, 5
      %v2554 = vor.u32 %v2550, %v2553
      %v2555 = vrot.slane %v2554, 4
      %v2557 = vshll.u32 %v2434, 16
      %v2559 = vrot.slane %v2557, 5
      %v2560 = vsel %vm805, %v2555, %v2559
      %v2561 = vshrl.u32 %v2434, 16
      %v2563 = vrot.slane %v2561, 4
      %v2564 = vor.u32 %v2563, %v2559
      %v2565 = vrot.slane %v2564, 4
      %v2567 = vshll.u32 %v2462, 16
      %v2569 = vrot.slane %v2567, 5
      %v2570 = vsel %vm805, %v2565, %v2569
      %v2572 = vshrl.u32 %v2435, 16
      %v2574 = vrot.slane %v2572, 4
      %v2575 = vshll.u32 %v2435, 16
      %v2577 = vrot.slane %v2575, 5
      %v2578 = vor.u32 %v2574, %v2577
      %v2579 = vrot.slane %v2578, 4
      %v2581 = vshll.u32 %v2436, 16
      %v2583 = vrot.slane %v2581, 5
      %v2584 = vsel %vm805, %v2579, %v2583
      %v2585 = vshrl.u32 %v2436, 16
      %v2587 = vrot.slane %v2585, 4
      %v2588 = vor.u32 %v2587, %v2583
      %v2589 = vrot.slane %v2588, 4
      %v2591 = vshll.u32 %v2463, 16
      %v2593 = vrot.slane %v2591, 5
      %v2594 = vsel %vm805, %v2589, %v2593
      %v2596 = vshrl.u32 %v2437, 16
      %v2598 = vrot.slane %v2596, 4
      %v2599 = vshll.u32 %v2437, 16
      %v2601 = vrot.slane %v2599, 5
      %v2602 = vor.u32 %v2598, %v2601
      %v2603 = vrot.slane %v2602, 4
      %v2605 = vshll.u32 %v2438, 16
      %v2607 = vrot.slane %v2605, 5
      %v2608 = vsel %vm805, %v2603, %v2607
      %v2609 = vshrl.u32 %v2438, 16
      %v2611 = vrot.slane %v2609, 4
      %v2612 = vor.u32 %v2611, %v2607
      %v2613 = vrot.slane %v2612, 4
      %v2615 = vshll.u32 %v2464, 16
      %v2617 = vrot.slane %v2615, 5
      %v2618 = vsel %vm805, %v2613, %v2617
      %v2620 = vshrl.u32 %v2439, 16
      %v2622 = vrot.slane %v2620, 4
      %v2623 = vshll.u32 %v2439, 16
      %v2625 = vrot.slane %v2623, 5
      %v2626 = vor.u32 %v2622, %v2625
      %v2627 = vrot.slane %v2626, 4
      %v2629 = vshll.u32 %v2440, 16
      %v2631 = vrot.slane %v2629, 5
      %v2632 = vsel %vm805, %v2627, %v2631
      %v2633 = vshrl.u32 %v2440, 16
      %v2635 = vrot.slane %v2633, 4
      %v2636 = vor.u32 %v2635, %v2631
      %v2637 = vrot.slane %v2636, 4
      %v2639 = vshll.u32 %v2465, 16
      %v2641 = vrot.slane %v2639, 5
      %v2642 = vsel %vm805, %v2637, %v2641
      %v2644 = vshrl.u32 %v2441, 16
      %v2646 = vrot.slane %v2644, 4
      %v2647 = vshll.u32 %v2441, 16
      %v2649 = vrot.slane %v2647, 5
      %v2650 = vor.u32 %v2646, %v2649
      %v2651 = vrot.slane %v2650, 4
      %v2653 = vshll.u32 %v2442, 16
      %v2655 = vrot.slane %v2653, 5
      %v2656 = vsel %vm805, %v2651, %v2655
      %v2657 = vshrl.u32 %v2442, 16
      %v2659 = vrot.slane %v2657, 4
      %v2660 = vor.u32 %v2659, %v2655
      %v2661 = vrot.slane %v2660, 4
      %v2663 = vshll.u32 %v2466, 16
      %v2665 = vrot.slane %v2663, 5
      %v2666 = vsel %vm805, %v2661, %v2665
      %v2668 = vshrl.u32 %v2443, 16
      %v2670 = vrot.slane %v2668, 4
      %v2671 = vshll.u32 %v2443, 16
      %v2673 = vrot.slane %v2671, 5
      %v2674 = vor.u32 %v2670, %v2673
      %v2675 = vrot.slane %v2674, 4
      %v2677 = vshll.u32 %v2444, 16
      %v2679 = vrot.slane %v2677, 5
      %v2680 = vsel %vm805, %v2675, %v2679
      %v2681 = vshrl.u32 %v2444, 16
      %v2683 = vrot.slane %v2681, 4
      %v2684 = vor.u32 %v2683, %v2679
      %v2685 = vrot.slane %v2684, 4
      %v2687 = vshll.u32 %v2467, 16
      %v2689 = vrot.slane %v2687, 5
      %v2690 = vsel %vm805, %v2685, %v2689
      %v2692 = vshrl.u32 %v2445, 16
      %v2694 = vrot.slane %v2692, 4
      %v2695 = vshll.u32 %v2445, 16
      %v2697 = vrot.slane %v2695, 5
      %v2698 = vor.u32 %v2694, %v2697
      %v2699 = vrot.slane %v2698, 4
      %v2701 = vshll.u32 %v2446, 16
      %v2703 = vrot.slane %v2701, 5
      %v2704 = vsel %vm805, %v2699, %v2703
      %v2705 = vshrl.u32 %v2446, 16
      %v2707 = vrot.slane %v2705, 4
      %v2708 = vor.u32 %v2707, %v2703
      %v2709 = vrot.slane %v2708, 4
      %v2711 = vshll.u32 %v2468, 16
      %v2713 = vrot.slane %v2711, 5
      %v2714 = vsel %vm805, %v2709, %v2713
      %v2716 = vshrl.u32 %v2447, 16
      %v2718 = vrot.slane %v2716, 4
      %v2719 = vshll.u32 %v2447, 16
      %v2721 = vrot.slane %v2719, 5
      %v2722 = vor.u32 %v2718, %v2721
      %v2723 = vrot.slane %v2722, 4
      %v2725 = vshll.u32 %v2448, 16
      %v2727 = vrot.slane %v2725, 5
      %v2728 = vsel %vm805, %v2723, %v2727
      %v2729 = vshrl.u32 %v2448, 16
      %v2731 = vrot.slane %v2729, 4
      %v2732 = vor.u32 %v2731, %v2727
      %v2733 = vrot.slane %v2732, 4
      %v2735 = vshll.u32 %v2469, 16
      %v2737 = vrot.slane %v2735, 5
      %v2738 = vsel %vm805, %v2733, %v2737
      %v2740 = vshrl.u32 %v2449, 16
      %v2742 = vrot.slane %v2740, 4
      %v2743 = vshll.u32 %v2449, 16
      %v2745 = vrot.slane %v2743, 5
      %v2746 = vor.u32 %v2742, %v2745
      %v2747 = vrot.slane %v2746, 4
      %v2749 = vshll.u32 %v2450, 16
      %v2751 = vrot.slane %v2749, 5
      %v2752 = vsel %vm805, %v2747, %v2751
      %v2753 = vshrl.u32 %v2450, 16
      %v2755 = vrot.slane %v2753, 4
      %v2756 = vor.u32 %v2755, %v2751
      %v2757 = vrot.slane %v2756, 4
      %v2759 = vshll.u32 %v2470, 16
      %v2761 = vrot.slane %v2759, 5
      %v2762 = vsel %vm805, %v2757, %v2761
      %v2764 = vshrl.u32 %v2451, 16
      %v2766 = vrot.slane %v2764, 4
      %v2767 = vshll.u32 %v2451, 16
      %v2769 = vrot.slane %v2767, 5
      %v2770 = vor.u32 %v2766, %v2769
      %v2771 = vrot.slane %v2770, 4
      %v2773 = vshll.u32 %v2452, 16
      %v2775 = vrot.slane %v2773, 5
      %v2776 = vsel %vm805, %v2771, %v2775
      %v2777 = vshrl.u32 %v2452, 16
      %v2779 = vrot.slane %v2777, 4
      %v2780 = vor.u32 %v2779, %v2775
      %v2781 = vrot.slane %v2780, 4
      %v2783 = vshll.u32 %v2471, 16
      %v2785 = vrot.slane %v2783, 5
      %v2786 = vsel %vm805, %v2781, %v2785
      %v2788 = vshrl.u32 %v2453, 16
      %v2790 = vrot.slane %v2788, 4
      %v2791 = vshll.u32 %v2453, 16
      %v2793 = vrot.slane %v2791, 5
      %v2794 = vor.u32 %v2790, %v2793
      %v2795 = vrot.slane %v2794, 4
      %v2797 = vshll.u32 %v2454, 16
      %v2799 = vrot.slane %v2797, 5
      %v2800 = vsel %vm805, %v2795, %v2799
      %v2801 = vshrl.u32 %v2454, 16
      %v2803 = vrot.slane %v2801, 4
      %v2804 = vor.u32 %v2803, %v2799
      %v2805 = vrot.slane %v2804, 4
      %v2807 = vshll.u32 %v2472, 16
      %v2809 = vrot.slane %v2807, 5
      %v2810 = vsel %vm805, %v2805, %v2809
      %v2812 = vshrl.u32 %v2455, 16
      %v2814 = vrot.slane %v2812, 4
      %v2815 = vshll.u32 %v2455, 16
      %v2817 = vrot.slane %v2815, 5
      %v2818 = vor.u32 %v2814, %v2817
      %v2819 = vrot.slane %v2818, 4
      %v2821 = vshll.u32 %v2456, 16
      %v2823 = vrot.slane %v2821, 5
      %v2824 = vsel %vm805, %v2819, %v2823
      %v2825 = vshrl.u32 %v2456, 16
      %v2827 = vrot.slane %v2825, 4
      %v2828 = vor.u32 %v2827, %v2823
      %v2829 = vrot.slane %v2828, 4
      %v2831 = vshll.u32 %v2473, 16
      %v2833 = vrot.slane %v2831, 5
      %v2834 = vsel %vm805, %v2829, %v2833
      %v2836 = vshrl.u32 %v2457, 16
      %v2838 = vrot.slane %v2836, 4
      %v2839 = vshll.u32 %v2457, 16
      %v2841 = vrot.slane %v2839, 5
      %v2842 = vor.u32 %v2838, %v2841
      %v2843 = vrot.slane %v2842, 4
      %v2845 = vshll.u32 %v2458, 16
      %v2847 = vrot.slane %v2845, 5
      %v2848 = vsel %vm805, %v2843, %v2847
      %v2849 = vshrl.u32 %v2458, 16
      %v2851 = vrot.slane %v2849, 4
      %v2852 = vor.u32 %v2851, %v2847
      %v2853 = vrot.slane %v2852, 4
      %v2855 = vshll.u32 %v2474, 16
      %v2857 = vrot.slane %v2855, 5
      %v2858 = vsel %vm805, %v2853, %v2857
      %v2859 = vunpack.c.l.b16 %v1895
      %v2860 = vunpack.c.l.b16 %v1905
      %v2861 = vunpack.c.l.b16 %v1919
      %v2862 = vunpack.c.l.b16 %v1929
      %v2863 = vunpack.c.l.b16 %v1943
      %v2864 = vunpack.c.l.b16 %v1953
      %v2865 = vunpack.c.l.b16 %v1967
      %v2866 = vunpack.c.l.b16 %v1977
      %v2867 = vunpack.c.l.b16 %v1991
      %v2868 = vunpack.c.l.b16 %v2001
      %v2869 = vunpack.c.l.b16 %v2015
      %v2870 = vunpack.c.l.b16 %v2025
      %v2871 = vunpack.c.l.b16 %v2039
      %v2872 = vunpack.c.l.b16 %v2049
      %v2873 = vunpack.c.l.b16 %v2063
      %v2874 = vunpack.c.l.b16 %v2073
      %v2875 = vunpack.c.l.b16 %v2087
      %v2876 = vunpack.c.l.b16 %v2097
      %v2877 = vunpack.c.l.b16 %v2111
      %v2878 = vunpack.c.l.b16 %v2121
      %v2879 = vunpack.c.l.b16 %v2135
      %v2880 = vunpack.c.l.b16 %v2145
      %v2881 = vunpack.c.l.b16 %v2159
      %v2882 = vunpack.c.l.b16 %v2169
      %v2883 = vunpack.c.l.b16 %v2183
      %v2884 = vunpack.c.l.b16 %v2193
      %v2885 = vunpack.c.l.b16 %v2207
      %v2886 = vunpack.c.l.b16 %v2217
      %v2887 = vunpack.c.l.b16 %v2231
      %v2888 = vunpack.c.l.b16 %v2241
      %v2889 = vunpack.c.l.b16 %v2255
      %v2890 = vunpack.c.l.b16 %v2265
      %v2891 = vpack.c.b16 %v2860, %v2859
      %v2892 = vpack.c.b16 %v2862, %v2861
      %v2893 = vpack.c.b16 %v2864, %v2863
      %v2894 = vpack.c.b16 %v2866, %v2865
      %v2895 = vpack.c.b16 %v2868, %v2867
      %v2896 = vpack.c.b16 %v2870, %v2869
      %v2897 = vpack.c.b16 %v2872, %v2871
      %v2898 = vpack.c.b16 %v2874, %v2873
      %v2899 = vpack.c.b16 %v2876, %v2875
      %v2900 = vpack.c.b16 %v2878, %v2877
      %v2901 = vpack.c.b16 %v2880, %v2879
      %v2902 = vpack.c.b16 %v2882, %v2881
      %v2903 = vpack.c.b16 %v2884, %v2883
      %v2904 = vpack.c.b16 %v2886, %v2885
      %v2905 = vpack.c.b16 %v2888, %v2887
      %v2906 = vpack.c.b16 %v2890, %v2889
      %v2907 = vunpack.c.l.b16 %v2317
      %v2908 = vunpack.c.l.b16 %v2320
      %v2909 = vunpack.c.l.b16 %v2324
      %v2910 = vunpack.c.l.b16 %v2327
      %v2911 = vunpack.c.l.b16 %v2331
      %v2912 = vunpack.c.l.b16 %v2334
      %v2913 = vunpack.c.l.b16 %v2338
      %v2914 = vunpack.c.l.b16 %v2341
      %v2915 = vunpack.c.l.b16 %v2345
      %v2916 = vunpack.c.l.b16 %v2348
      %v2917 = vunpack.c.l.b16 %v2352
      %v2918 = vunpack.c.l.b16 %v2355
      %v2919 = vunpack.c.l.b16 %v2359
      %v2920 = vunpack.c.l.b16 %v2362
      %v2921 = vunpack.c.l.b16 %v2366
      %v2922 = vunpack.c.l.b16 %v2369
      %v2923 = vunpack.c.l.b16 %v2373
      %v2924 = vunpack.c.l.b16 %v2376
      %v2925 = vunpack.c.l.b16 %v2380
      %v2926 = vunpack.c.l.b16 %v2383
      %v2927 = vunpack.c.l.b16 %v2387
      %v2928 = vunpack.c.l.b16 %v2390
      %v2929 = vunpack.c.l.b16 %v2394
      %v2930 = vunpack.c.l.b16 %v2397
      %v2931 = vunpack.c.l.b16 %v2401
      %v2932 = vunpack.c.l.b16 %v2404
      %v2933 = vunpack.c.l.b16 %v2408
      %v2934 = vunpack.c.l.b16 %v2411
      %v2935 = vunpack.c.l.b16 %v2415
      %v2936 = vunpack.c.l.b16 %v2418
      %v2937 = vunpack.c.l.b16 %v2422
      %v2938 = vunpack.c.l.b16 %v2425
      %v2939 = vpack.c.b16 %v2908, %v2907
      %v2940 = vpack.c.b16 %v2910, %v2909
      %v2941 = vpack.c.b16 %v2912, %v2911
      %v2942 = vpack.c.b16 %v2914, %v2913
      %v2943 = vpack.c.b16 %v2916, %v2915
      %v2944 = vpack.c.b16 %v2918, %v2917
      %v2945 = vpack.c.b16 %v2920, %v2919
      %v2946 = vpack.c.b16 %v2922, %v2921
      %v2947 = vpack.c.b16 %v2924, %v2923
      %v2948 = vpack.c.b16 %v2926, %v2925
      %v2949 = vpack.c.b16 %v2928, %v2927
      %v2950 = vpack.c.b16 %v2930, %v2929
      %v2951 = vpack.c.b16 %v2932, %v2931
      %v2952 = vpack.c.b16 %v2934, %v2933
      %v2953 = vpack.c.b16 %v2936, %v2935
      %v2954 = vpack.c.b16 %v2938, %v2937
      %2955 = vrot.lane.b32.xlu0 %v2939, 64
      %v2956 = vpop.permute.xlu0 %2955
      %2957 = vrot.lane.b32.xlu0 %v2940, 64
      %v2958 = vpop.permute.xlu0 %2957
      %2959 = vrot.lane.b32.xlu0 %v2941, 64
      %v2960 = vpop.permute.xlu0 %2959
      %2961 = vrot.lane.b32.xlu0 %v2942, 64
      %v2962 = vpop.permute.xlu0 %2961
      %2963 = vrot.lane.b32.xlu0 %v2943, 64
      %v2964 = vpop.permute.xlu0 %2963
      %2965 = vrot.lane.b32.xlu0 %v2944, 64
      %v2966 = vpop.permute.xlu0 %2965
      %2967 = vrot.lane.b32.xlu0 %v2945, 64
      %v2968 = vpop.permute.xlu0 %2967
      %2969 = vrot.lane.b32.xlu0 %v2946, 64
      %v2970 = vpop.permute.xlu0 %2969
      %2971 = vrot.lane.b32.xlu0 %v2947, 64
      %v2972 = vpop.permute.xlu0 %2971
      %2973 = vrot.lane.b32.xlu0 %v2948, 64
      %v2974 = vpop.permute.xlu0 %2973
      %2975 = vrot.lane.b32.xlu0 %v2949, 64
      %v2976 = vpop.permute.xlu0 %2975
      %2977 = vrot.lane.b32.xlu0 %v2950, 64
      %v2978 = vpop.permute.xlu0 %2977
      %2979 = vrot.lane.b32.xlu0 %v2951, 64
      %v2980 = vpop.permute.xlu0 %2979
      %2981 = vrot.lane.b32.xlu0 %v2952, 64
      %v2982 = vpop.permute.xlu0 %2981
      %2983 = vrot.lane.b32.xlu0 %v2953, 64
      %v2984 = vpop.permute.xlu0 %2983
      %2985 = vrot.lane.b32.xlu0 %v2954, 64
      %v2986 = vpop.permute.xlu0 %2985
      %v3019 = vunpack.c.l.b16 %v2427
      %v3020 = vunpack.c.l.b16 %v2428
      %v3021 = vunpack.c.l.b16 %v2429
      %v3022 = vunpack.c.l.b16 %v2430
      %v3023 = vunpack.c.l.b16 %v2431
      %v3024 = vunpack.c.l.b16 %v2432
      %v3025 = vunpack.c.l.b16 %v2433
      %v3026 = vunpack.c.l.b16 %v2434
      %v3027 = vunpack.c.l.b16 %v2435
      %v3028 = vunpack.c.l.b16 %v2436
      %v3029 = vunpack.c.l.b16 %v2437
      %v3030 = vunpack.c.l.b16 %v2438
      %v3031 = vunpack.c.l.b16 %v2439
      %v3032 = vunpack.c.l.b16 %v2440
      %v3033 = vunpack.c.l.b16 %v2441
      %v3034 = vunpack.c.l.b16 %v2442
      %v3035 = vunpack.c.l.b16 %v2443
      %v3036 = vunpack.c.l.b16 %v2444
      %v3037 = vunpack.c.l.b16 %v2445
      %v3038 = vunpack.c.l.b16 %v2446
      %v3039 = vunpack.c.l.b16 %v2447
      %v3040 = vunpack.c.l.b16 %v2448
      %v3041 = vunpack.c.l.b16 %v2449
      %v3042 = vunpack.c.l.b16 %v2450
      %v3043 = vunpack.c.l.b16 %v2451
      %v3044 = vunpack.c.l.b16 %v2452
      %v3045 = vunpack.c.l.b16 %v2453
      %v3046 = vunpack.c.l.b16 %v2454
      %v3047 = vunpack.c.l.b16 %v2455
      %v3048 = vunpack.c.l.b16 %v2456
      %v3049 = vunpack.c.l.b16 %v2457
      %v3050 = vunpack.c.l.b16 %v2458
      %v3051 = vpack.c.b16 %v3020, %v3019
      %v3052 = vpack.c.b16 %v3022, %v3021
      %v3053 = vpack.c.b16 %v3024, %v3023
      %v3054 = vpack.c.b16 %v3026, %v3025
      %v3055 = vpack.c.b16 %v3028, %v3027
      %v3056 = vpack.c.b16 %v3030, %v3029
      %v3057 = vpack.c.b16 %v3032, %v3031
      %v3058 = vpack.c.b16 %v3034, %v3033
      %v3059 = vpack.c.b16 %v3036, %v3035
      %v3060 = vpack.c.b16 %v3038, %v3037
      %v3061 = vpack.c.b16 %v3040, %v3039
      %v3062 = vpack.c.b16 %v3042, %v3041
      %v3063 = vpack.c.b16 %v3044, %v3043
      %v3064 = vpack.c.b16 %v3046, %v3045
      %v3065 = vpack.c.b16 %v3048, %v3047
      %v3066 = vpack.c.b16 %v3050, %v3049
      %v3067 = vunpack.c.l.b16 %v2488
      %v3068 = vunpack.c.l.b16 %v2498
      %v3069 = vunpack.c.l.b16 %v2512
      %v3070 = vunpack.c.l.b16 %v2522
      %v3071 = vunpack.c.l.b16 %v2536
      %v3072 = vunpack.c.l.b16 %v2546
      %v3073 = vunpack.c.l.b16 %v2560
      %v3074 = vunpack.c.l.b16 %v2570
      %v3075 = vunpack.c.l.b16 %v2584
      %v3076 = vunpack.c.l.b16 %v2594
      %v3077 = vunpack.c.l.b16 %v2608
      %v3078 = vunpack.c.l.b16 %v2618
      %v3079 = vunpack.c.l.b16 %v2632
      %v3080 = vunpack.c.l.b16 %v2642
      %v3081 = vunpack.c.l.b16 %v2656
      %v3082 = vunpack.c.l.b16 %v2666
      %v3083 = vunpack.c.l.b16 %v2680
      %v3084 = vunpack.c.l.b16 %v2690
      %v3085 = vunpack.c.l.b16 %v2704
      %v3086 = vunpack.c.l.b16 %v2714
      %v3087 = vunpack.c.l.b16 %v2728
      %v3088 = vunpack.c.l.b16 %v2738
      %v3089 = vunpack.c.l.b16 %v2752
      %v3090 = vunpack.c.l.b16 %v2762
      %v3091 = vunpack.c.l.b16 %v2776
      %v3092 = vunpack.c.l.b16 %v2786
      %v3093 = vunpack.c.l.b16 %v2800
      %v3094 = vunpack.c.l.b16 %v2810
      %v3095 = vunpack.c.l.b16 %v2824
      %v3096 = vunpack.c.l.b16 %v2834
      %v3097 = vunpack.c.l.b16 %v2848
      %v3098 = vunpack.c.l.b16 %v2858
      %v3099 = vpack.c.b16 %v3068, %v3067
      %v3100 = vpack.c.b16 %v3070, %v3069
      %v3101 = vpack.c.b16 %v3072, %v3071
      %v3102 = vpack.c.b16 %v3074, %v3073
      %v3103 = vpack.c.b16 %v3076, %v3075
      %v3104 = vpack.c.b16 %v3078, %v3077
      %v3105 = vpack.c.b16 %v3080, %v3079
      %v3106 = vpack.c.b16 %v3082, %v3081
      %v3107 = vpack.c.b16 %v3084, %v3083
      %v3108 = vpack.c.b16 %v3086, %v3085
      %v3109 = vpack.c.b16 %v3088, %v3087
      %v3110 = vpack.c.b16 %v3090, %v3089
      %v3111 = vpack.c.b16 %v3092, %v3091
      %v3112 = vpack.c.b16 %v3094, %v3093
      %v3113 = vpack.c.b16 %v3096, %v3095
      %v3114 = vpack.c.b16 %v3098, %v3097
      %3115 = vrot.lane.b32.xlu0 %v3099, 64
      %v3116 = vpop.permute.xlu0 %3115
      %3117 = vrot.lane.b32.xlu0 %v3100, 64
      %v3118 = vpop.permute.xlu0 %3117
      %3119 = vrot.lane.b32.xlu0 %v3101, 64
      %v3120 = vpop.permute.xlu0 %3119
      %3121 = vrot.lane.b32.xlu0 %v3102, 64
      %v3122 = vpop.permute.xlu0 %3121
      %3123 = vrot.lane.b32.xlu0 %v3103, 64
      %v3124 = vpop.permute.xlu0 %3123
      %3125 = vrot.lane.b32.xlu0 %v3104, 64
      %v3126 = vpop.permute.xlu0 %3125
      %3127 = vrot.lane.b32.xlu0 %v3105, 64
      %v3128 = vpop.permute.xlu0 %3127
      %3129 = vrot.lane.b32.xlu0 %v3106, 64
      %v3130 = vpop.permute.xlu0 %3129
      %3131 = vrot.lane.b32.xlu0 %v3107, 64
      %v3132 = vpop.permute.xlu0 %3131
      %3133 = vrot.lane.b32.xlu0 %v3108, 64
      %v3134 = vpop.permute.xlu0 %3133
      %3135 = vrot.lane.b32.xlu0 %v3109, 64
      %v3136 = vpop.permute.xlu0 %3135
      %3137 = vrot.lane.b32.xlu0 %v3110, 64
      %v3138 = vpop.permute.xlu0 %3137
      %3139 = vrot.lane.b32.xlu0 %v3111, 64
      %v3140 = vpop.permute.xlu0 %3139
      %3141 = vrot.lane.b32.xlu0 %v3112, 64
      %v3142 = vpop.permute.xlu0 %3141
      %3143 = vrot.lane.b32.xlu0 %v3113, 64
      %v3144 = vpop.permute.xlu0 %3143
      %3145 = vrot.lane.b32.xlu0 %v3114, 64
      %v3146 = vpop.permute.xlu0 %3145
      %v3149 = vsel %vm1705, %v2891, %v2956
      %v3153 = vsel %vm1705, %v2892, %v2958
      %v3157 = vsel %vm1705, %v2893, %v2960
      %v3161 = vsel %vm1705, %v2894, %v2962
      %v3165 = vsel %vm1705, %v2895, %v2964
      %v3169 = vsel %vm1705, %v2896, %v2966
      %v3173 = vsel %vm1705, %v2897, %v2968
      %v3177 = vsel %vm1705, %v2898, %v2970
      %v3181 = vsel %vm1705, %v2899, %v2972
      %v3185 = vsel %vm1705, %v2900, %v2974
      %v3189 = vsel %vm1705, %v2901, %v2976
      %v3193 = vsel %vm1705, %v2902, %v2978
      %v3197 = vsel %vm1705, %v2903, %v2980
      %v3201 = vsel %vm1705, %v2904, %v2982
      %v3205 = vsel %vm1705, %v2905, %v2984
      %v3209 = vsel %vm1705, %v2906, %v2986
      %v3213 = vsel %vm1705, %v3051, %v3116
      %v3217 = vsel %vm1705, %v3052, %v3118
      %v3221 = vsel %vm1705, %v3053, %v3120
      %v3225 = vsel %vm1705, %v3054, %v3122
      %v3229 = vsel %vm1705, %v3055, %v3124
      %v3233 = vsel %vm1705, %v3056, %v3126
      %v3237 = vsel %vm1705, %v3057, %v3128
      %v3241 = vsel %vm1705, %v3058, %v3130
      %v3245 = vsel %vm1705, %v3059, %v3132
      %v3249 = vsel %vm1705, %v3060, %v3134
      %v3253 = vsel %vm1705, %v3061, %v3136
      %v3257 = vsel %vm1705, %v3062, %v3138
      %v3261 = vsel %vm1705, %v3063, %v3140
      %v3265 = vsel %vm1705, %v3064, %v3142
      %v3269 = vsel %vm1705, %v3065, %v3144
      %v3273 = vsel %vm1705, %v3066, %v3146
      %v3275 = vld [vmem:[%s1 + $0x80] sm:$0xf]
      %v3276 = vld [vmem:[%s1 + $0x84] sm:$0xf]
      %v3277 = vld [vmem:[%s1 + $0x88] sm:$0xf]
      %v3278 = vld [vmem:[%s1 + $0x8c] sm:$0xf]
      %v3279 = vld [vmem:[%s1 + $0x90] sm:$0xf]
      %v3280 = vld [vmem:[%s1 + $0x94] sm:$0xf]
      %v3281 = vld [vmem:[%s1 + $0x98] sm:$0xf]
      %v3282 = vld [vmem:[%s1 + $0x9c] sm:$0xf]
      %v3283 = vld [vmem:[%s1 + $0xa0] sm:$0xf]
      %v3284 = vld [vmem:[%s1 + $0xa4] sm:$0xf]
      %v3285 = vld [vmem:[%s1 + $0xa8] sm:$0xf]
      %v3286 = vld [vmem:[%s1 + $0xac] sm:$0xf]
      %v3287 = vld [vmem:[%s1 + $0xb0] sm:$0xf]
      %v3288 = vld [vmem:[%s1 + $0xb4] sm:$0xf]
      %v3289 = vld [vmem:[%s1 + $0xb8] sm:$0xf]
      %v3290 = vld [vmem:[%s1 + $0xbc] sm:$0xf]
      %v3291 = vld [vmem:[%s1 + $0xc0] sm:$0xf]
      %v3292 = vld [vmem:[%s1 + $0xc4] sm:$0xf]
      %v3293 = vld [vmem:[%s1 + $0xc8] sm:$0xf]
      %v3294 = vld [vmem:[%s1 + $0xcc] sm:$0xf]
      %v3295 = vld [vmem:[%s1 + $0xd0] sm:$0xf]
      %v3296 = vld [vmem:[%s1 + $0xd4] sm:$0xf]
      %v3297 = vld [vmem:[%s1 + $0xd8] sm:$0xf]
      %v3298 = vld [vmem:[%s1 + $0xdc] sm:$0xf]
      %v3299 = vld [vmem:[%s1 + $0xe0] sm:$0xf]
      %v3300 = vld [vmem:[%s1 + $0xe4] sm:$0xf]
      %v3301 = vld [vmem:[%s1 + $0xe8] sm:$0xf]
      %v3302 = vld [vmem:[%s1 + $0xec] sm:$0xf]
      %v3303 = vld [vmem:[%s1 + $0xf0] sm:$0xf]
      %v3304 = vld [vmem:[%s1 + $0xf4] sm:$0xf]
      %v3305 = vld [vmem:[%s1 + $0xf8] sm:$0xf]
      %v3306 = vld [vmem:[%s1 + $0xfc] sm:$0xf]
      %v3339 = vunpack.c.l.b16 %v3275
      %v3340 = vunpack.c.l.b16 %v3276
      %v3341 = vunpack.c.l.b16 %v3277
      %v3342 = vunpack.c.l.b16 %v3278
      %v3343 = vunpack.c.l.b16 %v3279
      %v3344 = vunpack.c.l.b16 %v3280
      %v3345 = vunpack.c.l.b16 %v3281
      %v3346 = vunpack.c.l.b16 %v3282
      %v3347 = vunpack.c.l.b16 %v3283
      %v3348 = vunpack.c.l.b16 %v3284
      %v3349 = vunpack.c.l.b16 %v3285
      %v3350 = vunpack.c.l.b16 %v3286
      %v3351 = vunpack.c.l.b16 %v3287
      %v3352 = vunpack.c.l.b16 %v3288
      %v3353 = vunpack.c.l.b16 %v3289
      %v3354 = vunpack.c.l.b16 %v3290
      %v3355 = vunpack.c.l.b16 %v3291
      %v3356 = vunpack.c.l.b16 %v3292
      %v3357 = vunpack.c.l.b16 %v3293
      %v3358 = vunpack.c.l.b16 %v3294
      %v3359 = vunpack.c.l.b16 %v3295
      %v3360 = vunpack.c.l.b16 %v3296
      %v3361 = vunpack.c.l.b16 %v3297
      %v3362 = vunpack.c.l.b16 %v3298
      %v3363 = vunpack.c.l.b16 %v3299
      %v3364 = vunpack.c.l.b16 %v3300
      %v3365 = vunpack.c.l.b16 %v3301
      %v3366 = vunpack.c.l.b16 %v3302
      %v3367 = vunpack.c.l.b16 %v3303
      %v3368 = vunpack.c.l.b16 %v3304
      %v3369 = vunpack.c.l.b16 %v3305
      %v3370 = vunpack.c.l.b16 %v3306
      %v3371 = vpack.c.b16 %v3340, %v3339
      %v3372 = vpack.c.b16 %v3342, %v3341
      %v3373 = vpack.c.b16 %v3344, %v3343
      %v3374 = vpack.c.b16 %v3346, %v3345
      %v3375 = vpack.c.b16 %v3348, %v3347
      %v3376 = vpack.c.b16 %v3350, %v3349
      %v3377 = vpack.c.b16 %v3352, %v3351
      %v3378 = vpack.c.b16 %v3354, %v3353
      %v3379 = vpack.c.b16 %v3356, %v3355
      %v3380 = vpack.c.b16 %v3358, %v3357
      %v3381 = vpack.c.b16 %v3360, %v3359
      %v3382 = vpack.c.b16 %v3362, %v3361
      %v3383 = vpack.c.b16 %v3364, %v3363
      %v3384 = vpack.c.b16 %v3366, %v3365
      %v3385 = vpack.c.b16 %v3368, %v3367
      %v3386 = vpack.c.b16 %v3370, %v3369
      %3403 = vmatpush.bf16.msra.mxu0 %v3378
      %3404 = vmatpush.bf16.msra.mxu0 %v3377
      %3405 = vmatpush.bf16.msra.mxu0 %v3376
      %3406 = vmatpush.bf16.msra.mxu0 %v3375
      %3407 = vmatpush.bf16.msra.mxu0 %v3374
      %3408 = vmatpush.bf16.msra.mxu0 %v3373
      %3409 = vmatpush.bf16.msra.mxu0 %v3372
      %3410 = vmatpush.bf16.msra.mxu0 %v3371
      %3411 = vmatmul.bf16.gmra.mxu0 %v3149
      %v3412 = vpop.f32.mrf.mxu0
      %v3413 = vadd.f32 0.0, %v3412
      %v3414 = vpop.f32.mrf.mxu0
      %v3415 = vadd.f32 0.0, %v3414
      %3416 = vmatmul.bf16.gmra.mxu0 %v3153
      %v3417 = vpop.f32.mrf.mxu0
      %v3418 = vadd.f32 0.0, %v3417
      %v3419 = vpop.f32.mrf.mxu0
      %v3420 = vadd.f32 0.0, %v3419
      %3421 = vmatmul.bf16.gmra.mxu0 %v3157
      %v3422 = vpop.f32.mrf.mxu0
      %v3423 = vadd.f32 0.0, %v3422
      %v3424 = vpop.f32.mrf.mxu0
      %v3425 = vadd.f32 0.0, %v3424
      %3426 = vmatmul.bf16.gmra.mxu0 %v3161
      %v3427 = vpop.f32.mrf.mxu0
      %v3428 = vadd.f32 0.0, %v3427
      %v3429 = vpop.f32.mrf.mxu0
      %v3430 = vadd.f32 0.0, %v3429
      %3431 = vmatmul.bf16.gmra.mxu0 %v3165
      %v3432 = vpop.f32.mrf.mxu0
      %v3433 = vadd.f32 0.0, %v3432
      %v3434 = vpop.f32.mrf.mxu0
      %v3435 = vadd.f32 0.0, %v3434
      %3436 = vmatmul.bf16.gmra.mxu0 %v3169
      %v3437 = vpop.f32.mrf.mxu0
      %v3438 = vadd.f32 0.0, %v3437
      %v3439 = vpop.f32.mrf.mxu0
      %v3440 = vadd.f32 0.0, %v3439
      %3441 = vmatmul.bf16.gmra.mxu0 %v3173
      %v3442 = vpop.f32.mrf.mxu0
      %v3443 = vadd.f32 0.0, %v3442
      %v3444 = vpop.f32.mrf.mxu0
      %v3445 = vadd.f32 0.0, %v3444
      %3446 = vmatmul.bf16.gmra.mxu0 %v3177
      %v3447 = vpop.f32.mrf.mxu0
      %v3448 = vadd.f32 0.0, %v3447
      %v3449 = vpop.f32.mrf.mxu0
      %v3450 = vadd.f32 0.0, %v3449
      %3451 = vmatmul.bf16.gmra.mxu0 %v3181
      %v3452 = vpop.f32.mrf.mxu0
      %v3453 = vadd.f32 0.0, %v3452
      %v3454 = vpop.f32.mrf.mxu0
      %v3455 = vadd.f32 0.0, %v3454
      %3456 = vmatmul.bf16.gmra.mxu0 %v3185
      %v3457 = vpop.f32.mrf.mxu0
      %v3458 = vadd.f32 0.0, %v3457
      %v3459 = vpop.f32.mrf.mxu0
      %v3460 = vadd.f32 0.0, %v3459
      %3461 = vmatmul.bf16.gmra.mxu0 %v3189
      %v3462 = vpop.f32.mrf.mxu0
      %v3463 = vadd.f32 0.0, %v3462
      %v3464 = vpop.f32.mrf.mxu0
      %v3465 = vadd.f32 0.0, %v3464
      %3466 = vmatmul.bf16.gmra.mxu0 %v3193
      %v3467 = vpop.f32.mrf.mxu0
      %v3468 = vadd.f32 0.0, %v3467
      %v3469 = vpop.f32.mrf.mxu0
      %v3470 = vadd.f32 0.0, %v3469
      %3471 = vmatmul.bf16.gmra.mxu0 %v3197
      %v3472 = vpop.f32.mrf.mxu0
      %v3473 = vadd.f32 0.0, %v3472
      %v3474 = vpop.f32.mrf.mxu0
      %v3475 = vadd.f32 0.0, %v3474
      %3476 = vmatmul.bf16.gmra.mxu0 %v3201
      %v3477 = vpop.f32.mrf.mxu0
      %v3478 = vadd.f32 0.0, %v3477
      %v3479 = vpop.f32.mrf.mxu0
      %v3480 = vadd.f32 0.0, %v3479
      %3481 = vmatmul.bf16.gmra.mxu0 %v3205
      %v3482 = vpop.f32.mrf.mxu0
      %v3483 = vadd.f32 0.0, %v3482
      %v3484 = vpop.f32.mrf.mxu0
      %v3485 = vadd.f32 0.0, %v3484
      %3486 = vmatmul.bf16.gmra.mxu0 %v3209
      %v3487 = vpop.f32.mrf.mxu0
      %v3488 = vadd.f32 0.0, %v3487
      %v3489 = vpop.f32.mrf.mxu0
      %v3490 = vadd.f32 0.0, %v3489
      %3491 = vdwg.mxu0
      %3492 = vmatpush.bf16.msra.mxu0 %v3386
      %3493 = vmatpush.bf16.msra.mxu0 %v3385
      %3494 = vmatpush.bf16.msra.mxu0 %v3384
      %3495 = vmatpush.bf16.msra.mxu0 %v3383
      %3496 = vmatpush.bf16.msra.mxu0 %v3382
      %3497 = vmatpush.bf16.msra.mxu0 %v3381
      %3498 = vmatpush.bf16.msra.mxu0 %v3380
      %3499 = vmatpush.bf16.msra.mxu0 %v3379
      %3500 = vmatmul.bf16.gmra.mxu0 %v3213
      %v3501 = vpop.f32.mrf.mxu0
      %v3502 = vadd.f32 %v3413, %v3501
      %v3503 = vpop.f32.mrf.mxu0
      %v3504 = vadd.f32 %v3415, %v3503
      %3505 = vmatmul.bf16.gmra.mxu0 %v3217
      %v3506 = vpop.f32.mrf.mxu0
      %v3507 = vadd.f32 %v3418, %v3506
      %v3508 = vpop.f32.mrf.mxu0
      %v3509 = vadd.f32 %v3420, %v3508
      %3510 = vmatmul.bf16.gmra.mxu0 %v3221
      %v3511 = vpop.f32.mrf.mxu0
      %v3512 = vadd.f32 %v3423, %v3511
      %v3513 = vpop.f32.mrf.mxu0
      %v3514 = vadd.f32 %v3425, %v3513
      %3515 = vmatmul.bf16.gmra.mxu0 %v3225
      %v3516 = vpop.f32.mrf.mxu0
      %v3517 = vadd.f32 %v3428, %v3516
      %v3518 = vpop.f32.mrf.mxu0
      %v3519 = vadd.f32 %v3430, %v3518
      %3520 = vmatmul.bf16.gmra.mxu0 %v3229
      %v3521 = vpop.f32.mrf.mxu0
      %v3522 = vadd.f32 %v3433, %v3521
      %v3523 = vpop.f32.mrf.mxu0
      %v3524 = vadd.f32 %v3435, %v3523
      %3525 = vmatmul.bf16.gmra.mxu0 %v3233
      %v3526 = vpop.f32.mrf.mxu0
      %v3527 = vadd.f32 %v3438, %v3526
      %v3528 = vpop.f32.mrf.mxu0
      %v3529 = vadd.f32 %v3440, %v3528
      %3530 = vmatmul.bf16.gmra.mxu0 %v3237
      %v3531 = vpop.f32.mrf.mxu0
      %v3532 = vadd.f32 %v3443, %v3531
      %v3533 = vpop.f32.mrf.mxu0
      %v3534 = vadd.f32 %v3445, %v3533
      %3535 = vmatmul.bf16.gmra.mxu0 %v3241
      %v3536 = vpop.f32.mrf.mxu0
      %v3537 = vadd.f32 %v3448, %v3536
      %v3538 = vpop.f32.mrf.mxu0
      %v3539 = vadd.f32 %v3450, %v3538
      %3540 = vmatmul.bf16.gmra.mxu0 %v3245
      %v3541 = vpop.f32.mrf.mxu0
      %v3542 = vadd.f32 %v3453, %v3541
      %v3543 = vpop.f32.mrf.mxu0
      %v3544 = vadd.f32 %v3455, %v3543
      %3545 = vmatmul.bf16.gmra.mxu0 %v3249
      %v3546 = vpop.f32.mrf.mxu0
      %v3547 = vadd.f32 %v3458, %v3546
      %v3548 = vpop.f32.mrf.mxu0
      %v3549 = vadd.f32 %v3460, %v3548
      %3550 = vmatmul.bf16.gmra.mxu0 %v3253
      %v3551 = vpop.f32.mrf.mxu0
      %v3552 = vadd.f32 %v3463, %v3551
      %v3553 = vpop.f32.mrf.mxu0
      %v3554 = vadd.f32 %v3465, %v3553
      %3555 = vmatmul.bf16.gmra.mxu0 %v3257
      %v3556 = vpop.f32.mrf.mxu0
      %v3557 = vadd.f32 %v3468, %v3556
      %v3558 = vpop.f32.mrf.mxu0
      %v3559 = vadd.f32 %v3470, %v3558
      %3560 = vmatmul.bf16.gmra.mxu0 %v3261
      %v3561 = vpop.f32.mrf.mxu0
      %v3562 = vadd.f32 %v3473, %v3561
      %v3563 = vpop.f32.mrf.mxu0
      %v3564 = vadd.f32 %v3475, %v3563
      %3565 = vmatmul.bf16.gmra.mxu0 %v3265
      %v3566 = vpop.f32.mrf.mxu0
      %v3567 = vadd.f32 %v3478, %v3566
      %v3568 = vpop.f32.mrf.mxu0
      %v3569 = vadd.f32 %v3480, %v3568
      %3570 = vmatmul.bf16.gmra.mxu0 %v3269
      %v3571 = vpop.f32.mrf.mxu0
      %v3572 = vadd.f32 %v3483, %v3571
      %v3573 = vpop.f32.mrf.mxu0
      %v3574 = vadd.f32 %v3485, %v3573
      %3575 = vmatmul.bf16.gmra.mxu0 %v3273
      %v3576 = vpop.f32.mrf.mxu0
      %v3577 = vadd.f32 %v3488, %v3576
      %v3578 = vpop.f32.mrf.mxu0
      %v3579 = vadd.f32 %v3490, %v3578
      %3580 = vdwg.mxu0
      %v3613 = vunpack.c.l.b16 %v1834
      %v3614 = vunpack.c.l.b16 %v1835
      %v3615 = vunpack.c.l.b16 %v1836
      %v3616 = vunpack.c.l.b16 %v1837
      %v3617 = vunpack.c.l.b16 %v1838
      %v3618 = vunpack.c.l.b16 %v1839
      %v3619 = vunpack.c.l.b16 %v1840
      %v3620 = vunpack.c.l.b16 %v1841
      %v3621 = vunpack.c.l.b16 %v1842
      %v3622 = vunpack.c.l.b16 %v1843
      %v3623 = vunpack.c.l.b16 %v1844
      %v3624 = vunpack.c.l.b16 %v1845
      %v3625 = vunpack.c.l.b16 %v1846
      %v3626 = vunpack.c.l.b16 %v1847
      %v3627 = vunpack.c.l.b16 %v1848
      %v3628 = vunpack.c.l.b16 %v1849
      %v3629 = vunpack.c.l.b16 %v1850
      %v3630 = vunpack.c.l.b16 %v1851
      %v3631 = vunpack.c.l.b16 %v1852
      %v3632 = vunpack.c.l.b16 %v1853
      %v3633 = vunpack.c.l.b16 %v1854
      %v3634 = vunpack.c.l.b16 %v1855
      %v3635 = vunpack.c.l.b16 %v1856
      %v3636 = vunpack.c.l.b16 %v1857
      %v3637 = vunpack.c.l.b16 %v1858
      %v3638 = vunpack.c.l.b16 %v1859
      %v3639 = vunpack.c.l.b16 %v1860
      %v3640 = vunpack.c.l.b16 %v1861
      %v3641 = vunpack.c.l.b16 %v1862
      %v3642 = vunpack.c.l.b16 %v1863
      %v3643 = vunpack.c.l.b16 %v1864
      %v3644 = vunpack.c.l.b16 %v1865
      %v3645 = vpack.c.b16 %v3614, %v3613
      %v3646 = vpack.c.b16 %v3616, %v3615
      %v3647 = vpack.c.b16 %v3618, %v3617
      %v3648 = vpack.c.b16 %v3620, %v3619
      %v3649 = vpack.c.b16 %v3622, %v3621
      %v3650 = vpack.c.b16 %v3624, %v3623
      %v3651 = vpack.c.b16 %v3626, %v3625
      %v3652 = vpack.c.b16 %v3628, %v3627
      %v3653 = vpack.c.b16 %v3630, %v3629
      %v3654 = vpack.c.b16 %v3632, %v3631
      %v3655 = vpack.c.b16 %v3634, %v3633
      %v3656 = vpack.c.b16 %v3636, %v3635
      %v3657 = vpack.c.b16 %v3638, %v3637
      %v3658 = vpack.c.b16 %v3640, %v3639
      %v3659 = vpack.c.b16 %v3642, %v3641
      %v3660 = vpack.c.b16 %v3644, %v3643
      %3677 = vmatpush.bf16.msra.mxu0 %v3652
      %3678 = vmatpush.bf16.msra.mxu0 %v3651
      %3679 = vmatpush.bf16.msra.mxu0 %v3650
      %3680 = vmatpush.bf16.msra.mxu0 %v3649
      %3681 = vmatpush.bf16.msra.mxu0 %v3648
      %3682 = vmatpush.bf16.msra.mxu0 %v3647
      %3683 = vmatpush.bf16.msra.mxu0 %v3646
      %3684 = vmatpush.bf16.msra.mxu0 %v3645
      %3685 = vmatmul.bf16.gmra.mxu0 %v1708
      %v3686 = vpop.f32.mrf.mxu0
      %v3687 = vadd.f32 %v3502, %v3686
      %v3688 = vpop.f32.mrf.mxu0
      %v3689 = vadd.f32 %v3504, %v3688
      %3690 = vmatmul.bf16.gmra.mxu0 %v1712
      %v3691 = vpop.f32.mrf.mxu0
      %v3692 = vadd.f32 %v3507, %v3691
      %v3693 = vpop.f32.mrf.mxu0
      %v3694 = vadd.f32 %v3509, %v3693
      %3695 = vmatmul.bf16.gmra.mxu0 %v1716
      %v3696 = vpop.f32.mrf.mxu0
      %v3697 = vadd.f32 %v3512, %v3696
      %v3698 = vpop.f32.mrf.mxu0
      %v3699 = vadd.f32 %v3514, %v3698
      %3700 = vmatmul.bf16.gmra.mxu0 %v1720
      %v3701 = vpop.f32.mrf.mxu0
      %v3702 = vadd.f32 %v3517, %v3701
      %v3703 = vpop.f32.mrf.mxu0
      %v3704 = vadd.f32 %v3519, %v3703
      %3705 = vmatmul.bf16.gmra.mxu0 %v1724
      %v3706 = vpop.f32.mrf.mxu0
      %v3707 = vadd.f32 %v3522, %v3706
      %v3708 = vpop.f32.mrf.mxu0
      %v3709 = vadd.f32 %v3524, %v3708
      %3710 = vmatmul.bf16.gmra.mxu0 %v1728
      %v3711 = vpop.f32.mrf.mxu0
      %v3712 = vadd.f32 %v3527, %v3711
      %v3713 = vpop.f32.mrf.mxu0
      %v3714 = vadd.f32 %v3529, %v3713
      %3715 = vmatmul.bf16.gmra.mxu0 %v1732
      %v3716 = vpop.f32.mrf.mxu0
      %v3717 = vadd.f32 %v3532, %v3716
      %v3718 = vpop.f32.mrf.mxu0
      %v3719 = vadd.f32 %v3534, %v3718
      %3720 = vmatmul.bf16.gmra.mxu0 %v1736
      %v3721 = vpop.f32.mrf.mxu0
      %v3722 = vadd.f32 %v3537, %v3721
      %v3723 = vpop.f32.mrf.mxu0
      %v3724 = vadd.f32 %v3539, %v3723
      %3725 = vmatmul.bf16.gmra.mxu0 %v1740
      %v3726 = vpop.f32.mrf.mxu0
      %v3727 = vadd.f32 %v3542, %v3726
      %v3728 = vpop.f32.mrf.mxu0
      %v3729 = vadd.f32 %v3544, %v3728
      %3730 = vmatmul.bf16.gmra.mxu0 %v1744
      %v3731 = vpop.f32.mrf.mxu0
      %v3732 = vadd.f32 %v3547, %v3731
      %v3733 = vpop.f32.mrf.mxu0
      %v3734 = vadd.f32 %v3549, %v3733
      %3735 = vmatmul.bf16.gmra.mxu0 %v1748
      %v3736 = vpop.f32.mrf.mxu0
      %v3737 = vadd.f32 %v3552, %v3736
      %v3738 = vpop.f32.mrf.mxu0
      %v3739 = vadd.f32 %v3554, %v3738
      %3740 = vmatmul.bf16.gmra.mxu0 %v1752
      %v3741 = vpop.f32.mrf.mxu0
      %v3742 = vadd.f32 %v3557, %v3741
      %v3743 = vpop.f32.mrf.mxu0
      %v3744 = vadd.f32 %v3559, %v3743
      %3745 = vmatmul.bf16.gmra.mxu0 %v1756
      %v3746 = vpop.f32.mrf.mxu0
      %v3747 = vadd.f32 %v3562, %v3746
      %v3748 = vpop.f32.mrf.mxu0
      %v3749 = vadd.f32 %v3564, %v3748
      %3750 = vmatmul.bf16.gmra.mxu0 %v1760
      %v3751 = vpop.f32.mrf.mxu0
      %v3752 = vadd.f32 %v3567, %v3751
      %v3753 = vpop.f32.mrf.mxu0
      %v3754 = vadd.f32 %v3569, %v3753
      %3755 = vmatmul.bf16.gmra.mxu0 %v1764
      %v3756 = vpop.f32.mrf.mxu0
      %v3757 = vadd.f32 %v3572, %v3756
      %v3758 = vpop.f32.mrf.mxu0
      %v3759 = vadd.f32 %v3574, %v3758
      %3760 = vmatmul.bf16.gmra.mxu0 %v1768
      %v3761 = vpop.f32.mrf.mxu0
      %v3762 = vadd.f32 %v3577, %v3761
      %v3763 = vpop.f32.mrf.mxu0
      %v3764 = vadd.f32 %v3579, %v3763
      %3765 = vdwg.mxu0
      %3766 = vmatpush.bf16.msra.mxu0 %v3660
      %3767 = vmatpush.bf16.msra.mxu0 %v3659
      %3768 = vmatpush.bf16.msra.mxu0 %v3658
      %3769 = vmatpush.bf16.msra.mxu0 %v3657
      %3770 = vmatpush.bf16.msra.mxu0 %v3656
      %3771 = vmatpush.bf16.msra.mxu0 %v3655
      %3772 = vmatpush.bf16.msra.mxu0 %v3654
      %3773 = vmatpush.bf16.msra.mxu0 %v3653
      %3774 = vmatmul.bf16.gmra.mxu0 %v1772
      %v3775 = vpop.f32.mrf.mxu0
      %v3776 = vadd.f32 %v3687, %v3775
      %v3777 = vpop.f32.mrf.mxu0
      %v3778 = vadd.f32 %v3689, %v3777
      %3779 = vmatmul.bf16.gmra.mxu0 %v1776
      %v3780 = vpop.f32.mrf.mxu0
      %v3781 = vadd.f32 %v3692, %v3780
      %v3782 = vpop.f32.mrf.mxu0
      %v3783 = vadd.f32 %v3694, %v3782
      %3784 = vmatmul.bf16.gmra.mxu0 %v1780
      %v3785 = vpop.f32.mrf.mxu0
      %v3786 = vadd.f32 %v3697, %v3785
      %v3787 = vpop.f32.mrf.mxu0
      %v3788 = vadd.f32 %v3699, %v3787
      %3789 = vmatmul.bf16.gmra.mxu0 %v1784
      %v3790 = vpop.f32.mrf.mxu0
      %v3791 = vadd.f32 %v3702, %v3790
      %v3792 = vpop.f32.mrf.mxu0
      %v3793 = vadd.f32 %v3704, %v3792
      %3794 = vmatmul.bf16.gmra.mxu0 %v1788
      %v3795 = vpop.f32.mrf.mxu0
      %v3796 = vadd.f32 %v3707, %v3795
      %v3797 = vpop.f32.mrf.mxu0
      %v3798 = vadd.f32 %v3709, %v3797
      %3799 = vmatmul.bf16.gmra.mxu0 %v1792
      %v3800 = vpop.f32.mrf.mxu0
      %v3801 = vadd.f32 %v3712, %v3800
      %v3802 = vpop.f32.mrf.mxu0
      %v3803 = vadd.f32 %v3714, %v3802
      %3804 = vmatmul.bf16.gmra.mxu0 %v1796
      %v3805 = vpop.f32.mrf.mxu0
      %v3806 = vadd.f32 %v3717, %v3805
      %v3807 = vpop.f32.mrf.mxu0
      %v3808 = vadd.f32 %v3719, %v3807
      %3809 = vmatmul.bf16.gmra.mxu0 %v1800
      %v3810 = vpop.f32.mrf.mxu0
      %v3811 = vadd.f32 %v3722, %v3810
      %v3812 = vpop.f32.mrf.mxu0
      %v3813 = vadd.f32 %v3724, %v3812
      %3814 = vmatmul.bf16.gmra.mxu0 %v1804
      %v3815 = vpop.f32.mrf.mxu0
      %v3816 = vadd.f32 %v3727, %v3815
      %v3817 = vpop.f32.mrf.mxu0
      %v3818 = vadd.f32 %v3729, %v3817
      %3819 = vmatmul.bf16.gmra.mxu0 %v1808
      %v3820 = vpop.f32.mrf.mxu0
      %v3821 = vadd.f32 %v3732, %v3820
      %v3822 = vpop.f32.mrf.mxu0
      %v3823 = vadd.f32 %v3734, %v3822
      %3824 = vmatmul.bf16.gmra.mxu0 %v1812
      %v3825 = vpop.f32.mrf.mxu0
      %v3826 = vadd.f32 %v3737, %v3825
      %v3827 = vpop.f32.mrf.mxu0
      %v3828 = vadd.f32 %v3739, %v3827
      %3829 = vmatmul.bf16.gmra.mxu0 %v1816
      %v3830 = vpop.f32.mrf.mxu0
      %v3831 = vadd.f32 %v3742, %v3830
      %v3832 = vpop.f32.mrf.mxu0
      %v3833 = vadd.f32 %v3744, %v3832
      %3834 = vmatmul.bf16.gmra.mxu0 %v1820
      %v3835 = vpop.f32.mrf.mxu0
      %v3836 = vadd.f32 %v3747, %v3835
      %v3837 = vpop.f32.mrf.mxu0
      %v3838 = vadd.f32 %v3749, %v3837
      %3839 = vmatmul.bf16.gmra.mxu0 %v1824
      %v3840 = vpop.f32.mrf.mxu0
      %v3841 = vadd.f32 %v3752, %v3840
      %v3842 = vpop.f32.mrf.mxu0
      %v3843 = vadd.f32 %v3754, %v3842
      %3844 = vmatmul.bf16.gmra.mxu0 %v1828
      %v3845 = vpop.f32.mrf.mxu0
      %v3846 = vadd.f32 %v3757, %v3845
      %v3847 = vpop.f32.mrf.mxu0
      %v3848 = vadd.f32 %v3759, %v3847
      %3849 = vmatmul.bf16.gmra.mxu0 %v1832
      %v3850 = vpop.f32.mrf.mxu0
      %v3851 = vadd.f32 %v3762, %v3850
      %v3852 = vpop.f32.mrf.mxu0
      %v3853 = vadd.f32 %v3764, %v3852
      %3854 = vdwg.mxu0
      %v3855 = vld [vmem:[%s2426] sm:$0xe]
      %v3856 = vld [vmem:[%s2426 + $0xc] sm:$0xe]
      %v3857 = vld [vmem:[%s2426 + $0x18] sm:$0xe]
      %v3858 = vld [vmem:[%s2426 + $0x24] sm:$0xe]
      %v3859 = vld [vmem:[%s2426 + $0x30] sm:$0xe]
      %v3860 = vld [vmem:[%s2426 + $0x3c] sm:$0xe]
      %v3861 = vld [vmem:[%s2426 + $0x48] sm:$0xe]
      %v3862 = vld [vmem:[%s2426 + $0x54] sm:$0xe]
      %v3863 = vld [vmem:[%s2426 + $0x60] sm:$0xe]
      %v3864 = vld [vmem:[%s2426 + $0x6c] sm:$0xe]
      %v3865 = vld [vmem:[%s2426 + $0x78] sm:$0xe]
      %v3866 = vld [vmem:[%s2426 + $0x84] sm:$0xe]
      %v3867 = vld [vmem:[%s2426 + $0x90] sm:$0xe]
      %v3868 = vld [vmem:[%s2426 + $0x9c] sm:$0xe]
      %v3869 = vld [vmem:[%s2426 + $0xa8] sm:$0xe]
      %v3870 = vld [vmem:[%s2426 + $0xb4] sm:$0xe]
      %v3903 = vrot.slane %v3855, 5
      %v3904 = vrot.slane %v3903, 4
      %v3905 = vrot.slane %v2428, 5
      %v3906 = vsel %vm1256, %v3904, %v3905
      %v3907 = vrot.slane %v3905, 4
      %v3908 = vrot.slane %v2459, 5
      %v3909 = vsel %vm1256, %v3907, %v3908
      %v3910 = vrot.slane %v3856, 5
      %v3911 = vrot.slane %v3910, 4
      %v3912 = vrot.slane %v2430, 5
      %v3913 = vsel %vm1256, %v3911, %v3912
      %v3914 = vrot.slane %v3912, 4
      %v3915 = vrot.slane %v2460, 5
      %v3916 = vsel %vm1256, %v3914, %v3915
      %v3917 = vrot.slane %v3857, 5
      %v3918 = vrot.slane %v3917, 4
      %v3919 = vrot.slane %v2432, 5
      %v3920 = vsel %vm1256, %v3918, %v3919
      %v3921 = vrot.slane %v3919, 4
      %v3922 = vrot.slane %v2461, 5
      %v3923 = vsel %vm1256, %v3921, %v3922
      %v3924 = vrot.slane %v3858, 5
      %v3925 = vrot.slane %v3924, 4
      %v3926 = vrot.slane %v2434, 5
      %v3927 = vsel %vm1256, %v3925, %v3926
      %v3928 = vrot.slane %v3926, 4
      %v3929 = vrot.slane %v2462, 5
      %v3930 = vsel %vm1256, %v3928, %v3929
      %v3931 = vrot.slane %v3859, 5
      %v3932 = vrot.slane %v3931, 4
      %v3933 = vrot.slane %v2436, 5
      %v3934 = vsel %vm1256, %v3932, %v3933
      %v3935 = vrot.slane %v3933, 4
      %v3936 = vrot.slane %v2463, 5
      %v3937 = vsel %vm1256, %v3935, %v3936
      %v3938 = vrot.slane %v3860, 5
      %v3939 = vrot.slane %v3938, 4
      %v3940 = vrot.slane %v2438, 5
      %v3941 = vsel %vm1256, %v3939, %v3940
      %v3942 = vrot.slane %v3940, 4
      %v3943 = vrot.slane %v2464, 5
      %v3944 = vsel %vm1256, %v3942, %v3943
      %v3945 = vrot.slane %v3861, 5
      %v3946 = vrot.slane %v3945, 4
      %v3947 = vrot.slane %v2440, 5
      %v3948 = vsel %vm1256, %v3946, %v3947
      %v3949 = vrot.slane %v3947, 4
      %v3950 = vrot.slane %v2465, 5
      %v3951 = vsel %vm1256, %v3949, %v3950
      %v3952 = vrot.slane %v3862, 5
      %v3953 = vrot.slane %v3952, 4
      %v3954 = vrot.slane %v2442, 5
      %v3955 = vsel %vm1256, %v3953, %v3954
      %v3956 = vrot.slane %v3954, 4
      %v3957 = vrot.slane %v2466, 5
      %v3958 = vsel %vm1256, %v3956, %v3957
      %v3959 = vrot.slane %v3863, 5
      %v3960 = vrot.slane %v3959, 4
      %v3961 = vrot.slane %v2444, 5
      %v3962 = vsel %vm1256, %v3960, %v3961
      %v3963 = vrot.slane %v3961, 4
      %v3964 = vrot.slane %v2467, 5
      %v3965 = vsel %vm1256, %v3963, %v3964
      %v3966 = vrot.slane %v3864, 5
      %v3967 = vrot.slane %v3966, 4
      %v3968 = vrot.slane %v2446, 5
      %v3969 = vsel %vm1256, %v3967, %v3968
      %v3970 = vrot.slane %v3968, 4
      %v3971 = vrot.slane %v2468, 5
      %v3972 = vsel %vm1256, %v3970, %v3971
      %v3973 = vrot.slane %v3865, 5
      %v3974 = vrot.slane %v3973, 4
      %v3975 = vrot.slane %v2448, 5
      %v3976 = vsel %vm1256, %v3974, %v3975
      %v3977 = vrot.slane %v3975, 4
      %v3978 = vrot.slane %v2469, 5
      %v3979 = vsel %vm1256, %v3977, %v3978
      %v3980 = vrot.slane %v3866, 5
      %v3981 = vrot.slane %v3980, 4
      %v3982 = vrot.slane %v2450, 5
      %v3983 = vsel %vm1256, %v3981, %v3982
      %v3984 = vrot.slane %v3982, 4
      %v3985 = vrot.slane %v2470, 5
      %v3986 = vsel %vm1256, %v3984, %v3985
      %v3987 = vrot.slane %v3867, 5
      %v3988 = vrot.slane %v3987, 4
      %v3989 = vrot.slane %v2452, 5
      %v3990 = vsel %vm1256, %v3988, %v3989
      %v3991 = vrot.slane %v3989, 4
      %v3992 = vrot.slane %v2471, 5
      %v3993 = vsel %vm1256, %v3991, %v3992
      %v3994 = vrot.slane %v3868, 5
      %v3995 = vrot.slane %v3994, 4
      %v3996 = vrot.slane %v2454, 5
      %v3997 = vsel %vm1256, %v3995, %v3996
      %v3998 = vrot.slane %v3996, 4
      %v3999 = vrot.slane %v2472, 5
      %v4000 = vsel %vm1256, %v3998, %v3999
      %v4001 = vrot.slane %v3869, 5
      %v4002 = vrot.slane %v4001, 4
      %v4003 = vrot.slane %v2456, 5
      %v4004 = vsel %vm1256, %v4002, %v4003
      %v4005 = vrot.slane %v4003, 4
      %v4006 = vrot.slane %v2473, 5
      %v4007 = vsel %vm1256, %v4005, %v4006
      %v4008 = vrot.slane %v3870, 5
      %v4009 = vrot.slane %v4008, 4
      %v4010 = vrot.slane %v2458, 5
      %v4011 = vsel %vm1256, %v4009, %v4010
      %v4012 = vrot.slane %v4010, 4
      %v4013 = vrot.slane %v2474, 5
      %v4014 = vsel %vm1256, %v4012, %v4013
      %v4015 = vld [vmem:[%s1 + $0x100] sm:$0xf]
      %v4016 = vld [vmem:[%s1 + $0x104] sm:$0xf]
      %v4017 = vld [vmem:[%s1 + $0x108] sm:$0xf]
      %v4018 = vld [vmem:[%s1 + $0x10c] sm:$0xf]
      %v4019 = vld [vmem:[%s1 + $0x110] sm:$0xf]
      %v4020 = vld [vmem:[%s1 + $0x114] sm:$0xf]
      %v4021 = vld [vmem:[%s1 + $0x118] sm:$0xf]
      %v4022 = vld [vmem:[%s1 + $0x11c] sm:$0xf]
      %v4023 = vunpack.c.l.b16 %v3906
      %v4024 = vunpack.c.l.b16 %v3909
      %v4025 = vunpack.c.l.b16 %v3913
      %v4026 = vunpack.c.l.b16 %v3916
      %v4027 = vunpack.c.l.b16 %v3920
      %v4028 = vunpack.c.l.b16 %v3923
      %v4029 = vunpack.c.l.b16 %v3927
      %v4030 = vunpack.c.l.b16 %v3930
      %v4031 = vunpack.c.l.b16 %v3934
      %v4032 = vunpack.c.l.b16 %v3937
      %v4033 = vunpack.c.l.b16 %v3941
      %v4034 = vunpack.c.l.b16 %v3944
      %v4035 = vunpack.c.l.b16 %v3948
      %v4036 = vunpack.c.l.b16 %v3951
      %v4037 = vunpack.c.l.b16 %v3955
      %v4038 = vunpack.c.l.b16 %v3958
      %v4039 = vunpack.c.l.b16 %v3962
      %v4040 = vunpack.c.l.b16 %v3965
      %v4041 = vunpack.c.l.b16 %v3969
      %v4042 = vunpack.c.l.b16 %v3972
      %v4043 = vunpack.c.l.b16 %v3976
      %v4044 = vunpack.c.l.b16 %v3979
      %v4045 = vunpack.c.l.b16 %v3983
      %v4046 = vunpack.c.l.b16 %v3986
      %v4047 = vunpack.c.l.b16 %v3990
      %v4048 = vunpack.c.l.b16 %v3993
      %v4049 = vunpack.c.l.b16 %v3997
      %v4050 = vunpack.c.l.b16 %v4000
      %v4051 = vunpack.c.l.b16 %v4004
      %v4052 = vunpack.c.l.b16 %v4007
      %v4053 = vunpack.c.l.b16 %v4011
      %v4054 = vunpack.c.l.b16 %v4014
      %v4055 = vpack.c.b16 %v4024, %v4023
      %v4056 = vpack.c.b16 %v4026, %v4025
      %v4057 = vpack.c.b16 %v4028, %v4027
      %v4058 = vpack.c.b16 %v4030, %v4029
      %v4059 = vpack.c.b16 %v4032, %v4031
      %v4060 = vpack.c.b16 %v4034, %v4033
      %v4061 = vpack.c.b16 %v4036, %v4035
      %v4062 = vpack.c.b16 %v4038, %v4037
      %v4063 = vpack.c.b16 %v4040, %v4039
      %v4064 = vpack.c.b16 %v4042, %v4041
      %v4065 = vpack.c.b16 %v4044, %v4043
      %v4066 = vpack.c.b16 %v4046, %v4045
      %v4067 = vpack.c.b16 %v4048, %v4047
      %v4068 = vpack.c.b16 %v4050, %v4049
      %v4069 = vpack.c.b16 %v4052, %v4051
      %v4070 = vpack.c.b16 %v4054, %v4053
      %v4079 = vunpack.c.l.b16 %v4015
      %v4080 = vunpack.c.l.b16 %v4016
      %v4081 = vunpack.c.l.b16 %v4017
      %v4082 = vunpack.c.l.b16 %v4018
      %v4083 = vunpack.c.l.b16 %v4019
      %v4084 = vunpack.c.l.b16 %v4020
      %v4085 = vunpack.c.l.b16 %v4021
      %v4086 = vunpack.c.l.b16 %v4022
      %v4087 = vpack.c.b16 %v4080, %v4079
      %v4088 = vpack.c.b16 %v4082, %v4081
      %v4089 = vpack.c.b16 %v4084, %v4083
      %v4090 = vpack.c.b16 %v4086, %v4085
      %v4096 = vsel %vm1705, %v4055, 0
      %v4099 = vsel %vm1705, %v4056, 0
      %v4102 = vsel %vm1705, %v4057, 0
      %v4105 = vsel %vm1705, %v4058, 0
      %v4108 = vsel %vm1705, %v4059, 0
      %v4111 = vsel %vm1705, %v4060, 0
      %v4114 = vsel %vm1705, %v4061, 0
      %v4117 = vsel %vm1705, %v4062, 0
      %v4120 = vsel %vm1705, %v4063, 0
      %v4123 = vsel %vm1705, %v4064, 0
      %v4126 = vsel %vm1705, %v4065, 0
      %v4129 = vsel %vm1705, %v4066, 0
      %v4132 = vsel %vm1705, %v4067, 0
      %v4135 = vsel %vm1705, %v4068, 0
      %v4138 = vsel %vm1705, %v4069, 0
      %v4141 = vsel %vm1705, %v4070, 0
      %4143 = vmatpush.bf16.msra.mxu0 0
      %4144 = vmatpush.bf16.msra.mxu0 0
      %4145 = vmatpush.bf16.msra.mxu0 0
      %4146 = vmatpush.bf16.msra.mxu0 0
      %4147 = vmatpush.bf16.msra.mxu0 %v4090
      %4148 = vmatpush.bf16.msra.mxu0 %v4089
      %4149 = vmatpush.bf16.msra.mxu0 %v4088
      %4150 = vmatpush.bf16.msra.mxu0 %v4087
      %4151 = vmatmul.bf16.gmra.mxu0 %v4096
      %v4152 = vpop.f32.mrf.mxu0
      %v4153 = vadd.f32 0.0, %v4152
      %v4154 = vpop.f32.mrf.mxu0
      %v4155 = vadd.f32 0.0, %v4154
      %4156 = vmatmul.bf16.gmra.mxu0 %v4099
      %v4157 = vpop.f32.mrf.mxu0
      %v4158 = vadd.f32 0.0, %v4157
      %v4159 = vpop.f32.mrf.mxu0
      %v4160 = vadd.f32 0.0, %v4159
      %4161 = vmatmul.bf16.gmra.mxu0 %v4102
      %v4162 = vpop.f32.mrf.mxu0
      %v4163 = vadd.f32 0.0, %v4162
      %v4164 = vpop.f32.mrf.mxu0
      %v4165 = vadd.f32 0.0, %v4164
      %4166 = vmatmul.bf16.gmra.mxu0 %v4105
      %v4167 = vpop.f32.mrf.mxu0
      %v4168 = vadd.f32 0.0, %v4167
      %v4169 = vpop.f32.mrf.mxu0
      %v4170 = vadd.f32 0.0, %v4169
      %4171 = vmatmul.bf16.gmra.mxu0 %v4108
      %v4172 = vpop.f32.mrf.mxu0
      %v4173 = vadd.f32 0.0, %v4172
      %v4174 = vpop.f32.mrf.mxu0
      %v4175 = vadd.f32 0.0, %v4174
      %4176 = vmatmul.bf16.gmra.mxu0 %v4111
      %v4177 = vpop.f32.mrf.mxu0
      %v4178 = vadd.f32 0.0, %v4177
      %v4179 = vpop.f32.mrf.mxu0
      %v4180 = vadd.f32 0.0, %v4179
      %4181 = vmatmul.bf16.gmra.mxu0 %v4114
      %v4182 = vpop.f32.mrf.mxu0
      %v4183 = vadd.f32 0.0, %v4182
      %v4184 = vpop.f32.mrf.mxu0
      %v4185 = vadd.f32 0.0, %v4184
      %4186 = vmatmul.bf16.gmra.mxu0 %v4117
      %v4187 = vpop.f32.mrf.mxu0
      %v4188 = vadd.f32 0.0, %v4187
      %v4189 = vpop.f32.mrf.mxu0
      %v4190 = vadd.f32 0.0, %v4189
      %4191 = vmatmul.bf16.gmra.mxu0 %v4120
      %v4192 = vpop.f32.mrf.mxu0
      %v4193 = vadd.f32 0.0, %v4192
      %v4194 = vpop.f32.mrf.mxu0
      %v4195 = vadd.f32 0.0, %v4194
      %4196 = vmatmul.bf16.gmra.mxu0 %v4123
      %v4197 = vpop.f32.mrf.mxu0
      %v4198 = vadd.f32 0.0, %v4197
      %v4199 = vpop.f32.mrf.mxu0
      %v4200 = vadd.f32 0.0, %v4199
      %4201 = vmatmul.bf16.gmra.mxu0 %v4126
      %v4202 = vpop.f32.mrf.mxu0
      %v4203 = vadd.f32 0.0, %v4202
      %v4204 = vpop.f32.mrf.mxu0
      %v4205 = vadd.f32 0.0, %v4204
      %4206 = vmatmul.bf16.gmra.mxu0 %v4129
      %v4207 = vpop.f32.mrf.mxu0
      %v4208 = vadd.f32 0.0, %v4207
      %v4209 = vpop.f32.mrf.mxu0
      %v4210 = vadd.f32 0.0, %v4209
      %4211 = vmatmul.bf16.gmra.mxu0 %v4132
      %v4212 = vpop.f32.mrf.mxu0
      %v4213 = vadd.f32 0.0, %v4212
      %v4214 = vpop.f32.mrf.mxu0
      %v4215 = vadd.f32 0.0, %v4214
      %4216 = vmatmul.bf16.gmra.mxu0 %v4135
      %v4217 = vpop.f32.mrf.mxu0
      %v4218 = vadd.f32 0.0, %v4217
      %v4219 = vpop.f32.mrf.mxu0
      %v4220 = vadd.f32 0.0, %v4219
      %4221 = vmatmul.bf16.gmra.mxu0 %v4138
      %v4222 = vpop.f32.mrf.mxu0
      %v4223 = vadd.f32 0.0, %v4222
      %v4224 = vpop.f32.mrf.mxu0
      %v4225 = vadd.f32 0.0, %v4224
      %4226 = vmatmul.bf16.gmra.mxu0 %v4141
      %v4227 = vpop.f32.mrf.mxu0
      %v4228 = vadd.f32 0.0, %v4227
      %v4229 = vpop.f32.mrf.mxu0
      %v4230 = vadd.f32 0.0, %v4229
      %4231 = vdwg.mxu0
      %v4232 = vadd.f32 %v3776, %v4153
      %v4233 = vadd.f32 %v3778, %v4155
      %v4234 = vadd.f32 %v3781, %v4158
      %v4235 = vadd.f32 %v3783, %v4160
      %v4236 = vadd.f32 %v3786, %v4163
      %v4237 = vadd.f32 %v3788, %v4165
      %v4238 = vadd.f32 %v3791, %v4168
      %v4239 = vadd.f32 %v3793, %v4170
      %v4240 = vadd.f32 %v3796, %v4173
      %v4241 = vadd.f32 %v3798, %v4175
      %v4242 = vadd.f32 %v3801, %v4178
      %v4243 = vadd.f32 %v3803, %v4180
      %v4244 = vadd.f32 %v3806, %v4183
      %v4245 = vadd.f32 %v3808, %v4185
      %v4246 = vadd.f32 %v3811, %v4188
      %v4247 = vadd.f32 %v3813, %v4190
      %v4248 = vadd.f32 %v3816, %v4193
      %v4249 = vadd.f32 %v3818, %v4195
      %v4250 = vadd.f32 %v3821, %v4198
      %v4251 = vadd.f32 %v3823, %v4200
      %v4252 = vadd.f32 %v3826, %v4203
      %v4253 = vadd.f32 %v3828, %v4205
      %v4254 = vadd.f32 %v3831, %v4208
      %v4255 = vadd.f32 %v3833, %v4210
      %v4256 = vadd.f32 %v3836, %v4213
      %v4257 = vadd.f32 %v3838, %v4215
      %v4258 = vadd.f32 %v3841, %v4218
      %v4259 = vadd.f32 %v3843, %v4220
      %v4260 = vadd.f32 %v3846, %v4223
      %v4261 = vadd.f32 %v3848, %v4225
      %v4262 = vadd.f32 %v3851, %v4228
      %v4263 = vadd.f32 %v3853, %v4230
      %v4264 = vld [vmem:[%s2] sm:$0x1]
      %v4266 = vperm.slane %v4264, 0
      %v4268 = vadd.f32 %v4232, %v4266
      %v4269 = vadd.f32 %v4233, %v4266
      %v4270 = vadd.f32 %v4234, %v4266
      %v4271 = vadd.f32 %v4235, %v4266
      %v4272 = vadd.f32 %v4236, %v4266
      %v4273 = vadd.f32 %v4237, %v4266
      %v4274 = vadd.f32 %v4238, %v4266
      %v4275 = vadd.f32 %v4239, %v4266
      %v4276 = vadd.f32 %v4240, %v4266
      %v4277 = vadd.f32 %v4241, %v4266
      %v4278 = vadd.f32 %v4242, %v4266
      %v4279 = vadd.f32 %v4243, %v4266
      %v4280 = vadd.f32 %v4244, %v4266
      %v4281 = vadd.f32 %v4245, %v4266
      %v4282 = vadd.f32 %v4246, %v4266
      %v4283 = vadd.f32 %v4247, %v4266
      %v4284 = vadd.f32 %v4248, %v4266
      %v4285 = vadd.f32 %v4249, %v4266
      %v4286 = vadd.f32 %v4250, %v4266
      %v4287 = vadd.f32 %v4251, %v4266
      %v4288 = vadd.f32 %v4252, %v4266
      %v4289 = vadd.f32 %v4253, %v4266
      %v4290 = vadd.f32 %v4254, %v4266
      %v4291 = vadd.f32 %v4255, %v4266
      %v4292 = vadd.f32 %v4256, %v4266
      %v4293 = vadd.f32 %v4257, %v4266
      %v4294 = vadd.f32 %v4258, %v4266
      %v4295 = vadd.f32 %v4259, %v4266
      %v4296 = vadd.f32 %v4260, %v4266
      %v4297 = vadd.f32 %v4261, %v4266
      %v4298 = vadd.f32 %v4262, %v4266
      %v4299 = vadd.f32 %v4263, %v4266
      %v4300 = vmax.f32 %v4268, 0.0
      %v4301 = vmax.f32 %v4269, 0.0
      %v4302 = vmax.f32 %v4270, 0.0
      %v4303 = vmax.f32 %v4271, 0.0
      %v4304 = vmax.f32 %v4272, 0.0
      %v4305 = vmax.f32 %v4273, 0.0
      %v4306 = vmax.f32 %v4274, 0.0
      %v4307 = vmax.f32 %v4275, 0.0
      %v4308 = vmax.f32 %v4276, 0.0
      %v4309 = vmax.f32 %v4277, 0.0
      %v4310 = vmax.f32 %v4278, 0.0
      %v4311 = vmax.f32 %v4279, 0.0
      %v4312 = vmax.f32 %v4280, 0.0
      %v4313 = vmax.f32 %v4281, 0.0
      %v4314 = vmax.f32 %v4282, 0.0
      %v4315 = vmax.f32 %v4283, 0.0
      %v4316 = vmax.f32 %v4284, 0.0
      %v4317 = vmax.f32 %v4285, 0.0
      %v4318 = vmax.f32 %v4286, 0.0
      %v4319 = vmax.f32 %v4287, 0.0
      %v4320 = vmax.f32 %v4288, 0.0
      %v4321 = vmax.f32 %v4289, 0.0
      %v4322 = vmax.f32 %v4290, 0.0
      %v4323 = vmax.f32 %v4291, 0.0
      %v4324 = vmax.f32 %v4292, 0.0
      %v4325 = vmax.f32 %v4293, 0.0
      %v4326 = vmax.f32 %v4294, 0.0
      %v4327 = vmax.f32 %v4295, 0.0
      %v4328 = vmax.f32 %v4296, 0.0
      %v4329 = vmax.f32 %v4297, 0.0
      %v4330 = vmax.f32 %v4298, 0.0
      %v4331 = vmax.f32 %v4299, 0.0
      %v4332 = vpack.c.bf16 %v4300, %v4300
      %v4333 = vpack.c.bf16 %v4301, %v4301
      %v4334 = vpack.c.bf16 %v4302, %v4302
      %v4335 = vpack.c.bf16 %v4303, %v4303
      %v4336 = vpack.c.bf16 %v4304, %v4304
      %v4337 = vpack.c.bf16 %v4305, %v4305
      %v4338 = vpack.c.bf16 %v4306, %v4306
      %v4339 = vpack.c.bf16 %v4307, %v4307
      %v4340 = vpack.c.bf16 %v4308, %v4308
      %v4341 = vpack.c.bf16 %v4309, %v4309
      %v4342 = vpack.c.bf16 %v4310, %v4310
      %v4343 = vpack.c.bf16 %v4311, %v4311
      %v4344 = vpack.c.bf16 %v4312, %v4312
      %v4345 = vpack.c.bf16 %v4313, %v4313
      %v4346 = vpack.c.bf16 %v4314, %v4314
      %v4347 = vpack.c.bf16 %v4315, %v4315
      %v4348 = vpack.c.bf16 %v4316, %v4316
      %v4349 = vpack.c.bf16 %v4317, %v4317
      %v4350 = vpack.c.bf16 %v4318, %v4318
      %v4351 = vpack.c.bf16 %v4319, %v4319
      %v4352 = vpack.c.bf16 %v4320, %v4320
      %v4353 = vpack.c.bf16 %v4321, %v4321
      %v4354 = vpack.c.bf16 %v4322, %v4322
      %v4355 = vpack.c.bf16 %v4323, %v4323
      %v4356 = vpack.c.bf16 %v4324, %v4324
      %v4357 = vpack.c.bf16 %v4325, %v4325
      %v4358 = vpack.c.bf16 %v4326, %v4326
      %v4359 = vpack.c.bf16 %v4327, %v4327
      %v4360 = vpack.c.bf16 %v4328, %v4328
      %v4361 = vpack.c.bf16 %v4329, %v4329
      %v4362 = vpack.c.bf16 %v4330, %v4330
      %v4363 = vpack.c.bf16 %v4331, %v4331
      %4364 = vst.msk [vmem:[#allocation3] sm:$0xf] %vm226, 0
      %4365 = vst.msk [vmem:[#allocation3 + $0x4] sm:$0xf] %vm226, 0
      %4366 = vst.msk [vmem:[#allocation3 + $0x8] sm:$0x1] %vm229, 0
      %4367 = vst.msk [vmem:[#allocation3 + $0xc] sm:$0xf] %vm226, 0
      %4368 = vst.msk [vmem:[#allocation3 + $0x10] sm:$0xf] %vm226, 0
      %4369 = vst.msk [vmem:[#allocation3 + $0x14] sm:$0x1] %vm229, 0
      %4370 = vst.msk [vmem:[#allocation3 + $0x18] sm:$0xf] %vm226, 0
      %4371 = vst.msk [vmem:[#allocation3 + $0x1c] sm:$0xf] %vm226, 0
      %4372 = vst.msk [vmem:[#allocation3 + $0x20] sm:$0x1] %vm229, 0
      %4373 = vst.msk [vmem:[#allocation3 + $0x24] sm:$0xf] %vm226, 0
      %4374 = vst.msk [vmem:[#allocation3 + $0x28] sm:$0xf] %vm226, 0
      %4375 = vst.msk [vmem:[#allocation3 + $0x2c] sm:$0x1] %vm229, 0
      %4376 = vst.msk [vmem:[#allocation3 + $0x30] sm:$0xf] %vm226, 0
      %4377 = vst.msk [vmem:[#allocation3 + $0x34] sm:$0xf] %vm226, 0
      %4378 = vst.msk [vmem:[#allocation3 + $0x38] sm:$0x1] %vm229, 0
      %4379 = vst.msk [vmem:[#allocation3 + $0x3c] sm:$0xf] %vm226, 0
      %4380 = vst.msk [vmem:[#allocation3 + $0x40] sm:$0xf] %vm226, 0
      %4381 = vst.msk [vmem:[#allocation3 + $0x44] sm:$0x1] %vm229, 0
      %4382 = vst.msk [vmem:[#allocation3 + $0x48] sm:$0xf] %vm226, 0
      %4383 = vst.msk [vmem:[#allocation3 + $0x4c] sm:$0xf] %vm226, 0
      %4384 = vst.msk [vmem:[#allocation3 + $0x50] sm:$0x1] %vm229, 0
      %4385 = vst.msk [vmem:[#allocation3 + $0x54] sm:$0xf] %vm226, 0
      %4386 = vst.msk [vmem:[#allocation3 + $0x58] sm:$0xf] %vm226, 0
      %4387 = vst.msk [vmem:[#allocation3 + $0x5c] sm:$0x1] %vm229, 0
      %4388 = vst.msk [vmem:[#allocation3 + $0x60] sm:$0xf] %vm226, 0
      %4389 = vst.msk [vmem:[#allocation3 + $0x64] sm:$0xf] %vm226, 0
      %4390 = vst.msk [vmem:[#allocation3 + $0x68] sm:$0x1] %vm229, 0
      %4391 = vst.msk [vmem:[#allocation3 + $0x6c] sm:$0xf] %vm226, 0
      %4392 = vst.msk [vmem:[#allocation3 + $0x70] sm:$0xf] %vm226, 0
      %4393 = vst.msk [vmem:[#allocation3 + $0x74] sm:$0x1] %vm229, 0
      %4394 = vst.msk [vmem:[#allocation3 + $0x78] sm:$0xf] %vm226, 0
      %4395 = vst.msk [vmem:[#allocation3 + $0x7c] sm:$0xf] %vm226, 0
      %4396 = vst.msk [vmem:[#allocation3 + $0x80] sm:$0x1] %vm229, 0
      %4397 = vst.msk [vmem:[#allocation3 + $0x84] sm:$0xf] %vm226, 0
      %4398 = vst.msk [vmem:[#allocation3 + $0x88] sm:$0xf] %vm226, 0
      %4399 = vst.msk [vmem:[#allocation3 + $0x8c] sm:$0x1] %vm229, 0
      %4400 = vst.msk [vmem:[#allocation3 + $0x90] sm:$0xf] %vm226, 0
      %4401 = vst.msk [vmem:[#allocation3 + $0x94] sm:$0xf] %vm226, 0
      %4402 = vst.msk [vmem:[#allocation3 + $0x98] sm:$0x1] %vm229, 0
      %4403 = vst.msk [vmem:[#allocation3 + $0x9c] sm:$0xf] %vm226, 0
      %4404 = vst.msk [vmem:[#allocation3 + $0xa0] sm:$0xf] %vm226, 0
      %4405 = vst.msk [vmem:[#allocation3 + $0xa4] sm:$0x1] %vm229, 0
      %4406 = vst.msk [vmem:[#allocation3 + $0xa8] sm:$0xf] %vm226, 0
      %4407 = vst.msk [vmem:[#allocation3 + $0xac] sm:$0xf] %vm226, 0
      %4408 = vst.msk [vmem:[#allocation3 + $0xb0] sm:$0x1] %vm229, 0
      %4409 = vst.msk [vmem:[#allocation3 + $0xb4] sm:$0xf] %vm226, 0
      %4410 = vst.msk [vmem:[#allocation3 + $0xb8] sm:$0xf] %vm226, 0
      %4411 = vst.msk [vmem:[#allocation3 + $0xbc] sm:$0x1] %vm229, 0
      %4412 = vst.msk [vmem:[#allocation3 + $0xc0] sm:$0xf] %vm226, 0
      %4413 = vst.msk [vmem:[#allocation3 + $0xc4] sm:$0xf] %vm226, 0
      %4414 = vst.msk [vmem:[#allocation3 + $0xc8] sm:$0x1] %vm229, 0
      %4415 = vst.msk [vmem:[#allocation3 + $0xcc] sm:$0xf] %vm226, 0
      %4416 = vst.msk [vmem:[#allocation3 + $0xd0] sm:$0xf] %vm226, 0
      %4417 = vst.msk [vmem:[#allocation3 + $0xd4] sm:$0x1] %vm229, 0
      %v4419 = vshrl.u32 %v4332, 16
      %v4421 = vrot.slane %v4419, 7
      %v4422 = vshll.u32 %v4332, 16
      %v4424 = vor.u32 %v4421, %v4422
      %v4425 = vrot.slane %v4421, 4
      %v4427 = vshrl.u32 %v4333, 16
      %v4429 = vrot.slane %v4427, 7
      %v4430 = vshll.u32 %v4333, 16
      %v4432 = vor.u32 %v4429, %v4430
      %v4433 = vsel %vm316, %v4425, %v4432
      %v4434 = vrot.slane %v4429, 4
      %v4436 = vshrl.u32 %v4334, 16
      %v4438 = vrot.slane %v4436, 7
      %v4439 = vshll.u32 %v4334, 16
      %v4441 = vor.u32 %v4438, %v4439
      %v4442 = vrot.slane %v4438, 4
      %v4444 = vshrl.u32 %v4335, 16
      %v4446 = vrot.slane %v4444, 7
      %v4447 = vshll.u32 %v4335, 16
      %v4449 = vor.u32 %v4446, %v4447
      %v4450 = vsel %vm316, %v4442, %v4449
      %v4451 = vrot.slane %v4446, 4
      %v4453 = vshrl.u32 %v4336, 16
      %v4455 = vrot.slane %v4453, 7
      %v4456 = vshll.u32 %v4336, 16
      %v4458 = vor.u32 %v4455, %v4456
      %v4459 = vrot.slane %v4455, 4
      %v4461 = vshrl.u32 %v4337, 16
      %v4463 = vrot.slane %v4461, 7
      %v4464 = vshll.u32 %v4337, 16
      %v4466 = vor.u32 %v4463, %v4464
      %v4467 = vsel %vm316, %v4459, %v4466
      %v4468 = vrot.slane %v4463, 4
      %v4470 = vshrl.u32 %v4338, 16
      %v4472 = vrot.slane %v4470, 7
      %v4473 = vshll.u32 %v4338, 16
      %v4475 = vor.u32 %v4472, %v4473
      %v4476 = vrot.slane %v4472, 4
      %v4478 = vshrl.u32 %v4339, 16
      %v4480 = vrot.slane %v4478, 7
      %v4481 = vshll.u32 %v4339, 16
      %v4483 = vor.u32 %v4480, %v4481
      %v4484 = vsel %vm316, %v4476, %v4483
      %v4485 = vrot.slane %v4480, 4
      %v4487 = vshrl.u32 %v4340, 16
      %v4489 = vrot.slane %v4487, 7
      %v4490 = vshll.u32 %v4340, 16
      %v4492 = vor.u32 %v4489, %v4490
      %v4493 = vrot.slane %v4489, 4
      %v4495 = vshrl.u32 %v4341, 16
      %v4497 = vrot.slane %v4495, 7
      %v4498 = vshll.u32 %v4341, 16
      %v4500 = vor.u32 %v4497, %v4498
      %v4501 = vsel %vm316, %v4493, %v4500
      %v4502 = vrot.slane %v4497, 4
      %v4504 = vshrl.u32 %v4342, 16
      %v4506 = vrot.slane %v4504, 7
      %v4507 = vshll.u32 %v4342, 16
      %v4509 = vor.u32 %v4506, %v4507
      %v4510 = vrot.slane %v4506, 4
      %v4512 = vshrl.u32 %v4343, 16
      %v4514 = vrot.slane %v4512, 7
      %v4515 = vshll.u32 %v4343, 16
      %v4517 = vor.u32 %v4514, %v4515
      %v4518 = vsel %vm316, %v4510, %v4517
      %v4519 = vrot.slane %v4514, 4
      %v4521 = vshrl.u32 %v4344, 16
      %v4523 = vrot.slane %v4521, 7
      %v4524 = vshll.u32 %v4344, 16
      %v4526 = vor.u32 %v4523, %v4524
      %v4527 = vrot.slane %v4523, 4
      %v4529 = vshrl.u32 %v4345, 16
      %v4531 = vrot.slane %v4529, 7
      %v4532 = vshll.u32 %v4345, 16
      %v4534 = vor.u32 %v4531, %v4532
      %v4535 = vsel %vm316, %v4527, %v4534
      %v4536 = vrot.slane %v4531, 4
      %v4538 = vshrl.u32 %v4346, 16
      %v4540 = vrot.slane %v4538, 7
      %v4541 = vshll.u32 %v4346, 16
      %v4543 = vor.u32 %v4540, %v4541
      %v4544 = vrot.slane %v4540, 4
      %v4546 = vshrl.u32 %v4347, 16
      %v4548 = vrot.slane %v4546, 7
      %v4549 = vshll.u32 %v4347, 16
      %v4551 = vor.u32 %v4548, %v4549
      %v4552 = vsel %vm316, %v4544, %v4551
      %v4553 = vrot.slane %v4548, 4
      %v4555 = vshrl.u32 %v4348, 16
      %v4557 = vrot.slane %v4555, 7
      %v4558 = vshll.u32 %v4348, 16
      %v4560 = vor.u32 %v4557, %v4558
      %v4561 = vrot.slane %v4557, 4
      %v4563 = vshrl.u32 %v4349, 16
      %v4565 = vrot.slane %v4563, 7
      %v4566 = vshll.u32 %v4349, 16
      %v4568 = vor.u32 %v4565, %v4566
      %v4569 = vsel %vm316, %v4561, %v4568
      %v4570 = vrot.slane %v4565, 4
      %v4572 = vshrl.u32 %v4350, 16
      %v4574 = vrot.slane %v4572, 7
      %v4575 = vshll.u32 %v4350, 16
      %v4577 = vor.u32 %v4574, %v4575
      %v4578 = vrot.slane %v4574, 4
      %v4580 = vshrl.u32 %v4351, 16
      %v4582 = vrot.slane %v4580, 7
      %v4583 = vshll.u32 %v4351, 16
      %v4585 = vor.u32 %v4582, %v4583
      %v4586 = vsel %vm316, %v4578, %v4585
      %v4587 = vrot.slane %v4582, 4
      %v4589 = vshrl.u32 %v4352, 16
      %v4591 = vrot.slane %v4589, 7
      %v4592 = vshll.u32 %v4352, 16
      %v4594 = vor.u32 %v4591, %v4592
      %v4595 = vrot.slane %v4591, 4
      %v4597 = vshrl.u32 %v4353, 16
      %v4599 = vrot.slane %v4597, 7
      %v4600 = vshll.u32 %v4353, 16
      %v4602 = vor.u32 %v4599, %v4600
      %v4603 = vsel %vm316, %v4595, %v4602
      %v4604 = vrot.slane %v4599, 4
      %v4606 = vshrl.u32 %v4354, 16
      %v4608 = vrot.slane %v4606, 7
      %v4609 = vshll.u32 %v4354, 16
      %v4611 = vor.u32 %v4608, %v4609
      %v4612 = vrot.slane %v4608, 4
      %v4614 = vshrl.u32 %v4355, 16
      %v4616 = vrot.slane %v4614, 7
      %v4617 = vshll.u32 %v4355, 16
      %v4619 = vor.u32 %v4616, %v4617
      %v4620 = vsel %vm316, %v4612, %v4619
      %v4621 = vrot.slane %v4616, 4
      %v4623 = vshrl.u32 %v4356, 16
      %v4625 = vrot.slane %v4623, 7
      %v4626 = vshll.u32 %v4356, 16
      %v4628 = vor.u32 %v4625, %v4626
      %v4629 = vrot.slane %v4625, 4
      %v4631 = vshrl.u32 %v4357, 16
      %v4633 = vrot.slane %v4631, 7
      %v4634 = vshll.u32 %v4357, 16
      %v4636 = vor.u32 %v4633, %v4634
      %v4637 = vsel %vm316, %v4629, %v4636
      %v4638 = vrot.slane %v4633, 4
      %v4640 = vshrl.u32 %v4358, 16
      %v4642 = vrot.slane %v4640, 7
      %v4643 = vshll.u32 %v4358, 16
      %v4645 = vor.u32 %v4642, %v4643
      %v4646 = vrot.slane %v4642, 4
      %v4648 = vshrl.u32 %v4359, 16
      %v4650 = vrot.slane %v4648, 7
      %v4651 = vshll.u32 %v4359, 16
      %v4653 = vor.u32 %v4650, %v4651
      %v4654 = vsel %vm316, %v4646, %v4653
      %v4655 = vrot.slane %v4650, 4
      %v4657 = vshrl.u32 %v4360, 16
      %v4659 = vrot.slane %v4657, 7
      %v4660 = vshll.u32 %v4360, 16
      %v4662 = vor.u32 %v4659, %v4660
      %v4663 = vrot.slane %v4659, 4
      %v4665 = vshrl.u32 %v4361, 16
      %v4667 = vrot.slane %v4665, 7
      %v4668 = vshll.u32 %v4361, 16
      %v4670 = vor.u32 %v4667, %v4668
      %v4671 = vsel %vm316, %v4663, %v4670
      %v4672 = vrot.slane %v4667, 4
      %v4674 = vshrl.u32 %v4362, 16
      %v4676 = vrot.slane %v4674, 7
      %v4677 = vshll.u32 %v4362, 16
      %v4679 = vor.u32 %v4676, %v4677
      %v4680 = vrot.slane %v4676, 4
      %v4682 = vshrl.u32 %v4363, 16
      %v4684 = vrot.slane %v4682, 7
      %v4685 = vshll.u32 %v4363, 16
      %v4687 = vor.u32 %v4684, %v4685
      %v4688 = vsel %vm316, %v4680, %v4687
      %v4689 = vrot.slane %v4684, 4
      %s4738 = scalar_lea.vmem [#allocation3], 12
      %v4739 = vld [vmem:[%s4738] sm:$0xf]
      %v4740 = vsel %vm640, %v4424, %v4739
      %4741 = vst [vmem:[%s4738] sm:$0xf] %v4740
      %4742 = vst.msk [vmem:[%s4738 + $0x4] sm:$0xf] %vm226, %v4433
      %v4743 = vld [vmem:[%s4738 + $0x8] sm:$0x1]
      %v4744 = vsel %vm646, %v4434, %v4743
      %4745 = vst [vmem:[%s4738 + $0x8] sm:$0x1] %v4744
      %v4746 = vld [vmem:[%s4738 + $0xc] sm:$0xf]
      %v4747 = vsel %vm640, %v4441, %v4746
      %4748 = vst [vmem:[%s4738 + $0xc] sm:$0xf] %v4747
      %4749 = vst.msk [vmem:[%s4738 + $0x10] sm:$0xf] %vm226, %v4450
      %v4750 = vld [vmem:[%s4738 + $0x14] sm:$0x1]
      %v4751 = vsel %vm646, %v4451, %v4750
      %4752 = vst [vmem:[%s4738 + $0x14] sm:$0x1] %v4751
      %v4753 = vld [vmem:[%s4738 + $0x18] sm:$0xf]
      %v4754 = vsel %vm640, %v4458, %v4753
      %4755 = vst [vmem:[%s4738 + $0x18] sm:$0xf] %v4754
      %4756 = vst.msk [vmem:[%s4738 + $0x1c] sm:$0xf] %vm226, %v4467
      %v4757 = vld [vmem:[%s4738 + $0x20] sm:$0x1]
      %v4758 = vsel %vm646, %v4468, %v4757
      %4759 = vst [vmem:[%s4738 + $0x20] sm:$0x1] %v4758
      %v4760 = vld [vmem:[%s4738 + $0x24] sm:$0xf]
      %v4761 = vsel %vm640, %v4475, %v4760
      %4762 = vst [vmem:[%s4738 + $0x24] sm:$0xf] %v4761
      %4763 = vst.msk [vmem:[%s4738 + $0x28] sm:$0xf] %vm226, %v4484
      %v4764 = vld [vmem:[%s4738 + $0x2c] sm:$0x1]
      %v4765 = vsel %vm646, %v4485, %v4764
      %4766 = vst [vmem:[%s4738 + $0x2c] sm:$0x1] %v4765
      %v4767 = vld [vmem:[%s4738 + $0x30] sm:$0xf]
      %v4768 = vsel %vm640, %v4492, %v4767
      %4769 = vst [vmem:[%s4738 + $0x30] sm:$0xf] %v4768
      %4770 = vst.msk [vmem:[%s4738 + $0x34] sm:$0xf] %vm226, %v4501
      %v4771 = vld [vmem:[%s4738 + $0x38] sm:$0x1]
      %v4772 = vsel %vm646, %v4502, %v4771
      %4773 = vst [vmem:[%s4738 + $0x38] sm:$0x1] %v4772
      %v4774 = vld [vmem:[%s4738 + $0x3c] sm:$0xf]
      %v4775 = vsel %vm640, %v4509, %v4774
      %4776 = vst [vmem:[%s4738 + $0x3c] sm:$0xf] %v4775
      %4777 = vst.msk [vmem:[%s4738 + $0x40] sm:$0xf] %vm226, %v4518
      %v4778 = vld [vmem:[%s4738 + $0x44] sm:$0x1]
      %v4779 = vsel %vm646, %v4519, %v4778
      %4780 = vst [vmem:[%s4738 + $0x44] sm:$0x1] %v4779
      %v4781 = vld [vmem:[%s4738 + $0x48] sm:$0xf]
      %v4782 = vsel %vm640, %v4526, %v4781
      %4783 = vst [vmem:[%s4738 + $0x48] sm:$0xf] %v4782
      %4784 = vst.msk [vmem:[%s4738 + $0x4c] sm:$0xf] %vm226, %v4535
      %v4785 = vld [vmem:[%s4738 + $0x50] sm:$0x1]
      %v4786 = vsel %vm646, %v4536, %v4785
      %4787 = vst [vmem:[%s4738 + $0x50] sm:$0x1] %v4786
      %v4788 = vld [vmem:[%s4738 + $0x54] sm:$0xf]
      %v4789 = vsel %vm640, %v4543, %v4788
      %4790 = vst [vmem:[%s4738 + $0x54] sm:$0xf] %v4789
      %4791 = vst.msk [vmem:[%s4738 + $0x58] sm:$0xf] %vm226, %v4552
      %v4792 = vld [vmem:[%s4738 + $0x5c] sm:$0x1]
      %v4793 = vsel %vm646, %v4553, %v4792
      %4794 = vst [vmem:[%s4738 + $0x5c] sm:$0x1] %v4793
      %v4795 = vld [vmem:[%s4738 + $0x60] sm:$0xf]
      %v4796 = vsel %vm640, %v4560, %v4795
      %4797 = vst [vmem:[%s4738 + $0x60] sm:$0xf] %v4796
      %4798 = vst.msk [vmem:[%s4738 + $0x64] sm:$0xf] %vm226, %v4569
      %v4799 = vld [vmem:[%s4738 + $0x68] sm:$0x1]
      %v4800 = vsel %vm646, %v4570, %v4799
      %4801 = vst [vmem:[%s4738 + $0x68] sm:$0x1] %v4800
      %v4802 = vld [vmem:[%s4738 + $0x6c] sm:$0xf]
      %v4803 = vsel %vm640, %v4577, %v4802
      %4804 = vst [vmem:[%s4738 + $0x6c] sm:$0xf] %v4803
      %4805 = vst.msk [vmem:[%s4738 + $0x70] sm:$0xf] %vm226, %v4586
      %v4806 = vld [vmem:[%s4738 + $0x74] sm:$0x1]
      %v4807 = vsel %vm646, %v4587, %v4806
      %4808 = vst [vmem:[%s4738 + $0x74] sm:$0x1] %v4807
      %v4809 = vld [vmem:[%s4738 + $0x78] sm:$0xf]
      %v4810 = vsel %vm640, %v4594, %v4809
      %4811 = vst [vmem:[%s4738 + $0x78] sm:$0xf] %v4810
      %4812 = vst.msk [vmem:[%s4738 + $0x7c] sm:$0xf] %vm226, %v4603
      %v4813 = vld [vmem:[%s4738 + $0x80] sm:$0x1]
      %v4814 = vsel %vm646, %v4604, %v4813
      %4815 = vst [vmem:[%s4738 + $0x80] sm:$0x1] %v4814
      %v4816 = vld [vmem:[%s4738 + $0x84] sm:$0xf]
      %v4817 = vsel %vm640, %v4611, %v4816
      %4818 = vst [vmem:[%s4738 + $0x84] sm:$0xf] %v4817
      %4819 = vst.msk [vmem:[%s4738 + $0x88] sm:$0xf] %vm226, %v4620
      %v4820 = vld [vmem:[%s4738 + $0x8c] sm:$0x1]
      %v4821 = vsel %vm646, %v4621, %v4820
      %4822 = vst [vmem:[%s4738 + $0x8c] sm:$0x1] %v4821
      %v4823 = vld [vmem:[%s4738 + $0x90] sm:$0xf]
      %v4824 = vsel %vm640, %v4628, %v4823
      %4825 = vst [vmem:[%s4738 + $0x90] sm:$0xf] %v4824
      %4826 = vst.msk [vmem:[%s4738 + $0x94] sm:$0xf] %vm226, %v4637
      %v4827 = vld [vmem:[%s4738 + $0x98] sm:$0x1]
      %v4828 = vsel %vm646, %v4638, %v4827
      %4829 = vst [vmem:[%s4738 + $0x98] sm:$0x1] %v4828
      %v4830 = vld [vmem:[%s4738 + $0x9c] sm:$0xf]
      %v4831 = vsel %vm640, %v4645, %v4830
      %4832 = vst [vmem:[%s4738 + $0x9c] sm:$0xf] %v4831
      %4833 = vst.msk [vmem:[%s4738 + $0xa0] sm:$0xf] %vm226, %v4654
      %v4834 = vld [vmem:[%s4738 + $0xa4] sm:$0x1]
      %v4835 = vsel %vm646, %v4655, %v4834
      %4836 = vst [vmem:[%s4738 + $0xa4] sm:$0x1] %v4835
      %v4837 = vld [vmem:[%s4738 + $0xa8] sm:$0xf]
      %v4838 = vsel %vm640, %v4662, %v4837
      %4839 = vst [vmem:[%s4738 + $0xa8] sm:$0xf] %v4838
      %4840 = vst.msk [vmem:[%s4738 + $0xac] sm:$0xf] %vm226, %v4671
      %v4841 = vld [vmem:[%s4738 + $0xb0] sm:$0x1]
      %v4842 = vsel %vm646, %v4672, %v4841
      %4843 = vst [vmem:[%s4738 + $0xb0] sm:$0x1] %v4842
      %v4844 = vld [vmem:[%s4738 + $0xb4] sm:$0xf]
      %v4845 = vsel %vm640, %v4679, %v4844
      %4846 = vst [vmem:[%s4738 + $0xb4] sm:$0xf] %v4845
      %4847 = vst.msk [vmem:[%s4738 + $0xb8] sm:$0xf] %vm226, %v4688
      %v4848 = vld [vmem:[%s4738 + $0xbc] sm:$0x1]
      %v4849 = vsel %vm646, %v4689, %v4848
      %4850 = vst [vmem:[%s4738 + $0xbc] sm:$0x1] %v4849
      %v4851 = vld [vmem:[#allocation3] sm:$0xf]
      %v4852 = vld [vmem:[#allocation3 + $0x4] sm:$0xf]
      %v4853 = vld [vmem:[#allocation3 + $0xc] sm:$0xf]
      %v4854 = vld [vmem:[#allocation3 + $0x10] sm:$0xf]
      %v4855 = vld [vmem:[#allocation3 + $0x18] sm:$0xf]
      %v4856 = vld [vmem:[#allocation3 + $0x1c] sm:$0xf]
      %v4857 = vld [vmem:[#allocation3 + $0x24] sm:$0xf]
      %v4858 = vld [vmem:[#allocation3 + $0x28] sm:$0xf]
      %v4859 = vld [vmem:[#allocation3 + $0x30] sm:$0xf]
      %v4860 = vld [vmem:[#allocation3 + $0x34] sm:$0xf]
      %v4861 = vld [vmem:[#allocation3 + $0x3c] sm:$0xf]
      %v4862 = vld [vmem:[#allocation3 + $0x40] sm:$0xf]
      %v4863 = vld [vmem:[#allocation3 + $0x48] sm:$0xf]
      %v4864 = vld [vmem:[#allocation3 + $0x4c] sm:$0xf]
      %v4865 = vld [vmem:[#allocation3 + $0x54] sm:$0xf]
      %v4866 = vld [vmem:[#allocation3 + $0x58] sm:$0xf]
      %v4867 = vld [vmem:[#allocation3 + $0x60] sm:$0xf]
      %v4868 = vld [vmem:[#allocation3 + $0x64] sm:$0xf]
      %v4869 = vld [vmem:[#allocation3 + $0x6c] sm:$0xf]
      %v4870 = vld [vmem:[#allocation3 + $0x70] sm:$0xf]
      %v4871 = vld [vmem:[#allocation3 + $0x78] sm:$0xf]
      %v4872 = vld [vmem:[#allocation3 + $0x7c] sm:$0xf]
      %v4873 = vld [vmem:[#allocation3 + $0x84] sm:$0xf]
      %v4874 = vld [vmem:[#allocation3 + $0x88] sm:$0xf]
      %v4875 = vld [vmem:[#allocation3 + $0x90] sm:$0xf]
      %v4876 = vld [vmem:[#allocation3 + $0x94] sm:$0xf]
      %v4877 = vld [vmem:[#allocation3 + $0x9c] sm:$0xf]
      %v4878 = vld [vmem:[#allocation3 + $0xa0] sm:$0xf]
      %v4879 = vld [vmem:[#allocation3 + $0xa8] sm:$0xf]
      %v4880 = vld [vmem:[#allocation3 + $0xac] sm:$0xf]
      %v4881 = vld [vmem:[#allocation3 + $0xb4] sm:$0xf]
      %v4882 = vld [vmem:[#allocation3 + $0xb8] sm:$0xf]
      %v4883 = vld [vmem:[#allocation3 + $0x8] sm:$0x1]
      %v4884 = vld [vmem:[#allocation3 + $0x14] sm:$0x1]
      %v4885 = vld [vmem:[#allocation3 + $0x20] sm:$0x1]
      %v4886 = vld [vmem:[#allocation3 + $0x2c] sm:$0x1]
      %v4887 = vld [vmem:[#allocation3 + $0x38] sm:$0x1]
      %v4888 = vld [vmem:[#allocation3 + $0x44] sm:$0x1]
      %v4889 = vld [vmem:[#allocation3 + $0x50] sm:$0x1]
      %v4890 = vld [vmem:[#allocation3 + $0x5c] sm:$0x1]
      %v4891 = vld [vmem:[#allocation3 + $0x68] sm:$0x1]
      %v4892 = vld [vmem:[#allocation3 + $0x74] sm:$0x1]
      %v4893 = vld [vmem:[#allocation3 + $0x80] sm:$0x1]
      %v4894 = vld [vmem:[#allocation3 + $0x8c] sm:$0x1]
      %v4895 = vld [vmem:[#allocation3 + $0x98] sm:$0x1]
      %v4896 = vld [vmem:[#allocation3 + $0xa4] sm:$0x1]
      %v4897 = vld [vmem:[#allocation3 + $0xb0] sm:$0x1]
      %v4898 = vld [vmem:[#allocation3 + $0xbc] sm:$0x1]
      %v4900 = vshrl.u32 %v4851, 16
      %v4902 = vrot.slane %v4900, 4
      %v4903 = vshll.u32 %v4851, 16
      %v4905 = vrot.slane %v4903, 5
      %v4906 = vor.u32 %v4902, %v4905
      %v4907 = vrot.slane %v4906, 4
      %v4909 = vshll.u32 %v4852, 16
      %v4911 = vrot.slane %v4909, 5
      %v4912 = vsel %vm805, %v4907, %v4911
      %v4913 = vshrl.u32 %v4852, 16
      %v4915 = vrot.slane %v4913, 4
      %v4916 = vor.u32 %v4915, %v4911
      %v4917 = vrot.slane %v4916, 4
      %v4919 = vshll.u32 %v4883, 16
      %v4921 = vrot.slane %v4919, 5
      %v4922 = vsel %vm805, %v4917, %v4921
      %v4924 = vshrl.u32 %v4853, 16
      %v4926 = vrot.slane %v4924, 4
      %v4927 = vshll.u32 %v4853, 16
      %v4929 = vrot.slane %v4927, 5
      %v4930 = vor.u32 %v4926, %v4929
      %v4931 = vrot.slane %v4930, 4
      %v4933 = vshll.u32 %v4854, 16
      %v4935 = vrot.slane %v4933, 5
      %v4936 = vsel %vm805, %v4931, %v4935
      %v4937 = vshrl.u32 %v4854, 16
      %v4939 = vrot.slane %v4937, 4
      %v4940 = vor.u32 %v4939, %v4935
      %v4941 = vrot.slane %v4940, 4
      %v4943 = vshll.u32 %v4884, 16
      %v4945 = vrot.slane %v4943, 5
      %v4946 = vsel %vm805, %v4941, %v4945
      %v4948 = vshrl.u32 %v4855, 16
      %v4950 = vrot.slane %v4948, 4
      %v4951 = vshll.u32 %v4855, 16
      %v4953 = vrot.slane %v4951, 5
      %v4954 = vor.u32 %v4950, %v4953
      %v4955 = vrot.slane %v4954, 4
      %v4957 = vshll.u32 %v4856, 16
      %v4959 = vrot.slane %v4957, 5
      %v4960 = vsel %vm805, %v4955, %v4959
      %v4961 = vshrl.u32 %v4856, 16
      %v4963 = vrot.slane %v4961, 4
      %v4964 = vor.u32 %v4963, %v4959
      %v4965 = vrot.slane %v4964, 4
      %v4967 = vshll.u32 %v4885, 16
      %v4969 = vrot.slane %v4967, 5
      %v4970 = vsel %vm805, %v4965, %v4969
      %v4972 = vshrl.u32 %v4857, 16
      %v4974 = vrot.slane %v4972, 4
      %v4975 = vshll.u32 %v4857, 16
      %v4977 = vrot.slane %v4975, 5
      %v4978 = vor.u32 %v4974, %v4977
      %v4979 = vrot.slane %v4978, 4
      %v4981 = vshll.u32 %v4858, 16
      %v4983 = vrot.slane %v4981, 5
      %v4984 = vsel %vm805, %v4979, %v4983
      %v4985 = vshrl.u32 %v4858, 16
      %v4987 = vrot.slane %v4985, 4
      %v4988 = vor.u32 %v4987, %v4983
      %v4989 = vrot.slane %v4988, 4
      %v4991 = vshll.u32 %v4886, 16
      %v4993 = vrot.slane %v4991, 5
      %v4994 = vsel %vm805, %v4989, %v4993
      %v4996 = vshrl.u32 %v4859, 16
      %v4998 = vrot.slane %v4996, 4
      %v4999 = vshll.u32 %v4859, 16
      %v5001 = vrot.slane %v4999, 5
      %v5002 = vor.u32 %v4998, %v5001
      %v5003 = vrot.slane %v5002, 4
      %v5005 = vshll.u32 %v4860, 16
      %v5007 = vrot.slane %v5005, 5
      %v5008 = vsel %vm805, %v5003, %v5007
      %v5009 = vshrl.u32 %v4860, 16
      %v5011 = vrot.slane %v5009, 4
      %v5012 = vor.u32 %v5011, %v5007
      %v5013 = vrot.slane %v5012, 4
      %v5015 = vshll.u32 %v4887, 16
      %v5017 = vrot.slane %v5015, 5
      %v5018 = vsel %vm805, %v5013, %v5017
      %v5020 = vshrl.u32 %v4861, 16
      %v5022 = vrot.slane %v5020, 4
      %v5023 = vshll.u32 %v4861, 16
      %v5025 = vrot.slane %v5023, 5
      %v5026 = vor.u32 %v5022, %v5025
      %v5027 = vrot.slane %v5026, 4
      %v5029 = vshll.u32 %v4862, 16
      %v5031 = vrot.slane %v5029, 5
      %v5032 = vsel %vm805, %v5027, %v5031
      %v5033 = vshrl.u32 %v4862, 16
      %v5035 = vrot.slane %v5033, 4
      %v5036 = vor.u32 %v5035, %v5031
      %v5037 = vrot.slane %v5036, 4
      %v5039 = vshll.u32 %v4888, 16
      %v5041 = vrot.slane %v5039, 5
      %v5042 = vsel %vm805, %v5037, %v5041
      %v5044 = vshrl.u32 %v4863, 16
      %v5046 = vrot.slane %v5044, 4
      %v5047 = vshll.u32 %v4863, 16
      %v5049 = vrot.slane %v5047, 5
      %v5050 = vor.u32 %v5046, %v5049
      %v5051 = vrot.slane %v5050, 4
      %v5053 = vshll.u32 %v4864, 16
      %v5055 = vrot.slane %v5053, 5
      %v5056 = vsel %vm805, %v5051, %v5055
      %v5057 = vshrl.u32 %v4864, 16
      %v5059 = vrot.slane %v5057, 4
      %v5060 = vor.u32 %v5059, %v5055
      %v5061 = vrot.slane %v5060, 4
      %v5063 = vshll.u32 %v4889, 16
      %v5065 = vrot.slane %v5063, 5
      %v5066 = vsel %vm805, %v5061, %v5065
      %v5068 = vshrl.u32 %v4865, 16
      %v5070 = vrot.slane %v5068, 4
      %v5071 = vshll.u32 %v4865, 16
      %v5073 = vrot.slane %v5071, 5
      %v5074 = vor.u32 %v5070, %v5073
      %v5075 = vrot.slane %v5074, 4
      %v5077 = vshll.u32 %v4866, 16
      %v5079 = vrot.slane %v5077, 5
      %v5080 = vsel %vm805, %v5075, %v5079
      %v5081 = vshrl.u32 %v4866, 16
      %v5083 = vrot.slane %v5081, 4
      %v5084 = vor.u32 %v5083, %v5079
      %v5085 = vrot.slane %v5084, 4
      %v5087 = vshll.u32 %v4890, 16
      %v5089 = vrot.slane %v5087, 5
      %v5090 = vsel %vm805, %v5085, %v5089
      %v5092 = vshrl.u32 %v4867, 16
      %v5094 = vrot.slane %v5092, 4
      %v5095 = vshll.u32 %v4867, 16
      %v5097 = vrot.slane %v5095, 5
      %v5098 = vor.u32 %v5094, %v5097
      %v5099 = vrot.slane %v5098, 4
      %v5101 = vshll.u32 %v4868, 16
      %v5103 = vrot.slane %v5101, 5
      %v5104 = vsel %vm805, %v5099, %v5103
      %v5105 = vshrl.u32 %v4868, 16
      %v5107 = vrot.slane %v5105, 4
      %v5108 = vor.u32 %v5107, %v5103
      %v5109 = vrot.slane %v5108, 4
      %v5111 = vshll.u32 %v4891, 16
      %v5113 = vrot.slane %v5111, 5
      %v5114 = vsel %vm805, %v5109, %v5113
      %v5116 = vshrl.u32 %v4869, 16
      %v5118 = vrot.slane %v5116, 4
      %v5119 = vshll.u32 %v4869, 16
      %v5121 = vrot.slane %v5119, 5
      %v5122 = vor.u32 %v5118, %v5121
      %v5123 = vrot.slane %v5122, 4
      %v5125 = vshll.u32 %v4870, 16
      %v5127 = vrot.slane %v5125, 5
      %v5128 = vsel %vm805, %v5123, %v5127
      %v5129 = vshrl.u32 %v4870, 16
      %v5131 = vrot.slane %v5129, 4
      %v5132 = vor.u32 %v5131, %v5127
      %v5133 = vrot.slane %v5132, 4
      %v5135 = vshll.u32 %v4892, 16
      %v5137 = vrot.slane %v5135, 5
      %v5138 = vsel %vm805, %v5133, %v5137
      %v5140 = vshrl.u32 %v4871, 16
      %v5142 = vrot.slane %v5140, 4
      %v5143 = vshll.u32 %v4871, 16
      %v5145 = vrot.slane %v5143, 5
      %v5146 = vor.u32 %v5142, %v5145
      %v5147 = vrot.slane %v5146, 4
      %v5149 = vshll.u32 %v4872, 16
      %v5151 = vrot.slane %v5149, 5
      %v5152 = vsel %vm805, %v5147, %v5151
      %v5153 = vshrl.u32 %v4872, 16
      %v5155 = vrot.slane %v5153, 4
      %v5156 = vor.u32 %v5155, %v5151
      %v5157 = vrot.slane %v5156, 4
      %v5159 = vshll.u32 %v4893, 16
      %v5161 = vrot.slane %v5159, 5
      %v5162 = vsel %vm805, %v5157, %v5161
      %v5164 = vshrl.u32 %v4873, 16
      %v5166 = vrot.slane %v5164, 4
      %v5167 = vshll.u32 %v4873, 16
      %v5169 = vrot.slane %v5167, 5
      %v5170 = vor.u32 %v5166, %v5169
      %v5171 = vrot.slane %v5170, 4
      %v5173 = vshll.u32 %v4874, 16
      %v5175 = vrot.slane %v5173, 5
      %v5176 = vsel %vm805, %v5171, %v5175
      %v5177 = vshrl.u32 %v4874, 16
      %v5179 = vrot.slane %v5177, 4
      %v5180 = vor.u32 %v5179, %v5175
      %v5181 = vrot.slane %v5180, 4
      %v5183 = vshll.u32 %v4894, 16
      %v5185 = vrot.slane %v5183, 5
      %v5186 = vsel %vm805, %v5181, %v5185
      %v5188 = vshrl.u32 %v4875, 16
      %v5190 = vrot.slane %v5188, 4
      %v5191 = vshll.u32 %v4875, 16
      %v5193 = vrot.slane %v5191, 5
      %v5194 = vor.u32 %v5190, %v5193
      %v5195 = vrot.slane %v5194, 4
      %v5197 = vshll.u32 %v4876, 16
      %v5199 = vrot.slane %v5197, 5
      %v5200 = vsel %vm805, %v5195, %v5199
      %v5201 = vshrl.u32 %v4876, 16
      %v5203 = vrot.slane %v5201, 4
      %v5204 = vor.u32 %v5203, %v5199
      %v5205 = vrot.slane %v5204, 4
      %v5207 = vshll.u32 %v4895, 16
      %v5209 = vrot.slane %v5207, 5
      %v5210 = vsel %vm805, %v5205, %v5209
      %v5212 = vshrl.u32 %v4877, 16
      %v5214 = vrot.slane %v5212, 4
      %v5215 = vshll.u32 %v4877, 16
      %v5217 = vrot.slane %v5215, 5
      %v5218 = vor.u32 %v5214, %v5217
      %v5219 = vrot.slane %v5218, 4
      %v5221 = vshll.u32 %v4878, 16
      %v5223 = vrot.slane %v5221, 5
      %v5224 = vsel %vm805, %v5219, %v5223
      %v5225 = vshrl.u32 %v4878, 16
      %v5227 = vrot.slane %v5225, 4
      %v5228 = vor.u32 %v5227, %v5223
      %v5229 = vrot.slane %v5228, 4
      %v5231 = vshll.u32 %v4896, 16
      %v5233 = vrot.slane %v5231, 5
      %v5234 = vsel %vm805, %v5229, %v5233
      %v5236 = vshrl.u32 %v4879, 16
      %v5238 = vrot.slane %v5236, 4
      %v5239 = vshll.u32 %v4879, 16
      %v5241 = vrot.slane %v5239, 5
      %v5242 = vor.u32 %v5238, %v5241
      %v5243 = vrot.slane %v5242, 4
      %v5245 = vshll.u32 %v4880, 16
      %v5247 = vrot.slane %v5245, 5
      %v5248 = vsel %vm805, %v5243, %v5247
      %v5249 = vshrl.u32 %v4880, 16
      %v5251 = vrot.slane %v5249, 4
      %v5252 = vor.u32 %v5251, %v5247
      %v5253 = vrot.slane %v5252, 4
      %v5255 = vshll.u32 %v4897, 16
      %v5257 = vrot.slane %v5255, 5
      %v5258 = vsel %vm805, %v5253, %v5257
      %v5260 = vshrl.u32 %v4881, 16
      %v5262 = vrot.slane %v5260, 4
      %v5263 = vshll.u32 %v4881, 16
      %v5265 = vrot.slane %v5263, 5
      %v5266 = vor.u32 %v5262, %v5265
      %v5267 = vrot.slane %v5266, 4
      %v5269 = vshll.u32 %v4882, 16
      %v5271 = vrot.slane %v5269, 5
      %v5272 = vsel %vm805, %v5267, %v5271
      %v5273 = vshrl.u32 %v4882, 16
      %v5275 = vrot.slane %v5273, 4
      %v5276 = vor.u32 %v5275, %v5271
      %v5277 = vrot.slane %v5276, 4
      %v5279 = vshll.u32 %v4898, 16
      %v5281 = vrot.slane %v5279, 5
      %v5282 = vsel %vm805, %v5277, %v5281
      %v5283 = vld [vmem:[#allocation3] sm:$0xe]
      %v5284 = vld [vmem:[#allocation3 + $0xc] sm:$0xe]
      %v5285 = vld [vmem:[#allocation3 + $0x18] sm:$0xe]
      %v5286 = vld [vmem:[#allocation3 + $0x24] sm:$0xe]
      %v5287 = vld [vmem:[#allocation3 + $0x30] sm:$0xe]
      %v5288 = vld [vmem:[#allocation3 + $0x3c] sm:$0xe]
      %v5289 = vld [vmem:[#allocation3 + $0x48] sm:$0xe]
      %v5290 = vld [vmem:[#allocation3 + $0x54] sm:$0xe]
      %v5291 = vld [vmem:[#allocation3 + $0x60] sm:$0xe]
      %v5292 = vld [vmem:[#allocation3 + $0x6c] sm:$0xe]
      %v5293 = vld [vmem:[#allocation3 + $0x78] sm:$0xe]
      %v5294 = vld [vmem:[#allocation3 + $0x84] sm:$0xe]
      %v5295 = vld [vmem:[#allocation3 + $0x90] sm:$0xe]
      %v5296 = vld [vmem:[#allocation3 + $0x9c] sm:$0xe]
      %v5297 = vld [vmem:[#allocation3 + $0xa8] sm:$0xe]
      %v5298 = vld [vmem:[#allocation3 + $0xb4] sm:$0xe]
      %v5347 = vrot.slane %v5283, 5
      %v5348 = vrot.slane %v5347, 4
      %v5349 = vrot.slane %v4852, 5
      %v5350 = vsel %vm1256, %v5348, %v5349
      %v5351 = vrot.slane %v5349, 4
      %v5352 = vrot.slane %v4883, 5
      %v5353 = vsel %vm1256, %v5351, %v5352
      %v5354 = vrot.slane %v5284, 5
      %v5355 = vrot.slane %v5354, 4
      %v5356 = vrot.slane %v4854, 5
      %v5357 = vsel %vm1256, %v5355, %v5356
      %v5358 = vrot.slane %v5356, 4
      %v5359 = vrot.slane %v4884, 5
      %v5360 = vsel %vm1256, %v5358, %v5359
      %v5361 = vrot.slane %v5285, 5
      %v5362 = vrot.slane %v5361, 4
      %v5363 = vrot.slane %v4856, 5
      %v5364 = vsel %vm1256, %v5362, %v5363
      %v5365 = vrot.slane %v5363, 4
      %v5366 = vrot.slane %v4885, 5
      %v5367 = vsel %vm1256, %v5365, %v5366
      %v5368 = vrot.slane %v5286, 5
      %v5369 = vrot.slane %v5368, 4
      %v5370 = vrot.slane %v4858, 5
      %v5371 = vsel %vm1256, %v5369, %v5370
      %v5372 = vrot.slane %v5370, 4
      %v5373 = vrot.slane %v4886, 5
      %v5374 = vsel %vm1256, %v5372, %v5373
      %v5375 = vrot.slane %v5287, 5
      %v5376 = vrot.slane %v5375, 4
      %v5377 = vrot.slane %v4860, 5
      %v5378 = vsel %vm1256, %v5376, %v5377
      %v5379 = vrot.slane %v5377, 4
      %v5380 = vrot.slane %v4887, 5
      %v5381 = vsel %vm1256, %v5379, %v5380
      %v5382 = vrot.slane %v5288, 5
      %v5383 = vrot.slane %v5382, 4
      %v5384 = vrot.slane %v4862, 5
      %v5385 = vsel %vm1256, %v5383, %v5384
      %v5386 = vrot.slane %v5384, 4
      %v5387 = vrot.slane %v4888, 5
      %v5388 = vsel %vm1256, %v5386, %v5387
      %v5389 = vrot.slane %v5289, 5
      %v5390 = vrot.slane %v5389, 4
      %v5391 = vrot.slane %v4864, 5
      %v5392 = vsel %vm1256, %v5390, %v5391
      %v5393 = vrot.slane %v5391, 4
      %v5394 = vrot.slane %v4889, 5
      %v5395 = vsel %vm1256, %v5393, %v5394
      %v5396 = vrot.slane %v5290, 5
      %v5397 = vrot.slane %v5396, 4
      %v5398 = vrot.slane %v4866, 5
      %v5399 = vsel %vm1256, %v5397, %v5398
      %v5400 = vrot.slane %v5398, 4
      %v5401 = vrot.slane %v4890, 5
      %v5402 = vsel %vm1256, %v5400, %v5401
      %v5403 = vrot.slane %v5291, 5
      %v5404 = vrot.slane %v5403, 4
      %v5405 = vrot.slane %v4868, 5
      %v5406 = vsel %vm1256, %v5404, %v5405
      %v5407 = vrot.slane %v5405, 4
      %v5408 = vrot.slane %v4891, 5
      %v5409 = vsel %vm1256, %v5407, %v5408
      %v5410 = vrot.slane %v5292, 5
      %v5411 = vrot.slane %v5410, 4
      %v5412 = vrot.slane %v4870, 5
      %v5413 = vsel %vm1256, %v5411, %v5412
      %v5414 = vrot.slane %v5412, 4
      %v5415 = vrot.slane %v4892, 5
      %v5416 = vsel %vm1256, %v5414, %v5415
      %v5417 = vrot.slane %v5293, 5
      %v5418 = vrot.slane %v5417, 4
      %v5419 = vrot.slane %v4872, 5
      %v5420 = vsel %vm1256, %v5418, %v5419
      %v5421 = vrot.slane %v5419, 4
      %v5422 = vrot.slane %v4893, 5
      %v5423 = vsel %vm1256, %v5421, %v5422
      %v5424 = vrot.slane %v5294, 5
      %v5425 = vrot.slane %v5424, 4
      %v5426 = vrot.slane %v4874, 5
      %v5427 = vsel %vm1256, %v5425, %v5426
      %v5428 = vrot.slane %v5426, 4
      %v5429 = vrot.slane %v4894, 5
      %v5430 = vsel %vm1256, %v5428, %v5429
      %v5431 = vrot.slane %v5295, 5
      %v5432 = vrot.slane %v5431, 4
      %v5433 = vrot.slane %v4876, 5
      %v5434 = vsel %vm1256, %v5432, %v5433
      %v5435 = vrot.slane %v5433, 4
      %v5436 = vrot.slane %v4895, 5
      %v5437 = vsel %vm1256, %v5435, %v5436
      %v5438 = vrot.slane %v5296, 5
      %v5439 = vrot.slane %v5438, 4
      %v5440 = vrot.slane %v4878, 5
      %v5441 = vsel %vm1256, %v5439, %v5440
      %v5442 = vrot.slane %v5440, 4
      %v5443 = vrot.slane %v4896, 5
      %v5444 = vsel %vm1256, %v5442, %v5443
      %v5445 = vrot.slane %v5297, 5
      %v5446 = vrot.slane %v5445, 4
      %v5447 = vrot.slane %v4880, 5
      %v5448 = vsel %vm1256, %v5446, %v5447
      %v5449 = vrot.slane %v5447, 4
      %v5450 = vrot.slane %v4897, 5
      %v5451 = vsel %vm1256, %v5449, %v5450
      %v5452 = vrot.slane %v5298, 5
      %v5453 = vrot.slane %v5452, 4
      %v5454 = vrot.slane %v4882, 5
      %v5455 = vsel %vm1256, %v5453, %v5454
      %v5456 = vrot.slane %v5454, 4
      %v5457 = vrot.slane %v4898, 5
      %v5458 = vsel %vm1256, %v5456, %v5457
      %v5459 = vld [vmem:[%s4738] sm:$0xf]
      %v5460 = vld [vmem:[%s4738 + $0x4] sm:$0xf]
      %v5461 = vld [vmem:[%s4738 + $0xc] sm:$0xf]
      %v5462 = vld [vmem:[%s4738 + $0x10] sm:$0xf]
      %v5463 = vld [vmem:[%s4738 + $0x18] sm:$0xf]
      %v5464 = vld [vmem:[%s4738 + $0x1c] sm:$0xf]
      %v5465 = vld [vmem:[%s4738 + $0x24] sm:$0xf]
      %v5466 = vld [vmem:[%s4738 + $0x28] sm:$0xf]
      %v5467 = vld [vmem:[%s4738 + $0x30] sm:$0xf]
      %v5468 = vld [vmem:[%s4738 + $0x34] sm:$0xf]
      %v5469 = vld [vmem:[%s4738 + $0x3c] sm:$0xf]
      %v5470 = vld [vmem:[%s4738 + $0x40] sm:$0xf]
      %v5471 = vld [vmem:[%s4738 + $0x48] sm:$0xf]
      %v5472 = vld [vmem:[%s4738 + $0x4c] sm:$0xf]
      %v5473 = vld [vmem:[%s4738 + $0x54] sm:$0xf]
      %v5474 = vld [vmem:[%s4738 + $0x58] sm:$0xf]
      %v5475 = vld [vmem:[%s4738 + $0x60] sm:$0xf]
      %v5476 = vld [vmem:[%s4738 + $0x64] sm:$0xf]
      %v5477 = vld [vmem:[%s4738 + $0x6c] sm:$0xf]
      %v5478 = vld [vmem:[%s4738 + $0x70] sm:$0xf]
      %v5479 = vld [vmem:[%s4738 + $0x78] sm:$0xf]
      %v5480 = vld [vmem:[%s4738 + $0x7c] sm:$0xf]
      %v5481 = vld [vmem:[%s4738 + $0x84] sm:$0xf]
      %v5482 = vld [vmem:[%s4738 + $0x88] sm:$0xf]
      %v5483 = vld [vmem:[%s4738 + $0x90] sm:$0xf]
      %v5484 = vld [vmem:[%s4738 + $0x94] sm:$0xf]
      %v5485 = vld [vmem:[%s4738 + $0x9c] sm:$0xf]
      %v5486 = vld [vmem:[%s4738 + $0xa0] sm:$0xf]
      %v5487 = vld [vmem:[%s4738 + $0xa8] sm:$0xf]
      %v5488 = vld [vmem:[%s4738 + $0xac] sm:$0xf]
      %v5489 = vld [vmem:[%s4738 + $0xb4] sm:$0xf]
      %v5490 = vld [vmem:[%s4738 + $0xb8] sm:$0xf]
      %v5507 = vunpack.c.l.b16 %v4851
      %v5508 = vunpack.c.l.b16 %v4852
      %v5509 = vunpack.c.l.b16 %v4853
      %v5510 = vunpack.c.l.b16 %v4854
      %v5511 = vunpack.c.l.b16 %v4855
      %v5512 = vunpack.c.l.b16 %v4856
      %v5513 = vunpack.c.l.b16 %v4857
      %v5514 = vunpack.c.l.b16 %v4858
      %v5515 = vunpack.c.l.b16 %v4859
      %v5516 = vunpack.c.l.b16 %v4860
      %v5517 = vunpack.c.l.b16 %v4861
      %v5518 = vunpack.c.l.b16 %v4862
      %v5519 = vunpack.c.l.b16 %v4863
      %v5520 = vunpack.c.l.b16 %v4864
      %v5521 = vunpack.c.l.b16 %v4865
      %v5522 = vunpack.c.l.b16 %v4866
      %v5523 = vunpack.c.l.b16 %v4867
      %v5524 = vunpack.c.l.b16 %v4868
      %v5525 = vunpack.c.l.b16 %v4869
      %v5526 = vunpack.c.l.b16 %v4870
      %v5527 = vunpack.c.l.b16 %v4871
      %v5528 = vunpack.c.l.b16 %v4872
      %v5529 = vunpack.c.l.b16 %v4873
      %v5530 = vunpack.c.l.b16 %v4874
      %v5531 = vunpack.c.l.b16 %v4875
      %v5532 = vunpack.c.l.b16 %v4876
      %v5533 = vunpack.c.l.b16 %v4877
      %v5534 = vunpack.c.l.b16 %v4878
      %v5535 = vunpack.c.l.b16 %v4879
      %v5536 = vunpack.c.l.b16 %v4880
      %v5537 = vunpack.c.l.b16 %v4881
      %v5538 = vunpack.c.l.b16 %v4882
      %v5539 = vpack.c.b16 %v5508, %v5507
      %v5540 = vpack.c.b16 %v5510, %v5509
      %v5541 = vpack.c.b16 %v5512, %v5511
      %v5542 = vpack.c.b16 %v5514, %v5513
      %v5543 = vpack.c.b16 %v5516, %v5515
      %v5544 = vpack.c.b16 %v5518, %v5517
      %v5545 = vpack.c.b16 %v5520, %v5519
      %v5546 = vpack.c.b16 %v5522, %v5521
      %v5547 = vpack.c.b16 %v5524, %v5523
      %v5548 = vpack.c.b16 %v5526, %v5525
      %v5549 = vpack.c.b16 %v5528, %v5527
      %v5550 = vpack.c.b16 %v5530, %v5529
      %v5551 = vpack.c.b16 %v5532, %v5531
      %v5552 = vpack.c.b16 %v5534, %v5533
      %v5553 = vpack.c.b16 %v5536, %v5535
      %v5554 = vpack.c.b16 %v5538, %v5537
      %v5555 = vunpack.c.l.b16 %v4912
      %v5556 = vunpack.c.l.b16 %v4922
      %v5557 = vunpack.c.l.b16 %v4936
      %v5558 = vunpack.c.l.b16 %v4946
      %v5559 = vunpack.c.l.b16 %v4960
      %v5560 = vunpack.c.l.b16 %v4970
      %v5561 = vunpack.c.l.b16 %v4984
      %v5562 = vunpack.c.l.b16 %v4994
      %v5563 = vunpack.c.l.b16 %v5008
      %v5564 = vunpack.c.l.b16 %v5018
      %v5565 = vunpack.c.l.b16 %v5032
      %v5566 = vunpack.c.l.b16 %v5042
      %v5567 = vunpack.c.l.b16 %v5056
      %v5568 = vunpack.c.l.b16 %v5066
      %v5569 = vunpack.c.l.b16 %v5080
      %v5570 = vunpack.c.l.b16 %v5090
      %v5571 = vunpack.c.l.b16 %v5104
      %v5572 = vunpack.c.l.b16 %v5114
      %v5573 = vunpack.c.l.b16 %v5128
      %v5574 = vunpack.c.l.b16 %v5138
      %v5575 = vunpack.c.l.b16 %v5152
      %v5576 = vunpack.c.l.b16 %v5162
      %v5577 = vunpack.c.l.b16 %v5176
      %v5578 = vunpack.c.l.b16 %v5186
      %v5579 = vunpack.c.l.b16 %v5200
      %v5580 = vunpack.c.l.b16 %v5210
      %v5581 = vunpack.c.l.b16 %v5224
      %v5582 = vunpack.c.l.b16 %v5234
      %v5583 = vunpack.c.l.b16 %v5248
      %v5584 = vunpack.c.l.b16 %v5258
      %v5585 = vunpack.c.l.b16 %v5272
      %v5586 = vunpack.c.l.b16 %v5282
      %v5587 = vpack.c.b16 %v5556, %v5555
      %v5588 = vpack.c.b16 %v5558, %v5557
      %v5589 = vpack.c.b16 %v5560, %v5559
      %v5590 = vpack.c.b16 %v5562, %v5561
      %v5591 = vpack.c.b16 %v5564, %v5563
      %v5592 = vpack.c.b16 %v5566, %v5565
      %v5593 = vpack.c.b16 %v5568, %v5567
      %v5594 = vpack.c.b16 %v5570, %v5569
      %v5595 = vpack.c.b16 %v5572, %v5571
      %v5596 = vpack.c.b16 %v5574, %v5573
      %v5597 = vpack.c.b16 %v5576, %v5575
      %v5598 = vpack.c.b16 %v5578, %v5577
      %v5599 = vpack.c.b16 %v5580, %v5579
      %v5600 = vpack.c.b16 %v5582, %v5581
      %v5601 = vpack.c.b16 %v5584, %v5583
      %v5602 = vpack.c.b16 %v5586, %v5585
      %5603 = vrot.lane.b32.xlu0 %v5587, 64
      %v5604 = vpop.permute.xlu0 %5603
      %5605 = vrot.lane.b32.xlu0 %v5588, 64
      %v5606 = vpop.permute.xlu0 %5605
      %5607 = vrot.lane.b32.xlu0 %v5589, 64
      %v5608 = vpop.permute.xlu0 %5607
      %5609 = vrot.lane.b32.xlu0 %v5590, 64
      %v5610 = vpop.permute.xlu0 %5609
      %5611 = vrot.lane.b32.xlu0 %v5591, 64
      %v5612 = vpop.permute.xlu0 %5611
      %5613 = vrot.lane.b32.xlu0 %v5592, 64
      %v5614 = vpop.permute.xlu0 %5613
      %5615 = vrot.lane.b32.xlu0 %v5593, 64
      %v5616 = vpop.permute.xlu0 %5615
      %5617 = vrot.lane.b32.xlu0 %v5594, 64
      %v5618 = vpop.permute.xlu0 %5617
      %5619 = vrot.lane.b32.xlu0 %v5595, 64
      %v5620 = vpop.permute.xlu0 %5619
      %5621 = vrot.lane.b32.xlu0 %v5596, 64
      %v5622 = vpop.permute.xlu0 %5621
      %5623 = vrot.lane.b32.xlu0 %v5597, 64
      %v5624 = vpop.permute.xlu0 %5623
      %5625 = vrot.lane.b32.xlu0 %v5598, 64
      %v5626 = vpop.permute.xlu0 %5625
      %5627 = vrot.lane.b32.xlu0 %v5599, 64
      %v5628 = vpop.permute.xlu0 %5627
      %5629 = vrot.lane.b32.xlu0 %v5600, 64
      %v5630 = vpop.permute.xlu0 %5629
      %5631 = vrot.lane.b32.xlu0 %v5601, 64
      %v5632 = vpop.permute.xlu0 %5631
      %5633 = vrot.lane.b32.xlu0 %v5602, 64
      %v5634 = vpop.permute.xlu0 %5633
      %v5635 = vunpack.c.l.b16 %v5350
      %v5636 = vunpack.c.l.b16 %v5353
      %v5637 = vunpack.c.l.b16 %v5357
      %v5638 = vunpack.c.l.b16 %v5360
      %v5639 = vunpack.c.l.b16 %v5364
      %v5640 = vunpack.c.l.b16 %v5367
      %v5641 = vunpack.c.l.b16 %v5371
      %v5642 = vunpack.c.l.b16 %v5374
      %v5643 = vunpack.c.l.b16 %v5378
      %v5644 = vunpack.c.l.b16 %v5381
      %v5645 = vunpack.c.l.b16 %v5385
      %v5646 = vunpack.c.l.b16 %v5388
      %v5647 = vunpack.c.l.b16 %v5392
      %v5648 = vunpack.c.l.b16 %v5395
      %v5649 = vunpack.c.l.b16 %v5399
      %v5650 = vunpack.c.l.b16 %v5402
      %v5651 = vunpack.c.l.b16 %v5406
      %v5652 = vunpack.c.l.b16 %v5409
      %v5653 = vunpack.c.l.b16 %v5413
      %v5654 = vunpack.c.l.b16 %v5416
      %v5655 = vunpack.c.l.b16 %v5420
      %v5656 = vunpack.c.l.b16 %v5423
      %v5657 = vunpack.c.l.b16 %v5427
      %v5658 = vunpack.c.l.b16 %v5430
      %v5659 = vunpack.c.l.b16 %v5434
      %v5660 = vunpack.c.l.b16 %v5437
      %v5661 = vunpack.c.l.b16 %v5441
      %v5662 = vunpack.c.l.b16 %v5444
      %v5663 = vunpack.c.l.b16 %v5448
      %v5664 = vunpack.c.l.b16 %v5451
      %v5665 = vunpack.c.l.b16 %v5455
      %v5666 = vunpack.c.l.b16 %v5458
      %v5667 = vpack.c.b16 %v5636, %v5635
      %v5668 = vpack.c.b16 %v5638, %v5637
      %v5669 = vpack.c.b16 %v5640, %v5639
      %v5670 = vpack.c.b16 %v5642, %v5641
      %v5671 = vpack.c.b16 %v5644, %v5643
      %v5672 = vpack.c.b16 %v5646, %v5645
      %v5673 = vpack.c.b16 %v5648, %v5647
      %v5674 = vpack.c.b16 %v5650, %v5649
      %v5675 = vpack.c.b16 %v5652, %v5651
      %v5676 = vpack.c.b16 %v5654, %v5653
      %v5677 = vpack.c.b16 %v5656, %v5655
      %v5678 = vpack.c.b16 %v5658, %v5657
      %v5679 = vpack.c.b16 %v5660, %v5659
      %v5680 = vpack.c.b16 %v5662, %v5661
      %v5681 = vpack.c.b16 %v5664, %v5663
      %v5682 = vpack.c.b16 %v5666, %v5665
      %v5715 = vunpack.c.l.b16 %v5459
      %v5716 = vunpack.c.l.b16 %v5460
      %v5717 = vunpack.c.l.b16 %v5461
      %v5718 = vunpack.c.l.b16 %v5462
      %v5719 = vunpack.c.l.b16 %v5463
      %v5720 = vunpack.c.l.b16 %v5464
      %v5721 = vunpack.c.l.b16 %v5465
      %v5722 = vunpack.c.l.b16 %v5466
      %v5723 = vunpack.c.l.b16 %v5467
      %v5724 = vunpack.c.l.b16 %v5468
      %v5725 = vunpack.c.l.b16 %v5469
      %v5726 = vunpack.c.l.b16 %v5470
      %v5727 = vunpack.c.l.b16 %v5471
      %v5728 = vunpack.c.l.b16 %v5472
      %v5729 = vunpack.c.l.b16 %v5473
      %v5730 = vunpack.c.l.b16 %v5474
      %v5731 = vunpack.c.l.b16 %v5475
      %v5732 = vunpack.c.l.b16 %v5476
      %v5733 = vunpack.c.l.b16 %v5477
      %v5734 = vunpack.c.l.b16 %v5478
      %v5735 = vunpack.c.l.b16 %v5479
      %v5736 = vunpack.c.l.b16 %v5480
      %v5737 = vunpack.c.l.b16 %v5481
      %v5738 = vunpack.c.l.b16 %v5482
      %v5739 = vunpack.c.l.b16 %v5483
      %v5740 = vunpack.c.l.b16 %v5484
      %v5741 = vunpack.c.l.b16 %v5485
      %v5742 = vunpack.c.l.b16 %v5486
      %v5743 = vunpack.c.l.b16 %v5487
      %v5744 = vunpack.c.l.b16 %v5488
      %v5745 = vunpack.c.l.b16 %v5489
      %v5746 = vunpack.c.l.b16 %v5490
      %v5747 = vpack.c.b16 %v5716, %v5715
      %v5748 = vpack.c.b16 %v5718, %v5717
      %v5749 = vpack.c.b16 %v5720, %v5719
      %v5750 = vpack.c.b16 %v5722, %v5721
      %v5751 = vpack.c.b16 %v5724, %v5723
      %v5752 = vpack.c.b16 %v5726, %v5725
      %v5753 = vpack.c.b16 %v5728, %v5727
      %v5754 = vpack.c.b16 %v5730, %v5729
      %v5755 = vpack.c.b16 %v5732, %v5731
      %v5756 = vpack.c.b16 %v5734, %v5733
      %v5757 = vpack.c.b16 %v5736, %v5735
      %v5758 = vpack.c.b16 %v5738, %v5737
      %v5759 = vpack.c.b16 %v5740, %v5739
      %v5760 = vpack.c.b16 %v5742, %v5741
      %v5761 = vpack.c.b16 %v5744, %v5743
      %v5762 = vpack.c.b16 %v5746, %v5745
      %5763 = vrot.lane.b32.xlu0 %v5747, 64
      %v5764 = vpop.permute.xlu0 %5763
      %5765 = vrot.lane.b32.xlu0 %v5748, 64
      %v5766 = vpop.permute.xlu0 %5765
      %5767 = vrot.lane.b32.xlu0 %v5749, 64
      %v5768 = vpop.permute.xlu0 %5767
      %5769 = vrot.lane.b32.xlu0 %v5750, 64
      %v5770 = vpop.permute.xlu0 %5769
      %5771 = vrot.lane.b32.xlu0 %v5751, 64
      %v5772 = vpop.permute.xlu0 %5771
      %5773 = vrot.lane.b32.xlu0 %v5752, 64
      %v5774 = vpop.permute.xlu0 %5773
      %5775 = vrot.lane.b32.xlu0 %v5753, 64
      %v5776 = vpop.permute.xlu0 %5775
      %5777 = vrot.lane.b32.xlu0 %v5754, 64
      %v5778 = vpop.permute.xlu0 %5777
      %5779 = vrot.lane.b32.xlu0 %v5755, 64
      %v5780 = vpop.permute.xlu0 %5779
      %5781 = vrot.lane.b32.xlu0 %v5756, 64
      %v5782 = vpop.permute.xlu0 %5781
      %5783 = vrot.lane.b32.xlu0 %v5757, 64
      %v5784 = vpop.permute.xlu0 %5783
      %5785 = vrot.lane.b32.xlu0 %v5758, 64
      %v5786 = vpop.permute.xlu0 %5785
      %5787 = vrot.lane.b32.xlu0 %v5759, 64
      %v5788 = vpop.permute.xlu0 %5787
      %5789 = vrot.lane.b32.xlu0 %v5760, 64
      %v5790 = vpop.permute.xlu0 %5789
      %5791 = vrot.lane.b32.xlu0 %v5761, 64
      %v5792 = vpop.permute.xlu0 %5791
      %5793 = vrot.lane.b32.xlu0 %v5762, 64
      %v5794 = vpop.permute.xlu0 %5793
      %v5797 = vsel %vm1705, %v5539, %v5604
      %v5801 = vsel %vm1705, %v5540, %v5606
      %v5805 = vsel %vm1705, %v5541, %v5608
      %v5809 = vsel %vm1705, %v5542, %v5610
      %v5813 = vsel %vm1705, %v5543, %v5612
      %v5817 = vsel %vm1705, %v5544, %v5614
      %v5821 = vsel %vm1705, %v5545, %v5616
      %v5825 = vsel %vm1705, %v5546, %v5618
      %v5829 = vsel %vm1705, %v5547, %v5620
      %v5833 = vsel %vm1705, %v5548, %v5622
      %v5837 = vsel %vm1705, %v5549, %v5624
      %v5841 = vsel %vm1705, %v5550, %v5626
      %v5845 = vsel %vm1705, %v5551, %v5628
      %v5849 = vsel %vm1705, %v5552, %v5630
      %v5853 = vsel %vm1705, %v5553, %v5632
      %v5857 = vsel %vm1705, %v5554, %v5634
      %v5861 = vsel %vm1705, %v5667, %v5764
      %v5865 = vsel %vm1705, %v5668, %v5766
      %v5869 = vsel %vm1705, %v5669, %v5768
      %v5873 = vsel %vm1705, %v5670, %v5770
      %v5877 = vsel %vm1705, %v5671, %v5772
      %v5881 = vsel %vm1705, %v5672, %v5774
      %v5885 = vsel %vm1705, %v5673, %v5776
      %v5889 = vsel %vm1705, %v5674, %v5778
      %v5893 = vsel %vm1705, %v5675, %v5780
      %v5897 = vsel %vm1705, %v5676, %v5782
      %v5901 = vsel %vm1705, %v5677, %v5784
      %v5905 = vsel %vm1705, %v5678, %v5786
      %v5909 = vsel %vm1705, %v5679, %v5788
      %v5913 = vsel %vm1705, %v5680, %v5790
      %v5917 = vsel %vm1705, %v5681, %v5792
      %v5921 = vsel %vm1705, %v5682, %v5794
      %v5923 = vld [vmem:[%s3] sm:$0xf]
      %v5924 = vld [vmem:[%s3 + $0x4] sm:$0xf]
      %v5925 = vld [vmem:[%s3 + $0x8] sm:$0xf]
      %v5926 = vld [vmem:[%s3 + $0xc] sm:$0xf]
      %v5927 = vld [vmem:[%s3 + $0x10] sm:$0xf]
      %v5928 = vld [vmem:[%s3 + $0x14] sm:$0xf]
      %v5929 = vld [vmem:[%s3 + $0x18] sm:$0xf]
      %v5930 = vld [vmem:[%s3 + $0x1c] sm:$0xf]
      %v5931 = vld [vmem:[%s3 + $0x20] sm:$0xf]
      %v5932 = vld [vmem:[%s3 + $0x24] sm:$0xf]
      %v5933 = vld [vmem:[%s3 + $0x28] sm:$0xf]
      %v5934 = vld [vmem:[%s3 + $0x2c] sm:$0xf]
      %v5935 = vld [vmem:[%s3 + $0x30] sm:$0xf]
      %v5936 = vld [vmem:[%s3 + $0x34] sm:$0xf]
      %v5937 = vld [vmem:[%s3 + $0x38] sm:$0xf]
      %v5938 = vld [vmem:[%s3 + $0x3c] sm:$0xf]
      %v5939 = vld [vmem:[%s3 + $0x40] sm:$0xf]
      %v5940 = vld [vmem:[%s3 + $0x44] sm:$0xf]
      %v5941 = vld [vmem:[%s3 + $0x48] sm:$0xf]
      %v5942 = vld [vmem:[%s3 + $0x4c] sm:$0xf]
      %v5943 = vld [vmem:[%s3 + $0x50] sm:$0xf]
      %v5944 = vld [vmem:[%s3 + $0x54] sm:$0xf]
      %v5945 = vld [vmem:[%s3 + $0x58] sm:$0xf]
      %v5946 = vld [vmem:[%s3 + $0x5c] sm:$0xf]
      %v5947 = vld [vmem:[%s3 + $0x60] sm:$0xf]
      %v5948 = vld [vmem:[%s3 + $0x64] sm:$0xf]
      %v5949 = vld [vmem:[%s3 + $0x68] sm:$0xf]
      %v5950 = vld [vmem:[%s3 + $0x6c] sm:$0xf]
      %v5951 = vld [vmem:[%s3 + $0x70] sm:$0xf]
      %v5952 = vld [vmem:[%s3 + $0x74] sm:$0xf]
      %v5953 = vld [vmem:[%s3 + $0x78] sm:$0xf]
      %v5954 = vld [vmem:[%s3 + $0x7c] sm:$0xf]
      %v5955 = vld [vmem:[%s4738 + $0x8] sm:$0x1]
      %v5956 = vld [vmem:[%s4738 + $0x14] sm:$0x1]
      %v5957 = vld [vmem:[%s4738 + $0x20] sm:$0x1]
      %v5958 = vld [vmem:[%s4738 + $0x2c] sm:$0x1]
      %v5959 = vld [vmem:[%s4738 + $0x38] sm:$0x1]
      %v5960 = vld [vmem:[%s4738 + $0x44] sm:$0x1]
      %v5961 = vld [vmem:[%s4738 + $0x50] sm:$0x1]
      %v5962 = vld [vmem:[%s4738 + $0x5c] sm:$0x1]
      %v5963 = vld [vmem:[%s4738 + $0x68] sm:$0x1]
      %v5964 = vld [vmem:[%s4738 + $0x74] sm:$0x1]
      %v5965 = vld [vmem:[%s4738 + $0x80] sm:$0x1]
      %v5966 = vld [vmem:[%s4738 + $0x8c] sm:$0x1]
      %v5967 = vld [vmem:[%s4738 + $0x98] sm:$0x1]
      %v5968 = vld [vmem:[%s4738 + $0xa4] sm:$0x1]
      %v5969 = vld [vmem:[%s4738 + $0xb0] sm:$0x1]
      %v5970 = vld [vmem:[%s4738 + $0xbc] sm:$0x1]
      %v5972 = vshrl.u32 %v5459, 16
      %v5974 = vrot.slane %v5972, 4
      %v5975 = vshll.u32 %v5459, 16
      %v5977 = vrot.slane %v5975, 5
      %v5978 = vor.u32 %v5974, %v5977
      %v5979 = vrot.slane %v5978, 4
      %v5981 = vshll.u32 %v5460, 16
      %v5983 = vrot.slane %v5981, 5
      %v5984 = vsel %vm805, %v5979, %v5983
      %v5985 = vshrl.u32 %v5460, 16
      %v5987 = vrot.slane %v5985, 4
      %v5988 = vor.u32 %v5987, %v5983
      %v5989 = vrot.slane %v5988, 4
      %v5991 = vshll.u32 %v5955, 16
      %v5993 = vrot.slane %v5991, 5
      %v5994 = vsel %vm805, %v5989, %v5993
      %v5996 = vshrl.u32 %v5461, 16
      %v5998 = vrot.slane %v5996, 4
      %v5999 = vshll.u32 %v5461, 16
      %v6001 = vrot.slane %v5999, 5
      %v6002 = vor.u32 %v5998, %v6001
      %v6003 = vrot.slane %v6002, 4
      %v6005 = vshll.u32 %v5462, 16
      %v6007 = vrot.slane %v6005, 5
      %v6008 = vsel %vm805, %v6003, %v6007
      %v6009 = vshrl.u32 %v5462, 16
      %v6011 = vrot.slane %v6009, 4
      %v6012 = vor.u32 %v6011, %v6007
      %v6013 = vrot.slane %v6012, 4
      %v6015 = vshll.u32 %v5956, 16
      %v6017 = vrot.slane %v6015, 5
      %v6018 = vsel %vm805, %v6013, %v6017
      %v6020 = vshrl.u32 %v5463, 16
      %v6022 = vrot.slane %v6020, 4
      %v6023 = vshll.u32 %v5463, 16
      %v6025 = vrot.slane %v6023, 5
      %v6026 = vor.u32 %v6022, %v6025
      %v6027 = vrot.slane %v6026, 4
      %v6029 = vshll.u32 %v5464, 16
      %v6031 = vrot.slane %v6029, 5
      %v6032 = vsel %vm805, %v6027, %v6031
      %v6033 = vshrl.u32 %v5464, 16
      %v6035 = vrot.slane %v6033, 4
      %v6036 = vor.u32 %v6035, %v6031
      %v6037 = vrot.slane %v6036, 4
      %v6039 = vshll.u32 %v5957, 16
      %v6041 = vrot.slane %v6039, 5
      %v6042 = vsel %vm805, %v6037, %v6041
      %v6044 = vshrl.u32 %v5465, 16
      %v6046 = vrot.slane %v6044, 4
      %v6047 = vshll.u32 %v5465, 16
      %v6049 = vrot.slane %v6047, 5
      %v6050 = vor.u32 %v6046, %v6049
      %v6051 = vrot.slane %v6050, 4
      %v6053 = vshll.u32 %v5466, 16
      %v6055 = vrot.slane %v6053, 5
      %v6056 = vsel %vm805, %v6051, %v6055
      %v6057 = vshrl.u32 %v5466, 16
      %v6059 = vrot.slane %v6057, 4
      %v6060 = vor.u32 %v6059, %v6055
      %v6061 = vrot.slane %v6060, 4
      %v6063 = vshll.u32 %v5958, 16
      %v6065 = vrot.slane %v6063, 5
      %v6066 = vsel %vm805, %v6061, %v6065
      %v6068 = vshrl.u32 %v5467, 16
      %v6070 = vrot.slane %v6068, 4
      %v6071 = vshll.u32 %v5467, 16
      %v6073 = vrot.slane %v6071, 5
      %v6074 = vor.u32 %v6070, %v6073
      %v6075 = vrot.slane %v6074, 4
      %v6077 = vshll.u32 %v5468, 16
      %v6079 = vrot.slane %v6077, 5
      %v6080 = vsel %vm805, %v6075, %v6079
      %v6081 = vshrl.u32 %v5468, 16
      %v6083 = vrot.slane %v6081, 4
      %v6084 = vor.u32 %v6083, %v6079
      %v6085 = vrot.slane %v6084, 4
      %v6087 = vshll.u32 %v5959, 16
      %v6089 = vrot.slane %v6087, 5
      %v6090 = vsel %vm805, %v6085, %v6089
      %v6092 = vshrl.u32 %v5469, 16
      %v6094 = vrot.slane %v6092, 4
      %v6095 = vshll.u32 %v5469, 16
      %v6097 = vrot.slane %v6095, 5
      %v6098 = vor.u32 %v6094, %v6097
      %v6099 = vrot.slane %v6098, 4
      %v6101 = vshll.u32 %v5470, 16
      %v6103 = vrot.slane %v6101, 5
      %v6104 = vsel %vm805, %v6099, %v6103
      %v6105 = vshrl.u32 %v5470, 16
      %v6107 = vrot.slane %v6105, 4
      %v6108 = vor.u32 %v6107, %v6103
      %v6109 = vrot.slane %v6108, 4
      %v6111 = vshll.u32 %v5960, 16
      %v6113 = vrot.slane %v6111, 5
      %v6114 = vsel %vm805, %v6109, %v6113
      %v6116 = vshrl.u32 %v5471, 16
      %v6118 = vrot.slane %v6116, 4
      %v6119 = vshll.u32 %v5471, 16
      %v6121 = vrot.slane %v6119, 5
      %v6122 = vor.u32 %v6118, %v6121
      %v6123 = vrot.slane %v6122, 4
      %v6125 = vshll.u32 %v5472, 16
      %v6127 = vrot.slane %v6125, 5
      %v6128 = vsel %vm805, %v6123, %v6127
      %v6129 = vshrl.u32 %v5472, 16
      %v6131 = vrot.slane %v6129, 4
      %v6132 = vor.u32 %v6131, %v6127
      %v6133 = vrot.slane %v6132, 4
      %v6135 = vshll.u32 %v5961, 16
      %v6137 = vrot.slane %v6135, 5
      %v6138 = vsel %vm805, %v6133, %v6137
      %v6140 = vshrl.u32 %v5473, 16
      %v6142 = vrot.slane %v6140, 4
      %v6143 = vshll.u32 %v5473, 16
      %v6145 = vrot.slane %v6143, 5
      %v6146 = vor.u32 %v6142, %v6145
      %v6147 = vrot.slane %v6146, 4
      %v6149 = vshll.u32 %v5474, 16
      %v6151 = vrot.slane %v6149, 5
      %v6152 = vsel %vm805, %v6147, %v6151
      %v6153 = vshrl.u32 %v5474, 16
      %v6155 = vrot.slane %v6153, 4
      %v6156 = vor.u32 %v6155, %v6151
      %v6157 = vrot.slane %v6156, 4
      %v6159 = vshll.u32 %v5962, 16
      %v6161 = vrot.slane %v6159, 5
      %v6162 = vsel %vm805, %v6157, %v6161
      %v6164 = vshrl.u32 %v5475, 16
      %v6166 = vrot.slane %v6164, 4
      %v6167 = vshll.u32 %v5475, 16
      %v6169 = vrot.slane %v6167, 5
      %v6170 = vor.u32 %v6166, %v6169
      %v6171 = vrot.slane %v6170, 4
      %v6173 = vshll.u32 %v5476, 16
      %v6175 = vrot.slane %v6173, 5
      %v6176 = vsel %vm805, %v6171, %v6175
      %v6177 = vshrl.u32 %v5476, 16
      %v6179 = vrot.slane %v6177, 4
      %v6180 = vor.u32 %v6179, %v6175
      %v6181 = vrot.slane %v6180, 4
      %v6183 = vshll.u32 %v5963, 16
      %v6185 = vrot.slane %v6183, 5
      %v6186 = vsel %vm805, %v6181, %v6185
      %v6188 = vshrl.u32 %v5477, 16
      %v6190 = vrot.slane %v6188, 4
      %v6191 = vshll.u32 %v5477, 16
      %v6193 = vrot.slane %v6191, 5
      %v6194 = vor.u32 %v6190, %v6193
      %v6195 = vrot.slane %v6194, 4
      %v6197 = vshll.u32 %v5478, 16
      %v6199 = vrot.slane %v6197, 5
      %v6200 = vsel %vm805, %v6195, %v6199
      %v6201 = vshrl.u32 %v5478, 16
      %v6203 = vrot.slane %v6201, 4
      %v6204 = vor.u32 %v6203, %v6199
      %v6205 = vrot.slane %v6204, 4
      %v6207 = vshll.u32 %v5964, 16
      %v6209 = vrot.slane %v6207, 5
      %v6210 = vsel %vm805, %v6205, %v6209
      %v6212 = vshrl.u32 %v5479, 16
      %v6214 = vrot.slane %v6212, 4
      %v6215 = vshll.u32 %v5479, 16
      %v6217 = vrot.slane %v6215, 5
      %v6218 = vor.u32 %v6214, %v6217
      %v6219 = vrot.slane %v6218, 4
      %v6221 = vshll.u32 %v5480, 16
      %v6223 = vrot.slane %v6221, 5
      %v6224 = vsel %vm805, %v6219, %v6223
      %v6225 = vshrl.u32 %v5480, 16
      %v6227 = vrot.slane %v6225, 4
      %v6228 = vor.u32 %v6227, %v6223
      %v6229 = vrot.slane %v6228, 4
      %v6231 = vshll.u32 %v5965, 16
      %v6233 = vrot.slane %v6231, 5
      %v6234 = vsel %vm805, %v6229, %v6233
      %v6236 = vshrl.u32 %v5481, 16
      %v6238 = vrot.slane %v6236, 4
      %v6239 = vshll.u32 %v5481, 16
      %v6241 = vrot.slane %v6239, 5
      %v6242 = vor.u32 %v6238, %v6241
      %v6243 = vrot.slane %v6242, 4
      %v6245 = vshll.u32 %v5482, 16
      %v6247 = vrot.slane %v6245, 5
      %v6248 = vsel %vm805, %v6243, %v6247
      %v6249 = vshrl.u32 %v5482, 16
      %v6251 = vrot.slane %v6249, 4
      %v6252 = vor.u32 %v6251, %v6247
      %v6253 = vrot.slane %v6252, 4
      %v6255 = vshll.u32 %v5966, 16
      %v6257 = vrot.slane %v6255, 5
      %v6258 = vsel %vm805, %v6253, %v6257
      %v6260 = vshrl.u32 %v5483, 16
      %v6262 = vrot.slane %v6260, 4
      %v6263 = vshll.u32 %v5483, 16
      %v6265 = vrot.slane %v6263, 5
      %v6266 = vor.u32 %v6262, %v6265
      %v6267 = vrot.slane %v6266, 4
      %v6269 = vshll.u32 %v5484, 16
      %v6271 = vrot.slane %v6269, 5
      %v6272 = vsel %vm805, %v6267, %v6271
      %v6273 = vshrl.u32 %v5484, 16
      %v6275 = vrot.slane %v6273, 4
      %v6276 = vor.u32 %v6275, %v6271
      %v6277 = vrot.slane %v6276, 4
      %v6279 = vshll.u32 %v5967, 16
      %v6281 = vrot.slane %v6279, 5
      %v6282 = vsel %vm805, %v6277, %v6281
      %v6284 = vshrl.u32 %v5485, 16
      %v6286 = vrot.slane %v6284, 4
      %v6287 = vshll.u32 %v5485, 16
      %v6289 = vrot.slane %v6287, 5
      %v6290 = vor.u32 %v6286, %v6289
      %v6291 = vrot.slane %v6290, 4
      %v6293 = vshll.u32 %v5486, 16
      %v6295 = vrot.slane %v6293, 5
      %v6296 = vsel %vm805, %v6291, %v6295
      %v6297 = vshrl.u32 %v5486, 16
      %v6299 = vrot.slane %v6297, 4
      %v6300 = vor.u32 %v6299, %v6295
      %v6301 = vrot.slane %v6300, 4
      %v6303 = vshll.u32 %v5968, 16
      %v6305 = vrot.slane %v6303, 5
      %v6306 = vsel %vm805, %v6301, %v6305
      %v6308 = vshrl.u32 %v5487, 16
      %v6310 = vrot.slane %v6308, 4
      %v6311 = vshll.u32 %v5487, 16
      %v6313 = vrot.slane %v6311, 5
      %v6314 = vor.u32 %v6310, %v6313
      %v6315 = vrot.slane %v6314, 4
      %v6317 = vshll.u32 %v5488, 16
      %v6319 = vrot.slane %v6317, 5
      %v6320 = vsel %vm805, %v6315, %v6319
      %v6321 = vshrl.u32 %v5488, 16
      %v6323 = vrot.slane %v6321, 4
      %v6324 = vor.u32 %v6323, %v6319
      %v6325 = vrot.slane %v6324, 4
      %v6327 = vshll.u32 %v5969, 16
      %v6329 = vrot.slane %v6327, 5
      %v6330 = vsel %vm805, %v6325, %v6329
      %v6332 = vshrl.u32 %v5489, 16
      %v6334 = vrot.slane %v6332, 4
      %v6335 = vshll.u32 %v5489, 16
      %v6337 = vrot.slane %v6335, 5
      %v6338 = vor.u32 %v6334, %v6337
      %v6339 = vrot.slane %v6338, 4
      %v6341 = vshll.u32 %v5490, 16
      %v6343 = vrot.slane %v6341, 5
      %v6344 = vsel %vm805, %v6339, %v6343
      %v6345 = vshrl.u32 %v5490, 16
      %v6347 = vrot.slane %v6345, 4
      %v6348 = vor.u32 %v6347, %v6343
      %v6349 = vrot.slane %v6348, 4
      %v6351 = vshll.u32 %v5970, 16
      %v6353 = vrot.slane %v6351, 5
      %v6354 = vsel %vm805, %v6349, %v6353
      %v6355 = vld [vmem:[%s4738] sm:$0xe]
      %v6356 = vld [vmem:[%s4738 + $0xc] sm:$0xe]
      %v6357 = vld [vmem:[%s4738 + $0x18] sm:$0xe]
      %v6358 = vld [vmem:[%s4738 + $0x24] sm:$0xe]
      %v6359 = vld [vmem:[%s4738 + $0x30] sm:$0xe]
      %v6360 = vld [vmem:[%s4738 + $0x3c] sm:$0xe]
      %v6361 = vld [vmem:[%s4738 + $0x48] sm:$0xe]
      %v6362 = vld [vmem:[%s4738 + $0x54] sm:$0xe]
      %v6363 = vld [vmem:[%s4738 + $0x60] sm:$0xe]
      %v6364 = vld [vmem:[%s4738 + $0x6c] sm:$0xe]
      %v6365 = vld [vmem:[%s4738 + $0x78] sm:$0xe]
      %v6366 = vld [vmem:[%s4738 + $0x84] sm:$0xe]
      %v6367 = vld [vmem:[%s4738 + $0x90] sm:$0xe]
      %v6368 = vld [vmem:[%s4738 + $0x9c] sm:$0xe]
      %v6369 = vld [vmem:[%s4738 + $0xa8] sm:$0xe]
      %v6370 = vld [vmem:[%s4738 + $0xb4] sm:$0xe]
      %v6403 = vrot.slane %v6355, 5
      %v6404 = vrot.slane %v6403, 4
      %v6405 = vrot.slane %v5460, 5
      %v6406 = vsel %vm1256, %v6404, %v6405
      %v6407 = vrot.slane %v6405, 4
      %v6408 = vrot.slane %v5955, 5
      %v6409 = vsel %vm1256, %v6407, %v6408
      %v6410 = vrot.slane %v6356, 5
      %v6411 = vrot.slane %v6410, 4
      %v6412 = vrot.slane %v5462, 5
      %v6413 = vsel %vm1256, %v6411, %v6412
      %v6414 = vrot.slane %v6412, 4
      %v6415 = vrot.slane %v5956, 5
      %v6416 = vsel %vm1256, %v6414, %v6415
      %v6417 = vrot.slane %v6357, 5
      %v6418 = vrot.slane %v6417, 4
      %v6419 = vrot.slane %v5464, 5
      %v6420 = vsel %vm1256, %v6418, %v6419
      %v6421 = vrot.slane %v6419, 4
      %v6422 = vrot.slane %v5957, 5
      %v6423 = vsel %vm1256, %v6421, %v6422
      %v6424 = vrot.slane %v6358, 5
      %v6425 = vrot.slane %v6424, 4
      %v6426 = vrot.slane %v5466, 5
      %v6427 = vsel %vm1256, %v6425, %v6426
      %v6428 = vrot.slane %v6426, 4
      %v6429 = vrot.slane %v5958, 5
      %v6430 = vsel %vm1256, %v6428, %v6429
      %v6431 = vrot.slane %v6359, 5
      %v6432 = vrot.slane %v6431, 4
      %v6433 = vrot.slane %v5468, 5
      %v6434 = vsel %vm1256, %v6432, %v6433
      %v6435 = vrot.slane %v6433, 4
      %v6436 = vrot.slane %v5959, 5
      %v6437 = vsel %vm1256, %v6435, %v6436
      %v6438 = vrot.slane %v6360, 5
      %v6439 = vrot.slane %v6438, 4
      %v6440 = vrot.slane %v5470, 5
      %v6441 = vsel %vm1256, %v6439, %v6440
      %v6442 = vrot.slane %v6440, 4
      %v6443 = vrot.slane %v5960, 5
      %v6444 = vsel %vm1256, %v6442, %v6443
      %v6445 = vrot.slane %v6361, 5
      %v6446 = vrot.slane %v6445, 4
      %v6447 = vrot.slane %v5472, 5
      %v6448 = vsel %vm1256, %v6446, %v6447
      %v6449 = vrot.slane %v6447, 4
      %v6450 = vrot.slane %v5961, 5
      %v6451 = vsel %vm1256, %v6449, %v6450
      %v6452 = vrot.slane %v6362, 5
      %v6453 = vrot.slane %v6452, 4
      %v6454 = vrot.slane %v5474, 5
      %v6455 = vsel %vm1256, %v6453, %v6454
      %v6456 = vrot.slane %v6454, 4
      %v6457 = vrot.slane %v5962, 5
      %v6458 = vsel %vm1256, %v6456, %v6457
      %v6459 = vrot.slane %v6363, 5
      %v6460 = vrot.slane %v6459, 4
      %v6461 = vrot.slane %v5476, 5
      %v6462 = vsel %vm1256, %v6460, %v6461
      %v6463 = vrot.slane %v6461, 4
      %v6464 = vrot.slane %v5963, 5
      %v6465 = vsel %vm1256, %v6463, %v6464
      %v6466 = vrot.slane %v6364, 5
      %v6467 = vrot.slane %v6466, 4
      %v6468 = vrot.slane %v5478, 5
      %v6469 = vsel %vm1256, %v6467, %v6468
      %v6470 = vrot.slane %v6468, 4
      %v6471 = vrot.slane %v5964, 5
      %v6472 = vsel %vm1256, %v6470, %v6471
      %v6473 = vrot.slane %v6365, 5
      %v6474 = vrot.slane %v6473, 4
      %v6475 = vrot.slane %v5480, 5
      %v6476 = vsel %vm1256, %v6474, %v6475
      %v6477 = vrot.slane %v6475, 4
      %v6478 = vrot.slane %v5965, 5
      %v6479 = vsel %vm1256, %v6477, %v6478
      %v6480 = vrot.slane %v6366, 5
      %v6481 = vrot.slane %v6480, 4
      %v6482 = vrot.slane %v5482, 5
      %v6483 = vsel %vm1256, %v6481, %v6482
      %v6484 = vrot.slane %v6482, 4
      %v6485 = vrot.slane %v5966, 5
      %v6486 = vsel %vm1256, %v6484, %v6485
      %v6487 = vrot.slane %v6367, 5
      %v6488 = vrot.slane %v6487, 4
      %v6489 = vrot.slane %v5484, 5
      %v6490 = vsel %vm1256, %v6488, %v6489
      %v6491 = vrot.slane %v6489, 4
      %v6492 = vrot.slane %v5967, 5
      %v6493 = vsel %vm1256, %v6491, %v6492
      %v6494 = vrot.slane %v6368, 5
      %v6495 = vrot.slane %v6494, 4
      %v6496 = vrot.slane %v5486, 5
      %v6497 = vsel %vm1256, %v6495, %v6496
      %v6498 = vrot.slane %v6496, 4
      %v6499 = vrot.slane %v5968, 5
      %v6500 = vsel %vm1256, %v6498, %v6499
      %v6501 = vrot.slane %v6369, 5
      %v6502 = vrot.slane %v6501, 4
      %v6503 = vrot.slane %v5488, 5
      %v6504 = vsel %vm1256, %v6502, %v6503
      %v6505 = vrot.slane %v6503, 4
      %v6506 = vrot.slane %v5969, 5
      %v6507 = vsel %vm1256, %v6505, %v6506
      %v6508 = vrot.slane %v6370, 5
      %v6509 = vrot.slane %v6508, 4
      %v6510 = vrot.slane %v5490, 5
      %v6511 = vsel %vm1256, %v6509, %v6510
      %v6512 = vrot.slane %v6510, 4
      %v6513 = vrot.slane %v5970, 5
      %v6514 = vsel %vm1256, %v6512, %v6513
      %s6515 = scalar_lea.vmem [#allocation3], 24
      %v6516 = vld [vmem:[%s6515] sm:$0xf]
      %v6517 = vld [vmem:[%s6515 + $0x4] sm:$0xf]
      %v6518 = vld [vmem:[%s6515 + $0xc] sm:$0xf]
      %v6519 = vld [vmem:[%s6515 + $0x10] sm:$0xf]
      %v6520 = vld [vmem:[%s6515 + $0x18] sm:$0xf]
      %v6521 = vld [vmem:[%s6515 + $0x1c] sm:$0xf]
      %v6522 = vld [vmem:[%s6515 + $0x24] sm:$0xf]
      %v6523 = vld [vmem:[%s6515 + $0x28] sm:$0xf]
      %v6524 = vld [vmem:[%s6515 + $0x30] sm:$0xf]
      %v6525 = vld [vmem:[%s6515 + $0x34] sm:$0xf]
      %v6526 = vld [vmem:[%s6515 + $0x3c] sm:$0xf]
      %v6527 = vld [vmem:[%s6515 + $0x40] sm:$0xf]
      %v6528 = vld [vmem:[%s6515 + $0x48] sm:$0xf]
      %v6529 = vld [vmem:[%s6515 + $0x4c] sm:$0xf]
      %v6530 = vld [vmem:[%s6515 + $0x54] sm:$0xf]
      %v6531 = vld [vmem:[%s6515 + $0x58] sm:$0xf]
      %v6532 = vld [vmem:[%s6515 + $0x60] sm:$0xf]
      %v6533 = vld [vmem:[%s6515 + $0x64] sm:$0xf]
      %v6534 = vld [vmem:[%s6515 + $0x6c] sm:$0xf]
      %v6535 = vld [vmem:[%s6515 + $0x70] sm:$0xf]
      %v6536 = vld [vmem:[%s6515 + $0x78] sm:$0xf]
      %v6537 = vld [vmem:[%s6515 + $0x7c] sm:$0xf]
      %v6538 = vld [vmem:[%s6515 + $0x84] sm:$0xf]
      %v6539 = vld [vmem:[%s6515 + $0x88] sm:$0xf]
      %v6540 = vld [vmem:[%s6515 + $0x90] sm:$0xf]
      %v6541 = vld [vmem:[%s6515 + $0x94] sm:$0xf]
      %v6542 = vld [vmem:[%s6515 + $0x9c] sm:$0xf]
      %v6543 = vld [vmem:[%s6515 + $0xa0] sm:$0xf]
      %v6544 = vld [vmem:[%s6515 + $0xa8] sm:$0xf]
      %v6545 = vld [vmem:[%s6515 + $0xac] sm:$0xf]
      %v6546 = vld [vmem:[%s6515 + $0xb4] sm:$0xf]
      %v6547 = vld [vmem:[%s6515 + $0xb8] sm:$0xf]
      %v6548 = vld [vmem:[%s6515 + $0x8] sm:$0x1]
      %v6549 = vld [vmem:[%s6515 + $0x14] sm:$0x1]
      %v6550 = vld [vmem:[%s6515 + $0x20] sm:$0x1]
      %v6551 = vld [vmem:[%s6515 + $0x2c] sm:$0x1]
      %v6552 = vld [vmem:[%s6515 + $0x38] sm:$0x1]
      %v6553 = vld [vmem:[%s6515 + $0x44] sm:$0x1]
      %v6554 = vld [vmem:[%s6515 + $0x50] sm:$0x1]
      %v6555 = vld [vmem:[%s6515 + $0x5c] sm:$0x1]
      %v6556 = vld [vmem:[%s6515 + $0x68] sm:$0x1]
      %v6557 = vld [vmem:[%s6515 + $0x74] sm:$0x1]
      %v6558 = vld [vmem:[%s6515 + $0x80] sm:$0x1]
      %v6559 = vld [vmem:[%s6515 + $0x8c] sm:$0x1]
      %v6560 = vld [vmem:[%s6515 + $0x98] sm:$0x1]
      %v6561 = vld [vmem:[%s6515 + $0xa4] sm:$0x1]
      %v6562 = vld [vmem:[%s6515 + $0xb0] sm:$0x1]
      %v6563 = vld [vmem:[%s6515 + $0xbc] sm:$0x1]
      %v6565 = vshrl.u32 %v6516, 16
      %v6567 = vrot.slane %v6565, 4
      %v6568 = vshll.u32 %v6516, 16
      %v6570 = vrot.slane %v6568, 5
      %v6571 = vor.u32 %v6567, %v6570
      %v6572 = vrot.slane %v6571, 4
      %v6574 = vshll.u32 %v6517, 16
      %v6576 = vrot.slane %v6574, 5
      %v6577 = vsel %vm805, %v6572, %v6576
      %v6578 = vshrl.u32 %v6517, 16
      %v6580 = vrot.slane %v6578, 4
      %v6581 = vor.u32 %v6580, %v6576
      %v6582 = vrot.slane %v6581, 4
      %v6584 = vshll.u32 %v6548, 16
      %v6586 = vrot.slane %v6584, 5
      %v6587 = vsel %vm805, %v6582, %v6586
      %v6589 = vshrl.u32 %v6518, 16
      %v6591 = vrot.slane %v6589, 4
      %v6592 = vshll.u32 %v6518, 16
      %v6594 = vrot.slane %v6592, 5
      %v6595 = vor.u32 %v6591, %v6594
      %v6596 = vrot.slane %v6595, 4
      %v6598 = vshll.u32 %v6519, 16
      %v6600 = vrot.slane %v6598, 5
      %v6601 = vsel %vm805, %v6596, %v6600
      %v6602 = vshrl.u32 %v6519, 16
      %v6604 = vrot.slane %v6602, 4
      %v6605 = vor.u32 %v6604, %v6600
      %v6606 = vrot.slane %v6605, 4
      %v6608 = vshll.u32 %v6549, 16
      %v6610 = vrot.slane %v6608, 5
      %v6611 = vsel %vm805, %v6606, %v6610
      %v6613 = vshrl.u32 %v6520, 16
      %v6615 = vrot.slane %v6613, 4
      %v6616 = vshll.u32 %v6520, 16
      %v6618 = vrot.slane %v6616, 5
      %v6619 = vor.u32 %v6615, %v6618
      %v6620 = vrot.slane %v6619, 4
      %v6622 = vshll.u32 %v6521, 16
      %v6624 = vrot.slane %v6622, 5
      %v6625 = vsel %vm805, %v6620, %v6624
      %v6626 = vshrl.u32 %v6521, 16
      %v6628 = vrot.slane %v6626, 4
      %v6629 = vor.u32 %v6628, %v6624
      %v6630 = vrot.slane %v6629, 4
      %v6632 = vshll.u32 %v6550, 16
      %v6634 = vrot.slane %v6632, 5
      %v6635 = vsel %vm805, %v6630, %v6634
      %v6637 = vshrl.u32 %v6522, 16
      %v6639 = vrot.slane %v6637, 4
      %v6640 = vshll.u32 %v6522, 16
      %v6642 = vrot.slane %v6640, 5
      %v6643 = vor.u32 %v6639, %v6642
      %v6644 = vrot.slane %v6643, 4
      %v6646 = vshll.u32 %v6523, 16
      %v6648 = vrot.slane %v6646, 5
      %v6649 = vsel %vm805, %v6644, %v6648
      %v6650 = vshrl.u32 %v6523, 16
      %v6652 = vrot.slane %v6650, 4
      %v6653 = vor.u32 %v6652, %v6648
      %v6654 = vrot.slane %v6653, 4
      %v6656 = vshll.u32 %v6551, 16
      %v6658 = vrot.slane %v6656, 5
      %v6659 = vsel %vm805, %v6654, %v6658
      %v6661 = vshrl.u32 %v6524, 16
      %v6663 = vrot.slane %v6661, 4
      %v6664 = vshll.u32 %v6524, 16
      %v6666 = vrot.slane %v6664, 5
      %v6667 = vor.u32 %v6663, %v6666
      %v6668 = vrot.slane %v6667, 4
      %v6670 = vshll.u32 %v6525, 16
      %v6672 = vrot.slane %v6670, 5
      %v6673 = vsel %vm805, %v6668, %v6672
      %v6674 = vshrl.u32 %v6525, 16
      %v6676 = vrot.slane %v6674, 4
      %v6677 = vor.u32 %v6676, %v6672
      %v6678 = vrot.slane %v6677, 4
      %v6680 = vshll.u32 %v6552, 16
      %v6682 = vrot.slane %v6680, 5
      %v6683 = vsel %vm805, %v6678, %v6682
      %v6685 = vshrl.u32 %v6526, 16
      %v6687 = vrot.slane %v6685, 4
      %v6688 = vshll.u32 %v6526, 16
      %v6690 = vrot.slane %v6688, 5
      %v6691 = vor.u32 %v6687, %v6690
      %v6692 = vrot.slane %v6691, 4
      %v6694 = vshll.u32 %v6527, 16
      %v6696 = vrot.slane %v6694, 5
      %v6697 = vsel %vm805, %v6692, %v6696
      %v6698 = vshrl.u32 %v6527, 16
      %v6700 = vrot.slane %v6698, 4
      %v6701 = vor.u32 %v6700, %v6696
      %v6702 = vrot.slane %v6701, 4
      %v6704 = vshll.u32 %v6553, 16
      %v6706 = vrot.slane %v6704, 5
      %v6707 = vsel %vm805, %v6702, %v6706
      %v6709 = vshrl.u32 %v6528, 16
      %v6711 = vrot.slane %v6709, 4
      %v6712 = vshll.u32 %v6528, 16
      %v6714 = vrot.slane %v6712, 5
      %v6715 = vor.u32 %v6711, %v6714
      %v6716 = vrot.slane %v6715, 4
      %v6718 = vshll.u32 %v6529, 16
      %v6720 = vrot.slane %v6718, 5
      %v6721 = vsel %vm805, %v6716, %v6720
      %v6722 = vshrl.u32 %v6529, 16
      %v6724 = vrot.slane %v6722, 4
      %v6725 = vor.u32 %v6724, %v6720
      %v6726 = vrot.slane %v6725, 4
      %v6728 = vshll.u32 %v6554, 16
      %v6730 = vrot.slane %v6728, 5
      %v6731 = vsel %vm805, %v6726, %v6730
      %v6733 = vshrl.u32 %v6530, 16
      %v6735 = vrot.slane %v6733, 4
      %v6736 = vshll.u32 %v6530, 16
      %v6738 = vrot.slane %v6736, 5
      %v6739 = vor.u32 %v6735, %v6738
      %v6740 = vrot.slane %v6739, 4
      %v6742 = vshll.u32 %v6531, 16
      %v6744 = vrot.slane %v6742, 5
      %v6745 = vsel %vm805, %v6740, %v6744
      %v6746 = vshrl.u32 %v6531, 16
      %v6748 = vrot.slane %v6746, 4
      %v6749 = vor.u32 %v6748, %v6744
      %v6750 = vrot.slane %v6749, 4
      %v6752 = vshll.u32 %v6555, 16
      %v6754 = vrot.slane %v6752, 5
      %v6755 = vsel %vm805, %v6750, %v6754
      %v6757 = vshrl.u32 %v6532, 16
      %v6759 = vrot.slane %v6757, 4
      %v6760 = vshll.u32 %v6532, 16
      %v6762 = vrot.slane %v6760, 5
      %v6763 = vor.u32 %v6759, %v6762
      %v6764 = vrot.slane %v6763, 4
      %v6766 = vshll.u32 %v6533, 16
      %v6768 = vrot.slane %v6766, 5
      %v6769 = vsel %vm805, %v6764, %v6768
      %v6770 = vshrl.u32 %v6533, 16
      %v6772 = vrot.slane %v6770, 4
      %v6773 = vor.u32 %v6772, %v6768
      %v6774 = vrot.slane %v6773, 4
      %v6776 = vshll.u32 %v6556, 16
      %v6778 = vrot.slane %v6776, 5
      %v6779 = vsel %vm805, %v6774, %v6778
      %v6781 = vshrl.u32 %v6534, 16
      %v6783 = vrot.slane %v6781, 4
      %v6784 = vshll.u32 %v6534, 16
      %v6786 = vrot.slane %v6784, 5
      %v6787 = vor.u32 %v6783, %v6786
      %v6788 = vrot.slane %v6787, 4
      %v6790 = vshll.u32 %v6535, 16
      %v6792 = vrot.slane %v6790, 5
      %v6793 = vsel %vm805, %v6788, %v6792
      %v6794 = vshrl.u32 %v6535, 16
      %v6796 = vrot.slane %v6794, 4
      %v6797 = vor.u32 %v6796, %v6792
      %v6798 = vrot.slane %v6797, 4
      %v6800 = vshll.u32 %v6557, 16
      %v6802 = vrot.slane %v6800, 5
      %v6803 = vsel %vm805, %v6798, %v6802
      %v6805 = vshrl.u32 %v6536, 16
      %v6807 = vrot.slane %v6805, 4
      %v6808 = vshll.u32 %v6536, 16
      %v6810 = vrot.slane %v6808, 5
      %v6811 = vor.u32 %v6807, %v6810
      %v6812 = vrot.slane %v6811, 4
      %v6814 = vshll.u32 %v6537, 16
      %v6816 = vrot.slane %v6814, 5
      %v6817 = vsel %vm805, %v6812, %v6816
      %v6818 = vshrl.u32 %v6537, 16
      %v6820 = vrot.slane %v6818, 4
      %v6821 = vor.u32 %v6820, %v6816
      %v6822 = vrot.slane %v6821, 4
      %v6824 = vshll.u32 %v6558, 16
      %v6826 = vrot.slane %v6824, 5
      %v6827 = vsel %vm805, %v6822, %v6826
      %v6829 = vshrl.u32 %v6538, 16
      %v6831 = vrot.slane %v6829, 4
      %v6832 = vshll.u32 %v6538, 16
      %v6834 = vrot.slane %v6832, 5
      %v6835 = vor.u32 %v6831, %v6834
      %v6836 = vrot.slane %v6835, 4
      %v6838 = vshll.u32 %v6539, 16
      %v6840 = vrot.slane %v6838, 5
      %v6841 = vsel %vm805, %v6836, %v6840
      %v6842 = vshrl.u32 %v6539, 16
      %v6844 = vrot.slane %v6842, 4
      %v6845 = vor.u32 %v6844, %v6840
      %v6846 = vrot.slane %v6845, 4
      %v6848 = vshll.u32 %v6559, 16
      %v6850 = vrot.slane %v6848, 5
      %v6851 = vsel %vm805, %v6846, %v6850
      %v6853 = vshrl.u32 %v6540, 16
      %v6855 = vrot.slane %v6853, 4
      %v6856 = vshll.u32 %v6540, 16
      %v6858 = vrot.slane %v6856, 5
      %v6859 = vor.u32 %v6855, %v6858
      %v6860 = vrot.slane %v6859, 4
      %v6862 = vshll.u32 %v6541, 16
      %v6864 = vrot.slane %v6862, 5
      %v6865 = vsel %vm805, %v6860, %v6864
      %v6866 = vshrl.u32 %v6541, 16
      %v6868 = vrot.slane %v6866, 4
      %v6869 = vor.u32 %v6868, %v6864
      %v6870 = vrot.slane %v6869, 4
      %v6872 = vshll.u32 %v6560, 16
      %v6874 = vrot.slane %v6872, 5
      %v6875 = vsel %vm805, %v6870, %v6874
      %v6877 = vshrl.u32 %v6542, 16
      %v6879 = vrot.slane %v6877, 4
      %v6880 = vshll.u32 %v6542, 16
      %v6882 = vrot.slane %v6880, 5
      %v6883 = vor.u32 %v6879, %v6882
      %v6884 = vrot.slane %v6883, 4
      %v6886 = vshll.u32 %v6543, 16
      %v6888 = vrot.slane %v6886, 5
      %v6889 = vsel %vm805, %v6884, %v6888
      %v6890 = vshrl.u32 %v6543, 16
      %v6892 = vrot.slane %v6890, 4
      %v6893 = vor.u32 %v6892, %v6888
      %v6894 = vrot.slane %v6893, 4
      %v6896 = vshll.u32 %v6561, 16
      %v6898 = vrot.slane %v6896, 5
      %v6899 = vsel %vm805, %v6894, %v6898
      %v6901 = vshrl.u32 %v6544, 16
      %v6903 = vrot.slane %v6901, 4
      %v6904 = vshll.u32 %v6544, 16
      %v6906 = vrot.slane %v6904, 5
      %v6907 = vor.u32 %v6903, %v6906
      %v6908 = vrot.slane %v6907, 4
      %v6910 = vshll.u32 %v6545, 16
      %v6912 = vrot.slane %v6910, 5
      %v6913 = vsel %vm805, %v6908, %v6912
      %v6914 = vshrl.u32 %v6545, 16
      %v6916 = vrot.slane %v6914, 4
      %v6917 = vor.u32 %v6916, %v6912
      %v6918 = vrot.slane %v6917, 4
      %v6920 = vshll.u32 %v6562, 16
      %v6922 = vrot.slane %v6920, 5
      %v6923 = vsel %vm805, %v6918, %v6922
      %v6925 = vshrl.u32 %v6546, 16
      %v6927 = vrot.slane %v6925, 4
      %v6928 = vshll.u32 %v6546, 16
      %v6930 = vrot.slane %v6928, 5
      %v6931 = vor.u32 %v6927, %v6930
      %v6932 = vrot.slane %v6931, 4
      %v6934 = vshll.u32 %v6547, 16
      %v6936 = vrot.slane %v6934, 5
      %v6937 = vsel %vm805, %v6932, %v6936
      %v6938 = vshrl.u32 %v6547, 16
      %v6940 = vrot.slane %v6938, 4
      %v6941 = vor.u32 %v6940, %v6936
      %v6942 = vrot.slane %v6941, 4
      %v6944 = vshll.u32 %v6563, 16
      %v6946 = vrot.slane %v6944, 5
      %v6947 = vsel %vm805, %v6942, %v6946
      %v6948 = vunpack.c.l.b16 %v5984
      %v6949 = vunpack.c.l.b16 %v5994
      %v6950 = vunpack.c.l.b16 %v6008
      %v6951 = vunpack.c.l.b16 %v6018
      %v6952 = vunpack.c.l.b16 %v6032
      %v6953 = vunpack.c.l.b16 %v6042
      %v6954 = vunpack.c.l.b16 %v6056
      %v6955 = vunpack.c.l.b16 %v6066
      %v6956 = vunpack.c.l.b16 %v6080
      %v6957 = vunpack.c.l.b16 %v6090
      %v6958 = vunpack.c.l.b16 %v6104
      %v6959 = vunpack.c.l.b16 %v6114
      %v6960 = vunpack.c.l.b16 %v6128
      %v6961 = vunpack.c.l.b16 %v6138
      %v6962 = vunpack.c.l.b16 %v6152
      %v6963 = vunpack.c.l.b16 %v6162
      %v6964 = vunpack.c.l.b16 %v6176
      %v6965 = vunpack.c.l.b16 %v6186
      %v6966 = vunpack.c.l.b16 %v6200
      %v6967 = vunpack.c.l.b16 %v6210
      %v6968 = vunpack.c.l.b16 %v6224
      %v6969 = vunpack.c.l.b16 %v6234
      %v6970 = vunpack.c.l.b16 %v6248
      %v6971 = vunpack.c.l.b16 %v6258
      %v6972 = vunpack.c.l.b16 %v6272
      %v6973 = vunpack.c.l.b16 %v6282
      %v6974 = vunpack.c.l.b16 %v6296
      %v6975 = vunpack.c.l.b16 %v6306
      %v6976 = vunpack.c.l.b16 %v6320
      %v6977 = vunpack.c.l.b16 %v6330
      %v6978 = vunpack.c.l.b16 %v6344
      %v6979 = vunpack.c.l.b16 %v6354
      %v6980 = vpack.c.b16 %v6949, %v6948
      %v6981 = vpack.c.b16 %v6951, %v6950
      %v6982 = vpack.c.b16 %v6953, %v6952
      %v6983 = vpack.c.b16 %v6955, %v6954
      %v6984 = vpack.c.b16 %v6957, %v6956
      %v6985 = vpack.c.b16 %v6959, %v6958
      %v6986 = vpack.c.b16 %v6961, %v6960
      %v6987 = vpack.c.b16 %v6963, %v6962
      %v6988 = vpack.c.b16 %v6965, %v6964
      %v6989 = vpack.c.b16 %v6967, %v6966
      %v6990 = vpack.c.b16 %v6969, %v6968
      %v6991 = vpack.c.b16 %v6971, %v6970
      %v6992 = vpack.c.b16 %v6973, %v6972
      %v6993 = vpack.c.b16 %v6975, %v6974
      %v6994 = vpack.c.b16 %v6977, %v6976
      %v6995 = vpack.c.b16 %v6979, %v6978
      %v6996 = vunpack.c.l.b16 %v6406
      %v6997 = vunpack.c.l.b16 %v6409
      %v6998 = vunpack.c.l.b16 %v6413
      %v6999 = vunpack.c.l.b16 %v6416
      %v7000 = vunpack.c.l.b16 %v6420
      %v7001 = vunpack.c.l.b16 %v6423
      %v7002 = vunpack.c.l.b16 %v6427
      %v7003 = vunpack.c.l.b16 %v6430
      %v7004 = vunpack.c.l.b16 %v6434
      %v7005 = vunpack.c.l.b16 %v6437
      %v7006 = vunpack.c.l.b16 %v6441
      %v7007 = vunpack.c.l.b16 %v6444
      %v7008 = vunpack.c.l.b16 %v6448
      %v7009 = vunpack.c.l.b16 %v6451
      %v7010 = vunpack.c.l.b16 %v6455
      %v7011 = vunpack.c.l.b16 %v6458
      %v7012 = vunpack.c.l.b16 %v6462
      %v7013 = vunpack.c.l.b16 %v6465
      %v7014 = vunpack.c.l.b16 %v6469
      %v7015 = vunpack.c.l.b16 %v6472
      %v7016 = vunpack.c.l.b16 %v6476
      %v7017 = vunpack.c.l.b16 %v6479
      %v7018 = vunpack.c.l.b16 %v6483
      %v7019 = vunpack.c.l.b16 %v6486
      %v7020 = vunpack.c.l.b16 %v6490
      %v7021 = vunpack.c.l.b16 %v6493
      %v7022 = vunpack.c.l.b16 %v6497
      %v7023 = vunpack.c.l.b16 %v6500
      %v7024 = vunpack.c.l.b16 %v6504
      %v7025 = vunpack.c.l.b16 %v6507
      %v7026 = vunpack.c.l.b16 %v6511
      %v7027 = vunpack.c.l.b16 %v6514
      %v7028 = vpack.c.b16 %v6997, %v6996
      %v7029 = vpack.c.b16 %v6999, %v6998
      %v7030 = vpack.c.b16 %v7001, %v7000
      %v7031 = vpack.c.b16 %v7003, %v7002
      %v7032 = vpack.c.b16 %v7005, %v7004
      %v7033 = vpack.c.b16 %v7007, %v7006
      %v7034 = vpack.c.b16 %v7009, %v7008
      %v7035 = vpack.c.b16 %v7011, %v7010
      %v7036 = vpack.c.b16 %v7013, %v7012
      %v7037 = vpack.c.b16 %v7015, %v7014
      %v7038 = vpack.c.b16 %v7017, %v7016
      %v7039 = vpack.c.b16 %v7019, %v7018
      %v7040 = vpack.c.b16 %v7021, %v7020
      %v7041 = vpack.c.b16 %v7023, %v7022
      %v7042 = vpack.c.b16 %v7025, %v7024
      %v7043 = vpack.c.b16 %v7027, %v7026
      %7044 = vrot.lane.b32.xlu0 %v7028, 64
      %v7045 = vpop.permute.xlu0 %7044
      %7046 = vrot.lane.b32.xlu0 %v7029, 64
      %v7047 = vpop.permute.xlu0 %7046
      %7048 = vrot.lane.b32.xlu0 %v7030, 64
      %v7049 = vpop.permute.xlu0 %7048
      %7050 = vrot.lane.b32.xlu0 %v7031, 64
      %v7051 = vpop.permute.xlu0 %7050
      %7052 = vrot.lane.b32.xlu0 %v7032, 64
      %v7053 = vpop.permute.xlu0 %7052
      %7054 = vrot.lane.b32.xlu0 %v7033, 64
      %v7055 = vpop.permute.xlu0 %7054
      %7056 = vrot.lane.b32.xlu0 %v7034, 64
      %v7057 = vpop.permute.xlu0 %7056
      %7058 = vrot.lane.b32.xlu0 %v7035, 64
      %v7059 = vpop.permute.xlu0 %7058
      %7060 = vrot.lane.b32.xlu0 %v7036, 64
      %v7061 = vpop.permute.xlu0 %7060
      %7062 = vrot.lane.b32.xlu0 %v7037, 64
      %v7063 = vpop.permute.xlu0 %7062
      %7064 = vrot.lane.b32.xlu0 %v7038, 64
      %v7065 = vpop.permute.xlu0 %7064
      %7066 = vrot.lane.b32.xlu0 %v7039, 64
      %v7067 = vpop.permute.xlu0 %7066
      %7068 = vrot.lane.b32.xlu0 %v7040, 64
      %v7069 = vpop.permute.xlu0 %7068
      %7070 = vrot.lane.b32.xlu0 %v7041, 64
      %v7071 = vpop.permute.xlu0 %7070
      %7072 = vrot.lane.b32.xlu0 %v7042, 64
      %v7073 = vpop.permute.xlu0 %7072
      %7074 = vrot.lane.b32.xlu0 %v7043, 64
      %v7075 = vpop.permute.xlu0 %7074
      %v7108 = vunpack.c.l.b16 %v6516
      %v7109 = vunpack.c.l.b16 %v6517
      %v7110 = vunpack.c.l.b16 %v6518
      %v7111 = vunpack.c.l.b16 %v6519
      %v7112 = vunpack.c.l.b16 %v6520
      %v7113 = vunpack.c.l.b16 %v6521
      %v7114 = vunpack.c.l.b16 %v6522
      %v7115 = vunpack.c.l.b16 %v6523
      %v7116 = vunpack.c.l.b16 %v6524
      %v7117 = vunpack.c.l.b16 %v6525
      %v7118 = vunpack.c.l.b16 %v6526
      %v7119 = vunpack.c.l.b16 %v6527
      %v7120 = vunpack.c.l.b16 %v6528
      %v7121 = vunpack.c.l.b16 %v6529
      %v7122 = vunpack.c.l.b16 %v6530
      %v7123 = vunpack.c.l.b16 %v6531
      %v7124 = vunpack.c.l.b16 %v6532
      %v7125 = vunpack.c.l.b16 %v6533
      %v7126 = vunpack.c.l.b16 %v6534
      %v7127 = vunpack.c.l.b16 %v6535
      %v7128 = vunpack.c.l.b16 %v6536
      %v7129 = vunpack.c.l.b16 %v6537
      %v7130 = vunpack.c.l.b16 %v6538
      %v7131 = vunpack.c.l.b16 %v6539
      %v7132 = vunpack.c.l.b16 %v6540
      %v7133 = vunpack.c.l.b16 %v6541
      %v7134 = vunpack.c.l.b16 %v6542
      %v7135 = vunpack.c.l.b16 %v6543
      %v7136 = vunpack.c.l.b16 %v6544
      %v7137 = vunpack.c.l.b16 %v6545
      %v7138 = vunpack.c.l.b16 %v6546
      %v7139 = vunpack.c.l.b16 %v6547
      %v7140 = vpack.c.b16 %v7109, %v7108
      %v7141 = vpack.c.b16 %v7111, %v7110
      %v7142 = vpack.c.b16 %v7113, %v7112
      %v7143 = vpack.c.b16 %v7115, %v7114
      %v7144 = vpack.c.b16 %v7117, %v7116
      %v7145 = vpack.c.b16 %v7119, %v7118
      %v7146 = vpack.c.b16 %v7121, %v7120
      %v7147 = vpack.c.b16 %v7123, %v7122
      %v7148 = vpack.c.b16 %v7125, %v7124
      %v7149 = vpack.c.b16 %v7127, %v7126
      %v7150 = vpack.c.b16 %v7129, %v7128
      %v7151 = vpack.c.b16 %v7131, %v7130
      %v7152 = vpack.c.b16 %v7133, %v7132
      %v7153 = vpack.c.b16 %v7135, %v7134
      %v7154 = vpack.c.b16 %v7137, %v7136
      %v7155 = vpack.c.b16 %v7139, %v7138
      %v7156 = vunpack.c.l.b16 %v6577
      %v7157 = vunpack.c.l.b16 %v6587
      %v7158 = vunpack.c.l.b16 %v6601
      %v7159 = vunpack.c.l.b16 %v6611
      %v7160 = vunpack.c.l.b16 %v6625
      %v7161 = vunpack.c.l.b16 %v6635
      %v7162 = vunpack.c.l.b16 %v6649
      %v7163 = vunpack.c.l.b16 %v6659
      %v7164 = vunpack.c.l.b16 %v6673
      %v7165 = vunpack.c.l.b16 %v6683
      %v7166 = vunpack.c.l.b16 %v6697
      %v7167 = vunpack.c.l.b16 %v6707
      %v7168 = vunpack.c.l.b16 %v6721
      %v7169 = vunpack.c.l.b16 %v6731
      %v7170 = vunpack.c.l.b16 %v6745
      %v7171 = vunpack.c.l.b16 %v6755
      %v7172 = vunpack.c.l.b16 %v6769
      %v7173 = vunpack.c.l.b16 %v6779
      %v7174 = vunpack.c.l.b16 %v6793
      %v7175 = vunpack.c.l.b16 %v6803
      %v7176 = vunpack.c.l.b16 %v6817
      %v7177 = vunpack.c.l.b16 %v6827
      %v7178 = vunpack.c.l.b16 %v6841
      %v7179 = vunpack.c.l.b16 %v6851
      %v7180 = vunpack.c.l.b16 %v6865
      %v7181 = vunpack.c.l.b16 %v6875
      %v7182 = vunpack.c.l.b16 %v6889
      %v7183 = vunpack.c.l.b16 %v6899
      %v7184 = vunpack.c.l.b16 %v6913
      %v7185 = vunpack.c.l.b16 %v6923
      %v7186 = vunpack.c.l.b16 %v6937
      %v7187 = vunpack.c.l.b16 %v6947
      %v7188 = vpack.c.b16 %v7157, %v7156
      %v7189 = vpack.c.b16 %v7159, %v7158
      %v7190 = vpack.c.b16 %v7161, %v7160
      %v7191 = vpack.c.b16 %v7163, %v7162
      %v7192 = vpack.c.b16 %v7165, %v7164
      %v7193 = vpack.c.b16 %v7167, %v7166
      %v7194 = vpack.c.b16 %v7169, %v7168
      %v7195 = vpack.c.b16 %v7171, %v7170
      %v7196 = vpack.c.b16 %v7173, %v7172
      %v7197 = vpack.c.b16 %v7175, %v7174
      %v7198 = vpack.c.b16 %v7177, %v7176
      %v7199 = vpack.c.b16 %v7179, %v7178
      %v7200 = vpack.c.b16 %v7181, %v7180
      %v7201 = vpack.c.b16 %v7183, %v7182
      %v7202 = vpack.c.b16 %v7185, %v7184
      %v7203 = vpack.c.b16 %v7187, %v7186
      %7204 = vrot.lane.b32.xlu0 %v7188, 64
      %v7205 = vpop.permute.xlu0 %7204
      %7206 = vrot.lane.b32.xlu0 %v7189, 64
      %v7207 = vpop.permute.xlu0 %7206
      %7208 = vrot.lane.b32.xlu0 %v7190, 64
      %v7209 = vpop.permute.xlu0 %7208
      %7210 = vrot.lane.b32.xlu0 %v7191, 64
      %v7211 = vpop.permute.xlu0 %7210
      %7212 = vrot.lane.b32.xlu0 %v7192, 64
      %v7213 = vpop.permute.xlu0 %7212
      %7214 = vrot.lane.b32.xlu0 %v7193, 64
      %v7215 = vpop.permute.xlu0 %7214
      %7216 = vrot.lane.b32.xlu0 %v7194, 64
      %v7217 = vpop.permute.xlu0 %7216
      %7218 = vrot.lane.b32.xlu0 %v7195, 64
      %v7219 = vpop.permute.xlu0 %7218
      %7220 = vrot.lane.b32.xlu0 %v7196, 64
      %v7221 = vpop.permute.xlu0 %7220
      %7222 = vrot.lane.b32.xlu0 %v7197, 64
      %v7223 = vpop.permute.xlu0 %7222
      %7224 = vrot.lane.b32.xlu0 %v7198, 64
      %v7225 = vpop.permute.xlu0 %7224
      %7226 = vrot.lane.b32.xlu0 %v7199, 64
      %v7227 = vpop.permute.xlu0 %7226
      %7228 = vrot.lane.b32.xlu0 %v7200, 64
      %v7229 = vpop.permute.xlu0 %7228
      %7230 = vrot.lane.b32.xlu0 %v7201, 64
      %v7231 = vpop.permute.xlu0 %7230
      %7232 = vrot.lane.b32.xlu0 %v7202, 64
      %v7233 = vpop.permute.xlu0 %7232
      %7234 = vrot.lane.b32.xlu0 %v7203, 64
      %v7235 = vpop.permute.xlu0 %7234
      %v7238 = vsel %vm1705, %v6980, %v7045
      %v7242 = vsel %vm1705, %v6981, %v7047
      %v7246 = vsel %vm1705, %v6982, %v7049
      %v7250 = vsel %vm1705, %v6983, %v7051
      %v7254 = vsel %vm1705, %v6984, %v7053
      %v7258 = vsel %vm1705, %v6985, %v7055
      %v7262 = vsel %vm1705, %v6986, %v7057
      %v7266 = vsel %vm1705, %v6987, %v7059
      %v7270 = vsel %vm1705, %v6988, %v7061
      %v7274 = vsel %vm1705, %v6989, %v7063
      %v7278 = vsel %vm1705, %v6990, %v7065
      %v7282 = vsel %vm1705, %v6991, %v7067
      %v7286 = vsel %vm1705, %v6992, %v7069
      %v7290 = vsel %vm1705, %v6993, %v7071
      %v7294 = vsel %vm1705, %v6994, %v7073
      %v7298 = vsel %vm1705, %v6995, %v7075
      %v7302 = vsel %vm1705, %v7140, %v7205
      %v7306 = vsel %vm1705, %v7141, %v7207
      %v7310 = vsel %vm1705, %v7142, %v7209
      %v7314 = vsel %vm1705, %v7143, %v7211
      %v7318 = vsel %vm1705, %v7144, %v7213
      %v7322 = vsel %vm1705, %v7145, %v7215
      %v7326 = vsel %vm1705, %v7146, %v7217
      %v7330 = vsel %vm1705, %v7147, %v7219
      %v7334 = vsel %vm1705, %v7148, %v7221
      %v7338 = vsel %vm1705, %v7149, %v7223
      %v7342 = vsel %vm1705, %v7150, %v7225
      %v7346 = vsel %vm1705, %v7151, %v7227
      %v7350 = vsel %vm1705, %v7152, %v7229
      %v7354 = vsel %vm1705, %v7153, %v7231
      %v7358 = vsel %vm1705, %v7154, %v7233
      %v7362 = vsel %vm1705, %v7155, %v7235
      %v7364 = vld [vmem:[%s3 + $0x80] sm:$0xf]
      %v7365 = vld [vmem:[%s3 + $0x84] sm:$0xf]
      %v7366 = vld [vmem:[%s3 + $0x88] sm:$0xf]
      %v7367 = vld [vmem:[%s3 + $0x8c] sm:$0xf]
      %v7368 = vld [vmem:[%s3 + $0x90] sm:$0xf]
      %v7369 = vld [vmem:[%s3 + $0x94] sm:$0xf]
      %v7370 = vld [vmem:[%s3 + $0x98] sm:$0xf]
      %v7371 = vld [vmem:[%s3 + $0x9c] sm:$0xf]
      %v7372 = vld [vmem:[%s3 + $0xa0] sm:$0xf]
      %v7373 = vld [vmem:[%s3 + $0xa4] sm:$0xf]
      %v7374 = vld [vmem:[%s3 + $0xa8] sm:$0xf]
      %v7375 = vld [vmem:[%s3 + $0xac] sm:$0xf]
      %v7376 = vld [vmem:[%s3 + $0xb0] sm:$0xf]
      %v7377 = vld [vmem:[%s3 + $0xb4] sm:$0xf]
      %v7378 = vld [vmem:[%s3 + $0xb8] sm:$0xf]
      %v7379 = vld [vmem:[%s3 + $0xbc] sm:$0xf]
      %v7380 = vld [vmem:[%s3 + $0xc0] sm:$0xf]
      %v7381 = vld [vmem:[%s3 + $0xc4] sm:$0xf]
      %v7382 = vld [vmem:[%s3 + $0xc8] sm:$0xf]
      %v7383 = vld [vmem:[%s3 + $0xcc] sm:$0xf]
      %v7384 = vld [vmem:[%s3 + $0xd0] sm:$0xf]
      %v7385 = vld [vmem:[%s3 + $0xd4] sm:$0xf]
      %v7386 = vld [vmem:[%s3 + $0xd8] sm:$0xf]
      %v7387 = vld [vmem:[%s3 + $0xdc] sm:$0xf]
      %v7388 = vld [vmem:[%s3 + $0xe0] sm:$0xf]
      %v7389 = vld [vmem:[%s3 + $0xe4] sm:$0xf]
      %v7390 = vld [vmem:[%s3 + $0xe8] sm:$0xf]
      %v7391 = vld [vmem:[%s3 + $0xec] sm:$0xf]
      %v7392 = vld [vmem:[%s3 + $0xf0] sm:$0xf]
      %v7393 = vld [vmem:[%s3 + $0xf4] sm:$0xf]
      %v7394 = vld [vmem:[%s3 + $0xf8] sm:$0xf]
      %v7395 = vld [vmem:[%s3 + $0xfc] sm:$0xf]
      %v7428 = vunpack.c.l.b16 %v7364
      %v7429 = vunpack.c.l.b16 %v7365
      %v7430 = vunpack.c.l.b16 %v7366
      %v7431 = vunpack.c.l.b16 %v7367
      %v7432 = vunpack.c.l.b16 %v7368
      %v7433 = vunpack.c.l.b16 %v7369
      %v7434 = vunpack.c.l.b16 %v7370
      %v7435 = vunpack.c.l.b16 %v7371
      %v7436 = vunpack.c.l.b16 %v7372
      %v7437 = vunpack.c.l.b16 %v7373
      %v7438 = vunpack.c.l.b16 %v7374
      %v7439 = vunpack.c.l.b16 %v7375
      %v7440 = vunpack.c.l.b16 %v7376
      %v7441 = vunpack.c.l.b16 %v7377
      %v7442 = vunpack.c.l.b16 %v7378
      %v7443 = vunpack.c.l.b16 %v7379
      %v7444 = vunpack.c.l.b16 %v7380
      %v7445 = vunpack.c.l.b16 %v7381
      %v7446 = vunpack.c.l.b16 %v7382
      %v7447 = vunpack.c.l.b16 %v7383
      %v7448 = vunpack.c.l.b16 %v7384
      %v7449 = vunpack.c.l.b16 %v7385
      %v7450 = vunpack.c.l.b16 %v7386
      %v7451 = vunpack.c.l.b16 %v7387
      %v7452 = vunpack.c.l.b16 %v7388
      %v7453 = vunpack.c.l.b16 %v7389
      %v7454 = vunpack.c.l.b16 %v7390
      %v7455 = vunpack.c.l.b16 %v7391
      %v7456 = vunpack.c.l.b16 %v7392
      %v7457 = vunpack.c.l.b16 %v7393
      %v7458 = vunpack.c.l.b16 %v7394
      %v7459 = vunpack.c.l.b16 %v7395
      %v7460 = vpack.c.b16 %v7429, %v7428
      %v7461 = vpack.c.b16 %v7431, %v7430
      %v7462 = vpack.c.b16 %v7433, %v7432
      %v7463 = vpack.c.b16 %v7435, %v7434
      %v7464 = vpack.c.b16 %v7437, %v7436
      %v7465 = vpack.c.b16 %v7439, %v7438
      %v7466 = vpack.c.b16 %v7441, %v7440
      %v7467 = vpack.c.b16 %v7443, %v7442
      %v7468 = vpack.c.b16 %v7445, %v7444
      %v7469 = vpack.c.b16 %v7447, %v7446
      %v7470 = vpack.c.b16 %v7449, %v7448
      %v7471 = vpack.c.b16 %v7451, %v7450
      %v7472 = vpack.c.b16 %v7453, %v7452
      %v7473 = vpack.c.b16 %v7455, %v7454
      %v7474 = vpack.c.b16 %v7457, %v7456
      %v7475 = vpack.c.b16 %v7459, %v7458
      %7492 = vmatpush.bf16.msra.mxu0 %v7467
      %7493 = vmatpush.bf16.msra.mxu0 %v7466
      %7494 = vmatpush.bf16.msra.mxu0 %v7465
      %7495 = vmatpush.bf16.msra.mxu0 %v7464
      %7496 = vmatpush.bf16.msra.mxu0 %v7463
      %7497 = vmatpush.bf16.msra.mxu0 %v7462
      %7498 = vmatpush.bf16.msra.mxu0 %v7461
      %7499 = vmatpush.bf16.msra.mxu0 %v7460
      %7500 = vmatmul.bf16.gmra.mxu0 %v7238
      %v7501 = vpop.f32.mrf.mxu0
      %v7502 = vadd.f32 0.0, %v7501
      %v7503 = vpop.f32.mrf.mxu0
      %v7504 = vadd.f32 0.0, %v7503
      %7505 = vmatmul.bf16.gmra.mxu0 %v7242
      %v7506 = vpop.f32.mrf.mxu0
      %v7507 = vadd.f32 0.0, %v7506
      %v7508 = vpop.f32.mrf.mxu0
      %v7509 = vadd.f32 0.0, %v7508
      %7510 = vmatmul.bf16.gmra.mxu0 %v7246
      %v7511 = vpop.f32.mrf.mxu0
      %v7512 = vadd.f32 0.0, %v7511
      %v7513 = vpop.f32.mrf.mxu0
      %v7514 = vadd.f32 0.0, %v7513
      %7515 = vmatmul.bf16.gmra.mxu0 %v7250
      %v7516 = vpop.f32.mrf.mxu0
      %v7517 = vadd.f32 0.0, %v7516
      %v7518 = vpop.f32.mrf.mxu0
      %v7519 = vadd.f32 0.0, %v7518
      %7520 = vmatmul.bf16.gmra.mxu0 %v7254
      %v7521 = vpop.f32.mrf.mxu0
      %v7522 = vadd.f32 0.0, %v7521
      %v7523 = vpop.f32.mrf.mxu0
      %v7524 = vadd.f32 0.0, %v7523
      %7525 = vmatmul.bf16.gmra.mxu0 %v7258
      %v7526 = vpop.f32.mrf.mxu0
      %v7527 = vadd.f32 0.0, %v7526
      %v7528 = vpop.f32.mrf.mxu0
      %v7529 = vadd.f32 0.0, %v7528
      %7530 = vmatmul.bf16.gmra.mxu0 %v7262
      %v7531 = vpop.f32.mrf.mxu0
      %v7532 = vadd.f32 0.0, %v7531
      %v7533 = vpop.f32.mrf.mxu0
      %v7534 = vadd.f32 0.0, %v7533
      %7535 = vmatmul.bf16.gmra.mxu0 %v7266
      %v7536 = vpop.f32.mrf.mxu0
      %v7537 = vadd.f32 0.0, %v7536
      %v7538 = vpop.f32.mrf.mxu0
      %v7539 = vadd.f32 0.0, %v7538
      %7540 = vmatmul.bf16.gmra.mxu0 %v7270
      %v7541 = vpop.f32.mrf.mxu0
      %v7542 = vadd.f32 0.0, %v7541
      %v7543 = vpop.f32.mrf.mxu0
      %v7544 = vadd.f32 0.0, %v7543
      %7545 = vmatmul.bf16.gmra.mxu0 %v7274
      %v7546 = vpop.f32.mrf.mxu0
      %v7547 = vadd.f32 0.0, %v7546
      %v7548 = vpop.f32.mrf.mxu0
      %v7549 = vadd.f32 0.0, %v7548
      %7550 = vmatmul.bf16.gmra.mxu0 %v7278
      %v7551 = vpop.f32.mrf.mxu0
      %v7552 = vadd.f32 0.0, %v7551
      %v7553 = vpop.f32.mrf.mxu0
      %v7554 = vadd.f32 0.0, %v7553
      %7555 = vmatmul.bf16.gmra.mxu0 %v7282
      %v7556 = vpop.f32.mrf.mxu0
      %v7557 = vadd.f32 0.0, %v7556
      %v7558 = vpop.f32.mrf.mxu0
      %v7559 = vadd.f32 0.0, %v7558
      %7560 = vmatmul.bf16.gmra.mxu0 %v7286
      %v7561 = vpop.f32.mrf.mxu0
      %v7562 = vadd.f32 0.0, %v7561
      %v7563 = vpop.f32.mrf.mxu0
      %v7564 = vadd.f32 0.0, %v7563
      %7565 = vmatmul.bf16.gmra.mxu0 %v7290
      %v7566 = vpop.f32.mrf.mxu0
      %v7567 = vadd.f32 0.0, %v7566
      %v7568 = vpop.f32.mrf.mxu0
      %v7569 = vadd.f32 0.0, %v7568
      %7570 = vmatmul.bf16.gmra.mxu0 %v7294
      %v7571 = vpop.f32.mrf.mxu0
      %v7572 = vadd.f32 0.0, %v7571
      %v7573 = vpop.f32.mrf.mxu0
      %v7574 = vadd.f32 0.0, %v7573
      %7575 = vmatmul.bf16.gmra.mxu0 %v7298
      %v7576 = vpop.f32.mrf.mxu0
      %v7577 = vadd.f32 0.0, %v7576
      %v7578 = vpop.f32.mrf.mxu0
      %v7579 = vadd.f32 0.0, %v7578
      %7580 = vdwg.mxu0
      %7581 = vmatpush.bf16.msra.mxu0 %v7475
      %7582 = vmatpush.bf16.msra.mxu0 %v7474
      %7583 = vmatpush.bf16.msra.mxu0 %v7473
      %7584 = vmatpush.bf16.msra.mxu0 %v7472
      %7585 = vmatpush.bf16.msra.mxu0 %v7471
      %7586 = vmatpush.bf16.msra.mxu0 %v7470
      %7587 = vmatpush.bf16.msra.mxu0 %v7469
      %7588 = vmatpush.bf16.msra.mxu0 %v7468
      %7589 = vmatmul.bf16.gmra.mxu0 %v7302
      %v7590 = vpop.f32.mrf.mxu0
      %v7591 = vadd.f32 %v7502, %v7590
      %v7592 = vpop.f32.mrf.mxu0
      %v7593 = vadd.f32 %v7504, %v7592
      %7594 = vmatmul.bf16.gmra.mxu0 %v7306
      %v7595 = vpop.f32.mrf.mxu0
      %v7596 = vadd.f32 %v7507, %v7595
      %v7597 = vpop.f32.mrf.mxu0
      %v7598 = vadd.f32 %v7509, %v7597
      %7599 = vmatmul.bf16.gmra.mxu0 %v7310
      %v7600 = vpop.f32.mrf.mxu0
      %v7601 = vadd.f32 %v7512, %v7600
      %v7602 = vpop.f32.mrf.mxu0
      %v7603 = vadd.f32 %v7514, %v7602
      %7604 = vmatmul.bf16.gmra.mxu0 %v7314
      %v7605 = vpop.f32.mrf.mxu0
      %v7606 = vadd.f32 %v7517, %v7605
      %v7607 = vpop.f32.mrf.mxu0
      %v7608 = vadd.f32 %v7519, %v7607
      %7609 = vmatmul.bf16.gmra.mxu0 %v7318
      %v7610 = vpop.f32.mrf.mxu0
      %v7611 = vadd.f32 %v7522, %v7610
      %v7612 = vpop.f32.mrf.mxu0
      %v7613 = vadd.f32 %v7524, %v7612
      %7614 = vmatmul.bf16.gmra.mxu0 %v7322
      %v7615 = vpop.f32.mrf.mxu0
      %v7616 = vadd.f32 %v7527, %v7615
      %v7617 = vpop.f32.mrf.mxu0
      %v7618 = vadd.f32 %v7529, %v7617
      %7619 = vmatmul.bf16.gmra.mxu0 %v7326
      %v7620 = vpop.f32.mrf.mxu0
      %v7621 = vadd.f32 %v7532, %v7620
      %v7622 = vpop.f32.mrf.mxu0
      %v7623 = vadd.f32 %v7534, %v7622
      %7624 = vmatmul.bf16.gmra.mxu0 %v7330
      %v7625 = vpop.f32.mrf.mxu0
      %v7626 = vadd.f32 %v7537, %v7625
      %v7627 = vpop.f32.mrf.mxu0
      %v7628 = vadd.f32 %v7539, %v7627
      %7629 = vmatmul.bf16.gmra.mxu0 %v7334
      %v7630 = vpop.f32.mrf.mxu0
      %v7631 = vadd.f32 %v7542, %v7630
      %v7632 = vpop.f32.mrf.mxu0
      %v7633 = vadd.f32 %v7544, %v7632
      %7634 = vmatmul.bf16.gmra.mxu0 %v7338
      %v7635 = vpop.f32.mrf.mxu0
      %v7636 = vadd.f32 %v7547, %v7635
      %v7637 = vpop.f32.mrf.mxu0
      %v7638 = vadd.f32 %v7549, %v7637
      %7639 = vmatmul.bf16.gmra.mxu0 %v7342
      %v7640 = vpop.f32.mrf.mxu0
      %v7641 = vadd.f32 %v7552, %v7640
      %v7642 = vpop.f32.mrf.mxu0
      %v7643 = vadd.f32 %v7554, %v7642
      %7644 = vmatmul.bf16.gmra.mxu0 %v7346
      %v7645 = vpop.f32.mrf.mxu0
      %v7646 = vadd.f32 %v7557, %v7645
      %v7647 = vpop.f32.mrf.mxu0
      %v7648 = vadd.f32 %v7559, %v7647
      %7649 = vmatmul.bf16.gmra.mxu0 %v7350
      %v7650 = vpop.f32.mrf.mxu0
      %v7651 = vadd.f32 %v7562, %v7650
      %v7652 = vpop.f32.mrf.mxu0
      %v7653 = vadd.f32 %v7564, %v7652
      %7654 = vmatmul.bf16.gmra.mxu0 %v7354
      %v7655 = vpop.f32.mrf.mxu0
      %v7656 = vadd.f32 %v7567, %v7655
      %v7657 = vpop.f32.mrf.mxu0
      %v7658 = vadd.f32 %v7569, %v7657
      %7659 = vmatmul.bf16.gmra.mxu0 %v7358
      %v7660 = vpop.f32.mrf.mxu0
      %v7661 = vadd.f32 %v7572, %v7660
      %v7662 = vpop.f32.mrf.mxu0
      %v7663 = vadd.f32 %v7574, %v7662
      %7664 = vmatmul.bf16.gmra.mxu0 %v7362
      %v7665 = vpop.f32.mrf.mxu0
      %v7666 = vadd.f32 %v7577, %v7665
      %v7667 = vpop.f32.mrf.mxu0
      %v7668 = vadd.f32 %v7579, %v7667
      %7669 = vdwg.mxu0
      %v7702 = vunpack.c.l.b16 %v5923
      %v7703 = vunpack.c.l.b16 %v5924
      %v7704 = vunpack.c.l.b16 %v5925
      %v7705 = vunpack.c.l.b16 %v5926
      %v7706 = vunpack.c.l.b16 %v5927
      %v7707 = vunpack.c.l.b16 %v5928
      %v7708 = vunpack.c.l.b16 %v5929
      %v7709 = vunpack.c.l.b16 %v5930
      %v7710 = vunpack.c.l.b16 %v5931
      %v7711 = vunpack.c.l.b16 %v5932
      %v7712 = vunpack.c.l.b16 %v5933
      %v7713 = vunpack.c.l.b16 %v5934
      %v7714 = vunpack.c.l.b16 %v5935
      %v7715 = vunpack.c.l.b16 %v5936
      %v7716 = vunpack.c.l.b16 %v5937
      %v7717 = vunpack.c.l.b16 %v5938
      %v7718 = vunpack.c.l.b16 %v5939
      %v7719 = vunpack.c.l.b16 %v5940
      %v7720 = vunpack.c.l.b16 %v5941
      %v7721 = vunpack.c.l.b16 %v5942
      %v7722 = vunpack.c.l.b16 %v5943
      %v7723 = vunpack.c.l.b16 %v5944
      %v7724 = vunpack.c.l.b16 %v5945
      %v7725 = vunpack.c.l.b16 %v5946
      %v7726 = vunpack.c.l.b16 %v5947
      %v7727 = vunpack.c.l.b16 %v5948
      %v7728 = vunpack.c.l.b16 %v5949
      %v7729 = vunpack.c.l.b16 %v5950
      %v7730 = vunpack.c.l.b16 %v5951
      %v7731 = vunpack.c.l.b16 %v5952
      %v7732 = vunpack.c.l.b16 %v5953
      %v7733 = vunpack.c.l.b16 %v5954
      %v7734 = vpack.c.b16 %v7703, %v7702
      %v7735 = vpack.c.b16 %v7705, %v7704
      %v7736 = vpack.c.b16 %v7707, %v7706
      %v7737 = vpack.c.b16 %v7709, %v7708
      %v7738 = vpack.c.b16 %v7711, %v7710
      %v7739 = vpack.c.b16 %v7713, %v7712
      %v7740 = vpack.c.b16 %v7715, %v7714
      %v7741 = vpack.c.b16 %v7717, %v7716
      %v7742 = vpack.c.b16 %v7719, %v7718
      %v7743 = vpack.c.b16 %v7721, %v7720
      %v7744 = vpack.c.b16 %v7723, %v7722
      %v7745 = vpack.c.b16 %v7725, %v7724
      %v7746 = vpack.c.b16 %v7727, %v7726
      %v7747 = vpack.c.b16 %v7729, %v7728
      %v7748 = vpack.c.b16 %v7731, %v7730
      %v7749 = vpack.c.b16 %v7733, %v7732
      %7766 = vmatpush.bf16.msra.mxu0 %v7741
      %7767 = vmatpush.bf16.msra.mxu0 %v7740
      %7768 = vmatpush.bf16.msra.mxu0 %v7739
      %7769 = vmatpush.bf16.msra.mxu0 %v7738
      %7770 = vmatpush.bf16.msra.mxu0 %v7737
      %7771 = vmatpush.bf16.msra.mxu0 %v7736
      %7772 = vmatpush.bf16.msra.mxu0 %v7735
      %7773 = vmatpush.bf16.msra.mxu0 %v7734
      %7774 = vmatmul.bf16.gmra.mxu0 %v5797
      %v7775 = vpop.f32.mrf.mxu0
      %v7776 = vadd.f32 %v7591, %v7775
      %v7777 = vpop.f32.mrf.mxu0
      %v7778 = vadd.f32 %v7593, %v7777
      %7779 = vmatmul.bf16.gmra.mxu0 %v5801
      %v7780 = vpop.f32.mrf.mxu0
      %v7781 = vadd.f32 %v7596, %v7780
      %v7782 = vpop.f32.mrf.mxu0
      %v7783 = vadd.f32 %v7598, %v7782
      %7784 = vmatmul.bf16.gmra.mxu0 %v5805
      %v7785 = vpop.f32.mrf.mxu0
      %v7786 = vadd.f32 %v7601, %v7785
      %v7787 = vpop.f32.mrf.mxu0
      %v7788 = vadd.f32 %v7603, %v7787
      %7789 = vmatmul.bf16.gmra.mxu0 %v5809
      %v7790 = vpop.f32.mrf.mxu0
      %v7791 = vadd.f32 %v7606, %v7790
      %v7792 = vpop.f32.mrf.mxu0
      %v7793 = vadd.f32 %v7608, %v7792
      %7794 = vmatmul.bf16.gmra.mxu0 %v5813
      %v7795 = vpop.f32.mrf.mxu0
      %v7796 = vadd.f32 %v7611, %v7795
      %v7797 = vpop.f32.mrf.mxu0
      %v7798 = vadd.f32 %v7613, %v7797
      %7799 = vmatmul.bf16.gmra.mxu0 %v5817
      %v7800 = vpop.f32.mrf.mxu0
      %v7801 = vadd.f32 %v7616, %v7800
      %v7802 = vpop.f32.mrf.mxu0
      %v7803 = vadd.f32 %v7618, %v7802
      %7804 = vmatmul.bf16.gmra.mxu0 %v5821
      %v7805 = vpop.f32.mrf.mxu0
      %v7806 = vadd.f32 %v7621, %v7805
      %v7807 = vpop.f32.mrf.mxu0
      %v7808 = vadd.f32 %v7623, %v7807
      %7809 = vmatmul.bf16.gmra.mxu0 %v5825
      %v7810 = vpop.f32.mrf.mxu0
      %v7811 = vadd.f32 %v7626, %v7810
      %v7812 = vpop.f32.mrf.mxu0
      %v7813 = vadd.f32 %v7628, %v7812
      %7814 = vmatmul.bf16.gmra.mxu0 %v5829
      %v7815 = vpop.f32.mrf.mxu0
      %v7816 = vadd.f32 %v7631, %v7815
      %v7817 = vpop.f32.mrf.mxu0
      %v7818 = vadd.f32 %v7633, %v7817
      %7819 = vmatmul.bf16.gmra.mxu0 %v5833
      %v7820 = vpop.f32.mrf.mxu0
      %v7821 = vadd.f32 %v7636, %v7820
      %v7822 = vpop.f32.mrf.mxu0
      %v7823 = vadd.f32 %v7638, %v7822
      %7824 = vmatmul.bf16.gmra.mxu0 %v5837
      %v7825 = vpop.f32.mrf.mxu0
      %v7826 = vadd.f32 %v7641, %v7825
      %v7827 = vpop.f32.mrf.mxu0
      %v7828 = vadd.f32 %v7643, %v7827
      %7829 = vmatmul.bf16.gmra.mxu0 %v5841
      %v7830 = vpop.f32.mrf.mxu0
      %v7831 = vadd.f32 %v7646, %v7830
      %v7832 = vpop.f32.mrf.mxu0
      %v7833 = vadd.f32 %v7648, %v7832
      %7834 = vmatmul.bf16.gmra.mxu0 %v5845
      %v7835 = vpop.f32.mrf.mxu0
      %v7836 = vadd.f32 %v7651, %v7835
      %v7837 = vpop.f32.mrf.mxu0
      %v7838 = vadd.f32 %v7653, %v7837
      %7839 = vmatmul.bf16.gmra.mxu0 %v5849
      %v7840 = vpop.f32.mrf.mxu0
      %v7841 = vadd.f32 %v7656, %v7840
      %v7842 = vpop.f32.mrf.mxu0
      %v7843 = vadd.f32 %v7658, %v7842
      %7844 = vmatmul.bf16.gmra.mxu0 %v5853
      %v7845 = vpop.f32.mrf.mxu0
      %v7846 = vadd.f32 %v7661, %v7845
      %v7847 = vpop.f32.mrf.mxu0
      %v7848 = vadd.f32 %v7663, %v7847
      %7849 = vmatmul.bf16.gmra.mxu0 %v5857
      %v7850 = vpop.f32.mrf.mxu0
      %v7851 = vadd.f32 %v7666, %v7850
      %v7852 = vpop.f32.mrf.mxu0
      %v7853 = vadd.f32 %v7668, %v7852
      %7854 = vdwg.mxu0
      %7855 = vmatpush.bf16.msra.mxu0 %v7749
      %7856 = vmatpush.bf16.msra.mxu0 %v7748
      %7857 = vmatpush.bf16.msra.mxu0 %v7747
      %7858 = vmatpush.bf16.msra.mxu0 %v7746
      %7859 = vmatpush.bf16.msra.mxu0 %v7745
      %7860 = vmatpush.bf16.msra.mxu0 %v7744
      %7861 = vmatpush.bf16.msra.mxu0 %v7743
      %7862 = vmatpush.bf16.msra.mxu0 %v7742
      %7863 = vmatmul.bf16.gmra.mxu0 %v5861
      %v7864 = vpop.f32.mrf.mxu0
      %v7865 = vadd.f32 %v7776, %v7864
      %v7866 = vpop.f32.mrf.mxu0
      %v7867 = vadd.f32 %v7778, %v7866
      %7868 = vmatmul.bf16.gmra.mxu0 %v5865
      %v7869 = vpop.f32.mrf.mxu0
      %v7870 = vadd.f32 %v7781, %v7869
      %v7871 = vpop.f32.mrf.mxu0
      %v7872 = vadd.f32 %v7783, %v7871
      %7873 = vmatmul.bf16.gmra.mxu0 %v5869
      %v7874 = vpop.f32.mrf.mxu0
      %v7875 = vadd.f32 %v7786, %v7874
      %v7876 = vpop.f32.mrf.mxu0
      %v7877 = vadd.f32 %v7788, %v7876
      %7878 = vmatmul.bf16.gmra.mxu0 %v5873
      %v7879 = vpop.f32.mrf.mxu0
      %v7880 = vadd.f32 %v7791, %v7879
      %v7881 = vpop.f32.mrf.mxu0
      %v7882 = vadd.f32 %v7793, %v7881
      %7883 = vmatmul.bf16.gmra.mxu0 %v5877
      %v7884 = vpop.f32.mrf.mxu0
      %v7885 = vadd.f32 %v7796, %v7884
      %v7886 = vpop.f32.mrf.mxu0
      %v7887 = vadd.f32 %v7798, %v7886
      %7888 = vmatmul.bf16.gmra.mxu0 %v5881
      %v7889 = vpop.f32.mrf.mxu0
      %v7890 = vadd.f32 %v7801, %v7889
      %v7891 = vpop.f32.mrf.mxu0
      %v7892 = vadd.f32 %v7803, %v7891
      %7893 = vmatmul.bf16.gmra.mxu0 %v5885
      %v7894 = vpop.f32.mrf.mxu0
      %v7895 = vadd.f32 %v7806, %v7894
      %v7896 = vpop.f32.mrf.mxu0
      %v7897 = vadd.f32 %v7808, %v7896
      %7898 = vmatmul.bf16.gmra.mxu0 %v5889
      %v7899 = vpop.f32.mrf.mxu0
      %v7900 = vadd.f32 %v7811, %v7899
      %v7901 = vpop.f32.mrf.mxu0
      %v7902 = vadd.f32 %v7813, %v7901
      %7903 = vmatmul.bf16.gmra.mxu0 %v5893
      %v7904 = vpop.f32.mrf.mxu0
      %v7905 = vadd.f32 %v7816, %v7904
      %v7906 = vpop.f32.mrf.mxu0
      %v7907 = vadd.f32 %v7818, %v7906
      %7908 = vmatmul.bf16.gmra.mxu0 %v5897
      %v7909 = vpop.f32.mrf.mxu0
      %v7910 = vadd.f32 %v7821, %v7909
      %v7911 = vpop.f32.mrf.mxu0
      %v7912 = vadd.f32 %v7823, %v7911
      %7913 = vmatmul.bf16.gmra.mxu0 %v5901
      %v7914 = vpop.f32.mrf.mxu0
      %v7915 = vadd.f32 %v7826, %v7914
      %v7916 = vpop.f32.mrf.mxu0
      %v7917 = vadd.f32 %v7828, %v7916
      %7918 = vmatmul.bf16.gmra.mxu0 %v5905
      %v7919 = vpop.f32.mrf.mxu0
      %v7920 = vadd.f32 %v7831, %v7919
      %v7921 = vpop.f32.mrf.mxu0
      %v7922 = vadd.f32 %v7833, %v7921
      %7923 = vmatmul.bf16.gmra.mxu0 %v5909
      %v7924 = vpop.f32.mrf.mxu0
      %v7925 = vadd.f32 %v7836, %v7924
      %v7926 = vpop.f32.mrf.mxu0
      %v7927 = vadd.f32 %v7838, %v7926
      %7928 = vmatmul.bf16.gmra.mxu0 %v5913
      %v7929 = vpop.f32.mrf.mxu0
      %v7930 = vadd.f32 %v7841, %v7929
      %v7931 = vpop.f32.mrf.mxu0
      %v7932 = vadd.f32 %v7843, %v7931
      %7933 = vmatmul.bf16.gmra.mxu0 %v5917
      %v7934 = vpop.f32.mrf.mxu0
      %v7935 = vadd.f32 %v7846, %v7934
      %v7936 = vpop.f32.mrf.mxu0
      %v7937 = vadd.f32 %v7848, %v7936
      %7938 = vmatmul.bf16.gmra.mxu0 %v5921
      %v7939 = vpop.f32.mrf.mxu0
      %v7940 = vadd.f32 %v7851, %v7939
      %v7941 = vpop.f32.mrf.mxu0
      %v7942 = vadd.f32 %v7853, %v7941
      %7943 = vdwg.mxu0
      %v7944 = vld [vmem:[%s6515] sm:$0xe]
      %v7945 = vld [vmem:[%s6515 + $0xc] sm:$0xe]
      %v7946 = vld [vmem:[%s6515 + $0x18] sm:$0xe]
      %v7947 = vld [vmem:[%s6515 + $0x24] sm:$0xe]
      %v7948 = vld [vmem:[%s6515 + $0x30] sm:$0xe]
      %v7949 = vld [vmem:[%s6515 + $0x3c] sm:$0xe]
      %v7950 = vld [vmem:[%s6515 + $0x48] sm:$0xe]
      %v7951 = vld [vmem:[%s6515 + $0x54] sm:$0xe]
      %v7952 = vld [vmem:[%s6515 + $0x60] sm:$0xe]
      %v7953 = vld [vmem:[%s6515 + $0x6c] sm:$0xe]
      %v7954 = vld [vmem:[%s6515 + $0x78] sm:$0xe]
      %v7955 = vld [vmem:[%s6515 + $0x84] sm:$0xe]
      %v7956 = vld [vmem:[%s6515 + $0x90] sm:$0xe]
      %v7957 = vld [vmem:[%s6515 + $0x9c] sm:$0xe]
      %v7958 = vld [vmem:[%s6515 + $0xa8] sm:$0xe]
      %v7959 = vld [vmem:[%s6515 + $0xb4] sm:$0xe]
      %v7992 = vrot.slane %v7944, 5
      %v7993 = vrot.slane %v7992, 4
      %v7994 = vrot.slane %v6517, 5
      %v7995 = vsel %vm1256, %v7993, %v7994
      %v7996 = vrot.slane %v7994, 4
      %v7997 = vrot.slane %v6548, 5
      %v7998 = vsel %vm1256, %v7996, %v7997
      %v7999 = vrot.slane %v7945, 5
      %v8000 = vrot.slane %v7999, 4
      %v8001 = vrot.slane %v6519, 5
      %v8002 = vsel %vm1256, %v8000, %v8001
      %v8003 = vrot.slane %v8001, 4
      %v8004 = vrot.slane %v6549, 5
      %v8005 = vsel %vm1256, %v8003, %v8004
      %v8006 = vrot.slane %v7946, 5
      %v8007 = vrot.slane %v8006, 4
      %v8008 = vrot.slane %v6521, 5
      %v8009 = vsel %vm1256, %v8007, %v8008
      %v8010 = vrot.slane %v8008, 4
      %v8011 = vrot.slane %v6550, 5
      %v8012 = vsel %vm1256, %v8010, %v8011
      %v8013 = vrot.slane %v7947, 5
      %v8014 = vrot.slane %v8013, 4
      %v8015 = vrot.slane %v6523, 5
      %v8016 = vsel %vm1256, %v8014, %v8015
      %v8017 = vrot.slane %v8015, 4
      %v8018 = vrot.slane %v6551, 5
      %v8019 = vsel %vm1256, %v8017, %v8018
      %v8020 = vrot.slane %v7948, 5
      %v8021 = vrot.slane %v8020, 4
      %v8022 = vrot.slane %v6525, 5
      %v8023 = vsel %vm1256, %v8021, %v8022
      %v8024 = vrot.slane %v8022, 4
      %v8025 = vrot.slane %v6552, 5
      %v8026 = vsel %vm1256, %v8024, %v8025
      %v8027 = vrot.slane %v7949, 5
      %v8028 = vrot.slane %v8027, 4
      %v8029 = vrot.slane %v6527, 5
      %v8030 = vsel %vm1256, %v8028, %v8029
      %v8031 = vrot.slane %v8029, 4
      %v8032 = vrot.slane %v6553, 5
      %v8033 = vsel %vm1256, %v8031, %v8032
      %v8034 = vrot.slane %v7950, 5
      %v8035 = vrot.slane %v8034, 4
      %v8036 = vrot.slane %v6529, 5
      %v8037 = vsel %vm1256, %v8035, %v8036
      %v8038 = vrot.slane %v8036, 4
      %v8039 = vrot.slane %v6554, 5
      %v8040 = vsel %vm1256, %v8038, %v8039
      %v8041 = vrot.slane %v7951, 5
      %v8042 = vrot.slane %v8041, 4
      %v8043 = vrot.slane %v6531, 5
      %v8044 = vsel %vm1256, %v8042, %v8043
      %v8045 = vrot.slane %v8043, 4
      %v8046 = vrot.slane %v6555, 5
      %v8047 = vsel %vm1256, %v8045, %v8046
      %v8048 = vrot.slane %v7952, 5
      %v8049 = vrot.slane %v8048, 4
      %v8050 = vrot.slane %v6533, 5
      %v8051 = vsel %vm1256, %v8049, %v8050
      %v8052 = vrot.slane %v8050, 4
      %v8053 = vrot.slane %v6556, 5
      %v8054 = vsel %vm1256, %v8052, %v8053
      %v8055 = vrot.slane %v7953, 5
      %v8056 = vrot.slane %v8055, 4
      %v8057 = vrot.slane %v6535, 5
      %v8058 = vsel %vm1256, %v8056, %v8057
      %v8059 = vrot.slane %v8057, 4
      %v8060 = vrot.slane %v6557, 5
      %v8061 = vsel %vm1256, %v8059, %v8060
      %v8062 = vrot.slane %v7954, 5
      %v8063 = vrot.slane %v8062, 4
      %v8064 = vrot.slane %v6537, 5
      %v8065 = vsel %vm1256, %v8063, %v8064
      %v8066 = vrot.slane %v8064, 4
      %v8067 = vrot.slane %v6558, 5
      %v8068 = vsel %vm1256, %v8066, %v8067
      %v8069 = vrot.slane %v7955, 5
      %v8070 = vrot.slane %v8069, 4
      %v8071 = vrot.slane %v6539, 5
      %v8072 = vsel %vm1256, %v8070, %v8071
      %v8073 = vrot.slane %v8071, 4
      %v8074 = vrot.slane %v6559, 5
      %v8075 = vsel %vm1256, %v8073, %v8074
      %v8076 = vrot.slane %v7956, 5
      %v8077 = vrot.slane %v8076, 4
      %v8078 = vrot.slane %v6541, 5
      %v8079 = vsel %vm1256, %v8077, %v8078
      %v8080 = vrot.slane %v8078, 4
      %v8081 = vrot.slane %v6560, 5
      %v8082 = vsel %vm1256, %v8080, %v8081
      %v8083 = vrot.slane %v7957, 5
      %v8084 = vrot.slane %v8083, 4
      %v8085 = vrot.slane %v6543, 5
      %v8086 = vsel %vm1256, %v8084, %v8085
      %v8087 = vrot.slane %v8085, 4
      %v8088 = vrot.slane %v6561, 5
      %v8089 = vsel %vm1256, %v8087, %v8088
      %v8090 = vrot.slane %v7958, 5
      %v8091 = vrot.slane %v8090, 4
      %v8092 = vrot.slane %v6545, 5
      %v8093 = vsel %vm1256, %v8091, %v8092
      %v8094 = vrot.slane %v8092, 4
      %v8095 = vrot.slane %v6562, 5
      %v8096 = vsel %vm1256, %v8094, %v8095
      %v8097 = vrot.slane %v7959, 5
      %v8098 = vrot.slane %v8097, 4
      %v8099 = vrot.slane %v6547, 5
      %v8100 = vsel %vm1256, %v8098, %v8099
      %v8101 = vrot.slane %v8099, 4
      %v8102 = vrot.slane %v6563, 5
      %v8103 = vsel %vm1256, %v8101, %v8102
      %v8104 = vld [vmem:[%s3 + $0x100] sm:$0xf]
      %v8105 = vld [vmem:[%s3 + $0x104] sm:$0xf]
      %v8106 = vld [vmem:[%s3 + $0x108] sm:$0xf]
      %v8107 = vld [vmem:[%s3 + $0x10c] sm:$0xf]
      %v8108 = vld [vmem:[%s3 + $0x110] sm:$0xf]
      %v8109 = vld [vmem:[%s3 + $0x114] sm:$0xf]
      %v8110 = vld [vmem:[%s3 + $0x118] sm:$0xf]
      %v8111 = vld [vmem:[%s3 + $0x11c] sm:$0xf]
      %v8112 = vunpack.c.l.b16 %v7995
      %v8113 = vunpack.c.l.b16 %v7998
      %v8114 = vunpack.c.l.b16 %v8002
      %v8115 = vunpack.c.l.b16 %v8005
      %v8116 = vunpack.c.l.b16 %v8009
      %v8117 = vunpack.c.l.b16 %v8012
      %v8118 = vunpack.c.l.b16 %v8016
      %v8119 = vunpack.c.l.b16 %v8019
      %v8120 = vunpack.c.l.b16 %v8023
      %v8121 = vunpack.c.l.b16 %v8026
      %v8122 = vunpack.c.l.b16 %v8030
      %v8123 = vunpack.c.l.b16 %v8033
      %v8124 = vunpack.c.l.b16 %v8037
      %v8125 = vunpack.c.l.b16 %v8040
      %v8126 = vunpack.c.l.b16 %v8044
      %v8127 = vunpack.c.l.b16 %v8047
      %v8128 = vunpack.c.l.b16 %v8051
      %v8129 = vunpack.c.l.b16 %v8054
      %v8130 = vunpack.c.l.b16 %v8058
      %v8131 = vunpack.c.l.b16 %v8061
      %v8132 = vunpack.c.l.b16 %v8065
      %v8133 = vunpack.c.l.b16 %v8068
      %v8134 = vunpack.c.l.b16 %v8072
      %v8135 = vunpack.c.l.b16 %v8075
      %v8136 = vunpack.c.l.b16 %v8079
      %v8137 = vunpack.c.l.b16 %v8082
      %v8138 = vunpack.c.l.b16 %v8086
      %v8139 = vunpack.c.l.b16 %v8089
      %v8140 = vunpack.c.l.b16 %v8093
      %v8141 = vunpack.c.l.b16 %v8096
      %v8142 = vunpack.c.l.b16 %v8100
      %v8143 = vunpack.c.l.b16 %v8103
      %v8144 = vpack.c.b16 %v8113, %v8112
      %v8145 = vpack.c.b16 %v8115, %v8114
      %v8146 = vpack.c.b16 %v8117, %v8116
      %v8147 = vpack.c.b16 %v8119, %v8118
      %v8148 = vpack.c.b16 %v8121, %v8120
      %v8149 = vpack.c.b16 %v8123, %v8122
      %v8150 = vpack.c.b16 %v8125, %v8124
      %v8151 = vpack.c.b16 %v8127, %v8126
      %v8152 = vpack.c.b16 %v8129, %v8128
      %v8153 = vpack.c.b16 %v8131, %v8130
      %v8154 = vpack.c.b16 %v8133, %v8132
      %v8155 = vpack.c.b16 %v8135, %v8134
      %v8156 = vpack.c.b16 %v8137, %v8136
      %v8157 = vpack.c.b16 %v8139, %v8138
      %v8158 = vpack.c.b16 %v8141, %v8140
      %v8159 = vpack.c.b16 %v8143, %v8142
      %v8168 = vunpack.c.l.b16 %v8104
      %v8169 = vunpack.c.l.b16 %v8105
      %v8170 = vunpack.c.l.b16 %v8106
      %v8171 = vunpack.c.l.b16 %v8107
      %v8172 = vunpack.c.l.b16 %v8108
      %v8173 = vunpack.c.l.b16 %v8109
      %v8174 = vunpack.c.l.b16 %v8110
      %v8175 = vunpack.c.l.b16 %v8111
      %v8176 = vpack.c.b16 %v8169, %v8168
      %v8177 = vpack.c.b16 %v8171, %v8170
      %v8178 = vpack.c.b16 %v8173, %v8172
      %v8179 = vpack.c.b16 %v8175, %v8174
      %v8185 = vsel %vm1705, %v8144, 0
      %v8188 = vsel %vm1705, %v8145, 0
      %v8191 = vsel %vm1705, %v8146, 0
      %v8194 = vsel %vm1705, %v8147, 0
      %v8197 = vsel %vm1705, %v8148, 0
      %v8200 = vsel %vm1705, %v8149, 0
      %v8203 = vsel %vm1705, %v8150, 0
      %v8206 = vsel %vm1705, %v8151, 0
      %v8209 = vsel %vm1705, %v8152, 0
      %v8212 = vsel %vm1705, %v8153, 0
      %v8215 = vsel %vm1705, %v8154, 0
      %v8218 = vsel %vm1705, %v8155, 0
      %v8221 = vsel %vm1705, %v8156, 0
      %v8224 = vsel %vm1705, %v8157, 0
      %v8227 = vsel %vm1705, %v8158, 0
      %v8230 = vsel %vm1705, %v8159, 0
      %8232 = vmatpush.bf16.msra.mxu0 0
      %8233 = vmatpush.bf16.msra.mxu0 0
      %8234 = vmatpush.bf16.msra.mxu0 0
      %8235 = vmatpush.bf16.msra.mxu0 0
      %8236 = vmatpush.bf16.msra.mxu0 %v8179
      %8237 = vmatpush.bf16.msra.mxu0 %v8178
      %8238 = vmatpush.bf16.msra.mxu0 %v8177
      %8239 = vmatpush.bf16.msra.mxu0 %v8176
      %8240 = vmatmul.bf16.gmra.mxu0 %v8185
      %v8241 = vpop.f32.mrf.mxu0
      %v8242 = vadd.f32 0.0, %v8241
      %v8243 = vpop.f32.mrf.mxu0
      %v8244 = vadd.f32 0.0, %v8243
      %8245 = vmatmul.bf16.gmra.mxu0 %v8188
      %v8246 = vpop.f32.mrf.mxu0
      %v8247 = vadd.f32 0.0, %v8246
      %v8248 = vpop.f32.mrf.mxu0
      %v8249 = vadd.f32 0.0, %v8248
      %8250 = vmatmul.bf16.gmra.mxu0 %v8191
      %v8251 = vpop.f32.mrf.mxu0
      %v8252 = vadd.f32 0.0, %v8251
      %v8253 = vpop.f32.mrf.mxu0
      %v8254 = vadd.f32 0.0, %v8253
      %8255 = vmatmul.bf16.gmra.mxu0 %v8194
      %v8256 = vpop.f32.mrf.mxu0
      %v8257 = vadd.f32 0.0, %v8256
      %v8258 = vpop.f32.mrf.mxu0
      %v8259 = vadd.f32 0.0, %v8258
      %8260 = vmatmul.bf16.gmra.mxu0 %v8197
      %v8261 = vpop.f32.mrf.mxu0
      %v8262 = vadd.f32 0.0, %v8261
      %v8263 = vpop.f32.mrf.mxu0
      %v8264 = vadd.f32 0.0, %v8263
      %8265 = vmatmul.bf16.gmra.mxu0 %v8200
      %v8266 = vpop.f32.mrf.mxu0
      %v8267 = vadd.f32 0.0, %v8266
      %v8268 = vpop.f32.mrf.mxu0
      %v8269 = vadd.f32 0.0, %v8268
      %8270 = vmatmul.bf16.gmra.mxu0 %v8203
      %v8271 = vpop.f32.mrf.mxu0
      %v8272 = vadd.f32 0.0, %v8271
      %v8273 = vpop.f32.mrf.mxu0
      %v8274 = vadd.f32 0.0, %v8273
      %8275 = vmatmul.bf16.gmra.mxu0 %v8206
      %v8276 = vpop.f32.mrf.mxu0
      %v8277 = vadd.f32 0.0, %v8276
      %v8278 = vpop.f32.mrf.mxu0
      %v8279 = vadd.f32 0.0, %v8278
      %8280 = vmatmul.bf16.gmra.mxu0 %v8209
      %v8281 = vpop.f32.mrf.mxu0
      %v8282 = vadd.f32 0.0, %v8281
      %v8283 = vpop.f32.mrf.mxu0
      %v8284 = vadd.f32 0.0, %v8283
      %8285 = vmatmul.bf16.gmra.mxu0 %v8212
      %v8286 = vpop.f32.mrf.mxu0
      %v8287 = vadd.f32 0.0, %v8286
      %v8288 = vpop.f32.mrf.mxu0
      %v8289 = vadd.f32 0.0, %v8288
      %8290 = vmatmul.bf16.gmra.mxu0 %v8215
      %v8291 = vpop.f32.mrf.mxu0
      %v8292 = vadd.f32 0.0, %v8291
      %v8293 = vpop.f32.mrf.mxu0
      %v8294 = vadd.f32 0.0, %v8293
      %8295 = vmatmul.bf16.gmra.mxu0 %v8218
      %v8296 = vpop.f32.mrf.mxu0
      %v8297 = vadd.f32 0.0, %v8296
      %v8298 = vpop.f32.mrf.mxu0
      %v8299 = vadd.f32 0.0, %v8298
      %8300 = vmatmul.bf16.gmra.mxu0 %v8221
      %v8301 = vpop.f32.mrf.mxu0
      %v8302 = vadd.f32 0.0, %v8301
      %v8303 = vpop.f32.mrf.mxu0
      %v8304 = vadd.f32 0.0, %v8303
      %8305 = vmatmul.bf16.gmra.mxu0 %v8224
      %v8306 = vpop.f32.mrf.mxu0
      %v8307 = vadd.f32 0.0, %v8306
      %v8308 = vpop.f32.mrf.mxu0
      %v8309 = vadd.f32 0.0, %v8308
      %8310 = vmatmul.bf16.gmra.mxu0 %v8227
      %v8311 = vpop.f32.mrf.mxu0
      %v8312 = vadd.f32 0.0, %v8311
      %v8313 = vpop.f32.mrf.mxu0
      %v8314 = vadd.f32 0.0, %v8313
      %8315 = vmatmul.bf16.gmra.mxu0 %v8230
      %v8316 = vpop.f32.mrf.mxu0
      %v8317 = vadd.f32 0.0, %v8316
      %v8318 = vpop.f32.mrf.mxu0
      %v8319 = vadd.f32 0.0, %v8318
      %8320 = vdwg.mxu0
      %v8321 = vadd.f32 %v7865, %v8242
      %v8322 = vadd.f32 %v7867, %v8244
      %v8323 = vadd.f32 %v7870, %v8247
      %v8324 = vadd.f32 %v7872, %v8249
      %v8325 = vadd.f32 %v7875, %v8252
      %v8326 = vadd.f32 %v7877, %v8254
      %v8327 = vadd.f32 %v7880, %v8257
      %v8328 = vadd.f32 %v7882, %v8259
      %v8329 = vadd.f32 %v7885, %v8262
      %v8330 = vadd.f32 %v7887, %v8264
      %v8331 = vadd.f32 %v7890, %v8267
      %v8332 = vadd.f32 %v7892, %v8269
      %v8333 = vadd.f32 %v7895, %v8272
      %v8334 = vadd.f32 %v7897, %v8274
      %v8335 = vadd.f32 %v7900, %v8277
      %v8336 = vadd.f32 %v7902, %v8279
      %v8337 = vadd.f32 %v7905, %v8282
      %v8338 = vadd.f32 %v7907, %v8284
      %v8339 = vadd.f32 %v7910, %v8287
      %v8340 = vadd.f32 %v7912, %v8289
      %v8341 = vadd.f32 %v7915, %v8292
      %v8342 = vadd.f32 %v7917, %v8294
      %v8343 = vadd.f32 %v7920, %v8297
      %v8344 = vadd.f32 %v7922, %v8299
      %v8345 = vadd.f32 %v7925, %v8302
      %v8346 = vadd.f32 %v7927, %v8304
      %v8347 = vadd.f32 %v7930, %v8307
      %v8348 = vadd.f32 %v7932, %v8309
      %v8349 = vadd.f32 %v7935, %v8312
      %v8350 = vadd.f32 %v7937, %v8314
      %v8351 = vadd.f32 %v7940, %v8317
      %v8352 = vadd.f32 %v7942, %v8319
      %v8353 = vld [vmem:[%s4] sm:$0x1]
      %v8355 = vperm.slane %v8353, 0
      %v8357 = vadd.f32 %v8321, %v8355
      %v8358 = vadd.f32 %v8322, %v8355
      %v8359 = vadd.f32 %v8323, %v8355
      %v8360 = vadd.f32 %v8324, %v8355
      %v8361 = vadd.f32 %v8325, %v8355
      %v8362 = vadd.f32 %v8326, %v8355
      %v8363 = vadd.f32 %v8327, %v8355
      %v8364 = vadd.f32 %v8328, %v8355
      %v8365 = vadd.f32 %v8329, %v8355
      %v8366 = vadd.f32 %v8330, %v8355
      %v8367 = vadd.f32 %v8331, %v8355
      %v8368 = vadd.f32 %v8332, %v8355
      %v8369 = vadd.f32 %v8333, %v8355
      %v8370 = vadd.f32 %v8334, %v8355
      %v8371 = vadd.f32 %v8335, %v8355
      %v8372 = vadd.f32 %v8336, %v8355
      %v8373 = vadd.f32 %v8337, %v8355
      %v8374 = vadd.f32 %v8338, %v8355
      %v8375 = vadd.f32 %v8339, %v8355
      %v8376 = vadd.f32 %v8340, %v8355
      %v8377 = vadd.f32 %v8341, %v8355
      %v8378 = vadd.f32 %v8342, %v8355
      %v8379 = vadd.f32 %v8343, %v8355
      %v8380 = vadd.f32 %v8344, %v8355
      %v8381 = vadd.f32 %v8345, %v8355
      %v8382 = vadd.f32 %v8346, %v8355
      %v8383 = vadd.f32 %v8347, %v8355
      %v8384 = vadd.f32 %v8348, %v8355
      %v8385 = vadd.f32 %v8349, %v8355
      %v8386 = vadd.f32 %v8350, %v8355
      %v8387 = vadd.f32 %v8351, %v8355
      %v8388 = vadd.f32 %v8352, %v8355
      %v8389 = vld [vmem:[%s637] sm:$0xf]
      %v8390 = vld [vmem:[%s637 + $0x4] sm:$0xf]
      %v8391 = vld [vmem:[%s637 + $0x8] sm:$0x1]
      %v8392 = vld [vmem:[%s637 + $0xc] sm:$0xf]
      %v8393 = vld [vmem:[%s637 + $0x10] sm:$0xf]
      %v8394 = vld [vmem:[%s637 + $0x14] sm:$0x1]
      %v8395 = vld [vmem:[%s637 + $0x18] sm:$0xf]
      %v8396 = vld [vmem:[%s637 + $0x1c] sm:$0xf]
      %v8397 = vld [vmem:[%s637 + $0x20] sm:$0x1]
      %v8398 = vld [vmem:[%s637 + $0x24] sm:$0xf]
      %v8399 = vld [vmem:[%s637 + $0x28] sm:$0xf]
      %v8400 = vld [vmem:[%s637 + $0x2c] sm:$0x1]
      %v8401 = vld [vmem:[%s637 + $0x30] sm:$0xf]
      %v8402 = vld [vmem:[%s637 + $0x34] sm:$0xf]
      %v8403 = vld [vmem:[%s637 + $0x38] sm:$0x1]
      %v8404 = vld [vmem:[%s637 + $0x3c] sm:$0xf]
      %v8405 = vld [vmem:[%s637 + $0x40] sm:$0xf]
      %v8406 = vld [vmem:[%s637 + $0x44] sm:$0x1]
      %v8407 = vld [vmem:[%s637 + $0x48] sm:$0xf]
      %v8408 = vld [vmem:[%s637 + $0x4c] sm:$0xf]
      %v8409 = vld [vmem:[%s637 + $0x50] sm:$0x1]
      %v8410 = vld [vmem:[%s637 + $0x54] sm:$0xf]
      %v8411 = vld [vmem:[%s637 + $0x58] sm:$0xf]
      %v8412 = vld [vmem:[%s637 + $0x5c] sm:$0x1]
      %v8413 = vld [vmem:[%s637 + $0x60] sm:$0xf]
      %v8414 = vld [vmem:[%s637 + $0x64] sm:$0xf]
      %v8415 = vld [vmem:[%s637 + $0x68] sm:$0x1]
      %v8416 = vld [vmem:[%s637 + $0x6c] sm:$0xf]
      %v8417 = vld [vmem:[%s637 + $0x70] sm:$0xf]
      %v8418 = vld [vmem:[%s637 + $0x74] sm:$0x1]
      %v8419 = vld [vmem:[%s637 + $0x78] sm:$0xf]
      %v8420 = vld [vmem:[%s637 + $0x7c] sm:$0xf]
      %v8421 = vld [vmem:[%s637 + $0x80] sm:$0x1]
      %v8422 = vld [vmem:[%s637 + $0x84] sm:$0xf]
      %v8423 = vld [vmem:[%s637 + $0x88] sm:$0xf]
      %v8424 = vld [vmem:[%s637 + $0x8c] sm:$0x1]
      %v8425 = vld [vmem:[%s637 + $0x90] sm:$0xf]
      %v8426 = vld [vmem:[%s637 + $0x94] sm:$0xf]
      %v8427 = vld [vmem:[%s637 + $0x98] sm:$0x1]
      %v8428 = vld [vmem:[%s637 + $0x9c] sm:$0xf]
      %v8429 = vld [vmem:[%s637 + $0xa0] sm:$0xf]
      %v8430 = vld [vmem:[%s637 + $0xa4] sm:$0x1]
      %v8431 = vld [vmem:[%s637 + $0xa8] sm:$0xf]
      %v8432 = vld [vmem:[%s637 + $0xac] sm:$0xf]
      %v8433 = vld [vmem:[%s637 + $0xb0] sm:$0x1]
      %v8434 = vld [vmem:[%s637 + $0xb4] sm:$0xf]
      %v8435 = vld [vmem:[%s637 + $0xb8] sm:$0xf]
      %v8436 = vld [vmem:[%s637 + $0xbc] sm:$0x1]
      %v8438 = vshrl.u32 %v8389, 16
      %v8440 = vrot.slane %v8438, 4
      %v8441 = vshll.u32 %v8389, 16
      %v8443 = vrot.slane %v8441, 5
      %v8444 = vor.u32 %v8440, %v8443
      %v8445 = vrot.slane %v8444, 4
      %v8447 = vshll.u32 %v8390, 16
      %v8449 = vrot.slane %v8447, 5
      %v8450 = vsel %vm805, %v8445, %v8449
      %v8451 = vshrl.u32 %v8390, 16
      %v8453 = vrot.slane %v8451, 4
      %v8454 = vor.u32 %v8453, %v8449
      %v8455 = vrot.slane %v8454, 4
      %v8457 = vshll.u32 %v8391, 16
      %v8459 = vrot.slane %v8457, 5
      %v8460 = vsel %vm805, %v8455, %v8459
      %v8462 = vshrl.u32 %v8392, 16
      %v8464 = vrot.slane %v8462, 4
      %v8465 = vshll.u32 %v8392, 16
      %v8467 = vrot.slane %v8465, 5
      %v8468 = vor.u32 %v8464, %v8467
      %v8469 = vrot.slane %v8468, 4
      %v8471 = vshll.u32 %v8393, 16
      %v8473 = vrot.slane %v8471, 5
      %v8474 = vsel %vm805, %v8469, %v8473
      %v8475 = vshrl.u32 %v8393, 16
      %v8477 = vrot.slane %v8475, 4
      %v8478 = vor.u32 %v8477, %v8473
      %v8479 = vrot.slane %v8478, 4
      %v8481 = vshll.u32 %v8394, 16
      %v8483 = vrot.slane %v8481, 5
      %v8484 = vsel %vm805, %v8479, %v8483
      %v8486 = vshrl.u32 %v8395, 16
      %v8488 = vrot.slane %v8486, 4
      %v8489 = vshll.u32 %v8395, 16
      %v8491 = vrot.slane %v8489, 5
      %v8492 = vor.u32 %v8488, %v8491
      %v8493 = vrot.slane %v8492, 4
      %v8495 = vshll.u32 %v8396, 16
      %v8497 = vrot.slane %v8495, 5
      %v8498 = vsel %vm805, %v8493, %v8497
      %v8499 = vshrl.u32 %v8396, 16
      %v8501 = vrot.slane %v8499, 4
      %v8502 = vor.u32 %v8501, %v8497
      %v8503 = vrot.slane %v8502, 4
      %v8505 = vshll.u32 %v8397, 16
      %v8507 = vrot.slane %v8505, 5
      %v8508 = vsel %vm805, %v8503, %v8507
      %v8510 = vshrl.u32 %v8398, 16
      %v8512 = vrot.slane %v8510, 4
      %v8513 = vshll.u32 %v8398, 16
      %v8515 = vrot.slane %v8513, 5
      %v8516 = vor.u32 %v8512, %v8515
      %v8517 = vrot.slane %v8516, 4
      %v8519 = vshll.u32 %v8399, 16
      %v8521 = vrot.slane %v8519, 5
      %v8522 = vsel %vm805, %v8517, %v8521
      %v8523 = vshrl.u32 %v8399, 16
      %v8525 = vrot.slane %v8523, 4
      %v8526 = vor.u32 %v8525, %v8521
      %v8527 = vrot.slane %v8526, 4
      %v8529 = vshll.u32 %v8400, 16
      %v8531 = vrot.slane %v8529, 5
      %v8532 = vsel %vm805, %v8527, %v8531
      %v8534 = vshrl.u32 %v8401, 16
      %v8536 = vrot.slane %v8534, 4
      %v8537 = vshll.u32 %v8401, 16
      %v8539 = vrot.slane %v8537, 5
      %v8540 = vor.u32 %v8536, %v8539
      %v8541 = vrot.slane %v8540, 4
      %v8543 = vshll.u32 %v8402, 16
      %v8545 = vrot.slane %v8543, 5
      %v8546 = vsel %vm805, %v8541, %v8545
      %v8547 = vshrl.u32 %v8402, 16
      %v8549 = vrot.slane %v8547, 4
      %v8550 = vor.u32 %v8549, %v8545
      %v8551 = vrot.slane %v8550, 4
      %v8553 = vshll.u32 %v8403, 16
      %v8555 = vrot.slane %v8553, 5
      %v8556 = vsel %vm805, %v8551, %v8555
      %v8558 = vshrl.u32 %v8404, 16
      %v8560 = vrot.slane %v8558, 4
      %v8561 = vshll.u32 %v8404, 16
      %v8563 = vrot.slane %v8561, 5
      %v8564 = vor.u32 %v8560, %v8563
      %v8565 = vrot.slane %v8564, 4
      %v8567 = vshll.u32 %v8405, 16
      %v8569 = vrot.slane %v8567, 5
      %v8570 = vsel %vm805, %v8565, %v8569
      %v8571 = vshrl.u32 %v8405, 16
      %v8573 = vrot.slane %v8571, 4
      %v8574 = vor.u32 %v8573, %v8569
      %v8575 = vrot.slane %v8574, 4
      %v8577 = vshll.u32 %v8406, 16
      %v8579 = vrot.slane %v8577, 5
      %v8580 = vsel %vm805, %v8575, %v8579
      %v8582 = vshrl.u32 %v8407, 16
      %v8584 = vrot.slane %v8582, 4
      %v8585 = vshll.u32 %v8407, 16
      %v8587 = vrot.slane %v8585, 5
      %v8588 = vor.u32 %v8584, %v8587
      %v8589 = vrot.slane %v8588, 4
      %v8591 = vshll.u32 %v8408, 16
      %v8593 = vrot.slane %v8591, 5
      %v8594 = vsel %vm805, %v8589, %v8593
      %v8595 = vshrl.u32 %v8408, 16
      %v8597 = vrot.slane %v8595, 4
      %v8598 = vor.u32 %v8597, %v8593
      %v8599 = vrot.slane %v8598, 4
      %v8601 = vshll.u32 %v8409, 16
      %v8603 = vrot.slane %v8601, 5
      %v8604 = vsel %vm805, %v8599, %v8603
      %v8606 = vshrl.u32 %v8410, 16
      %v8608 = vrot.slane %v8606, 4
      %v8609 = vshll.u32 %v8410, 16
      %v8611 = vrot.slane %v8609, 5
      %v8612 = vor.u32 %v8608, %v8611
      %v8613 = vrot.slane %v8612, 4
      %v8615 = vshll.u32 %v8411, 16
      %v8617 = vrot.slane %v8615, 5
      %v8618 = vsel %vm805, %v8613, %v8617
      %v8619 = vshrl.u32 %v8411, 16
      %v8621 = vrot.slane %v8619, 4
      %v8622 = vor.u32 %v8621, %v8617
      %v8623 = vrot.slane %v8622, 4
      %v8625 = vshll.u32 %v8412, 16
      %v8627 = vrot.slane %v8625, 5
      %v8628 = vsel %vm805, %v8623, %v8627
      %v8630 = vshrl.u32 %v8413, 16
      %v8632 = vrot.slane %v8630, 4
      %v8633 = vshll.u32 %v8413, 16
      %v8635 = vrot.slane %v8633, 5
      %v8636 = vor.u32 %v8632, %v8635
      %v8637 = vrot.slane %v8636, 4
      %v8639 = vshll.u32 %v8414, 16
      %v8641 = vrot.slane %v8639, 5
      %v8642 = vsel %vm805, %v8637, %v8641
      %v8643 = vshrl.u32 %v8414, 16
      %v8645 = vrot.slane %v8643, 4
      %v8646 = vor.u32 %v8645, %v8641
      %v8647 = vrot.slane %v8646, 4
      %v8649 = vshll.u32 %v8415, 16
      %v8651 = vrot.slane %v8649, 5
      %v8652 = vsel %vm805, %v8647, %v8651
      %v8654 = vshrl.u32 %v8416, 16
      %v8656 = vrot.slane %v8654, 4
      %v8657 = vshll.u32 %v8416, 16
      %v8659 = vrot.slane %v8657, 5
      %v8660 = vor.u32 %v8656, %v8659
      %v8661 = vrot.slane %v8660, 4
      %v8663 = vshll.u32 %v8417, 16
      %v8665 = vrot.slane %v8663, 5
      %v8666 = vsel %vm805, %v8661, %v8665
      %v8667 = vshrl.u32 %v8417, 16
      %v8669 = vrot.slane %v8667, 4
      %v8670 = vor.u32 %v8669, %v8665
      %v8671 = vrot.slane %v8670, 4
      %v8673 = vshll.u32 %v8418, 16
      %v8675 = vrot.slane %v8673, 5
      %v8676 = vsel %vm805, %v8671, %v8675
      %v8678 = vshrl.u32 %v8419, 16
      %v8680 = vrot.slane %v8678, 4
      %v8681 = vshll.u32 %v8419, 16
      %v8683 = vrot.slane %v8681, 5
      %v8684 = vor.u32 %v8680, %v8683
      %v8685 = vrot.slane %v8684, 4
      %v8687 = vshll.u32 %v8420, 16
      %v8689 = vrot.slane %v8687, 5
      %v8690 = vsel %vm805, %v8685, %v8689
      %v8691 = vshrl.u32 %v8420, 16
      %v8693 = vrot.slane %v8691, 4
      %v8694 = vor.u32 %v8693, %v8689
      %v8695 = vrot.slane %v8694, 4
      %v8697 = vshll.u32 %v8421, 16
      %v8699 = vrot.slane %v8697, 5
      %v8700 = vsel %vm805, %v8695, %v8699
      %v8702 = vshrl.u32 %v8422, 16
      %v8704 = vrot.slane %v8702, 4
      %v8705 = vshll.u32 %v8422, 16
      %v8707 = vrot.slane %v8705, 5
      %v8708 = vor.u32 %v8704, %v8707
      %v8709 = vrot.slane %v8708, 4
      %v8711 = vshll.u32 %v8423, 16
      %v8713 = vrot.slane %v8711, 5
      %v8714 = vsel %vm805, %v8709, %v8713
      %v8715 = vshrl.u32 %v8423, 16
      %v8717 = vrot.slane %v8715, 4
      %v8718 = vor.u32 %v8717, %v8713
      %v8719 = vrot.slane %v8718, 4
      %v8721 = vshll.u32 %v8424, 16
      %v8723 = vrot.slane %v8721, 5
      %v8724 = vsel %vm805, %v8719, %v8723
      %v8726 = vshrl.u32 %v8425, 16
      %v8728 = vrot.slane %v8726, 4
      %v8729 = vshll.u32 %v8425, 16
      %v8731 = vrot.slane %v8729, 5
      %v8732 = vor.u32 %v8728, %v8731
      %v8733 = vrot.slane %v8732, 4
      %v8735 = vshll.u32 %v8426, 16
      %v8737 = vrot.slane %v8735, 5
      %v8738 = vsel %vm805, %v8733, %v8737
      %v8739 = vshrl.u32 %v8426, 16
      %v8741 = vrot.slane %v8739, 4
      %v8742 = vor.u32 %v8741, %v8737
      %v8743 = vrot.slane %v8742, 4
      %v8745 = vshll.u32 %v8427, 16
      %v8747 = vrot.slane %v8745, 5
      %v8748 = vsel %vm805, %v8743, %v8747
      %v8750 = vshrl.u32 %v8428, 16
      %v8752 = vrot.slane %v8750, 4
      %v8753 = vshll.u32 %v8428, 16
      %v8755 = vrot.slane %v8753, 5
      %v8756 = vor.u32 %v8752, %v8755
      %v8757 = vrot.slane %v8756, 4
      %v8759 = vshll.u32 %v8429, 16
      %v8761 = vrot.slane %v8759, 5
      %v8762 = vsel %vm805, %v8757, %v8761
      %v8763 = vshrl.u32 %v8429, 16
      %v8765 = vrot.slane %v8763, 4
      %v8766 = vor.u32 %v8765, %v8761
      %v8767 = vrot.slane %v8766, 4
      %v8769 = vshll.u32 %v8430, 16
      %v8771 = vrot.slane %v8769, 5
      %v8772 = vsel %vm805, %v8767, %v8771
      %v8774 = vshrl.u32 %v8431, 16
      %v8776 = vrot.slane %v8774, 4
      %v8777 = vshll.u32 %v8431, 16
      %v8779 = vrot.slane %v8777, 5
      %v8780 = vor.u32 %v8776, %v8779
      %v8781 = vrot.slane %v8780, 4
      %v8783 = vshll.u32 %v8432, 16
      %v8785 = vrot.slane %v8783, 5
      %v8786 = vsel %vm805, %v8781, %v8785
      %v8787 = vshrl.u32 %v8432, 16
      %v8789 = vrot.slane %v8787, 4
      %v8790 = vor.u32 %v8789, %v8785
      %v8791 = vrot.slane %v8790, 4
      %v8793 = vshll.u32 %v8433, 16
      %v8795 = vrot.slane %v8793, 5
      %v8796 = vsel %vm805, %v8791, %v8795
      %v8798 = vshrl.u32 %v8434, 16
      %v8800 = vrot.slane %v8798, 4
      %v8801 = vshll.u32 %v8434, 16
      %v8803 = vrot.slane %v8801, 5
      %v8804 = vor.u32 %v8800, %v8803
      %v8805 = vrot.slane %v8804, 4
      %v8807 = vshll.u32 %v8435, 16
      %v8809 = vrot.slane %v8807, 5
      %v8810 = vsel %vm805, %v8805, %v8809
      %v8811 = vshrl.u32 %v8435, 16
      %v8813 = vrot.slane %v8811, 4
      %v8814 = vor.u32 %v8813, %v8809
      %v8815 = vrot.slane %v8814, 4
      %v8817 = vshll.u32 %v8436, 16
      %v8819 = vrot.slane %v8817, 5
      %v8820 = vsel %vm805, %v8815, %v8819
      %v8853 = vunpack.c.l.bf16 %v8450
      %v8854 = vunpack.c.l.bf16 %v8460
      %v8855 = vunpack.c.l.bf16 %v8474
      %v8856 = vunpack.c.l.bf16 %v8484
      %v8857 = vunpack.c.l.bf16 %v8498
      %v8858 = vunpack.c.l.bf16 %v8508
      %v8859 = vunpack.c.l.bf16 %v8522
      %v8860 = vunpack.c.l.bf16 %v8532
      %v8861 = vunpack.c.l.bf16 %v8546
      %v8862 = vunpack.c.l.bf16 %v8556
      %v8863 = vunpack.c.l.bf16 %v8570
      %v8864 = vunpack.c.l.bf16 %v8580
      %v8865 = vunpack.c.l.bf16 %v8594
      %v8866 = vunpack.c.l.bf16 %v8604
      %v8867 = vunpack.c.l.bf16 %v8618
      %v8868 = vunpack.c.l.bf16 %v8628
      %v8869 = vunpack.c.l.bf16 %v8642
      %v8870 = vunpack.c.l.bf16 %v8652
      %v8871 = vunpack.c.l.bf16 %v8666
      %v8872 = vunpack.c.l.bf16 %v8676
      %v8873 = vunpack.c.l.bf16 %v8690
      %v8874 = vunpack.c.l.bf16 %v8700
      %v8875 = vunpack.c.l.bf16 %v8714
      %v8876 = vunpack.c.l.bf16 %v8724
      %v8877 = vunpack.c.l.bf16 %v8738
      %v8878 = vunpack.c.l.bf16 %v8748
      %v8879 = vunpack.c.l.bf16 %v8762
      %v8880 = vunpack.c.l.bf16 %v8772
      %v8881 = vunpack.c.l.bf16 %v8786
      %v8882 = vunpack.c.l.bf16 %v8796
      %v8883 = vunpack.c.l.bf16 %v8810
      %v8884 = vunpack.c.l.bf16 %v8820
      %v8885 = vadd.f32 %v8357, %v8853
      %v8886 = vadd.f32 %v8358, %v8854
      %v8887 = vadd.f32 %v8359, %v8855
      %v8888 = vadd.f32 %v8360, %v8856
      %v8889 = vadd.f32 %v8361, %v8857
      %v8890 = vadd.f32 %v8362, %v8858
      %v8891 = vadd.f32 %v8363, %v8859
      %v8892 = vadd.f32 %v8364, %v8860
      %v8893 = vadd.f32 %v8365, %v8861
      %v8894 = vadd.f32 %v8366, %v8862
      %v8895 = vadd.f32 %v8367, %v8863
      %v8896 = vadd.f32 %v8368, %v8864
      %v8897 = vadd.f32 %v8369, %v8865
      %v8898 = vadd.f32 %v8370, %v8866
      %v8899 = vadd.f32 %v8371, %v8867
      %v8900 = vadd.f32 %v8372, %v8868
      %v8901 = vadd.f32 %v8373, %v8869
      %v8902 = vadd.f32 %v8374, %v8870
      %v8903 = vadd.f32 %v8375, %v8871
      %v8904 = vadd.f32 %v8376, %v8872
      %v8905 = vadd.f32 %v8377, %v8873
      %v8906 = vadd.f32 %v8378, %v8874
      %v8907 = vadd.f32 %v8379, %v8875
      %v8908 = vadd.f32 %v8380, %v8876
      %v8909 = vadd.f32 %v8381, %v8877
      %v8910 = vadd.f32 %v8382, %v8878
      %v8911 = vadd.f32 %v8383, %v8879
      %v8912 = vadd.f32 %v8384, %v8880
      %v8913 = vadd.f32 %v8385, %v8881
      %v8914 = vadd.f32 %v8386, %v8882
      %v8915 = vadd.f32 %v8387, %v8883
      %v8916 = vadd.f32 %v8388, %v8884
      %v8917 = vmax.f32 %v8885, 0.0
      %v8918 = vmax.f32 %v8886, 0.0
      %v8919 = vmax.f32 %v8887, 0.0
      %v8920 = vmax.f32 %v8888, 0.0
      %v8921 = vmax.f32 %v8889, 0.0
      %v8922 = vmax.f32 %v8890, 0.0
      %v8923 = vmax.f32 %v8891, 0.0
      %v8924 = vmax.f32 %v8892, 0.0
      %v8925 = vmax.f32 %v8893, 0.0
      %v8926 = vmax.f32 %v8894, 0.0
      %v8927 = vmax.f32 %v8895, 0.0
      %v8928 = vmax.f32 %v8896, 0.0
      %v8929 = vmax.f32 %v8897, 0.0
      %v8930 = vmax.f32 %v8898, 0.0
      %v8931 = vmax.f32 %v8899, 0.0
      %v8932 = vmax.f32 %v8900, 0.0
      %v8933 = vmax.f32 %v8901, 0.0
      %v8934 = vmax.f32 %v8902, 0.0
      %v8935 = vmax.f32 %v8903, 0.0
      %v8936 = vmax.f32 %v8904, 0.0
      %v8937 = vmax.f32 %v8905, 0.0
      %v8938 = vmax.f32 %v8906, 0.0
      %v8939 = vmax.f32 %v8907, 0.0
      %v8940 = vmax.f32 %v8908, 0.0
      %v8941 = vmax.f32 %v8909, 0.0
      %v8942 = vmax.f32 %v8910, 0.0
      %v8943 = vmax.f32 %v8911, 0.0
      %v8944 = vmax.f32 %v8912, 0.0
      %v8945 = vmax.f32 %v8913, 0.0
      %v8946 = vmax.f32 %v8914, 0.0
      %v8947 = vmax.f32 %v8915, 0.0
      %v8948 = vmax.f32 %v8916, 0.0
      %v8949 = vpack.c.bf16 %v8917, %v8917
      %v8950 = vpack.c.bf16 %v8918, %v8918
      %v8951 = vpack.c.bf16 %v8919, %v8919
      %v8952 = vpack.c.bf16 %v8920, %v8920
      %v8953 = vpack.c.bf16 %v8921, %v8921
      %v8954 = vpack.c.bf16 %v8922, %v8922
      %v8955 = vpack.c.bf16 %v8923, %v8923
      %v8956 = vpack.c.bf16 %v8924, %v8924
      %v8957 = vpack.c.bf16 %v8925, %v8925
      %v8958 = vpack.c.bf16 %v8926, %v8926
      %v8959 = vpack.c.bf16 %v8927, %v8927
      %v8960 = vpack.c.bf16 %v8928, %v8928
      %v8961 = vpack.c.bf16 %v8929, %v8929
      %v8962 = vpack.c.bf16 %v8930, %v8930
      %v8963 = vpack.c.bf16 %v8931, %v8931
      %v8964 = vpack.c.bf16 %v8932, %v8932
      %v8965 = vpack.c.bf16 %v8933, %v8933
      %v8966 = vpack.c.bf16 %v8934, %v8934
      %v8967 = vpack.c.bf16 %v8935, %v8935
      %v8968 = vpack.c.bf16 %v8936, %v8936
      %v8969 = vpack.c.bf16 %v8937, %v8937
      %v8970 = vpack.c.bf16 %v8938, %v8938
      %v8971 = vpack.c.bf16 %v8939, %v8939
      %v8972 = vpack.c.bf16 %v8940, %v8940
      %v8973 = vpack.c.bf16 %v8941, %v8941
      %v8974 = vpack.c.bf16 %v8942, %v8942
      %v8975 = vpack.c.bf16 %v8943, %v8943
      %v8976 = vpack.c.bf16 %v8944, %v8944
      %v8977 = vpack.c.bf16 %v8945, %v8945
      %v8978 = vpack.c.bf16 %v8946, %v8946
      %v8979 = vpack.c.bf16 %v8947, %v8947
      %v8980 = vpack.c.bf16 %v8948, %v8948
      %8981 = vst.msk [vmem:[%s224] sm:$0xf] %vm226, %v8949
      %8982 = vst.msk [vmem:[%s224 + $0x4] sm:$0xf] %vm226, %v8950
      %8983 = vst.msk [vmem:[%s224 + $0x8] sm:$0xf] %vm226, %v8951
      %8984 = vst.msk [vmem:[%s224 + $0xc] sm:$0xf] %vm226, %v8952
      %8985 = vst.msk [vmem:[%s224 + $0x10] sm:$0xf] %vm226, %v8953
      %8986 = vst.msk [vmem:[%s224 + $0x14] sm:$0xf] %vm226, %v8954
      %8987 = vst.msk [vmem:[%s224 + $0x18] sm:$0xf] %vm226, %v8955
      %8988 = vst.msk [vmem:[%s224 + $0x1c] sm:$0xf] %vm226, %v8956
      %8989 = vst.msk [vmem:[%s224 + $0x20] sm:$0xf] %vm226, %v8957
      %8990 = vst.msk [vmem:[%s224 + $0x24] sm:$0xf] %vm226, %v8958
      %8991 = vst.msk [vmem:[%s224 + $0x28] sm:$0xf] %vm226, %v8959
      %8992 = vst.msk [vmem:[%s224 + $0x2c] sm:$0xf] %vm226, %v8960
      %8993 = vst.msk [vmem:[%s224 + $0x30] sm:$0xf] %vm226, %v8961
      %8994 = vst.msk [vmem:[%s224 + $0x34] sm:$0xf] %vm226, %v8962
      %8995 = vst.msk [vmem:[%s224 + $0x38] sm:$0xf] %vm226, %v8963
      %8996 = vst.msk [vmem:[%s224 + $0x3c] sm:$0xf] %vm226, %v8964
      %8997 = vst.msk [vmem:[%s224 + $0x40] sm:$0xf] %vm226, %v8965
      %8998 = vst.msk [vmem:[%s224 + $0x44] sm:$0xf] %vm226, %v8966
      %8999 = vst.msk [vmem:[%s224 + $0x48] sm:$0xf] %vm226, %v8967
      %9000 = vst.msk [vmem:[%s224 + $0x4c] sm:$0xf] %vm226, %v8968
      %9001 = vst.msk [vmem:[%s224 + $0x50] sm:$0xf] %vm226, %v8969
      %9002 = vst.msk [vmem:[%s224 + $0x54] sm:$0xf] %vm226, %v8970
      %9003 = vst.msk [vmem:[%s224 + $0x58] sm:$0xf] %vm226, %v8971
      %9004 = vst.msk [vmem:[%s224 + $0x5c] sm:$0xf] %vm226, %v8972
      %9005 = vst.msk [vmem:[%s224 + $0x60] sm:$0xf] %vm226, %v8973
      %9006 = vst.msk [vmem:[%s224 + $0x64] sm:$0xf] %vm226, %v8974
      %9007 = vst.msk [vmem:[%s224 + $0x68] sm:$0xf] %vm226, %v8975
      %9008 = vst.msk [vmem:[%s224 + $0x6c] sm:$0xf] %vm226, %v8976
      %9009 = vst.msk [vmem:[%s224 + $0x70] sm:$0xf] %vm226, %v8977
      %9010 = vst.msk [vmem:[%s224 + $0x74] sm:$0xf] %vm226, %v8978
      %9011 = vst.msk [vmem:[%s224 + $0x78] sm:$0xf] %vm226, %v8979
      %9012 = vst.msk [vmem:[%s224 + $0x7c] sm:$0xf] %vm226, %v8980
      %p9013 = scmp.lt.s32.totalorder %s16, 1
      %s9014 = scalar_select %p9013, %s16, 1
      %s9015 = smul.addr %s9014, 32
      %s9016 = smul.addr %s9015, 4
      %s9017 = scalar_lea.vmem %s5, %s9016
      // Predicated region
      $region41: #{forward.2} parent=39 // pred_check
        %p9018 = pneg %p144
      $region42: #{forward.2} parent=39 // pred_check_branch
        %9020 = sbr.rel (%p9018) target = $region44
      $region43: #{forward.2} parent=39 // pred_region
        _
      $region44: #{forward.2} parent=39 // pred_fallthru
        _
    $region40: #{forward.2} parent=5 // pred_fallthru
      _
    %p9021 = scmp.le.s32.totalorder 2, %s11
    // Predicated region
    $region45: #{forward.2} parent=5 // pred_check
      %p9022 = pneg %p9021
    $region46: #{forward.2} parent=5 // pred_check_branch
      %9024 = sbr.rel (%p9022) target = $region48
    $region47: #{forward.2} parent=5 // pred_region
      %s9025 = ssub.s32 %s11, 2
      // Predicated region
      $region49: #{forward.2} parent=47 // pred_check
        %p9026 = pneg %p150
      $region50: #{forward.2} parent=47 // pred_check_branch
        %9028 = sbr.rel (%p9026) target = $region52
      $region51: #{forward.2} parent=47 // pred_region
        %p9029 = scmp.lt.s32.totalorder %s17, 1
        %s9030 = scalar_select %p9029, %s17, 1
        %s9031 = smul.addr %s9030, 32
        %s9032 = smul.addr %s9031, 4
        %s9033 = scalar_lea.vmem %s5, %s9032
      $region52: #{forward.2} parent=47 // pred_fallthru
        _
    $region48: #{forward.2} parent=5 // pred_fallthru
      _
  $region6: #{forward.2} parent=0 // loop_footer
    %s15 = sadd.s32 1, %s11
  $region7: #{forward.2} parent=0 // loop_footer_branch
    %10 = sbr.rel target = $region3
  $region8: #{forward.2} parent=0 // loop_exit
    _

</llo_original>
